<compile_context>
chip_gen: v7x
topology: tpu7x:2x2x1
jax: 0.10.0
libtpu: 0.0.40
codegen_flags: <defaults>
</compile_context>

<pallas_src>
import numpy as np

import jax
import jax.numpy as jnp
from jax.experimental import pallas as pl
from jax.experimental.pallas import tpu as pltpu


# ---------------------------------------------------------------------------
# Activation geometry for the 1x32x32 LeNet autoencoder.
#   G: image rows packed per storage row, W: image width, C: channels,
#   L: lane width = G*W*C zero-padded up to a multiple of 128.
# ---------------------------------------------------------------------------
_X0 = dict(G=4, W=32, C=1, L=128)     # input            32x32x1  -> (N, 8, 128)
_Y1 = dict(G=4, W=28, C=6, L=768)     # conv1 + tanh     28x28x6  -> (N, 7, 768)
_Y2 = dict(G=2, W=10, C=16, L=384)    # pool+conv2       10x10x16 -> (N, 5, 384)
_Y3 = dict(G=1, W=1, C=120, L=128)    # pool+conv3       1x1x120  -> (N, 1, 128)
_Y4 = dict(G=1, W=5, C=16, L=128)     # deconv1          5x5x16   -> (N, 5, 128)
_Y5 = dict(G=2, W=14, C=6, L=256)     # deconv2          14x14x6  -> (N, 7, 256)
_Y6 = dict(G=4, W=32, C=1, L=128)     # deconv3          32x32x1  -> (N, 8, 128)

# Per fused layer: (n_taps, R_out, top_pad_rows, bot_pad_rows, activation).
_LAYERS = (
    (2, 7, 0, 0, "tanh"),      # L1: Conv2d(1->6, 5)
    (3, 5, 0, 0, "tanh"),      # L2: AvgPool(2,2) folded into Conv2d(6->16, 5)
    (5, 1, 0, 0, "tanh"),      # L3: AvgPool(2,2) folded into Conv2d(16->120, 5)
    (5, 5, 4, 4, "tanh"),      # L4: ConvTranspose2d(120->16, 5, s=1)
    (3, 7, 2, 2, "tanh"),      # L5: ConvTranspose2d(16->6, 5, s=2, op=1)
    (2, 8, 1, 1, "sigmoid"),   # L6: ConvTranspose2d(6->1, 5, s=2, op=1)
)


# ---------------------------------------------------------------------------
# Host-side (one-time) weight packing into K-stacked tap matrices.
# ---------------------------------------------------------------------------
def _build_conv_taps(w_eff, b, a_in, a_out, stride, n_taps):
    """Valid Conv2d with stride `stride` as row-matmul taps.
    w_eff: (OC, IC, KH, KW) numpy (already pool-folded where applicable)."""
    OC, IC, KH, KW = w_eff.shape
    G_in, W_in = a_in["G"], a_in["W"]
    G_out, W_out = a_out["G"], a_out["W"]
    taps = np.zeros((n_taps, a_in["L"], a_out["L"]), np.float32)
    for t in range(n_taps):
        for g_in in range(G_in):
            for g_out in range(G_out):
                i = t * G_in + g_in - stride * g_out
                if not 0 <= i < KH:
                    continue
                for ow in range(W_out):
                    for j in range(KW):
                        iw = stride * ow + j
                        r0 = (g_in * W_in + iw) * IC
                        c0 = (g_out * W_out + ow) * OC
                        taps[t, r0:r0 + IC, c0:c0 + OC] = w_eff[:, :, i, j].T
    bias = np.zeros((1, a_out["L"]), np.float32)
    bias[0, :G_out * W_out * OC] = np.tile(b, G_out * W_out)
    return taps, bias


def _build_deconv_taps(w, b, a_in, a_out, stride, n_taps, top_pad):
    """ConvTranspose2d (padding=0; output_padding handled implicitly) as taps.
    w: (IC, OC, KH, KW) numpy (PyTorch layout)."""
    IC, OC, KH, KW = w.shape
    G_in, W_in = a_in["G"], a_in["W"]
    G_out, W_out = a_out["G"], a_out["W"]
    taps = np.zeros((n_taps, a_in["L"], a_out["L"]), np.float32)
    for t in range(n_taps):
        for g_in in range(G_in):
            for g_out in range(G_out):
                kh = g_out - stride * g_in - stride * G_in * (t - top_pad)
                if not 0 <= kh < KH:
                    continue
                for iw in range(W_in):
                    for kw in range(KW):
                        ow = stride * iw + kw
                        if ow >= W_out:
                            continue
                        r0 = (g_in * W_in + iw) * IC
                        c0 = (g_out * W_out + ow) * OC
                        taps[t, r0:r0 + IC, c0:c0 + OC] = w[:, :, kh, kw]
    bias = np.zeros((1, a_out["L"]), np.float32)
    bias[0, :G_out * W_out * OC] = np.tile(b, G_out * W_out)
    return taps, bias


def pack_params(params):
    """Host-side, one-time repack of PyTorch-layout weights into K-stacked
    bf16 tap matrices (n_taps*L_in, L_out) + f32 bias rows for the kernel."""
    f = lambda k: np.asarray(jax.device_get(params[k]), np.float32)

    def fold_pool(w):  # AvgPool2d(2,2) before this conv -> 10x10 stride-2 kernel
        return 0.25 * np.repeat(np.repeat(w, 2, axis=2), 2, axis=3)

    layers = [
        _build_conv_taps(f("e1_w"), f("e1_b"), _X0, _Y1, 1, 2),
        _build_conv_taps(fold_pool(f("e2_w")), f("e2_b"), _Y1, _Y2, 2, 3),
        _build_conv_taps(fold_pool(f("e3_w")), f("e3_b"), _Y2, _Y3, 2, 5),
        _build_deconv_taps(f("d1_w"), f("d1_b"), _Y3, _Y4, 1, 5, 4),
        _build_deconv_taps(f("d2_w"), f("d2_b"), _Y4, _Y5, 2, 3, 2),
        _build_deconv_taps(f("d3_w"), f("d3_b"), _Y5, _Y6, 2, 2, 1),
    ]
    packed = []
    for taps, bias in layers:
        nt, li, lo = taps.shape
        packed.append(jnp.asarray(taps.reshape(nt * li, lo), jnp.bfloat16))
        packed.append(jnp.asarray(bias, jnp.float32))
    return tuple(packed)


# ---------------------------------------------------------------------------
# Fused Pallas kernel (single invocation, everything VMEM-resident).
# ---------------------------------------------------------------------------
def _pad_rows(x, top, bot):
    if not (top or bot):
        return x
    n, _, l = x.shape
    parts = []
    if top:
        parts.append(jnp.zeros((n, top, l), x.dtype))
    parts.append(x)
    if bot:
        parts.append(jnp.zeros((n, bot, l), x.dtype))
    return jnp.concatenate(parts, axis=1)


def _row_layer(h, w_ref, bias_ref, n_taps, r_out, top, bot, act):
    """out = act( concat_t(window_t) @ W_stacked + bias ) — ONE matmul/layer."""
    h = _pad_rows(h, top, bot)
    n, _, l_in = h.shape
    l_out = w_ref.shape[-1]
    # Lane-concatenate the n_taps row windows (K-concat), single reshape + cast.
    slab = jnp.concatenate([h[:, t:t + r_out, :] for t in range(n_taps)], axis=2)
    slab = slab.reshape(n * r_out, n_taps * l_in).astype(jnp.bfloat16)
    acc = jnp.dot(slab, w_ref[...], preferred_element_type=jnp.float32)
    acc = acc + bias_ref[...]
    if act == "tanh":
        out = jnp.tanh(acc)
    else:  # exact sigmoid via the EUP tanh (no divide)
        out = 0.5 * (jnp.tanh(0.5 * acc) + 1.0)
    return out.reshape(n, r_out, l_out)


def _fused_kernel(x_ref, w1_ref, b1, b2, b3, b4, b5, b6,
                  w2_hbm, w3_hbm, w4_hbm, w5_hbm, w6_hbm,
                  o_ref,
                  w2_v, w3_v, w4_v, w5_v, w6_v, sems):
    # Kick off all later-layer weight DMAs (HBM -> VMEM scratch) at kernel
    # entry so they overlap the earlier layers' compute.
    copies = []
    for i, (src, dst) in enumerate(((w2_hbm, w2_v), (w3_hbm, w3_v),
                                    (w4_hbm, w4_v), (w5_hbm, w5_v),
                                    (w6_hbm, w6_v))):
        cp = pltpu.make_async_copy(src, dst, sems.at[i])
        cp.start()
        copies.append(cp)

    h = x_ref[...]                                        # (N, 8, 128) f32
    h = _row_layer(h, w1_ref, b1, *_LAYERS[0])            # runs under the DMAs

    wrefs = (w2_v, w3_v, w4_v, w5_v, w6_v)
    brefs = (b2, b3, b4, b5, b6)
    for i in range(5):
        copies[i].wait()                                  # only when needed
        h = _row_layer(h, wrefs[i], brefs[i], *_LAYERS[i + 1])

    o_ref[...] = h                                        # (N, 8, 128) f32


def forward(packed, x):
    """x: (N, 1, 32, 32) float32 NCHW -> (N, 1, 32, 32) float32 in [0, 1]."""
    n = x.shape[0]
    assert x.shape[1:] == (1, 32, 32), x.shape
    # Pack 4 consecutive image rows per storage row -> lane-dense (N, 8, 128).
    x_rows = x.astype(jnp.float32).reshape(n, 8, 128)

    (w1, b1, w2, b2, w3, b3, w4, b4, w5, b5, w6, b6) = packed
    operands = (x_rows, w1, b1, b2, b3, b4, b5, b6, w2, w3, w4, w5, w6)

    vmem = pltpu.MemorySpace.VMEM
    in_specs = ([pl.BlockSpec(memory_space=vmem)] * 8 +          # small: auto VMEM
                [pl.BlockSpec(memory_space=pl.ANY)] * 5)         # big taps: stay in HBM

    out = pl.pallas_call(
        _fused_kernel,
        out_shape=jax.ShapeDtypeStruct((n, 8, 128), jnp.float32),
        in_specs=in_specs,
        out_specs=pl.BlockSpec(memory_space=vmem),
        scratch_shapes=[
            pltpu.VMEM(w2.shape, jnp.bfloat16),
            pltpu.VMEM(w3.shape, jnp.bfloat16),
            pltpu.VMEM(w4.shape, jnp.bfloat16),
            pltpu.VMEM(w5.shape, jnp.bfloat16),
            pltpu.VMEM(w6.shape, jnp.bfloat16),
            pltpu.SemaphoreType.DMA((5,)),
        ],
        compiler_params=pltpu.CompilerParams(vmem_limit_bytes=32 * 1024 * 1024),
    )(*operands)
    # Undo the row packing: (N, 8, 128) == (N, 32, 32) row-major -> NCHW.
    return out.reshape(n, 1, 32, 32)


# ---------------------------------------------------------------------------
# Parameter init (PyTorch default ranges) and a pure-XLA reference.
# ---------------------------------------------------------------------------
def init_params(key):
    def uniform(k, shape, fan_in):
        bound = 1.0 / (fan_in ** 0.5)
        return jax.random.uniform(k, shape, jnp.float32, -bound, bound)

    keys = jax.random.split(key, 12)
    p = {}
    p["e1_w"] = uniform(keys[0], (6, 1, 5, 5), 1 * 25)
    p["e1_b"] = uniform(keys[1], (6,), 1 * 25)
    p["e2_w"] = uniform(keys[2], (16, 6, 5, 5), 6 * 25)
    p["e2_b"] = uniform(keys[3], (16,), 6 * 25)
    p["e3_w"] = uniform(keys[4], (120, 16, 5, 5), 16 * 25)
    p["e3_b"] = uniform(keys[5], (120,), 16 * 25)
    p["d1_w"] = uniform(keys[6], (120, 16, 5, 5), 16 * 25)
    p["d1_b"] = uniform(keys[7], (16,), 16 * 25)
    p["d2_w"] = uniform(keys[8], (16, 6, 5, 5), 6 * 25)
    p["d2_b"] = uniform(keys[9], (6,), 6 * 25)
    p["d3_w"] = uniform(keys[10], (6, 1, 5, 5), 1 * 25)
    p["d3_b"] = uniform(keys[11], (1,), 1 * 25)
    return p


def _reference_forward(params, x):
    """Pure-JAX/XLA reference (same PyTorch semantics, bf16 matmul operands)."""
    dn = ("NCHW", "OIHW", "NCHW")

    def conv(h, w, b):
        y = jax.lax.conv_general_dilated(
            h.astype(jnp.bfloat16), w.astype(jnp.bfloat16),
            window_strides=(1, 1), padding="VALID", dimension_numbers=dn,
            preferred_element_type=jnp.float32)
        return y + b.reshape(1, -1, 1, 1)

    def conv_t(h, w, b, stride, out_pad):
        w_eq = jnp.flip(w, (2, 3)).transpose(1, 0, 2, 3)
        k = w.shape[2]
        y = jax.lax.conv_general_dilated(
            h.astype(jnp.bfloat16), w_eq.astype(jnp.bfloat16),
            window_strides=(1, 1),
            padding=[(k - 1, k - 1 + out_pad), (k - 1, k - 1 + out_pad)],
            lhs_dilation=(stride, stride), dimension_numbers=dn,
            preferred_element_type=jnp.float32)
        return y + b.reshape(1, -1, 1, 1)

    def pool(h):
        N, C, H, W = h.shape
        return h.reshape(N, C, H // 2, 2, W // 2, 2).mean(axis=(3, 5))

    p = params
    h = jnp.tanh(conv(x, p["e1_w"], p["e1_b"]))
    h = pool(h)
    h = jnp.tanh(conv(h, p["e2_w"], p["e2_b"]))
    h = pool(h)
    h = jnp.tanh(conv(h, p["e3_w"], p["e3_b"]))
    h = jnp.tanh(conv_t(h, p["d1_w"], p["d1_b"], 1, 0))
    h = jnp.tanh(conv_t(h, p["d2_w"], p["d2_b"], 2, 1))
    h = jax.nn.sigmoid(conv_t(h, p["d3_w"], p["d3_b"], 2, 1))
    return h


if __name__ == "__main__":
    key = jax.random.PRNGKey(0)
    k_params, k_x = jax.random.split(key)
    params = init_params(k_params)
    packed = pack_params(params)          # one-time host-side weight repack

    # LeNet-style autoencoder expects 1x32x32 inputs (bottleneck is 120x1x1).
    x = jax.random.uniform(k_x, (2, 1, 32, 32), jnp.float32)

    y = jax.block_until_ready(jax.jit(forward)(packed, x))
    assert y.shape == (2, 1, 32, 32), y.shape
    assert bool(jnp.all(jnp.isfinite(y)))
    assert bool(jnp.all((y >= 0.0) & (y <= 1.0)))          # sigmoid range

    # Cross-check the fused kernel against a pure-XLA reference.
    y_ref = jax.block_until_ready(jax.jit(_reference_forward)(params, x))
    err = float(jnp.max(jnp.abs(y - y_ref)))
    assert err < 5e-2, f"kernel/reference mismatch: max abs err = {err}"
    print("KERNEL_OK")
</pallas_src>

<mosaic_0001>
module attributes {stable_mosaic.version = 11 : i64} {
  func.func @_fused_kernel(%arg0: memref<2x8x128xf32, #tpu.memory_space<vmem>>, %arg1: memref<256x768xbf16, #tpu.memory_space<vmem>>, %arg2: memref<1x768xf32, #tpu.memory_space<vmem>>, %arg3: memref<1x384xf32, #tpu.memory_space<vmem>>, %arg4: memref<1x128xf32, #tpu.memory_space<vmem>>, %arg5: memref<1x128xf32, #tpu.memory_space<vmem>>, %arg6: memref<1x256xf32, #tpu.memory_space<vmem>>, %arg7: memref<1x128xf32, #tpu.memory_space<vmem>>, %arg8: memref<2304x384xbf16, #tpu.memory_space<any>>, %arg9: memref<1920x128xbf16, #tpu.memory_space<any>>, %arg10: memref<640x128xbf16, #tpu.memory_space<any>>, %arg11: memref<384x256xbf16, #tpu.memory_space<any>>, %arg12: memref<512x128xbf16, #tpu.memory_space<any>>, %arg13: memref<2x8x128xf32, #tpu.memory_space<vmem>>, %arg14: memref<2304x384xbf16, #tpu.memory_space<vmem>>, %arg15: memref<1920x128xbf16, #tpu.memory_space<vmem>>, %arg16: memref<640x128xbf16, #tpu.memory_space<vmem>>, %arg17: memref<384x256xbf16, #tpu.memory_space<vmem>>, %arg18: memref<512x128xbf16, #tpu.memory_space<vmem>>, %arg19: memref<5x!tpu.dma_semaphore, #tpu.memory_space<semaphore_mem>>) attributes {dimension_semantics = [], scalar_prefetch = 0 : i64, scratch_operands = 6 : i64, tpu.core_type = #tpu.core_type<tc>} {
    %c0_i32 = arith.constant 0 : i32
    %0 = tpu.memref_slice %arg19[%c0_i32] : memref<5x!tpu.dma_semaphore, #tpu.memory_space<semaphore_mem>> -> memref<1x!tpu.dma_semaphore, #tpu.memory_space<semaphore_mem>>
    %1 = tpu.memref_squeeze %0 : memref<1x!tpu.dma_semaphore, #tpu.memory_space<semaphore_mem>> -> memref<!tpu.dma_semaphore, #tpu.memory_space<semaphore_mem>>
    tpu.enqueue_dma source(%arg8 : memref<2304x384xbf16, #tpu.memory_space<any>>) target(%arg14 : memref<2304x384xbf16, #tpu.memory_space<vmem>>) target_semaphore(%1 : memref<!tpu.dma_semaphore, #tpu.memory_space<semaphore_mem>>)
    %c1_i32 = arith.constant 1 : i32
    %2 = tpu.memref_slice %arg19[%c1_i32] : memref<5x!tpu.dma_semaphore, #tpu.memory_space<semaphore_mem>> -> memref<1x!tpu.dma_semaphore, #tpu.memory_space<semaphore_mem>>
    %3 = tpu.memref_squeeze %2 : memref<1x!tpu.dma_semaphore, #tpu.memory_space<semaphore_mem>> -> memref<!tpu.dma_semaphore, #tpu.memory_space<semaphore_mem>>
    tpu.enqueue_dma source(%arg9 : memref<1920x128xbf16, #tpu.memory_space<any>>) target(%arg15 : memref<1920x128xbf16, #tpu.memory_space<vmem>>) target_semaphore(%3 : memref<!tpu.dma_semaphore, #tpu.memory_space<semaphore_mem>>)
    %c2_i32 = arith.constant 2 : i32
    %4 = tpu.memref_slice %arg19[%c2_i32] : memref<5x!tpu.dma_semaphore, #tpu.memory_space<semaphore_mem>> -> memref<1x!tpu.dma_semaphore, #tpu.memory_space<semaphore_mem>>
    %5 = tpu.memref_squeeze %4 : memref<1x!tpu.dma_semaphore, #tpu.memory_space<semaphore_mem>> -> memref<!tpu.dma_semaphore, #tpu.memory_space<semaphore_mem>>
    tpu.enqueue_dma source(%arg10 : memref<640x128xbf16, #tpu.memory_space<any>>) target(%arg16 : memref<640x128xbf16, #tpu.memory_space<vmem>>) target_semaphore(%5 : memref<!tpu.dma_semaphore, #tpu.memory_space<semaphore_mem>>)
    %c3_i32 = arith.constant 3 : i32
    %6 = tpu.memref_slice %arg19[%c3_i32] : memref<5x!tpu.dma_semaphore, #tpu.memory_space<semaphore_mem>> -> memref<1x!tpu.dma_semaphore, #tpu.memory_space<semaphore_mem>>
    %7 = tpu.memref_squeeze %6 : memref<1x!tpu.dma_semaphore, #tpu.memory_space<semaphore_mem>> -> memref<!tpu.dma_semaphore, #tpu.memory_space<semaphore_mem>>
    tpu.enqueue_dma source(%arg11 : memref<384x256xbf16, #tpu.memory_space<any>>) target(%arg17 : memref<384x256xbf16, #tpu.memory_space<vmem>>) target_semaphore(%7 : memref<!tpu.dma_semaphore, #tpu.memory_space<semaphore_mem>>)
    %c4_i32 = arith.constant 4 : i32
    %8 = tpu.memref_slice %arg19[%c4_i32] : memref<5x!tpu.dma_semaphore, #tpu.memory_space<semaphore_mem>> -> memref<1x!tpu.dma_semaphore, #tpu.memory_space<semaphore_mem>>
    %9 = tpu.memref_squeeze %8 : memref<1x!tpu.dma_semaphore, #tpu.memory_space<semaphore_mem>> -> memref<!tpu.dma_semaphore, #tpu.memory_space<semaphore_mem>>
    tpu.enqueue_dma source(%arg12 : memref<512x128xbf16, #tpu.memory_space<any>>) target(%arg18 : memref<512x128xbf16, #tpu.memory_space<vmem>>) target_semaphore(%9 : memref<!tpu.dma_semaphore, #tpu.memory_space<semaphore_mem>>)
    %c0 = arith.constant 0 : index
    %c0_0 = arith.constant 0 : index
    %c0_1 = arith.constant 0 : index
    %10 = vector.load %arg0[%c0, %c0_0, %c0_1] : memref<2x8x128xf32, #tpu.memory_space<vmem>>, vector<2x8x128xf32>
    %11 = vector.extract_strided_slice %10 {offsets = [0, 0, 0], sizes = [2, 7, 128], strides = [1, 1, 1]} : vector<2x8x128xf32> to vector<2x7x128xf32>
    %12 = vector.extract_strided_slice %10 {offsets = [0, 1, 0], sizes = [2, 7, 128], strides = [1, 1, 1]} : vector<2x8x128xf32> to vector<2x7x128xf32>
    %13 = tpu.concatenate %11, %12 in 2 : vector<2x7x128xf32>, vector<2x7x128xf32> -> vector<2x7x256xf32>
    %14 = vector.shape_cast %13 : vector<2x7x256xf32> to vector<14x256xf32>
    %15 = arith.truncf %14 : vector<14x256xf32> to vector<14x256xbf16>
    %c0_2 = arith.constant 0 : index
    %c0_3 = arith.constant 0 : index
    %16 = vector.load %arg1[%c0_2, %c0_3] : memref<256x768xbf16, #tpu.memory_space<vmem>>, vector<256x768xbf16>
    %cst = arith.constant dense<0.000000e+00> : vector<14x768xf32>
    %17 = tpu.matmul %15, %16, %cst {dimension_numbers = #tpu.dot_dimension_numbers<[1], [0], [0], [1], [0, 0, 1, 1], [], []>} : vector<14x256xbf16>, vector<256x768xbf16>, vector<14x768xf32> -> vector<14x768xf32>
    %c0_4 = arith.constant 0 : index
    %c0_5 = arith.constant 0 : index
    %18 = vector.load %arg2[%c0_4, %c0_5] : memref<1x768xf32, #tpu.memory_space<vmem>>, vector<1x768xf32>
    %19 = vector.broadcast %18 : vector<1x768xf32> to vector<14x768xf32>
    %20 = arith.addf %17, %19 : vector<14x768xf32>
    %21 = math.tanh %20 : vector<14x768xf32>
    %22 = vector.shape_cast %21 : vector<14x768xf32> to vector<2x7x768xf32>
    %c0_i32_6 = arith.constant 0 : i32
    %23 = tpu.memref_slice %arg19[%c0_i32_6] : memref<5x!tpu.dma_semaphore, #tpu.memory_space<semaphore_mem>> -> memref<1x!tpu.dma_semaphore, #tpu.memory_space<semaphore_mem>>
    %24 = tpu.memref_squeeze %23 : memref<1x!tpu.dma_semaphore, #tpu.memory_space<semaphore_mem>> -> memref<!tpu.dma_semaphore, #tpu.memory_space<semaphore_mem>>
    tpu.wait_dma2 semaphore(%24 : memref<!tpu.dma_semaphore, #tpu.memory_space<semaphore_mem>>) src(%arg8 : memref<2304x384xbf16, #tpu.memory_space<any>>) dst(%arg14 : memref<2304x384xbf16, #tpu.memory_space<vmem>>)
    %25 = vector.extract_strided_slice %22 {offsets = [0, 0, 0], sizes = [2, 5, 768], strides = [1, 1, 1]} : vector<2x7x768xf32> to vector<2x5x768xf32>
    %26 = vector.extract_strided_slice %22 {offsets = [0, 1, 0], sizes = [2, 5, 768], strides = [1, 1, 1]} : vector<2x7x768xf32> to vector<2x5x768xf32>
    %27 = vector.extract_strided_slice %22 {offsets = [0, 2, 0], sizes = [2, 5, 768], strides = [1, 1, 1]} : vector<2x7x768xf32> to vector<2x5x768xf32>
    %28 = tpu.concatenate %25, %26, %27 in 2 : vector<2x5x768xf32>, vector<2x5x768xf32>, vector<2x5x768xf32> -> vector<2x5x2304xf32>
    %29 = vector.shape_cast %28 : vector<2x5x2304xf32> to vector<10x2304xf32>
    %30 = arith.truncf %29 : vector<10x2304xf32> to vector<10x2304xbf16>
    %c0_7 = arith.constant 0 : index
    %c0_8 = arith.constant 0 : index
    %31 = vector.load %arg14[%c0_7, %c0_8] : memref<2304x384xbf16, #tpu.memory_space<vmem>>, vector<2304x384xbf16>
    %cst_9 = arith.constant dense<0.000000e+00> : vector<10x384xf32>
    %32 = tpu.matmul %30, %31, %cst_9 {dimension_numbers = #tpu.dot_dimension_numbers<[1], [0], [0], [1], [0, 0, 1, 1], [], []>} : vector<10x2304xbf16>, vector<2304x384xbf16>, vector<10x384xf32> -> vector<10x384xf32>
    %c0_10 = arith.constant 0 : index
    %c0_11 = arith.constant 0 : index
    %33 = vector.load %arg3[%c0_10, %c0_11] : memref<1x384xf32, #tpu.memory_space<vmem>>, vector<1x384xf32>
    %34 = vector.broadcast %33 : vector<1x384xf32> to vector<10x384xf32>
    %35 = arith.addf %32, %34 : vector<10x384xf32>
    %36 = math.tanh %35 : vector<10x384xf32>
    %37 = vector.shape_cast %36 : vector<10x384xf32> to vector<2x5x384xf32>
    %c1_i32_12 = arith.constant 1 : i32
    %38 = tpu.memref_slice %arg19[%c1_i32_12] : memref<5x!tpu.dma_semaphore, #tpu.memory_space<semaphore_mem>> -> memref<1x!tpu.dma_semaphore, #tpu.memory_space<semaphore_mem>>
    %39 = tpu.memref_squeeze %38 : memref<1x!tpu.dma_semaphore, #tpu.memory_space<semaphore_mem>> -> memref<!tpu.dma_semaphore, #tpu.memory_space<semaphore_mem>>
    tpu.wait_dma2 semaphore(%39 : memref<!tpu.dma_semaphore, #tpu.memory_space<semaphore_mem>>) src(%arg9 : memref<1920x128xbf16, #tpu.memory_space<any>>) dst(%arg15 : memref<1920x128xbf16, #tpu.memory_space<vmem>>)
    %40 = vector.extract_strided_slice %37 {offsets = [0, 0, 0], sizes = [2, 1, 384], strides = [1, 1, 1]} : vector<2x5x384xf32> to vector<2x1x384xf32>
    %41 = vector.extract_strided_slice %37 {offsets = [0, 1, 0], sizes = [2, 1, 384], strides = [1, 1, 1]} : vector<2x5x384xf32> to vector<2x1x384xf32>
    %42 = vector.extract_strided_slice %37 {offsets = [0, 2, 0], sizes = [2, 1, 384], strides = [1, 1, 1]} : vector<2x5x384xf32> to vector<2x1x384xf32>
    %43 = vector.extract_strided_slice %37 {offsets = [0, 3, 0], sizes = [2, 1, 384], strides = [1, 1, 1]} : vector<2x5x384xf32> to vector<2x1x384xf32>
    %44 = vector.extract_strided_slice %37 {offsets = [0, 4, 0], sizes = [2, 1, 384], strides = [1, 1, 1]} : vector<2x5x384xf32> to vector<2x1x384xf32>
    %45 = tpu.concatenate %40, %41, %42, %43, %44 in 2 : vector<2x1x384xf32>, vector<2x1x384xf32>, vector<2x1x384xf32>, vector<2x1x384xf32>, vector<2x1x384xf32> -> vector<2x1x1920xf32>
    %46 = vector.shape_cast %45 : vector<2x1x1920xf32> to vector<2x1920xf32>
    %47 = arith.truncf %46 : vector<2x1920xf32> to vector<2x1920xbf16>
    %c0_13 = arith.constant 0 : index
    %c0_14 = arith.constant 0 : index
    %48 = vector.load %arg15[%c0_13, %c0_14] : memref<1920x128xbf16, #tpu.memory_space<vmem>>, vector<1920x128xbf16>
    %cst_15 = arith.constant dense<0.000000e+00> : vector<2x128xf32>
    %49 = tpu.matmul %47, %48, %cst_15 {dimension_numbers = #tpu.dot_dimension_numbers<[1], [0], [0], [1], [0, 0, 1, 1], [], []>} : vector<2x1920xbf16>, vector<1920x128xbf16>, vector<2x128xf32> -> vector<2x128xf32>
    %c0_16 = arith.constant 0 : index
    %c0_17 = arith.constant 0 : index
    %50 = vector.load %arg4[%c0_16, %c0_17] : memref<1x128xf32, #tpu.memory_space<vmem>>, vector<1x128xf32>
    %51 = vector.broadcast %50 : vector<1x128xf32> to vector<2x128xf32>
    %52 = arith.addf %49, %51 : vector<2x128xf32>
    %53 = math.tanh %52 : vector<2x128xf32>
    %54 = vector.shape_cast %53 : vector<2x128xf32> to vector<2x1x128xf32>
    %c2_i32_18 = arith.constant 2 : i32
    %55 = tpu.memref_slice %arg19[%c2_i32_18] : memref<5x!tpu.dma_semaphore, #tpu.memory_space<semaphore_mem>> -> memref<1x!tpu.dma_semaphore, #tpu.memory_space<semaphore_mem>>
    %56 = tpu.memref_squeeze %55 : memref<1x!tpu.dma_semaphore, #tpu.memory_space<semaphore_mem>> -> memref<!tpu.dma_semaphore, #tpu.memory_space<semaphore_mem>>
    tpu.wait_dma2 semaphore(%56 : memref<!tpu.dma_semaphore, #tpu.memory_space<semaphore_mem>>) src(%arg10 : memref<640x128xbf16, #tpu.memory_space<any>>) dst(%arg16 : memref<640x128xbf16, #tpu.memory_space<vmem>>)
    %cst_19 = arith.constant 0.000000e+00 : f32
    %57 = vector.broadcast %cst_19 : f32 to vector<2x4x128xf32>
    %cst_20 = arith.constant 0.000000e+00 : f32
    %58 = vector.broadcast %cst_20 : f32 to vector<2x4x128xf32>
    %59 = tpu.concatenate %57, %54, %58 in 1 : vector<2x4x128xf32>, vector<2x1x128xf32>, vector<2x4x128xf32> -> vector<2x9x128xf32>
    %60 = vector.extract_strided_slice %59 {offsets = [0, 0, 0], sizes = [2, 5, 128], strides = [1, 1, 1]} : vector<2x9x128xf32> to vector<2x5x128xf32>
    %61 = vector.extract_strided_slice %59 {offsets = [0, 1, 0], sizes = [2, 5, 128], strides = [1, 1, 1]} : vector<2x9x128xf32> to vector<2x5x128xf32>
    %62 = vector.extract_strided_slice %59 {offsets = [0, 2, 0], sizes = [2, 5, 128], strides = [1, 1, 1]} : vector<2x9x128xf32> to vector<2x5x128xf32>
    %63 = vector.extract_strided_slice %59 {offsets = [0, 3, 0], sizes = [2, 5, 128], strides = [1, 1, 1]} : vector<2x9x128xf32> to vector<2x5x128xf32>
    %64 = vector.extract_strided_slice %59 {offsets = [0, 4, 0], sizes = [2, 5, 128], strides = [1, 1, 1]} : vector<2x9x128xf32> to vector<2x5x128xf32>
    %65 = tpu.concatenate %60, %61, %62, %63, %64 in 2 : vector<2x5x128xf32>, vector<2x5x128xf32>, vector<2x5x128xf32>, vector<2x5x128xf32>, vector<2x5x128xf32> -> vector<2x5x640xf32>
    %66 = vector.shape_cast %65 : vector<2x5x640xf32> to vector<10x640xf32>
    %67 = arith.truncf %66 : vector<10x640xf32> to vector<10x640xbf16>
    %c0_21 = arith.constant 0 : index
    %c0_22 = arith.constant 0 : index
    %68 = vector.load %arg16[%c0_21, %c0_22] : memref<640x128xbf16, #tpu.memory_space<vmem>>, vector<640x128xbf16>
    %cst_23 = arith.constant dense<0.000000e+00> : vector<10x128xf32>
    %69 = tpu.matmul %67, %68, %cst_23 {dimension_numbers = #tpu.dot_dimension_numbers<[1], [0], [0], [1], [0, 0, 1, 1], [], []>} : vector<10x640xbf16>, vector<640x128xbf16>, vector<10x128xf32> -> vector<10x128xf32>
    %c0_24 = arith.constant 0 : index
    %c0_25 = arith.constant 0 : index
    %70 = vector.load %arg5[%c0_24, %c0_25] : memref<1x128xf32, #tpu.memory_space<vmem>>, vector<1x128xf32>
    %71 = vector.broadcast %70 : vector<1x128xf32> to vector<10x128xf32>
    %72 = arith.addf %69, %71 : vector<10x128xf32>
    %73 = math.tanh %72 : vector<10x128xf32>
    %74 = vector.shape_cast %73 : vector<10x128xf32> to vector<2x5x128xf32>
    %c3_i32_26 = arith.constant 3 : i32
    %75 = tpu.memref_slice %arg19[%c3_i32_26] : memref<5x!tpu.dma_semaphore, #tpu.memory_space<semaphore_mem>> -> memref<1x!tpu.dma_semaphore, #tpu.memory_space<semaphore_mem>>
    %76 = tpu.memref_squeeze %75 : memref<1x!tpu.dma_semaphore, #tpu.memory_space<semaphore_mem>> -> memref<!tpu.dma_semaphore, #tpu.memory_space<semaphore_mem>>
    tpu.wait_dma2 semaphore(%76 : memref<!tpu.dma_semaphore, #tpu.memory_space<semaphore_mem>>) src(%arg11 : memref<384x256xbf16, #tpu.memory_space<any>>) dst(%arg17 : memref<384x256xbf16, #tpu.memory_space<vmem>>)
    %cst_27 = arith.constant 0.000000e+00 : f32
    %77 = vector.broadcast %cst_27 : f32 to vector<2x2x128xf32>
    %cst_28 = arith.constant 0.000000e+00 : f32
    %78 = vector.broadcast %cst_28 : f32 to vector<2x2x128xf32>
    %79 = tpu.concatenate %77, %74, %78 in 1 : vector<2x2x128xf32>, vector<2x5x128xf32>, vector<2x2x128xf32> -> vector<2x9x128xf32>
    %80 = vector.extract_strided_slice %79 {offsets = [0, 0, 0], sizes = [2, 7, 128], strides = [1, 1, 1]} : vector<2x9x128xf32> to vector<2x7x128xf32>
    %81 = vector.extract_strided_slice %79 {offsets = [0, 1, 0], sizes = [2, 7, 128], strides = [1, 1, 1]} : vector<2x9x128xf32> to vector<2x7x128xf32>
    %82 = vector.extract_strided_slice %79 {offsets = [0, 2, 0], sizes = [2, 7, 128], strides = [1, 1, 1]} : vector<2x9x128xf32> to vector<2x7x128xf32>
    %83 = tpu.concatenate %80, %81, %82 in 2 : vector<2x7x128xf32>, vector<2x7x128xf32>, vector<2x7x128xf32> -> vector<2x7x384xf32>
    %84 = vector.shape_cast %83 : vector<2x7x384xf32> to vector<14x384xf32>
    %85 = arith.truncf %84 : vector<14x384xf32> to vector<14x384xbf16>
    %c0_29 = arith.constant 0 : index
    %c0_30 = arith.constant 0 : index
    %86 = vector.load %arg17[%c0_29, %c0_30] : memref<384x256xbf16, #tpu.memory_space<vmem>>, vector<384x256xbf16>
    %cst_31 = arith.constant dense<0.000000e+00> : vector<14x256xf32>
    %87 = tpu.matmul %85, %86, %cst_31 {dimension_numbers = #tpu.dot_dimension_numbers<[1], [0], [0], [1], [0, 0, 1, 1], [], []>} : vector<14x384xbf16>, vector<384x256xbf16>, vector<14x256xf32> -> vector<14x256xf32>
    %c0_32 = arith.constant 0 : index
    %c0_33 = arith.constant 0 : index
    %88 = vector.load %arg6[%c0_32, %c0_33] : memref<1x256xf32, #tpu.memory_space<vmem>>, vector<1x256xf32>
    %89 = vector.broadcast %88 : vector<1x256xf32> to vector<14x256xf32>
    %90 = arith.addf %87, %89 : vector<14x256xf32>
    %91 = math.tanh %90 : vector<14x256xf32>
    %92 = vector.shape_cast %91 : vector<14x256xf32> to vector<2x7x256xf32>
    %c4_i32_34 = arith.constant 4 : i32
    %93 = tpu.memref_slice %arg19[%c4_i32_34] : memref<5x!tpu.dma_semaphore, #tpu.memory_space<semaphore_mem>> -> memref<1x!tpu.dma_semaphore, #tpu.memory_space<semaphore_mem>>
    %94 = tpu.memref_squeeze %93 : memref<1x!tpu.dma_semaphore, #tpu.memory_space<semaphore_mem>> -> memref<!tpu.dma_semaphore, #tpu.memory_space<semaphore_mem>>
    tpu.wait_dma2 semaphore(%94 : memref<!tpu.dma_semaphore, #tpu.memory_space<semaphore_mem>>) src(%arg12 : memref<512x128xbf16, #tpu.memory_space<any>>) dst(%arg18 : memref<512x128xbf16, #tpu.memory_space<vmem>>)
    %cst_35 = arith.constant 0.000000e+00 : f32
    %95 = vector.broadcast %cst_35 : f32 to vector<2x1x256xf32>
    %cst_36 = arith.constant 0.000000e+00 : f32
    %96 = vector.broadcast %cst_36 : f32 to vector<2x1x256xf32>
    %97 = tpu.concatenate %95, %92, %96 in 1 : vector<2x1x256xf32>, vector<2x7x256xf32>, vector<2x1x256xf32> -> vector<2x9x256xf32>
    %98 = vector.extract_strided_slice %97 {offsets = [0, 0, 0], sizes = [2, 8, 256], strides = [1, 1, 1]} : vector<2x9x256xf32> to vector<2x8x256xf32>
    %99 = vector.extract_strided_slice %97 {offsets = [0, 1, 0], sizes = [2, 8, 256], strides = [1, 1, 1]} : vector<2x9x256xf32> to vector<2x8x256xf32>
    %100 = tpu.concatenate %98, %99 in 2 : vector<2x8x256xf32>, vector<2x8x256xf32> -> vector<2x8x512xf32>
    %101 = vector.shape_cast %100 : vector<2x8x512xf32> to vector<16x512xf32>
    %102 = arith.truncf %101 : vector<16x512xf32> to vector<16x512xbf16>
    %c0_37 = arith.constant 0 : index
    %c0_38 = arith.constant 0 : index
    %103 = vector.load %arg18[%c0_37, %c0_38] : memref<512x128xbf16, #tpu.memory_space<vmem>>, vector<512x128xbf16>
    %cst_39 = arith.constant dense<0.000000e+00> : vector<16x128xf32>
    %104 = tpu.matmul %102, %103, %cst_39 {dimension_numbers = #tpu.dot_dimension_numbers<[1], [0], [0], [1], [0, 0, 1, 1], [], []>} : vector<16x512xbf16>, vector<512x128xbf16>, vector<16x128xf32> -> vector<16x128xf32>
    %c0_40 = arith.constant 0 : index
    %c0_41 = arith.constant 0 : index
    %105 = vector.load %arg7[%c0_40, %c0_41] : memref<1x128xf32, #tpu.memory_space<vmem>>, vector<1x128xf32>
    %106 = vector.broadcast %105 : vector<1x128xf32> to vector<16x128xf32>
    %107 = arith.addf %104, %106 : vector<16x128xf32>
    %cst_42 = arith.constant 5.000000e-01 : f32
    %108 = vector.broadcast %cst_42 : f32 to vector<16x128xf32>
    %109 = arith.mulf %108, %107 : vector<16x128xf32>
    %110 = math.tanh %109 : vector<16x128xf32>
    %cst_43 = arith.constant 1.000000e+00 : f32
    %111 = vector.broadcast %cst_43 : f32 to vector<16x128xf32>
    %112 = arith.addf %110, %111 : vector<16x128xf32>
    %cst_44 = arith.constant 5.000000e-01 : f32
    %113 = vector.broadcast %cst_44 : f32 to vector<16x128xf32>
    %114 = arith.mulf %113, %112 : vector<16x128xf32>
    %115 = vector.shape_cast %114 : vector<16x128xf32> to vector<2x8x128xf32>
    %c0_45 = arith.constant 0 : index
    %c0_46 = arith.constant 0 : index
    %c0_47 = arith.constant 0 : index
    %116 = vector.load %arg13[%c0_45, %c0_46, %c0_47] : memref<2x8x128xf32, #tpu.memory_space<vmem>>, vector<2x8x128xf32>
    tpu.vector_store %arg13[%c0_45, %c0_46, %c0_47], %115 {strides = array<i32>} : memref<2x8x128xf32, #tpu.memory_space<vmem>>, vector<2x8x128xf32>,
    return
  }
}

</mosaic_0001>

<llo_original>
// kernel: forward.1
$region0: #{forward.1}
  #allocation0 [shape = 'u32[]', space=smem, size = 0x4, offset = 0x4, fixed_abs, tag = 'smem constant byte address 0x4 - core index']
  #allocation1 [shape = 'u32[144,128]{1,0:T(1,128)}', space=vmem, size = 0x12000, scoped, tag = 'internal scratch']
  #allocation2 [shape = 'bf16[2304,384]{1,0:T(16,128)(2,1)}', space=vmem, size = 0x1b0000, scoped, tag = 'scratch operand']
  #allocation3 [shape = 'bf16[1920,128]{1,0:T(16,128)(2,1)}', space=vmem, size = 0x78000, scoped, tag = 'scratch operand']
  #allocation4 [shape = 'bf16[640,128]{1,0:T(16,128)(2,1)}', space=vmem, size = 0x28000, scoped, tag = 'scratch operand']
  #allocation5 [shape = 'bf16[384,256]{1,0:T(16,128)(2,1)}', space=vmem, size = 0x30000, scoped, tag = 'scratch operand']
  #allocation6 [shape = 'bf16[512,128]{1,0:T(16,128)(2,1)}', space=vmem, size = 0x20000, scoped, tag = 'scratch operand']
  #allocation7 [shape = 's32[5]{0}', space=sflag, size = 0x14, scoped, tag = 'scratch operand']
  #allocation19 [shape = 's32[]', space=sflag, size = 0x4, offset = 0, fixed_abs, tag = 'sflag constant byte address 0x0 - dummy sync flag']
  #allocation21 [shape = 's32[]', space=sflag, size = 0x4, offset = 0, fixed_abs, tag = 'sflag constant byte address 0x0 - dummy sync flag']
  #allocation22 [shape = 's32[]', space=sflag, size = 0x4, offset = 0, fixed_abs, tag = 'sflag constant byte address 0x0 - dummy sync flag']
  #allocation23 [shape = 'u32[]', space=smem, size = 0x4, offset = 0x44, fixed_abs, tag = 'smem constant byte address 0x44 - assertion arg 0']
  #allocation24 [shape = 'u32[]', space=smem, size = 0x4, offset = 0x48, fixed_abs, tag = 'smem constant byte address 0x48 - assertion arg 1']
  #allocation25 [shape = 's32[]', space=sflag, size = 0x4, offset = 0, fixed_abs, tag = 'sflag constant byte address 0x0 - dummy sync flag']
  #allocation26 [shape = 's32[]', space=sflag, size = 0x4, offset = 0, fixed_abs, tag = 'sflag constant byte address 0x0 - dummy sync flag']
  #allocation27 [shape = 's32[]', space=sflag, size = 0x4, offset = 0, fixed_abs, tag = 'sflag constant byte address 0x0 - dummy sync flag']
  #allocation29 [shape = 's32[]', space=sflag, size = 0x4, offset = 0, fixed_abs, tag = 'sflag constant byte address 0x0 - dummy sync flag']
  #allocation30 [shape = 's32[]', space=sflag, size = 0x4, offset = 0, fixed_abs, tag = 'sflag constant byte address 0x0 - dummy sync flag']
  %s0 = inlined_call_operand.vmem [shape: f32[2,8,128], index: 0, kind: input, shape index: {}]
  %s1 = inlined_call_operand.hbm [shape: bf16[256,768], index: 1, kind: input, shape index: {}]
  %s2 = inlined_call_operand.hbm [shape: f32[1,768], index: 2, kind: input, shape index: {}]
  %s3 = inlined_call_operand.hbm [shape: f32[1,384], index: 3, kind: input, shape index: {}]
  %s4 = inlined_call_operand.hbm [shape: f32[1,128], index: 4, kind: input, shape index: {}]
  %s5 = inlined_call_operand.hbm [shape: f32[1,128], index: 5, kind: input, shape index: {}]
  %s6 = inlined_call_operand.hbm [shape: f32[1,256], index: 6, kind: input, shape index: {}]
  %s7 = inlined_call_operand.hbm [shape: f32[1,128], index: 7, kind: input, shape index: {}]
  %s8 = inlined_call_operand.hbm [shape: bf16[2304,384], index: 8, kind: input, shape index: {}]
  %s9 = inlined_call_operand.hbm [shape: bf16[1920,128], index: 9, kind: input, shape index: {}]
  %s10 = inlined_call_operand.hbm [shape: bf16[640,128], index: 10, kind: input, shape index: {}]
  %s11 = inlined_call_operand.hbm [shape: bf16[384,256], index: 11, kind: input, shape index: {}]
  %s12 = inlined_call_operand.hbm [shape: bf16[512,128], index: 12, kind: input, shape index: {}]
  %s13 = inlined_call_operand.vmem [shape: f32[2,8,128], index: 13, kind: output, shape index: {}]
  %s14 = sld [smem:[#allocation0]]
  $region82: #{forward.1} parent=0
    _
  %s16 = ssub.s32 1, %s14
  %s17 = scalar_select 0, %s16, %s14
  $region1: #{forward.1} parent=0
    #allocation8 [shape = 'u8[393216]{0}', space=vmem, size = 0x60000, scoped, tag = 'input window, operand 1, single buffered']
    #allocation9 [shape = 's32[1]{0}', space=sflag, size = 0x4, scoped, tag = 'scoped memory for forward.1']
    #allocation10 [shape = 'u8[3072]{0}', space=vmem, size = 0xc00, scoped, tag = 'input window, operand 2, single buffered']
    #allocation11 [shape = 's32[1]{0}', space=sflag, size = 0x4, scoped, tag = 'scoped memory for forward.1']
    #allocation12 [shape = 'u8[1536]{0}', space=vmem, size = 0x800, scoped, tag = 'input window, operand 3, single buffered']
    #allocation13 [shape = 'u8[512]{0}', space=vmem, size = 0x400, scoped, tag = 'input window, operand 4, single buffered']
    #allocation14 [shape = 's32[1]{0}', space=sflag, size = 0x4, scoped, tag = 'scoped memory for forward.1']
    #allocation15 [shape = 'u8[512]{0}', space=vmem, size = 0x400, scoped, tag = 'input window, operand 5, single buffered']
    #allocation16 [shape = 'u8[1024]{0}', space=vmem, size = 0x400, scoped, tag = 'input window, operand 6, single buffered']
    #allocation17 [shape = 's32[1]{0}', space=sflag, size = 0x4, scoped, tag = 'scoped memory for forward.1']
    #allocation18 [shape = 'u8[512]{0}', space=vmem, size = 0x400, scoped, tag = 'input window, operand 7, single buffered']
    #allocation20 [shape = 'u32[9]{0}', space=smem, size = 0x24, scoped, tag = 'DMA stride descriptor']
    #allocation28 [shape = 'u32[9]{0}', space=smem, size = 0x24, scoped, tag = 'DMA stride descriptor']
    %18 = vsyncpa [#allocation9], 0
    %19 = vsyncpa [#allocation11], 0
    %20 = vsyncpa [#allocation14], 0
    %21 = vsyncpa [#allocation17], 0
    // Predicated region
    $region2: #{forward.1} parent=1 // pred_check
      _
    $region3: #{forward.1} parent=1 // pred_check_branch
      %23 = sbr.rel (0) target = $region5
    $region4: #{forward.1} parent=1 // pred_region
      _
    $region5: #{forward.1} parent=1 // pred_fallthru
      _
    // Predicated region
    $region6: #{forward.1} parent=1 // pred_check
      _
    $region7: #{forward.1} parent=1 // pred_check_branch
      %25 = sbr.rel (0) target = $region9
    $region8: #{forward.1} parent=1 // pred_region
      %s27 = ssub.s32 12288, 12288
      %28 = vsyncadd [#allocation9], %s27
      %s29 = sshll.u32 [#allocation8], 4
      %s30 = int_to_ptr.vmem [resolvable:$true] %s29
      %35 = dma.hbm_to_vmem [thread:$0]  %s1, 12288, %s30, [#allocation9], 384, 384, 24
    $region9: #{forward.1} parent=1 // pred_fallthru
      _
    // Predicated region
    $region10: #{forward.1} parent=1 // pred_check
      _
    $region11: #{forward.1} parent=1 // pred_check_branch
      %37 = sbr.rel (0) target = $region13
    $region12: #{forward.1} parent=1 // pred_region
      %s39 = ssub.s32 96, 96
      %40 = vsyncadd [#allocation11], %s39
      %s42 = sshll.u32 [#allocation10], 4
      %s43 = int_to_ptr.vmem [resolvable:$true] %s42
      %45 = dma.hbm_to_vmem [thread:$0]  %s2, 96, %s43, [#allocation11]
    $region13: #{forward.1} parent=1 // pred_fallthru
      _
    // Predicated region
    $region14: #{forward.1} parent=1 // pred_check
      _
    $region15: #{forward.1} parent=1 // pred_check_branch
      %47 = sbr.rel (0) target = $region17
    $region16: #{forward.1} parent=1 // pred_region
      %s49 = ssub.s32 48, 48
      %50 = vsyncadd [#allocation11], %s49
      %s52 = sshll.u32 [#allocation12], 4
      %s53 = int_to_ptr.vmem [resolvable:$true] %s52
      %55 = dma.hbm_to_vmem [thread:$0]  %s3, 48, %s53, [#allocation11]
    $region17: #{forward.1} parent=1 // pred_fallthru
      _
    // Predicated region
    $region18: #{forward.1} parent=1 // pred_check
      _
    $region19: #{forward.1} parent=1 // pred_check_branch
      %57 = sbr.rel (0) target = $region21
    $region20: #{forward.1} parent=1 // pred_region
      %s59 = ssub.s32 16, 16
      %60 = vsyncadd [#allocation14], %s59
      %s62 = sshll.u32 [#allocation13], 4
      %s63 = int_to_ptr.vmem [resolvable:$true] %s62
      %65 = dma.hbm_to_vmem [thread:$0]  %s4, 16, %s63, [#allocation14]
    $region21: #{forward.1} parent=1 // pred_fallthru
      _
    // Predicated region
    $region22: #{forward.1} parent=1 // pred_check
      _
    $region23: #{forward.1} parent=1 // pred_check_branch
      %67 = sbr.rel (0) target = $region25
    $region24: #{forward.1} parent=1 // pred_region
      %s69 = ssub.s32 16, 16
      %70 = vsyncadd [#allocation14], %s69
      %s72 = sshll.u32 [#allocation15], 4
      %s73 = int_to_ptr.vmem [resolvable:$true] %s72
      %75 = dma.hbm_to_vmem [thread:$0]  %s5, 16, %s73, [#allocation14]
    $region25: #{forward.1} parent=1 // pred_fallthru
      _
    // Predicated region
    $region26: #{forward.1} parent=1 // pred_check
      _
    $region27: #{forward.1} parent=1 // pred_check_branch
      %77 = sbr.rel (0) target = $region29
    $region28: #{forward.1} parent=1 // pred_region
      %s79 = ssub.s32 32, 32
      %80 = vsyncadd [#allocation17], %s79
      %s82 = sshll.u32 [#allocation16], 4
      %s83 = int_to_ptr.vmem [resolvable:$true] %s82
      %85 = dma.hbm_to_vmem [thread:$0]  %s6, 32, %s83, [#allocation17]
    $region29: #{forward.1} parent=1 // pred_fallthru
      _
    // Predicated region
    $region30: #{forward.1} parent=1 // pred_check
      _
    $region31: #{forward.1} parent=1 // pred_check_branch
      %87 = sbr.rel (0) target = $region33
    $region32: #{forward.1} parent=1 // pred_region
      %s89 = ssub.s32 16, 16
      %90 = vsyncadd [#allocation17], %s89
      %s92 = sshll.u32 [#allocation18], 4
      %s93 = int_to_ptr.vmem [resolvable:$true] %s92
      %95 = dma.hbm_to_vmem [thread:$0]  %s7, 16, %s93, [#allocation17]
    $region33: #{forward.1} parent=1 // pred_fallthru
      _
    // Predicated region
    $region34: #{forward.1} parent=1 // pred_check
      _
    $region35: #{forward.1} parent=1 // pred_check_branch
      %97 = sbr.rel (0) target = $region37
    $region36: #{forward.1} parent=1 // pred_region
      %98 = dma.done [#allocation9], 12288
    $region37: #{forward.1} parent=1 // pred_fallthru
      _
    // Predicated region
    $region38: #{forward.1} parent=1 // pred_check
      _
    $region39: #{forward.1} parent=1 // pred_check_branch
      %100 = sbr.rel (0) target = $region41
    $region40: #{forward.1} parent=1 // pred_region
      %101 = dma.done [#allocation11], 96
    $region41: #{forward.1} parent=1 // pred_fallthru
      _
    // Predicated region
    $region42: #{forward.1} parent=1 // pred_check
      _
    $region43: #{forward.1} parent=1 // pred_check_branch
      %103 = sbr.rel (0) target = $region45
    $region44: #{forward.1} parent=1 // pred_region
      %104 = dma.done [#allocation11], 48
    $region45: #{forward.1} parent=1 // pred_fallthru
      _
    // Predicated region
    $region46: #{forward.1} parent=1 // pred_check
      _
    $region47: #{forward.1} parent=1 // pred_check_branch
      %106 = sbr.rel (0) target = $region49
    $region48: #{forward.1} parent=1 // pred_region
      %107 = dma.done [#allocation14], 16
    $region49: #{forward.1} parent=1 // pred_fallthru
      _
    // Predicated region
    $region50: #{forward.1} parent=1 // pred_check
      _
    $region51: #{forward.1} parent=1 // pred_check_branch
      %109 = sbr.rel (0) target = $region53
    $region52: #{forward.1} parent=1 // pred_region
      %110 = dma.done [#allocation14], 16
    $region53: #{forward.1} parent=1 // pred_fallthru
      _
    // Predicated region
    $region54: #{forward.1} parent=1 // pred_check
      _
    $region55: #{forward.1} parent=1 // pred_check_branch
      %112 = sbr.rel (0) target = $region57
    $region56: #{forward.1} parent=1 // pred_region
      %113 = dma.done [#allocation17], 32
    $region57: #{forward.1} parent=1 // pred_fallthru
      _
    // Predicated region
    $region58: #{forward.1} parent=1 // pred_check
      _
    $region59: #{forward.1} parent=1 // pred_check_branch
      %115 = sbr.rel (0) target = $region61
    $region60: #{forward.1} parent=1 // pred_region
      %116 = dma.done [#allocation17], 16
    $region61: #{forward.1} parent=1 // pred_fallthru
      _
    %s119 = sshll.u32 1, 14
    %s120 = sxor.u32 4294967295, %s119
    %s122 = sld [smem:[#allocation0]]
    %s123 = sadd.s32 2, %s122
    %s125 = sshll.u32 7, 26
    %s126 = sxor.u32 4294967295, %s125
    %s127 = sand.u32 0, %s126
    %s128 = sshll.u32 %s123, 26
    %s129 = sor.u32 %s127, %s128
    %s130 = sshll.u32 [#allocation2], 4
    %s131 = int_to_ptr.vmem [resolvable:$true] %s130
    %134 = sst [smem:[#allocation20]] 384
    %s135 = scalar_lea.smem [#allocation20], 1
    %136 = sst [smem:[%s135]] 384
    %s137 = scalar_lea.smem [#allocation20], 2
    %138 = sst [smem:[%s137]] 3
    %s139 = scalar_lea.smem [#allocation20], 3
    %140 = sst [smem:[%s139]] 64
    %s141 = scalar_lea.smem [#allocation20], 4
    %142 = sst [smem:[%s141]] 128
    %s143 = scalar_lea.smem [#allocation20], 5
    %144 = sst [smem:[%s143]] 2
    %s145 = scalar_lea.smem [#allocation20], 6
    %146 = sst [smem:[%s145]] 192
    %s147 = scalar_lea.smem [#allocation20], 7
    %148 = sst [smem:[%s147]] 64
    %s149 = scalar_lea.smem [#allocation20], 8
    %150 = sst [smem:[%s149]] 4
    %152 = dma.general %s8, 55296, %s131, [#allocation7], [#allocation19], [#allocation20], %s129, 0
    %s153 = scalar_lea.sflag [#allocation7], 1
    // Predicated region
    $region62: #{forward.1} parent=1 // pred_check
      _
    $region63: #{forward.1} parent=1 // pred_check_branch
      %155 = sbr.rel target = $region65
    $region64: #{forward.1} parent=1 // pred_region
      %156 = sst [smem:[#allocation23]] [#allocation22]
      %157 = sst [smem:[#allocation24]] [#allocation21]
    $region65: #{forward.1} parent=1 // pred_fallthru
      _
    %159 = shalt.err (0)
    %s161 = sshll.u32 [#allocation3], 4
    %s162 = int_to_ptr.vmem [resolvable:$true] %s161
    %164 = dma.hbm_to_vmem [thread:$0]  %s9, 15360, %s162, %s153
    %s165 = scalar_lea.sflag [#allocation7], 2
    // Predicated region
    $region66: #{forward.1} parent=1 // pred_check
      _
    $region67: #{forward.1} parent=1 // pred_check_branch
      %167 = sbr.rel target = $region69
    $region68: #{forward.1} parent=1 // pred_region
      %168 = sst [smem:[#allocation23]] [#allocation26]
      %169 = sst [smem:[#allocation24]] [#allocation25]
    $region69: #{forward.1} parent=1 // pred_fallthru
      _
    %171 = shalt.err (0)
    %s173 = sshll.u32 [#allocation4], 4
    %s174 = int_to_ptr.vmem [resolvable:$true] %s173
    %176 = dma.hbm_to_vmem [thread:$0]  %s10, 5120, %s174, %s165
    %s177 = scalar_lea.sflag [#allocation7], 3
    %s179 = sshll.u32 1, 14
    %s180 = sxor.u32 4294967295, %s179
    %s182 = sadd.s32 2, %s122
    %s184 = sshll.u32 7, 26
    %s185 = sxor.u32 4294967295, %s184
    %s186 = sand.u32 0, %s185
    %s187 = sshll.u32 %s182, 26
    %s188 = sor.u32 %s186, %s187
    %s189 = sshll.u32 [#allocation5], 4
    %s190 = int_to_ptr.vmem [resolvable:$true] %s189
    %193 = sst [smem:[#allocation28]] 256
    %s194 = scalar_lea.smem [#allocation28], 1
    %195 = sst [smem:[%s194]] 256
    %s196 = scalar_lea.smem [#allocation28], 2
    %197 = sst [smem:[%s196]] 2
    %s198 = scalar_lea.smem [#allocation28], 3
    %199 = sst [smem:[%s198]] 64
    %s200 = scalar_lea.smem [#allocation28], 4
    %201 = sst [smem:[%s200]] 128
    %s202 = scalar_lea.smem [#allocation28], 5
    %203 = sst [smem:[%s202]] 2
    %s204 = scalar_lea.smem [#allocation28], 6
    %205 = sst [smem:[%s204]] 128
    %s206 = scalar_lea.smem [#allocation28], 7
    %207 = sst [smem:[%s206]] 64
    %s208 = scalar_lea.smem [#allocation28], 8
    %209 = sst [smem:[%s208]] 4
    %211 = dma.general %s11, 6144, %s190, %s177, [#allocation27], [#allocation28], %s188, 0
    %s212 = scalar_lea.sflag [#allocation7], 4
    // Predicated region
    $region70: #{forward.1} parent=1 // pred_check
      _
    $region71: #{forward.1} parent=1 // pred_check_branch
      %214 = sbr.rel target = $region73
    $region72: #{forward.1} parent=1 // pred_region
      %215 = sst [smem:[#allocation23]] [#allocation30]
      %216 = sst [smem:[#allocation24]] [#allocation29]
    $region73: #{forward.1} parent=1 // pred_fallthru
      _
    %218 = shalt.err (0)
    %s220 = sshll.u32 [#allocation6], 4
    %s221 = int_to_ptr.vmem [resolvable:$true] %s220
    %223 = dma.hbm_to_vmem [thread:$0]  %s12, 4096, %s221, %s212
    %v224 = vld [vmem:[%s0] sm:$0xff]
    %v225 = vld [vmem:[%s0 + $0x8] sm:$0xff]
    %v228 = vrot.slane %v224, 1
    %v229 = vrot.slane %v225, 1
    %v230 = vcombine.low %v224, %v228
    %v231 = vcombine.high %v224, %v228
    %v233 = vunpack.c.l.s4 1966171168
    %v234 = vunpack.c.0.s8 %v233
    %v235 = vlaneseq
    %v236 = vshrl.u32 %v235, 7
    %v237 = vsub.s32 %v234, %v236
    %v238 = vrot.slane %v230, %v237
    %v240 = vunpack.c.l.s4 1966171168
    %v241 = vunpack.c.0.s8 %v240
    %v242 = vlaneseq
    %v243 = vshrl.u32 %v242, 7
    %v244 = vsub.s32 %v241, %v243
    %v245 = vrot.slane %v231, %v244
    %v246 = vcombine.high %v238, %v238
    %v247 = vcombine.high %v245, %v245
    %v249 = vunpack.c.l.s4 1966171168
    %v250 = vunpack.c.0.s8 %v249
    %v251 = vlaneseq
    %v252 = vshrl.u32 %v251, 7
    %v253 = vsub.s32 %v250, %v252
    %v254 = vrot.slane %v238, %v253
    %v256 = vunpack.c.l.s4 1966171168
    %v257 = vunpack.c.0.s8 %v256
    %v258 = vlaneseq
    %v259 = vshrl.u32 %v258, 7
    %v260 = vsub.s32 %v257, %v259
    %v261 = vrot.slane %v245, %v260
    %v263 = vunpack.c.l.s4 1966171168
    %v264 = vunpack.c.0.s8 %v263
    %v265 = vlaneseq
    %v266 = vshrl.u32 %v265, 7
    %v267 = vsub.s32 %v264, %v266
    %v268 = vrot.slane %v246, %v267
    %v270 = vunpack.c.l.s4 1966171168
    %v271 = vunpack.c.0.s8 %v270
    %v272 = vlaneseq
    %v273 = vshrl.u32 %v272, 7
    %v274 = vsub.s32 %v271, %v273
    %v275 = vrot.slane %v247, %v274
    %v276 = vcombine.high %v254, %v254
    %v277 = vcombine.high %v261, %v261
    %v278 = vcombine.high %v268, %v268
    %v279 = vcombine.low %v225, %v229
    %v280 = vcombine.high %v225, %v229
    %v282 = vunpack.c.l.s4 1966171168
    %v283 = vunpack.c.0.s8 %v282
    %v284 = vlaneseq
    %v285 = vshrl.u32 %v284, 7
    %v286 = vsub.s32 %v283, %v285
    %v287 = vrot.slane %v279, %v286
    %v289 = vunpack.c.l.s4 1966171168
    %v290 = vunpack.c.0.s8 %v289
    %v291 = vlaneseq
    %v292 = vshrl.u32 %v291, 7
    %v293 = vsub.s32 %v290, %v292
    %v294 = vrot.slane %v280, %v293
    %v295 = vcombine.high %v287, %v287
    %v296 = vcombine.high %v294, %v294
    %v298 = vunpack.c.l.s4 1966171168
    %v299 = vunpack.c.0.s8 %v298
    %v300 = vlaneseq
    %v301 = vshrl.u32 %v300, 7
    %v302 = vsub.s32 %v299, %v301
    %v303 = vrot.slane %v287, %v302
    %v305 = vunpack.c.l.s4 1966171168
    %v306 = vunpack.c.0.s8 %v305
    %v307 = vlaneseq
    %v308 = vshrl.u32 %v307, 7
    %v309 = vsub.s32 %v306, %v308
    %v310 = vrot.slane %v294, %v309
    %v312 = vunpack.c.l.s4 1966171168
    %v313 = vunpack.c.0.s8 %v312
    %v314 = vlaneseq
    %v315 = vshrl.u32 %v314, 7
    %v316 = vsub.s32 %v313, %v315
    %v317 = vrot.slane %v295, %v316
    %v319 = vunpack.c.l.s4 1966171168
    %v320 = vunpack.c.0.s8 %v319
    %v321 = vlaneseq
    %v322 = vshrl.u32 %v321, 7
    %v323 = vsub.s32 %v320, %v322
    %v324 = vrot.slane %v296, %v323
    %v325 = vcombine.high %v303, %v303
    %v326 = vcombine.high %v310, %v310
    %v327 = vcombine.high %v317, %v317
    %v328 = vcombine.low %v254, %v268
    %v329 = vcombine.low %v276, %v278
    %v330 = vcombine.low %v261, %v275
    %v331 = vcombine.low %v277, %v303
    %v333 = vunpack.c.l.s4 1966171168
    %v334 = vunpack.c.0.s8 %v333
    %v335 = vlaneseq
    %v336 = vshrl.u32 %v335, 7
    %v337 = vsub.s32 %v334, %v336
    %v338 = vrot.slane %v328, %v337
    %v340 = vunpack.c.l.s4 1966171168
    %v341 = vunpack.c.0.s8 %v340
    %v342 = vlaneseq
    %v343 = vshrl.u32 %v342, 7
    %v344 = vsub.s32 %v341, %v343
    %v345 = vrot.slane %v329, %v344
    %v347 = vunpack.c.l.s4 1966171168
    %v348 = vunpack.c.0.s8 %v347
    %v349 = vlaneseq
    %v350 = vshrl.u32 %v349, 7
    %v351 = vsub.s32 %v348, %v350
    %v352 = vrot.slane %v330, %v351
    %v354 = vunpack.c.l.s4 1966171168
    %v355 = vunpack.c.0.s8 %v354
    %v356 = vlaneseq
    %v357 = vshrl.u32 %v356, 7
    %v358 = vsub.s32 %v355, %v357
    %v359 = vrot.slane %v331, %v358
    %v360 = vcombine.low %v338, %v345
    %v361 = vcombine.high %v338, %v345
    %v362 = vcombine.low %v352, %v359
    %v363 = vcombine.high %v352, %v359
    %v365 = vunpack.c.l.s4 1966171168
    %v366 = vunpack.c.0.s8 %v365
    %v367 = vlaneseq
    %v368 = vshrl.u32 %v367, 7
    %v369 = vsub.s32 %v366, %v368
    %v370 = vrot.slane %v360, %v369
    %v372 = vunpack.c.l.s4 1966171168
    %v373 = vunpack.c.0.s8 %v372
    %v374 = vlaneseq
    %v375 = vshrl.u32 %v374, 7
    %v376 = vsub.s32 %v373, %v375
    %v377 = vrot.slane %v361, %v376
    %v379 = vunpack.c.l.s4 1966171168
    %v380 = vunpack.c.0.s8 %v379
    %v381 = vlaneseq
    %v382 = vshrl.u32 %v381, 7
    %v383 = vsub.s32 %v380, %v382
    %v384 = vrot.slane %v362, %v383
    %v386 = vunpack.c.l.s4 1966171168
    %v387 = vunpack.c.0.s8 %v386
    %v388 = vlaneseq
    %v389 = vshrl.u32 %v388, 7
    %v390 = vsub.s32 %v387, %v389
    %v391 = vrot.slane %v363, %v390
    %v392 = vcombine.low %v370, %v384
    %v393 = vcombine.low %v377, %v391
    %v394 = vcombine.low %v317, %v325
    %v395 = vcombine.low %v327, %v310
    %v396 = vcombine.low %v324, %v326
    %v398 = vunpack.c.l.s4 1966171168
    %v399 = vunpack.c.0.s8 %v398
    %v400 = vlaneseq
    %v401 = vshrl.u32 %v400, 7
    %v402 = vsub.s32 %v399, %v401
    %v403 = vrot.slane %v394, %v402
    %v405 = vunpack.c.l.s4 1966171168
    %v406 = vunpack.c.0.s8 %v405
    %v407 = vlaneseq
    %v408 = vshrl.u32 %v407, 7
    %v409 = vsub.s32 %v406, %v408
    %v410 = vrot.slane %v395, %v409
    %v412 = vunpack.c.l.s4 1966171168
    %v413 = vunpack.c.0.s8 %v412
    %v414 = vlaneseq
    %v415 = vshrl.u32 %v414, 7
    %v416 = vsub.s32 %v413, %v415
    %v417 = vrot.slane %v396, %v416
    %v418 = vcombine.low %v403, %v410
    %v419 = vcombine.high %v403, %v410
    %v420 = vcombine.high %v417, %v417
    %v422 = vunpack.c.l.s4 1966171168
    %v423 = vunpack.c.0.s8 %v422
    %v424 = vlaneseq
    %v425 = vshrl.u32 %v424, 7
    %v426 = vsub.s32 %v423, %v425
    %v427 = vrot.slane %v418, %v426
    %v429 = vunpack.c.l.s4 1966171168
    %v430 = vunpack.c.0.s8 %v429
    %v431 = vlaneseq
    %v432 = vshrl.u32 %v431, 7
    %v433 = vsub.s32 %v430, %v432
    %v434 = vrot.slane %v419, %v433
    %v436 = vunpack.c.l.s4 1966171168
    %v437 = vunpack.c.0.s8 %v436
    %v438 = vlaneseq
    %v439 = vshrl.u32 %v438, 7
    %v440 = vsub.s32 %v437, %v439
    %v441 = vrot.slane %v417, %v440
    %v443 = vunpack.c.l.s4 1966171168
    %v444 = vunpack.c.0.s8 %v443
    %v445 = vlaneseq
    %v446 = vshrl.u32 %v445, 7
    %v447 = vsub.s32 %v444, %v446
    %v448 = vrot.slane %v420, %v447
    %v449 = vcombine.low %v427, %v441
    %v450 = vcombine.low %v434, %v448
    %v455 = vpack.c.bf16 %v449, %v392
    %v456 = vpack.c.bf16 %v450, %v393
    %v457 = vld [vmem:[#allocation8] sm:$0xff]
    %v458 = vld [vmem:[#allocation8 + $0x8] sm:$0xff]
    %v459 = vld [vmem:[#allocation8 + $0x10] sm:$0xff]
    %v460 = vld [vmem:[#allocation8 + $0x18] sm:$0xff]
    %v461 = vld [vmem:[#allocation8 + $0x20] sm:$0xff]
    %v462 = vld [vmem:[#allocation8 + $0x28] sm:$0xff]
    %v463 = vld [vmem:[#allocation8 + $0x30] sm:$0xff]
    %v464 = vld [vmem:[#allocation8 + $0x38] sm:$0xff]
    %v465 = vld [vmem:[#allocation8 + $0x40] sm:$0xff]
    %v466 = vld [vmem:[#allocation8 + $0x48] sm:$0xff]
    %v467 = vld [vmem:[#allocation8 + $0x50] sm:$0xff]
    %v468 = vld [vmem:[#allocation8 + $0x58] sm:$0xff]
    %v469 = vld [vmem:[#allocation8 + $0x60] sm:$0xff]
    %v470 = vld [vmem:[#allocation8 + $0x68] sm:$0xff]
    %v471 = vld [vmem:[#allocation8 + $0x70] sm:$0xff]
    %v472 = vld [vmem:[#allocation8 + $0x78] sm:$0xff]
    %v473 = vld [vmem:[#allocation8 + $0x80] sm:$0xff]
    %v474 = vld [vmem:[#allocation8 + $0x88] sm:$0xff]
    %v475 = vld [vmem:[#allocation8 + $0x90] sm:$0xff]
    %v476 = vld [vmem:[#allocation8 + $0x98] sm:$0xff]
    %v477 = vld [vmem:[#allocation8 + $0xa0] sm:$0xff]
    %v478 = vld [vmem:[#allocation8 + $0xa8] sm:$0xff]
    %v479 = vld [vmem:[#allocation8 + $0xb0] sm:$0xff]
    %v480 = vld [vmem:[#allocation8 + $0xb8] sm:$0xff]
    %v481 = vld [vmem:[#allocation8 + $0xc0] sm:$0xff]
    %v482 = vld [vmem:[#allocation8 + $0xc8] sm:$0xff]
    %v483 = vld [vmem:[#allocation8 + $0xd0] sm:$0xff]
    %v484 = vld [vmem:[#allocation8 + $0xd8] sm:$0xff]
    %v485 = vld [vmem:[#allocation8 + $0xe0] sm:$0xff]
    %v486 = vld [vmem:[#allocation8 + $0xe8] sm:$0xff]
    %v487 = vld [vmem:[#allocation8 + $0xf0] sm:$0xff]
    %v488 = vld [vmem:[#allocation8 + $0xf8] sm:$0xff]
    %v489 = vld [vmem:[#allocation8 + $0x100] sm:$0xff]
    %v490 = vld [vmem:[#allocation8 + $0x108] sm:$0xff]
    %v491 = vld [vmem:[#allocation8 + $0x110] sm:$0xff]
    %v492 = vld [vmem:[#allocation8 + $0x118] sm:$0xff]
    %v493 = vld [vmem:[#allocation8 + $0x120] sm:$0xff]
    %v494 = vld [vmem:[#allocation8 + $0x128] sm:$0xff]
    %v495 = vld [vmem:[#allocation8 + $0x130] sm:$0xff]
    %v496 = vld [vmem:[#allocation8 + $0x138] sm:$0xff]
    %v497 = vld [vmem:[#allocation8 + $0x140] sm:$0xff]
    %v498 = vld [vmem:[#allocation8 + $0x148] sm:$0xff]
    %v499 = vld [vmem:[#allocation8 + $0x150] sm:$0xff]
    %v500 = vld [vmem:[#allocation8 + $0x158] sm:$0xff]
    %v501 = vld [vmem:[#allocation8 + $0x160] sm:$0xff]
    %v502 = vld [vmem:[#allocation8 + $0x168] sm:$0xff]
    %v503 = vld [vmem:[#allocation8 + $0x170] sm:$0xff]
    %v504 = vld [vmem:[#allocation8 + $0x178] sm:$0xff]
    %v505 = vld [vmem:[#allocation8 + $0x180] sm:$0xff]
    %v506 = vld [vmem:[#allocation8 + $0x188] sm:$0xff]
    %v507 = vld [vmem:[#allocation8 + $0x190] sm:$0xff]
    %v508 = vld [vmem:[#allocation8 + $0x198] sm:$0xff]
    %v509 = vld [vmem:[#allocation8 + $0x1a0] sm:$0xff]
    %v510 = vld [vmem:[#allocation8 + $0x1a8] sm:$0xff]
    %v511 = vld [vmem:[#allocation8 + $0x1b0] sm:$0xff]
    %v512 = vld [vmem:[#allocation8 + $0x1b8] sm:$0xff]
    %v513 = vld [vmem:[#allocation8 + $0x1c0] sm:$0xff]
    %v514 = vld [vmem:[#allocation8 + $0x1c8] sm:$0xff]
    %v515 = vld [vmem:[#allocation8 + $0x1d0] sm:$0xff]
    %v516 = vld [vmem:[#allocation8 + $0x1d8] sm:$0xff]
    %v517 = vld [vmem:[#allocation8 + $0x1e0] sm:$0xff]
    %v518 = vld [vmem:[#allocation8 + $0x1e8] sm:$0xff]
    %v519 = vld [vmem:[#allocation8 + $0x1f0] sm:$0xff]
    %v520 = vld [vmem:[#allocation8 + $0x1f8] sm:$0xff]
    %v521 = vld [vmem:[#allocation8 + $0x200] sm:$0xff]
    %v522 = vld [vmem:[#allocation8 + $0x208] sm:$0xff]
    %v523 = vld [vmem:[#allocation8 + $0x210] sm:$0xff]
    %v524 = vld [vmem:[#allocation8 + $0x218] sm:$0xff]
    %v525 = vld [vmem:[#allocation8 + $0x220] sm:$0xff]
    %v526 = vld [vmem:[#allocation8 + $0x228] sm:$0xff]
    %v527 = vld [vmem:[#allocation8 + $0x230] sm:$0xff]
    %v528 = vld [vmem:[#allocation8 + $0x238] sm:$0xff]
    %v529 = vld [vmem:[#allocation8 + $0x240] sm:$0xff]
    %v530 = vld [vmem:[#allocation8 + $0x248] sm:$0xff]
    %v531 = vld [vmem:[#allocation8 + $0x250] sm:$0xff]
    %v532 = vld [vmem:[#allocation8 + $0x258] sm:$0xff]
    %v533 = vld [vmem:[#allocation8 + $0x260] sm:$0xff]
    %v534 = vld [vmem:[#allocation8 + $0x268] sm:$0xff]
    %v535 = vld [vmem:[#allocation8 + $0x270] sm:$0xff]
    %v536 = vld [vmem:[#allocation8 + $0x278] sm:$0xff]
    %v537 = vld [vmem:[#allocation8 + $0x280] sm:$0xff]
    %v538 = vld [vmem:[#allocation8 + $0x288] sm:$0xff]
    %v539 = vld [vmem:[#allocation8 + $0x290] sm:$0xff]
    %v540 = vld [vmem:[#allocation8 + $0x298] sm:$0xff]
    %v541 = vld [vmem:[#allocation8 + $0x2a0] sm:$0xff]
    %v542 = vld [vmem:[#allocation8 + $0x2a8] sm:$0xff]
    %v543 = vld [vmem:[#allocation8 + $0x2b0] sm:$0xff]
    %v544 = vld [vmem:[#allocation8 + $0x2b8] sm:$0xff]
    %v545 = vld [vmem:[#allocation8 + $0x2c0] sm:$0xff]
    %v546 = vld [vmem:[#allocation8 + $0x2c8] sm:$0xff]
    %v547 = vld [vmem:[#allocation8 + $0x2d0] sm:$0xff]
    %v548 = vld [vmem:[#allocation8 + $0x2d8] sm:$0xff]
    %v549 = vld [vmem:[#allocation8 + $0x2e0] sm:$0xff]
    %v550 = vld [vmem:[#allocation8 + $0x2e8] sm:$0xff]
    %v551 = vld [vmem:[#allocation8 + $0x2f0] sm:$0xff]
    %v552 = vld [vmem:[#allocation8 + $0x2f8] sm:$0xff]
    %v553 = vld [vmem:[#allocation10] sm:$0x3f]
    %v555 = vlaneseq
    %v556 = vshrl.u32 %v555, 7
    %v557 = vsub.s32 0, %v556
    %v558 = vrot.slane %v553, %v557
    %v559 = vlaneseq
    %v560 = vshrl.u32 %v559, 7
    %v561 = vsub.s32 1, %v560
    %v562 = vrot.slane %v553, %v561
    %v563 = vlaneseq
    %v564 = vshrl.u32 %v563, 7
    %v565 = vsub.s32 2, %v564
    %v566 = vrot.slane %v553, %v565
    %v567 = vlaneseq
    %v568 = vshrl.u32 %v567, 7
    %v569 = vsub.s32 3, %v568
    %v570 = vrot.slane %v553, %v569
    %v571 = vlaneseq
    %v572 = vshrl.u32 %v571, 7
    %v573 = vsub.s32 4, %v572
    %v574 = vrot.slane %v553, %v573
    %v575 = vlaneseq
    %v576 = vshrl.u32 %v575, 7
    %v577 = vsub.s32 5, %v576
    %v578 = vrot.slane %v553, %v577
    %v681 = vunpack.c.l.b16 %v457
    %v682 = vunpack.c.h.b16 %v457
    %v683 = vunpack.c.l.b16 %v458
    %v684 = vunpack.c.h.b16 %v458
    %v685 = vunpack.c.l.b16 %v459
    %v686 = vunpack.c.h.b16 %v459
    %v687 = vunpack.c.l.b16 %v460
    %v688 = vunpack.c.h.b16 %v460
    %v689 = vunpack.c.l.b16 %v461
    %v690 = vunpack.c.h.b16 %v461
    %v691 = vunpack.c.l.b16 %v462
    %v692 = vunpack.c.h.b16 %v462
    %v693 = vunpack.c.l.b16 %v463
    %v694 = vunpack.c.h.b16 %v463
    %v695 = vunpack.c.l.b16 %v464
    %v696 = vunpack.c.h.b16 %v464
    %v697 = vunpack.c.l.b16 %v465
    %v698 = vunpack.c.h.b16 %v465
    %v699 = vunpack.c.l.b16 %v466
    %v700 = vunpack.c.h.b16 %v466
    %v701 = vunpack.c.l.b16 %v467
    %v702 = vunpack.c.h.b16 %v467
    %v703 = vunpack.c.l.b16 %v468
    %v704 = vunpack.c.h.b16 %v468
    %v705 = vunpack.c.l.b16 %v469
    %v706 = vunpack.c.h.b16 %v469
    %v707 = vunpack.c.l.b16 %v470
    %v708 = vunpack.c.h.b16 %v470
    %v709 = vunpack.c.l.b16 %v471
    %v710 = vunpack.c.h.b16 %v471
    %v711 = vunpack.c.l.b16 %v472
    %v712 = vunpack.c.h.b16 %v472
    %v713 = vunpack.c.l.b16 %v473
    %v714 = vunpack.c.h.b16 %v473
    %v715 = vunpack.c.l.b16 %v474
    %v716 = vunpack.c.h.b16 %v474
    %v717 = vunpack.c.l.b16 %v475
    %v718 = vunpack.c.h.b16 %v475
    %v719 = vunpack.c.l.b16 %v476
    %v720 = vunpack.c.h.b16 %v476
    %v721 = vunpack.c.l.b16 %v477
    %v722 = vunpack.c.h.b16 %v477
    %v723 = vunpack.c.l.b16 %v478
    %v724 = vunpack.c.h.b16 %v478
    %v725 = vunpack.c.l.b16 %v479
    %v726 = vunpack.c.h.b16 %v479
    %v727 = vunpack.c.l.b16 %v480
    %v728 = vunpack.c.h.b16 %v480
    %v729 = vunpack.c.l.b16 %v481
    %v730 = vunpack.c.h.b16 %v481
    %v731 = vunpack.c.l.b16 %v482
    %v732 = vunpack.c.h.b16 %v482
    %v733 = vunpack.c.l.b16 %v483
    %v734 = vunpack.c.h.b16 %v483
    %v735 = vunpack.c.l.b16 %v484
    %v736 = vunpack.c.h.b16 %v484
    %v737 = vunpack.c.l.b16 %v485
    %v738 = vunpack.c.h.b16 %v485
    %v739 = vunpack.c.l.b16 %v486
    %v740 = vunpack.c.h.b16 %v486
    %v741 = vunpack.c.l.b16 %v487
    %v742 = vunpack.c.h.b16 %v487
    %v743 = vunpack.c.l.b16 %v488
    %v744 = vunpack.c.h.b16 %v488
    %v745 = vunpack.c.l.b16 %v489
    %v746 = vunpack.c.h.b16 %v489
    %v747 = vunpack.c.l.b16 %v490
    %v748 = vunpack.c.h.b16 %v490
    %v749 = vunpack.c.l.b16 %v491
    %v750 = vunpack.c.h.b16 %v491
    %v751 = vunpack.c.l.b16 %v492
    %v752 = vunpack.c.h.b16 %v492
    %v753 = vunpack.c.l.b16 %v493
    %v754 = vunpack.c.h.b16 %v493
    %v755 = vunpack.c.l.b16 %v494
    %v756 = vunpack.c.h.b16 %v494
    %v757 = vunpack.c.l.b16 %v495
    %v758 = vunpack.c.h.b16 %v495
    %v759 = vunpack.c.l.b16 %v496
    %v760 = vunpack.c.h.b16 %v496
    %v761 = vunpack.c.l.b16 %v497
    %v762 = vunpack.c.h.b16 %v497
    %v763 = vunpack.c.l.b16 %v498
    %v764 = vunpack.c.h.b16 %v498
    %v765 = vunpack.c.l.b16 %v499
    %v766 = vunpack.c.h.b16 %v499
    %v767 = vunpack.c.l.b16 %v500
    %v768 = vunpack.c.h.b16 %v500
    %v769 = vunpack.c.l.b16 %v501
    %v770 = vunpack.c.h.b16 %v501
    %v771 = vunpack.c.l.b16 %v502
    %v772 = vunpack.c.h.b16 %v502
    %v773 = vunpack.c.l.b16 %v503
    %v774 = vunpack.c.h.b16 %v503
    %v775 = vunpack.c.l.b16 %v504
    %v776 = vunpack.c.h.b16 %v504
    %v777 = vunpack.c.l.b16 %v505
    %v778 = vunpack.c.h.b16 %v505
    %v779 = vunpack.c.l.b16 %v506
    %v780 = vunpack.c.h.b16 %v506
    %v781 = vunpack.c.l.b16 %v507
    %v782 = vunpack.c.h.b16 %v507
    %v783 = vunpack.c.l.b16 %v508
    %v784 = vunpack.c.h.b16 %v508
    %v785 = vunpack.c.l.b16 %v509
    %v786 = vunpack.c.h.b16 %v509
    %v787 = vunpack.c.l.b16 %v510
    %v788 = vunpack.c.h.b16 %v510
    %v789 = vunpack.c.l.b16 %v511
    %v790 = vunpack.c.h.b16 %v511
    %v791 = vunpack.c.l.b16 %v512
    %v792 = vunpack.c.h.b16 %v512
    %v793 = vunpack.c.l.b16 %v513
    %v794 = vunpack.c.h.b16 %v513
    %v795 = vunpack.c.l.b16 %v514
    %v796 = vunpack.c.h.b16 %v514
    %v797 = vunpack.c.l.b16 %v515
    %v798 = vunpack.c.h.b16 %v515
    %v799 = vunpack.c.l.b16 %v516
    %v800 = vunpack.c.h.b16 %v516
    %v801 = vunpack.c.l.b16 %v517
    %v802 = vunpack.c.h.b16 %v517
    %v803 = vunpack.c.l.b16 %v518
    %v804 = vunpack.c.h.b16 %v518
    %v805 = vunpack.c.l.b16 %v519
    %v806 = vunpack.c.h.b16 %v519
    %v807 = vunpack.c.l.b16 %v520
    %v808 = vunpack.c.h.b16 %v520
    %v809 = vunpack.c.l.b16 %v521
    %v810 = vunpack.c.h.b16 %v521
    %v811 = vunpack.c.l.b16 %v522
    %v812 = vunpack.c.h.b16 %v522
    %v813 = vunpack.c.l.b16 %v523
    %v814 = vunpack.c.h.b16 %v523
    %v815 = vunpack.c.l.b16 %v524
    %v816 = vunpack.c.h.b16 %v524
    %v817 = vunpack.c.l.b16 %v525
    %v818 = vunpack.c.h.b16 %v525
    %v819 = vunpack.c.l.b16 %v526
    %v820 = vunpack.c.h.b16 %v526
    %v821 = vunpack.c.l.b16 %v527
    %v822 = vunpack.c.h.b16 %v527
    %v823 = vunpack.c.l.b16 %v528
    %v824 = vunpack.c.h.b16 %v528
    %v825 = vunpack.c.l.b16 %v529
    %v826 = vunpack.c.h.b16 %v529
    %v827 = vunpack.c.l.b16 %v530
    %v828 = vunpack.c.h.b16 %v530
    %v829 = vunpack.c.l.b16 %v531
    %v830 = vunpack.c.h.b16 %v531
    %v831 = vunpack.c.l.b16 %v532
    %v832 = vunpack.c.h.b16 %v532
    %v833 = vunpack.c.l.b16 %v533
    %v834 = vunpack.c.h.b16 %v533
    %v835 = vunpack.c.l.b16 %v534
    %v836 = vunpack.c.h.b16 %v534
    %v837 = vunpack.c.l.b16 %v535
    %v838 = vunpack.c.h.b16 %v535
    %v839 = vunpack.c.l.b16 %v536
    %v840 = vunpack.c.h.b16 %v536
    %v841 = vunpack.c.l.b16 %v537
    %v842 = vunpack.c.h.b16 %v537
    %v843 = vunpack.c.l.b16 %v538
    %v844 = vunpack.c.h.b16 %v538
    %v845 = vunpack.c.l.b16 %v539
    %v846 = vunpack.c.h.b16 %v539
    %v847 = vunpack.c.l.b16 %v540
    %v848 = vunpack.c.h.b16 %v540
    %v849 = vunpack.c.l.b16 %v541
    %v850 = vunpack.c.h.b16 %v541
    %v851 = vunpack.c.l.b16 %v542
    %v852 = vunpack.c.h.b16 %v542
    %v853 = vunpack.c.l.b16 %v543
    %v854 = vunpack.c.h.b16 %v543
    %v855 = vunpack.c.l.b16 %v544
    %v856 = vunpack.c.h.b16 %v544
    %v857 = vunpack.c.l.b16 %v545
    %v858 = vunpack.c.h.b16 %v545
    %v859 = vunpack.c.l.b16 %v546
    %v860 = vunpack.c.h.b16 %v546
    %v861 = vunpack.c.l.b16 %v547
    %v862 = vunpack.c.h.b16 %v547
    %v863 = vunpack.c.l.b16 %v548
    %v864 = vunpack.c.h.b16 %v548
    %v865 = vunpack.c.l.b16 %v549
    %v866 = vunpack.c.h.b16 %v549
    %v867 = vunpack.c.l.b16 %v550
    %v868 = vunpack.c.h.b16 %v550
    %v869 = vunpack.c.l.b16 %v551
    %v870 = vunpack.c.h.b16 %v551
    %v871 = vunpack.c.l.b16 %v552
    %v872 = vunpack.c.h.b16 %v552
    %v873 = vpack.c.b16 %v687, %v681
    %v874 = vpack.c.b16 %v688, %v682
    %v875 = vpack.c.b16 %v689, %v683
    %v876 = vpack.c.b16 %v690, %v684
    %v877 = vpack.c.b16 %v691, %v685
    %v878 = vpack.c.b16 %v692, %v686
    %v879 = vpack.c.b16 %v699, %v693
    %v880 = vpack.c.b16 %v700, %v694
    %v881 = vpack.c.b16 %v701, %v695
    %v882 = vpack.c.b16 %v702, %v696
    %v883 = vpack.c.b16 %v703, %v697
    %v884 = vpack.c.b16 %v704, %v698
    %v885 = vpack.c.b16 %v711, %v705
    %v886 = vpack.c.b16 %v712, %v706
    %v887 = vpack.c.b16 %v713, %v707
    %v888 = vpack.c.b16 %v714, %v708
    %v889 = vpack.c.b16 %v715, %v709
    %v890 = vpack.c.b16 %v716, %v710
    %v891 = vpack.c.b16 %v723, %v717
    %v892 = vpack.c.b16 %v724, %v718
    %v893 = vpack.c.b16 %v725, %v719
    %v894 = vpack.c.b16 %v726, %v720
    %v895 = vpack.c.b16 %v727, %v721
    %v896 = vpack.c.b16 %v728, %v722
    %v897 = vpack.c.b16 %v735, %v729
    %v898 = vpack.c.b16 %v736, %v730
    %v899 = vpack.c.b16 %v737, %v731
    %v900 = vpack.c.b16 %v738, %v732
    %v901 = vpack.c.b16 %v739, %v733
    %v902 = vpack.c.b16 %v740, %v734
    %v903 = vpack.c.b16 %v747, %v741
    %v904 = vpack.c.b16 %v748, %v742
    %v905 = vpack.c.b16 %v749, %v743
    %v906 = vpack.c.b16 %v750, %v744
    %v907 = vpack.c.b16 %v751, %v745
    %v908 = vpack.c.b16 %v752, %v746
    %v909 = vpack.c.b16 %v759, %v753
    %v910 = vpack.c.b16 %v760, %v754
    %v911 = vpack.c.b16 %v761, %v755
    %v912 = vpack.c.b16 %v762, %v756
    %v913 = vpack.c.b16 %v763, %v757
    %v914 = vpack.c.b16 %v764, %v758
    %v915 = vpack.c.b16 %v771, %v765
    %v916 = vpack.c.b16 %v772, %v766
    %v917 = vpack.c.b16 %v773, %v767
    %v918 = vpack.c.b16 %v774, %v768
    %v919 = vpack.c.b16 %v775, %v769
    %v920 = vpack.c.b16 %v776, %v770
    %v921 = vpack.c.b16 %v783, %v777
    %v922 = vpack.c.b16 %v784, %v778
    %v923 = vpack.c.b16 %v785, %v779
    %v924 = vpack.c.b16 %v786, %v780
    %v925 = vpack.c.b16 %v787, %v781
    %v926 = vpack.c.b16 %v788, %v782
    %v927 = vpack.c.b16 %v795, %v789
    %v928 = vpack.c.b16 %v796, %v790
    %v929 = vpack.c.b16 %v797, %v791
    %v930 = vpack.c.b16 %v798, %v792
    %v931 = vpack.c.b16 %v799, %v793
    %v932 = vpack.c.b16 %v800, %v794
    %v933 = vpack.c.b16 %v807, %v801
    %v934 = vpack.c.b16 %v808, %v802
    %v935 = vpack.c.b16 %v809, %v803
    %v936 = vpack.c.b16 %v810, %v804
    %v937 = vpack.c.b16 %v811, %v805
    %v938 = vpack.c.b16 %v812, %v806
    %v939 = vpack.c.b16 %v819, %v813
    %v940 = vpack.c.b16 %v820, %v814
    %v941 = vpack.c.b16 %v821, %v815
    %v942 = vpack.c.b16 %v822, %v816
    %v943 = vpack.c.b16 %v823, %v817
    %v944 = vpack.c.b16 %v824, %v818
    %v945 = vpack.c.b16 %v831, %v825
    %v946 = vpack.c.b16 %v832, %v826
    %v947 = vpack.c.b16 %v833, %v827
    %v948 = vpack.c.b16 %v834, %v828
    %v949 = vpack.c.b16 %v835, %v829
    %v950 = vpack.c.b16 %v836, %v830
    %v951 = vpack.c.b16 %v843, %v837
    %v952 = vpack.c.b16 %v844, %v838
    %v953 = vpack.c.b16 %v845, %v839
    %v954 = vpack.c.b16 %v846, %v840
    %v955 = vpack.c.b16 %v847, %v841
    %v956 = vpack.c.b16 %v848, %v842
    %v957 = vpack.c.b16 %v855, %v849
    %v958 = vpack.c.b16 %v856, %v850
    %v959 = vpack.c.b16 %v857, %v851
    %v960 = vpack.c.b16 %v858, %v852
    %v961 = vpack.c.b16 %v859, %v853
    %v962 = vpack.c.b16 %v860, %v854
    %v963 = vpack.c.b16 %v867, %v861
    %v964 = vpack.c.b16 %v868, %v862
    %v965 = vpack.c.b16 %v869, %v863
    %v966 = vpack.c.b16 %v870, %v864
    %v967 = vpack.c.b16 %v871, %v865
    %v968 = vpack.c.b16 %v872, %v866
    %1065 = vmatprep.subr.bf16.mxu0 %v874
    %1066 = vmatpush1.bf16.msra.mxu0 %v873
    %1067 = vmatprep.subr.bf16.mxu0 %v880
    %1068 = vmatpush1.bf16.msra.mxu0 %v879
    %1069 = vmatprep.subr.bf16.mxu0 %v886
    %1070 = vmatpush1.bf16.msra.mxu0 %v885
    %1071 = vmatprep.subr.bf16.mxu0 %v892
    %1072 = vmatpush1.bf16.msra.mxu0 %v891
    %1073 = vmatprep.subr.bf16.mxu0 %v898
    %1074 = vmatpush1.bf16.msra.mxu0 %v897
    %1075 = vmatprep.subr.bf16.mxu0 %v904
    %1076 = vmatpush1.bf16.msra.mxu0 %v903
    %1077 = vmatprep.subr.bf16.mxu0 %v910
    %1078 = vmatpush1.bf16.msra.mxu0 %v909
    %1079 = vmatprep.subr.bf16.mxu0 %v916
    %1080 = vmatpush1.bf16.msra.mxu0 %v915
    %1081 = vmatprep.subr.bf16.mxu0 %v922
    %1082 = vmatpush1.bf16.msra.mxu0 %v921
    %1083 = vmatprep.subr.bf16.mxu0 %v928
    %1084 = vmatpush1.bf16.msra.mxu0 %v927
    %1085 = vmatprep.subr.bf16.mxu0 %v934
    %1086 = vmatpush1.bf16.msra.mxu0 %v933
    %1087 = vmatprep.subr.bf16.mxu0 %v940
    %1088 = vmatpush1.bf16.msra.mxu0 %v939
    %1089 = vmatprep.subr.bf16.mxu0 %v946
    %1090 = vmatpush1.bf16.msra.mxu0 %v945
    %1091 = vmatprep.subr.bf16.mxu0 %v952
    %1092 = vmatpush1.bf16.msra.mxu0 %v951
    %1093 = vmatprep.subr.bf16.mxu0 %v958
    %1094 = vmatpush1.bf16.msra.mxu0 %v957
    %1095 = vmatprep.subr.bf16.mxu0 %v964
    %1096 = vmatpush1.bf16.msra.mxu0 %v963
    %1097 = vmatprep.mubr.bf16.mxu0 %v456
    %1098 = vmatmul.mubr.bf16.gmra.mrb[0].mxu0 %v455
    %v1099 = vpop.f32.mrb[0].mxu0
    %v1100 = vadd.f32 %v558, %v1099
    %v1101 = vpop.f32.mrb[0].mxu0
    %v1102 = vadd.f32 %v562, %v1101
    %v1103 = vpop.f32.mrb[0].mxu0
    %v1104 = vadd.f32 %v558, %v1103
    %v1105 = vpop.f32.mrb[0].mxu0
    %v1106 = vadd.f32 %v562, %v1105
    %1107 = vdwg.mxu0
    %1108 = vmatprep.subr.bf16.mxu0 %v876
    %1109 = vmatpush1.bf16.msra.mxu0 %v875
    %1110 = vmatprep.subr.bf16.mxu0 %v882
    %1111 = vmatpush1.bf16.msra.mxu0 %v881
    %1112 = vmatprep.subr.bf16.mxu0 %v888
    %1113 = vmatpush1.bf16.msra.mxu0 %v887
    %1114 = vmatprep.subr.bf16.mxu0 %v894
    %1115 = vmatpush1.bf16.msra.mxu0 %v893
    %1116 = vmatprep.subr.bf16.mxu0 %v900
    %1117 = vmatpush1.bf16.msra.mxu0 %v899
    %1118 = vmatprep.subr.bf16.mxu0 %v906
    %1119 = vmatpush1.bf16.msra.mxu0 %v905
    %1120 = vmatprep.subr.bf16.mxu0 %v912
    %1121 = vmatpush1.bf16.msra.mxu0 %v911
    %1122 = vmatprep.subr.bf16.mxu0 %v918
    %1123 = vmatpush1.bf16.msra.mxu0 %v917
    %1124 = vmatprep.subr.bf16.mxu0 %v924
    %1125 = vmatpush1.bf16.msra.mxu0 %v923
    %1126 = vmatprep.subr.bf16.mxu0 %v930
    %1127 = vmatpush1.bf16.msra.mxu0 %v929
    %1128 = vmatprep.subr.bf16.mxu0 %v936
    %1129 = vmatpush1.bf16.msra.mxu0 %v935
    %1130 = vmatprep.subr.bf16.mxu0 %v942
    %1131 = vmatpush1.bf16.msra.mxu0 %v941
    %1132 = vmatprep.subr.bf16.mxu0 %v948
    %1133 = vmatpush1.bf16.msra.mxu0 %v947
    %1134 = vmatprep.subr.bf16.mxu0 %v954
    %1135 = vmatpush1.bf16.msra.mxu0 %v953
    %1136 = vmatprep.subr.bf16.mxu0 %v960
    %1137 = vmatpush1.bf16.msra.mxu0 %v959
    %1138 = vmatprep.subr.bf16.mxu0 %v966
    %1139 = vmatpush1.bf16.msra.mxu0 %v965
    %1140 = vmatprep.mubr.bf16.mxu0 %v456
    %1141 = vmatmul.mubr.bf16.gmra.mrb[0].mxu0 %v455
    %v1142 = vpop.f32.mrb[0].mxu0
    %v1143 = vadd.f32 %v566, %v1142
    %v1144 = vpop.f32.mrb[0].mxu0
    %v1145 = vadd.f32 %v570, %v1144
    %v1146 = vpop.f32.mrb[0].mxu0
    %v1147 = vadd.f32 %v566, %v1146
    %v1148 = vpop.f32.mrb[0].mxu0
    %v1149 = vadd.f32 %v570, %v1148
    %1150 = vdwg.mxu0
    %1151 = vmatprep.subr.bf16.mxu0 %v878
    %1152 = vmatpush1.bf16.msra.mxu0 %v877
    %1153 = vmatprep.subr.bf16.mxu0 %v884
    %1154 = vmatpush1.bf16.msra.mxu0 %v883
    %1155 = vmatprep.subr.bf16.mxu0 %v890
    %1156 = vmatpush1.bf16.msra.mxu0 %v889
    %1157 = vmatprep.subr.bf16.mxu0 %v896
    %1158 = vmatpush1.bf16.msra.mxu0 %v895
    %1159 = vmatprep.subr.bf16.mxu0 %v902
    %1160 = vmatpush1.bf16.msra.mxu0 %v901
    %1161 = vmatprep.subr.bf16.mxu0 %v908
    %1162 = vmatpush1.bf16.msra.mxu0 %v907
    %1163 = vmatprep.subr.bf16.mxu0 %v914
    %1164 = vmatpush1.bf16.msra.mxu0 %v913
    %1165 = vmatprep.subr.bf16.mxu0 %v920
    %1166 = vmatpush1.bf16.msra.mxu0 %v919
    %1167 = vmatprep.subr.bf16.mxu0 %v926
    %1168 = vmatpush1.bf16.msra.mxu0 %v925
    %1169 = vmatprep.subr.bf16.mxu0 %v932
    %1170 = vmatpush1.bf16.msra.mxu0 %v931
    %1171 = vmatprep.subr.bf16.mxu0 %v938
    %1172 = vmatpush1.bf16.msra.mxu0 %v937
    %1173 = vmatprep.subr.bf16.mxu0 %v944
    %1174 = vmatpush1.bf16.msra.mxu0 %v943
    %1175 = vmatprep.subr.bf16.mxu0 %v950
    %1176 = vmatpush1.bf16.msra.mxu0 %v949
    %1177 = vmatprep.subr.bf16.mxu0 %v956
    %1178 = vmatpush1.bf16.msra.mxu0 %v955
    %1179 = vmatprep.subr.bf16.mxu0 %v962
    %1180 = vmatpush1.bf16.msra.mxu0 %v961
    %1181 = vmatprep.subr.bf16.mxu0 %v968
    %1182 = vmatpush1.bf16.msra.mxu0 %v967
    %1183 = vmatprep.mubr.bf16.mxu0 %v456
    %1184 = vmatmul.mubr.bf16.gmra.mrb[0].mxu0 %v455
    %v1185 = vpop.f32.mrb[0].mxu0
    %v1186 = vadd.f32 %v574, %v1185
    %v1187 = vpop.f32.mrb[0].mxu0
    %v1188 = vadd.f32 %v578, %v1187
    %v1189 = vpop.f32.mrb[0].mxu0
    %v1190 = vadd.f32 %v574, %v1189
    %v1191 = vpop.f32.mrb[0].mxu0
    %v1192 = vadd.f32 %v578, %v1191
    %1193 = vdwg.mxu0
    %v1194 = vtanh.pop %v1100
    %v1195 = vtanh.pop %v1102
    %v1196 = vtanh.pop %v1143
    %v1197 = vtanh.pop %v1145
    %v1198 = vtanh.pop %v1186
    %v1199 = vtanh.pop %v1188
    %v1200 = vtanh.pop %v1104
    %v1201 = vtanh.pop %v1106
    %v1202 = vtanh.pop %v1147
    %v1203 = vtanh.pop %v1149
    %v1204 = vtanh.pop %v1190
    %v1205 = vtanh.pop %v1192
    %v1218 = vcombine.low %v1194, %v1195
    %v1219 = vcombine.high %v1194, %v1195
    %v1220 = vcombine.low %v1196, %v1197
    %v1221 = vcombine.high %v1196, %v1197
    %v1222 = vcombine.low %v1198, %v1199
    %v1223 = vcombine.high %v1198, %v1199
    %v1225 = vunpack.c.l.s4 1966171168
    %v1226 = vunpack.c.0.s8 %v1225
    %v1227 = vlaneseq
    %v1228 = vshrl.u32 %v1227, 7
    %v1229 = vsub.s32 %v1226, %v1228
    %v1230 = vrot.slane %v1218, %v1229
    %v1232 = vunpack.c.l.s4 1966171168
    %v1233 = vunpack.c.0.s8 %v1232
    %v1234 = vlaneseq
    %v1235 = vshrl.u32 %v1234, 7
    %v1236 = vsub.s32 %v1233, %v1235
    %v1237 = vrot.slane %v1219, %v1236
    %v1239 = vunpack.c.l.s4 1966171168
    %v1240 = vunpack.c.0.s8 %v1239
    %v1241 = vlaneseq
    %v1242 = vshrl.u32 %v1241, 7
    %v1243 = vsub.s32 %v1240, %v1242
    %v1244 = vrot.slane %v1220, %v1243
    %v1246 = vunpack.c.l.s4 1966171168
    %v1247 = vunpack.c.0.s8 %v1246
    %v1248 = vlaneseq
    %v1249 = vshrl.u32 %v1248, 7
    %v1250 = vsub.s32 %v1247, %v1249
    %v1251 = vrot.slane %v1221, %v1250
    %v1253 = vunpack.c.l.s4 1966171168
    %v1254 = vunpack.c.0.s8 %v1253
    %v1255 = vlaneseq
    %v1256 = vshrl.u32 %v1255, 7
    %v1257 = vsub.s32 %v1254, %v1256
    %v1258 = vrot.slane %v1222, %v1257
    %v1260 = vunpack.c.l.s4 1966171168
    %v1261 = vunpack.c.0.s8 %v1260
    %v1262 = vlaneseq
    %v1263 = vshrl.u32 %v1262, 7
    %v1264 = vsub.s32 %v1261, %v1263
    %v1265 = vrot.slane %v1223, %v1264
    %v1266 = vcombine.low %v1230, %v1244
    %v1267 = vcombine.high %v1230, %v1244
    %v1268 = vcombine.low %v1237, %v1251
    %v1269 = vcombine.high %v1237, %v1251
    %v1270 = vcombine.high %v1258, %v1258
    %v1271 = vcombine.high %v1265, %v1265
    %v1273 = vunpack.c.l.s4 1966171168
    %v1274 = vunpack.c.0.s8 %v1273
    %v1275 = vlaneseq
    %v1276 = vshrl.u32 %v1275, 7
    %v1277 = vsub.s32 %v1274, %v1276
    %v1278 = vrot.slane %v1266, %v1277
    %v1280 = vunpack.c.l.s4 1966171168
    %v1281 = vunpack.c.0.s8 %v1280
    %v1282 = vlaneseq
    %v1283 = vshrl.u32 %v1282, 7
    %v1284 = vsub.s32 %v1281, %v1283
    %v1285 = vrot.slane %v1268, %v1284
    %v1287 = vunpack.c.l.s4 1966171168
    %v1288 = vunpack.c.0.s8 %v1287
    %v1289 = vlaneseq
    %v1290 = vshrl.u32 %v1289, 7
    %v1291 = vsub.s32 %v1288, %v1290
    %v1292 = vrot.slane %v1267, %v1291
    %v1294 = vunpack.c.l.s4 1966171168
    %v1295 = vunpack.c.0.s8 %v1294
    %v1296 = vlaneseq
    %v1297 = vshrl.u32 %v1296, 7
    %v1298 = vsub.s32 %v1295, %v1297
    %v1299 = vrot.slane %v1269, %v1298
    %v1301 = vunpack.c.l.s4 1966171168
    %v1302 = vunpack.c.0.s8 %v1301
    %v1303 = vlaneseq
    %v1304 = vshrl.u32 %v1303, 7
    %v1305 = vsub.s32 %v1302, %v1304
    %v1306 = vrot.slane %v1258, %v1305
    %v1308 = vunpack.c.l.s4 1966171168
    %v1309 = vunpack.c.0.s8 %v1308
    %v1310 = vlaneseq
    %v1311 = vshrl.u32 %v1310, 7
    %v1312 = vsub.s32 %v1309, %v1311
    %v1313 = vrot.slane %v1265, %v1312
    %v1315 = vunpack.c.l.s4 1966171168
    %v1316 = vunpack.c.0.s8 %v1315
    %v1317 = vlaneseq
    %v1318 = vshrl.u32 %v1317, 7
    %v1319 = vsub.s32 %v1316, %v1318
    %v1320 = vrot.slane %v1270, %v1319
    %v1322 = vunpack.c.l.s4 1966171168
    %v1323 = vunpack.c.0.s8 %v1322
    %v1324 = vlaneseq
    %v1325 = vshrl.u32 %v1324, 7
    %v1326 = vsub.s32 %v1323, %v1325
    %v1327 = vrot.slane %v1271, %v1326
    %v1328 = vcombine.low %v1278, %v1306
    %v1329 = vcombine.high %v1278, %v1306
    %v1330 = vcombine.low %v1285, %v1313
    %v1331 = vcombine.high %v1285, %v1313
    %v1332 = vcombine.low %v1292, %v1320
    %v1333 = vcombine.high %v1292, %v1320
    %v1334 = vcombine.low %v1299, %v1327
    %v1335 = vcombine.high %v1299, %v1327
    %v1336 = vcombine.low %v1200, %v1201
    %v1337 = vcombine.high %v1200, %v1201
    %v1338 = vcombine.low %v1202, %v1203
    %v1339 = vcombine.high %v1202, %v1203
    %v1340 = vcombine.low %v1204, %v1205
    %v1341 = vcombine.high %v1204, %v1205
    %v1343 = vunpack.c.l.s4 1966171168
    %v1344 = vunpack.c.0.s8 %v1343
    %v1345 = vlaneseq
    %v1346 = vshrl.u32 %v1345, 7
    %v1347 = vsub.s32 %v1344, %v1346
    %v1348 = vrot.slane %v1336, %v1347
    %v1350 = vunpack.c.l.s4 1966171168
    %v1351 = vunpack.c.0.s8 %v1350
    %v1352 = vlaneseq
    %v1353 = vshrl.u32 %v1352, 7
    %v1354 = vsub.s32 %v1351, %v1353
    %v1355 = vrot.slane %v1337, %v1354
    %v1357 = vunpack.c.l.s4 1966171168
    %v1358 = vunpack.c.0.s8 %v1357
    %v1359 = vlaneseq
    %v1360 = vshrl.u32 %v1359, 7
    %v1361 = vsub.s32 %v1358, %v1360
    %v1362 = vrot.slane %v1338, %v1361
    %v1364 = vunpack.c.l.s4 1966171168
    %v1365 = vunpack.c.0.s8 %v1364
    %v1366 = vlaneseq
    %v1367 = vshrl.u32 %v1366, 7
    %v1368 = vsub.s32 %v1365, %v1367
    %v1369 = vrot.slane %v1339, %v1368
    %v1371 = vunpack.c.l.s4 1966171168
    %v1372 = vunpack.c.0.s8 %v1371
    %v1373 = vlaneseq
    %v1374 = vshrl.u32 %v1373, 7
    %v1375 = vsub.s32 %v1372, %v1374
    %v1376 = vrot.slane %v1340, %v1375
    %v1378 = vunpack.c.l.s4 1966171168
    %v1379 = vunpack.c.0.s8 %v1378
    %v1380 = vlaneseq
    %v1381 = vshrl.u32 %v1380, 7
    %v1382 = vsub.s32 %v1379, %v1381
    %v1383 = vrot.slane %v1341, %v1382
    %v1384 = vcombine.low %v1348, %v1362
    %v1385 = vcombine.high %v1348, %v1362
    %v1386 = vcombine.low %v1355, %v1369
    %v1387 = vcombine.high %v1355, %v1369
    %v1388 = vcombine.high %v1376, %v1376
    %v1389 = vcombine.high %v1383, %v1383
    %v1391 = vunpack.c.l.s4 1966171168
    %v1392 = vunpack.c.0.s8 %v1391
    %v1393 = vlaneseq
    %v1394 = vshrl.u32 %v1393, 7
    %v1395 = vsub.s32 %v1392, %v1394
    %v1396 = vrot.slane %v1384, %v1395
    %v1398 = vunpack.c.l.s4 1966171168
    %v1399 = vunpack.c.0.s8 %v1398
    %v1400 = vlaneseq
    %v1401 = vshrl.u32 %v1400, 7
    %v1402 = vsub.s32 %v1399, %v1401
    %v1403 = vrot.slane %v1386, %v1402
    %v1405 = vunpack.c.l.s4 1966171168
    %v1406 = vunpack.c.0.s8 %v1405
    %v1407 = vlaneseq
    %v1408 = vshrl.u32 %v1407, 7
    %v1409 = vsub.s32 %v1406, %v1408
    %v1410 = vrot.slane %v1385, %v1409
    %v1412 = vunpack.c.l.s4 1966171168
    %v1413 = vunpack.c.0.s8 %v1412
    %v1414 = vlaneseq
    %v1415 = vshrl.u32 %v1414, 7
    %v1416 = vsub.s32 %v1413, %v1415
    %v1417 = vrot.slane %v1387, %v1416
    %v1419 = vunpack.c.l.s4 1966171168
    %v1420 = vunpack.c.0.s8 %v1419
    %v1421 = vlaneseq
    %v1422 = vshrl.u32 %v1421, 7
    %v1423 = vsub.s32 %v1420, %v1422
    %v1424 = vrot.slane %v1376, %v1423
    %v1426 = vunpack.c.l.s4 1966171168
    %v1427 = vunpack.c.0.s8 %v1426
    %v1428 = vlaneseq
    %v1429 = vshrl.u32 %v1428, 7
    %v1430 = vsub.s32 %v1427, %v1429
    %v1431 = vrot.slane %v1383, %v1430
    %v1433 = vunpack.c.l.s4 1966171168
    %v1434 = vunpack.c.0.s8 %v1433
    %v1435 = vlaneseq
    %v1436 = vshrl.u32 %v1435, 7
    %v1437 = vsub.s32 %v1434, %v1436
    %v1438 = vrot.slane %v1388, %v1437
    %v1440 = vunpack.c.l.s4 1966171168
    %v1441 = vunpack.c.0.s8 %v1440
    %v1442 = vlaneseq
    %v1443 = vshrl.u32 %v1442, 7
    %v1444 = vsub.s32 %v1441, %v1443
    %v1445 = vrot.slane %v1389, %v1444
    %v1446 = vcombine.low %v1396, %v1424
    %v1447 = vcombine.high %v1396, %v1424
    %v1448 = vcombine.low %v1403, %v1431
    %v1449 = vcombine.low %v1410, %v1438
    %v1450 = vcombine.high %v1410, %v1438
    %v1451 = vcombine.low %v1417, %v1445
    %s1452 = smul.u32 4, 288
    %s1453 = smul.u32 %s1452, 3
    %s1454 = sshll.u32 %s1453, 4
    %1455 = dma.done [#allocation7], %s1454
    %v1456 = vcombine.low %v1328, %v1332
    %v1457 = vcombine.high %v1328, %v1332
    %v1458 = vcombine.low %v1329, %v1333
    %v1459 = vcombine.high %v1329, %v1333
    %v1460 = vcombine.high %v1330, %v1330
    %v1462 = vunpack.c.l.s4 1966171168
    %v1463 = vunpack.c.0.s8 %v1462
    %v1464 = vlaneseq
    %v1465 = vshrl.u32 %v1464, 7
    %v1466 = vsub.s32 %v1463, %v1465
    %v1467 = vrot.slane %v1456, %v1466
    %v1469 = vunpack.c.l.s4 1966171168
    %v1470 = vunpack.c.0.s8 %v1469
    %v1471 = vlaneseq
    %v1472 = vshrl.u32 %v1471, 7
    %v1473 = vsub.s32 %v1470, %v1472
    %v1474 = vrot.slane %v1457, %v1473
    %v1476 = vunpack.c.l.s4 1966171168
    %v1477 = vunpack.c.0.s8 %v1476
    %v1478 = vlaneseq
    %v1479 = vshrl.u32 %v1478, 7
    %v1480 = vsub.s32 %v1477, %v1479
    %v1481 = vrot.slane %v1458, %v1480
    %v1483 = vunpack.c.l.s4 1966171168
    %v1484 = vunpack.c.0.s8 %v1483
    %v1485 = vlaneseq
    %v1486 = vshrl.u32 %v1485, 7
    %v1487 = vsub.s32 %v1484, %v1486
    %v1488 = vrot.slane %v1459, %v1487
    %v1490 = vunpack.c.l.s4 1966171168
    %v1491 = vunpack.c.0.s8 %v1490
    %v1492 = vlaneseq
    %v1493 = vshrl.u32 %v1492, 7
    %v1494 = vsub.s32 %v1491, %v1493
    %v1495 = vrot.slane %v1330, %v1494
    %v1497 = vunpack.c.l.s4 1966171168
    %v1498 = vunpack.c.0.s8 %v1497
    %v1499 = vlaneseq
    %v1500 = vshrl.u32 %v1499, 7
    %v1501 = vsub.s32 %v1498, %v1500
    %v1502 = vrot.slane %v1460, %v1501
    %v1503 = vcombine.low %v1467, %v1481
    %v1504 = vcombine.high %v1467, %v1481
    %v1505 = vcombine.low %v1474, %v1488
    %v1506 = vcombine.high %v1474, %v1488
    %v1507 = vcombine.high %v1495, %v1495
    %v1508 = vcombine.high %v1502, %v1502
    %v1510 = vunpack.c.l.s4 1966171168
    %v1511 = vunpack.c.0.s8 %v1510
    %v1512 = vlaneseq
    %v1513 = vshrl.u32 %v1512, 7
    %v1514 = vsub.s32 %v1511, %v1513
    %v1515 = vrot.slane %v1503, %v1514
    %v1517 = vunpack.c.l.s4 1966171168
    %v1518 = vunpack.c.0.s8 %v1517
    %v1519 = vlaneseq
    %v1520 = vshrl.u32 %v1519, 7
    %v1521 = vsub.s32 %v1518, %v1520
    %v1522 = vrot.slane %v1505, %v1521
    %v1524 = vunpack.c.l.s4 1966171168
    %v1525 = vunpack.c.0.s8 %v1524
    %v1526 = vlaneseq
    %v1527 = vshrl.u32 %v1526, 7
    %v1528 = vsub.s32 %v1525, %v1527
    %v1529 = vrot.slane %v1504, %v1528
    %v1531 = vunpack.c.l.s4 1966171168
    %v1532 = vunpack.c.0.s8 %v1531
    %v1533 = vlaneseq
    %v1534 = vshrl.u32 %v1533, 7
    %v1535 = vsub.s32 %v1532, %v1534
    %v1536 = vrot.slane %v1506, %v1535
    %v1538 = vunpack.c.l.s4 1966171168
    %v1539 = vunpack.c.0.s8 %v1538
    %v1540 = vlaneseq
    %v1541 = vshrl.u32 %v1540, 7
    %v1542 = vsub.s32 %v1539, %v1541
    %v1543 = vrot.slane %v1495, %v1542
    %v1545 = vunpack.c.l.s4 1966171168
    %v1546 = vunpack.c.0.s8 %v1545
    %v1547 = vlaneseq
    %v1548 = vshrl.u32 %v1547, 7
    %v1549 = vsub.s32 %v1546, %v1548
    %v1550 = vrot.slane %v1502, %v1549
    %v1552 = vunpack.c.l.s4 1966171168
    %v1553 = vunpack.c.0.s8 %v1552
    %v1554 = vlaneseq
    %v1555 = vshrl.u32 %v1554, 7
    %v1556 = vsub.s32 %v1553, %v1555
    %v1557 = vrot.slane %v1507, %v1556
    %v1559 = vunpack.c.l.s4 1966171168
    %v1560 = vunpack.c.0.s8 %v1559
    %v1561 = vlaneseq
    %v1562 = vshrl.u32 %v1561, 7
    %v1563 = vsub.s32 %v1560, %v1562
    %v1564 = vrot.slane %v1508, %v1563
    %v1565 = vcombine.low %v1515, %v1543
    %v1566 = vcombine.high %v1515, %v1543
    %v1567 = vcombine.low %v1522, %v1550
    %v1568 = vcombine.low %v1529, %v1557
    %v1569 = vcombine.high %v1529, %v1557
    %v1570 = vcombine.low %v1536, %v1564
    %v1571 = vcombine.low %v1335, %v1446
    %v1572 = vcombine.high %v1335, %v1446
    %v1573 = vcombine.low %v1449, %v1447
    %v1574 = vcombine.high %v1449, %v1447
    %v1575 = vcombine.high %v1450, %v1450
    %v1577 = vunpack.c.l.s4 1966171168
    %v1578 = vunpack.c.0.s8 %v1577
    %v1579 = vlaneseq
    %v1580 = vshrl.u32 %v1579, 7
    %v1581 = vsub.s32 %v1578, %v1580
    %v1582 = vrot.slane %v1571, %v1581
    %v1584 = vunpack.c.l.s4 1966171168
    %v1585 = vunpack.c.0.s8 %v1584
    %v1586 = vlaneseq
    %v1587 = vshrl.u32 %v1586, 7
    %v1588 = vsub.s32 %v1585, %v1587
    %v1589 = vrot.slane %v1572, %v1588
    %v1591 = vunpack.c.l.s4 1966171168
    %v1592 = vunpack.c.0.s8 %v1591
    %v1593 = vlaneseq
    %v1594 = vshrl.u32 %v1593, 7
    %v1595 = vsub.s32 %v1592, %v1594
    %v1596 = vrot.slane %v1573, %v1595
    %v1598 = vunpack.c.l.s4 1966171168
    %v1599 = vunpack.c.0.s8 %v1598
    %v1600 = vlaneseq
    %v1601 = vshrl.u32 %v1600, 7
    %v1602 = vsub.s32 %v1599, %v1601
    %v1603 = vrot.slane %v1574, %v1602
    %v1605 = vunpack.c.l.s4 1966171168
    %v1606 = vunpack.c.0.s8 %v1605
    %v1607 = vlaneseq
    %v1608 = vshrl.u32 %v1607, 7
    %v1609 = vsub.s32 %v1606, %v1608
    %v1610 = vrot.slane %v1450, %v1609
    %v1612 = vunpack.c.l.s4 1966171168
    %v1613 = vunpack.c.0.s8 %v1612
    %v1614 = vlaneseq
    %v1615 = vshrl.u32 %v1614, 7
    %v1616 = vsub.s32 %v1613, %v1615
    %v1617 = vrot.slane %v1575, %v1616
    %v1618 = vcombine.low %v1582, %v1596
    %v1619 = vcombine.high %v1582, %v1596
    %v1620 = vcombine.low %v1589, %v1603
    %v1621 = vcombine.high %v1589, %v1603
    %v1622 = vcombine.high %v1610, %v1610
    %v1623 = vcombine.high %v1617, %v1617
    %v1625 = vunpack.c.l.s4 1966171168
    %v1626 = vunpack.c.0.s8 %v1625
    %v1627 = vlaneseq
    %v1628 = vshrl.u32 %v1627, 7
    %v1629 = vsub.s32 %v1626, %v1628
    %v1630 = vrot.slane %v1618, %v1629
    %v1632 = vunpack.c.l.s4 1966171168
    %v1633 = vunpack.c.0.s8 %v1632
    %v1634 = vlaneseq
    %v1635 = vshrl.u32 %v1634, 7
    %v1636 = vsub.s32 %v1633, %v1635
    %v1637 = vrot.slane %v1620, %v1636
    %v1639 = vunpack.c.l.s4 1966171168
    %v1640 = vunpack.c.0.s8 %v1639
    %v1641 = vlaneseq
    %v1642 = vshrl.u32 %v1641, 7
    %v1643 = vsub.s32 %v1640, %v1642
    %v1644 = vrot.slane %v1619, %v1643
    %v1646 = vunpack.c.l.s4 1966171168
    %v1647 = vunpack.c.0.s8 %v1646
    %v1648 = vlaneseq
    %v1649 = vshrl.u32 %v1648, 7
    %v1650 = vsub.s32 %v1647, %v1649
    %v1651 = vrot.slane %v1621, %v1650
    %v1653 = vunpack.c.l.s4 1966171168
    %v1654 = vunpack.c.0.s8 %v1653
    %v1655 = vlaneseq
    %v1656 = vshrl.u32 %v1655, 7
    %v1657 = vsub.s32 %v1654, %v1656
    %v1658 = vrot.slane %v1610, %v1657
    %v1660 = vunpack.c.l.s4 1966171168
    %v1661 = vunpack.c.0.s8 %v1660
    %v1662 = vlaneseq
    %v1663 = vshrl.u32 %v1662, 7
    %v1664 = vsub.s32 %v1661, %v1663
    %v1665 = vrot.slane %v1617, %v1664
    %v1667 = vunpack.c.l.s4 1966171168
    %v1668 = vunpack.c.0.s8 %v1667
    %v1669 = vlaneseq
    %v1670 = vshrl.u32 %v1669, 7
    %v1671 = vsub.s32 %v1668, %v1670
    %v1672 = vrot.slane %v1622, %v1671
    %v1674 = vunpack.c.l.s4 1966171168
    %v1675 = vunpack.c.0.s8 %v1674
    %v1676 = vlaneseq
    %v1677 = vshrl.u32 %v1676, 7
    %v1678 = vsub.s32 %v1675, %v1677
    %v1679 = vrot.slane %v1623, %v1678
    %v1680 = vcombine.low %v1630, %v1658
    %v1681 = vcombine.high %v1630, %v1658
    %v1682 = vcombine.low %v1637, %v1665
    %v1683 = vcombine.low %v1644, %v1672
    %v1684 = vcombine.high %v1644, %v1672
    %v1685 = vcombine.low %v1651, %v1679
    %v1686 = vcombine.low %v1332, %v1329
    %v1687 = vcombine.high %v1332, %v1329
    %v1688 = vcombine.low %v1333, %v1330
    %v1689 = vcombine.high %v1333, %v1330
    %v1690 = vcombine.high %v1334, %v1334
    %v1692 = vunpack.c.l.s4 1966171168
    %v1693 = vunpack.c.0.s8 %v1692
    %v1694 = vlaneseq
    %v1695 = vshrl.u32 %v1694, 7
    %v1696 = vsub.s32 %v1693, %v1695
    %v1697 = vrot.slane %v1686, %v1696
    %v1699 = vunpack.c.l.s4 1966171168
    %v1700 = vunpack.c.0.s8 %v1699
    %v1701 = vlaneseq
    %v1702 = vshrl.u32 %v1701, 7
    %v1703 = vsub.s32 %v1700, %v1702
    %v1704 = vrot.slane %v1687, %v1703
    %v1706 = vunpack.c.l.s4 1966171168
    %v1707 = vunpack.c.0.s8 %v1706
    %v1708 = vlaneseq
    %v1709 = vshrl.u32 %v1708, 7
    %v1710 = vsub.s32 %v1707, %v1709
    %v1711 = vrot.slane %v1688, %v1710
    %v1713 = vunpack.c.l.s4 1966171168
    %v1714 = vunpack.c.0.s8 %v1713
    %v1715 = vlaneseq
    %v1716 = vshrl.u32 %v1715, 7
    %v1717 = vsub.s32 %v1714, %v1716
    %v1718 = vrot.slane %v1689, %v1717
    %v1720 = vunpack.c.l.s4 1966171168
    %v1721 = vunpack.c.0.s8 %v1720
    %v1722 = vlaneseq
    %v1723 = vshrl.u32 %v1722, 7
    %v1724 = vsub.s32 %v1721, %v1723
    %v1725 = vrot.slane %v1334, %v1724
    %v1727 = vunpack.c.l.s4 1966171168
    %v1728 = vunpack.c.0.s8 %v1727
    %v1729 = vlaneseq
    %v1730 = vshrl.u32 %v1729, 7
    %v1731 = vsub.s32 %v1728, %v1730
    %v1732 = vrot.slane %v1690, %v1731
    %v1733 = vcombine.low %v1697, %v1711
    %v1734 = vcombine.high %v1697, %v1711
    %v1735 = vcombine.low %v1704, %v1718
    %v1736 = vcombine.high %v1704, %v1718
    %v1737 = vcombine.high %v1725, %v1725
    %v1738 = vcombine.high %v1732, %v1732
    %v1740 = vunpack.c.l.s4 1966171168
    %v1741 = vunpack.c.0.s8 %v1740
    %v1742 = vlaneseq
    %v1743 = vshrl.u32 %v1742, 7
    %v1744 = vsub.s32 %v1741, %v1743
    %v1745 = vrot.slane %v1733, %v1744
    %v1747 = vunpack.c.l.s4 1966171168
    %v1748 = vunpack.c.0.s8 %v1747
    %v1749 = vlaneseq
    %v1750 = vshrl.u32 %v1749, 7
    %v1751 = vsub.s32 %v1748, %v1750
    %v1752 = vrot.slane %v1735, %v1751
    %v1754 = vunpack.c.l.s4 1966171168
    %v1755 = vunpack.c.0.s8 %v1754
    %v1756 = vlaneseq
    %v1757 = vshrl.u32 %v1756, 7
    %v1758 = vsub.s32 %v1755, %v1757
    %v1759 = vrot.slane %v1734, %v1758
    %v1761 = vunpack.c.l.s4 1966171168
    %v1762 = vunpack.c.0.s8 %v1761
    %v1763 = vlaneseq
    %v1764 = vshrl.u32 %v1763, 7
    %v1765 = vsub.s32 %v1762, %v1764
    %v1766 = vrot.slane %v1736, %v1765
    %v1768 = vunpack.c.l.s4 1966171168
    %v1769 = vunpack.c.0.s8 %v1768
    %v1770 = vlaneseq
    %v1771 = vshrl.u32 %v1770, 7
    %v1772 = vsub.s32 %v1769, %v1771
    %v1773 = vrot.slane %v1725, %v1772
    %v1775 = vunpack.c.l.s4 1966171168
    %v1776 = vunpack.c.0.s8 %v1775
    %v1777 = vlaneseq
    %v1778 = vshrl.u32 %v1777, 7
    %v1779 = vsub.s32 %v1776, %v1778
    %v1780 = vrot.slane %v1732, %v1779
    %v1782 = vunpack.c.l.s4 1966171168
    %v1783 = vunpack.c.0.s8 %v1782
    %v1784 = vlaneseq
    %v1785 = vshrl.u32 %v1784, 7
    %v1786 = vsub.s32 %v1783, %v1785
    %v1787 = vrot.slane %v1737, %v1786
    %v1789 = vunpack.c.l.s4 1966171168
    %v1790 = vunpack.c.0.s8 %v1789
    %v1791 = vlaneseq
    %v1792 = vshrl.u32 %v1791, 7
    %v1793 = vsub.s32 %v1790, %v1792
    %v1794 = vrot.slane %v1738, %v1793
    %v1795 = vcombine.low %v1745, %v1773
    %v1796 = vcombine.high %v1745, %v1773
    %v1797 = vcombine.low %v1752, %v1780
    %v1798 = vcombine.low %v1759, %v1787
    %v1799 = vcombine.high %v1759, %v1787
    %v1800 = vcombine.low %v1766, %v1794
    %v1801 = vcombine.low %v1446, %v1449
    %v1802 = vcombine.high %v1446, %v1449
    %v1803 = vcombine.low %v1447, %v1450
    %v1804 = vcombine.high %v1447, %v1450
    %v1805 = vcombine.high %v1448, %v1448
    %v1807 = vunpack.c.l.s4 1966171168
    %v1808 = vunpack.c.0.s8 %v1807
    %v1809 = vlaneseq
    %v1810 = vshrl.u32 %v1809, 7
    %v1811 = vsub.s32 %v1808, %v1810
    %v1812 = vrot.slane %v1801, %v1811
    %v1814 = vunpack.c.l.s4 1966171168
    %v1815 = vunpack.c.0.s8 %v1814
    %v1816 = vlaneseq
    %v1817 = vshrl.u32 %v1816, 7
    %v1818 = vsub.s32 %v1815, %v1817
    %v1819 = vrot.slane %v1802, %v1818
    %v1821 = vunpack.c.l.s4 1966171168
    %v1822 = vunpack.c.0.s8 %v1821
    %v1823 = vlaneseq
    %v1824 = vshrl.u32 %v1823, 7
    %v1825 = vsub.s32 %v1822, %v1824
    %v1826 = vrot.slane %v1803, %v1825
    %v1828 = vunpack.c.l.s4 1966171168
    %v1829 = vunpack.c.0.s8 %v1828
    %v1830 = vlaneseq
    %v1831 = vshrl.u32 %v1830, 7
    %v1832 = vsub.s32 %v1829, %v1831
    %v1833 = vrot.slane %v1804, %v1832
    %v1835 = vunpack.c.l.s4 1966171168
    %v1836 = vunpack.c.0.s8 %v1835
    %v1837 = vlaneseq
    %v1838 = vshrl.u32 %v1837, 7
    %v1839 = vsub.s32 %v1836, %v1838
    %v1840 = vrot.slane %v1448, %v1839
    %v1842 = vunpack.c.l.s4 1966171168
    %v1843 = vunpack.c.0.s8 %v1842
    %v1844 = vlaneseq
    %v1845 = vshrl.u32 %v1844, 7
    %v1846 = vsub.s32 %v1843, %v1845
    %v1847 = vrot.slane %v1805, %v1846
    %v1848 = vcombine.low %v1812, %v1826
    %v1849 = vcombine.high %v1812, %v1826
    %v1850 = vcombine.low %v1819, %v1833
    %v1851 = vcombine.high %v1819, %v1833
    %v1852 = vcombine.high %v1840, %v1840
    %v1853 = vcombine.high %v1847, %v1847
    %v1855 = vunpack.c.l.s4 1966171168
    %v1856 = vunpack.c.0.s8 %v1855
    %v1857 = vlaneseq
    %v1858 = vshrl.u32 %v1857, 7
    %v1859 = vsub.s32 %v1856, %v1858
    %v1860 = vrot.slane %v1848, %v1859
    %v1862 = vunpack.c.l.s4 1966171168
    %v1863 = vunpack.c.0.s8 %v1862
    %v1864 = vlaneseq
    %v1865 = vshrl.u32 %v1864, 7
    %v1866 = vsub.s32 %v1863, %v1865
    %v1867 = vrot.slane %v1850, %v1866
    %v1869 = vunpack.c.l.s4 1966171168
    %v1870 = vunpack.c.0.s8 %v1869
    %v1871 = vlaneseq
    %v1872 = vshrl.u32 %v1871, 7
    %v1873 = vsub.s32 %v1870, %v1872
    %v1874 = vrot.slane %v1849, %v1873
    %v1876 = vunpack.c.l.s4 1966171168
    %v1877 = vunpack.c.0.s8 %v1876
    %v1878 = vlaneseq
    %v1879 = vshrl.u32 %v1878, 7
    %v1880 = vsub.s32 %v1877, %v1879
    %v1881 = vrot.slane %v1851, %v1880
    %v1883 = vunpack.c.l.s4 1966171168
    %v1884 = vunpack.c.0.s8 %v1883
    %v1885 = vlaneseq
    %v1886 = vshrl.u32 %v1885, 7
    %v1887 = vsub.s32 %v1884, %v1886
    %v1888 = vrot.slane %v1840, %v1887
    %v1890 = vunpack.c.l.s4 1966171168
    %v1891 = vunpack.c.0.s8 %v1890
    %v1892 = vlaneseq
    %v1893 = vshrl.u32 %v1892, 7
    %v1894 = vsub.s32 %v1891, %v1893
    %v1895 = vrot.slane %v1847, %v1894
    %v1897 = vunpack.c.l.s4 1966171168
    %v1898 = vunpack.c.0.s8 %v1897
    %v1899 = vlaneseq
    %v1900 = vshrl.u32 %v1899, 7
    %v1901 = vsub.s32 %v1898, %v1900
    %v1902 = vrot.slane %v1852, %v1901
    %v1904 = vunpack.c.l.s4 1966171168
    %v1905 = vunpack.c.0.s8 %v1904
    %v1906 = vlaneseq
    %v1907 = vshrl.u32 %v1906, 7
    %v1908 = vsub.s32 %v1905, %v1907
    %v1909 = vrot.slane %v1853, %v1908
    %v1910 = vcombine.low %v1860, %v1888
    %v1911 = vcombine.high %v1860, %v1888
    %v1912 = vcombine.low %v1867, %v1895
    %v1913 = vcombine.low %v1874, %v1902
    %v1914 = vcombine.high %v1874, %v1902
    %v1915 = vcombine.low %v1881, %v1909
    %v1916 = vcombine.low %v1330, %v1334
    %v1917 = vcombine.high %v1330, %v1334
    %v1918 = vcombine.high %v1331, %v1331
    %v1920 = vunpack.c.l.s4 1966171168
    %v1921 = vunpack.c.0.s8 %v1920
    %v1922 = vlaneseq
    %v1923 = vshrl.u32 %v1922, 7
    %v1924 = vsub.s32 %v1921, %v1923
    %v1925 = vrot.slane %v1916, %v1924
    %v1927 = vunpack.c.l.s4 1966171168
    %v1928 = vunpack.c.0.s8 %v1927
    %v1929 = vlaneseq
    %v1930 = vshrl.u32 %v1929, 7
    %v1931 = vsub.s32 %v1928, %v1930
    %v1932 = vrot.slane %v1917, %v1931
    %v1934 = vunpack.c.l.s4 1966171168
    %v1935 = vunpack.c.0.s8 %v1934
    %v1936 = vlaneseq
    %v1937 = vshrl.u32 %v1936, 7
    %v1938 = vsub.s32 %v1935, %v1937
    %v1939 = vrot.slane %v1331, %v1938
    %v1941 = vunpack.c.l.s4 1966171168
    %v1942 = vunpack.c.0.s8 %v1941
    %v1943 = vlaneseq
    %v1944 = vshrl.u32 %v1943, 7
    %v1945 = vsub.s32 %v1942, %v1944
    %v1946 = vrot.slane %v1918, %v1945
    %v1947 = vcombine.low %v1481, %v1925
    %v1948 = vcombine.high %v1481, %v1925
    %v1949 = vcombine.low %v1488, %v1932
    %v1950 = vcombine.high %v1488, %v1932
    %v1951 = vcombine.high %v1939, %v1939
    %v1952 = vcombine.high %v1946, %v1946
    %v1954 = vunpack.c.l.s4 1966171168
    %v1955 = vunpack.c.0.s8 %v1954
    %v1956 = vlaneseq
    %v1957 = vshrl.u32 %v1956, 7
    %v1958 = vsub.s32 %v1955, %v1957
    %v1959 = vrot.slane %v1947, %v1958
    %v1961 = vunpack.c.l.s4 1966171168
    %v1962 = vunpack.c.0.s8 %v1961
    %v1963 = vlaneseq
    %v1964 = vshrl.u32 %v1963, 7
    %v1965 = vsub.s32 %v1962, %v1964
    %v1966 = vrot.slane %v1949, %v1965
    %v1968 = vunpack.c.l.s4 1966171168
    %v1969 = vunpack.c.0.s8 %v1968
    %v1970 = vlaneseq
    %v1971 = vshrl.u32 %v1970, 7
    %v1972 = vsub.s32 %v1969, %v1971
    %v1973 = vrot.slane %v1948, %v1972
    %v1975 = vunpack.c.l.s4 1966171168
    %v1976 = vunpack.c.0.s8 %v1975
    %v1977 = vlaneseq
    %v1978 = vshrl.u32 %v1977, 7
    %v1979 = vsub.s32 %v1976, %v1978
    %v1980 = vrot.slane %v1950, %v1979
    %v1982 = vunpack.c.l.s4 1966171168
    %v1983 = vunpack.c.0.s8 %v1982
    %v1984 = vlaneseq
    %v1985 = vshrl.u32 %v1984, 7
    %v1986 = vsub.s32 %v1983, %v1985
    %v1987 = vrot.slane %v1939, %v1986
    %v1989 = vunpack.c.l.s4 1966171168
    %v1990 = vunpack.c.0.s8 %v1989
    %v1991 = vlaneseq
    %v1992 = vshrl.u32 %v1991, 7
    %v1993 = vsub.s32 %v1990, %v1992
    %v1994 = vrot.slane %v1946, %v1993
    %v1996 = vunpack.c.l.s4 1966171168
    %v1997 = vunpack.c.0.s8 %v1996
    %v1998 = vlaneseq
    %v1999 = vshrl.u32 %v1998, 7
    %v2000 = vsub.s32 %v1997, %v1999
    %v2001 = vrot.slane %v1951, %v2000
    %v2003 = vunpack.c.l.s4 1966171168
    %v2004 = vunpack.c.0.s8 %v2003
    %v2005 = vlaneseq
    %v2006 = vshrl.u32 %v2005, 7
    %v2007 = vsub.s32 %v2004, %v2006
    %v2008 = vrot.slane %v1952, %v2007
    %v2009 = vcombine.low %v1959, %v1987
    %v2010 = vcombine.high %v1959, %v1987
    %v2011 = vcombine.low %v1966, %v1994
    %v2012 = vcombine.low %v1973, %v2001
    %v2013 = vcombine.high %v1973, %v2001
    %v2014 = vcombine.low %v1980, %v2008
    %v2015 = vcombine.low %v1450, %v1448
    %v2016 = vcombine.high %v1450, %v1448
    %v2017 = vcombine.high %v1451, %v1451
    %v2019 = vunpack.c.l.s4 1966171168
    %v2020 = vunpack.c.0.s8 %v2019
    %v2021 = vlaneseq
    %v2022 = vshrl.u32 %v2021, 7
    %v2023 = vsub.s32 %v2020, %v2022
    %v2024 = vrot.slane %v2015, %v2023
    %v2026 = vunpack.c.l.s4 1966171168
    %v2027 = vunpack.c.0.s8 %v2026
    %v2028 = vlaneseq
    %v2029 = vshrl.u32 %v2028, 7
    %v2030 = vsub.s32 %v2027, %v2029
    %v2031 = vrot.slane %v2016, %v2030
    %v2033 = vunpack.c.l.s4 1966171168
    %v2034 = vunpack.c.0.s8 %v2033
    %v2035 = vlaneseq
    %v2036 = vshrl.u32 %v2035, 7
    %v2037 = vsub.s32 %v2034, %v2036
    %v2038 = vrot.slane %v1451, %v2037
    %v2040 = vunpack.c.l.s4 1966171168
    %v2041 = vunpack.c.0.s8 %v2040
    %v2042 = vlaneseq
    %v2043 = vshrl.u32 %v2042, 7
    %v2044 = vsub.s32 %v2041, %v2043
    %v2045 = vrot.slane %v2017, %v2044
    %v2046 = vcombine.low %v1596, %v2024
    %v2047 = vcombine.high %v1596, %v2024
    %v2048 = vcombine.low %v1603, %v2031
    %v2049 = vcombine.high %v1603, %v2031
    %v2050 = vcombine.high %v2038, %v2038
    %v2051 = vcombine.high %v2045, %v2045
    %v2053 = vunpack.c.l.s4 1966171168
    %v2054 = vunpack.c.0.s8 %v2053
    %v2055 = vlaneseq
    %v2056 = vshrl.u32 %v2055, 7
    %v2057 = vsub.s32 %v2054, %v2056
    %v2058 = vrot.slane %v2046, %v2057
    %v2060 = vunpack.c.l.s4 1966171168
    %v2061 = vunpack.c.0.s8 %v2060
    %v2062 = vlaneseq
    %v2063 = vshrl.u32 %v2062, 7
    %v2064 = vsub.s32 %v2061, %v2063
    %v2065 = vrot.slane %v2048, %v2064
    %v2067 = vunpack.c.l.s4 1966171168
    %v2068 = vunpack.c.0.s8 %v2067
    %v2069 = vlaneseq
    %v2070 = vshrl.u32 %v2069, 7
    %v2071 = vsub.s32 %v2068, %v2070
    %v2072 = vrot.slane %v2047, %v2071
    %v2074 = vunpack.c.l.s4 1966171168
    %v2075 = vunpack.c.0.s8 %v2074
    %v2076 = vlaneseq
    %v2077 = vshrl.u32 %v2076, 7
    %v2078 = vsub.s32 %v2075, %v2077
    %v2079 = vrot.slane %v2049, %v2078
    %v2081 = vunpack.c.l.s4 1966171168
    %v2082 = vunpack.c.0.s8 %v2081
    %v2083 = vlaneseq
    %v2084 = vshrl.u32 %v2083, 7
    %v2085 = vsub.s32 %v2082, %v2084
    %v2086 = vrot.slane %v2038, %v2085
    %v2088 = vunpack.c.l.s4 1966171168
    %v2089 = vunpack.c.0.s8 %v2088
    %v2090 = vlaneseq
    %v2091 = vshrl.u32 %v2090, 7
    %v2092 = vsub.s32 %v2089, %v2091
    %v2093 = vrot.slane %v2045, %v2092
    %v2095 = vunpack.c.l.s4 1966171168
    %v2096 = vunpack.c.0.s8 %v2095
    %v2097 = vlaneseq
    %v2098 = vshrl.u32 %v2097, 7
    %v2099 = vsub.s32 %v2096, %v2098
    %v2100 = vrot.slane %v2050, %v2099
    %v2102 = vunpack.c.l.s4 1966171168
    %v2103 = vunpack.c.0.s8 %v2102
    %v2104 = vlaneseq
    %v2105 = vshrl.u32 %v2104, 7
    %v2106 = vsub.s32 %v2103, %v2105
    %v2107 = vrot.slane %v2051, %v2106
    %v2108 = vcombine.low %v2058, %v2086
    %v2109 = vcombine.high %v2058, %v2086
    %v2110 = vcombine.low %v2065, %v2093
    %v2111 = vcombine.low %v2072, %v2100
    %v2112 = vcombine.high %v2072, %v2100
    %v2113 = vcombine.low %v2079, %v2107
    %v2114 = vcombine.low %v1565, %v1568
    %v2115 = vcombine.high %v1565, %v1568
    %v2116 = vcombine.low %v1566, %v1569
    %v2117 = vcombine.high %v1566, %v1569
    %v2118 = vcombine.low %v1567, %v1570
    %v2119 = vcombine.high %v1567, %v1570
    %v2120 = vcombine.low %v1795, %v1798
    %v2121 = vcombine.high %v1795, %v1798
    %v2123 = vunpack.c.l.s4 1966171168
    %v2124 = vunpack.c.0.s8 %v2123
    %v2125 = vlaneseq
    %v2126 = vshrl.u32 %v2125, 7
    %v2127 = vsub.s32 %v2124, %v2126
    %v2128 = vrot.slane %v2114, %v2127
    %v2130 = vunpack.c.l.s4 1966171168
    %v2131 = vunpack.c.0.s8 %v2130
    %v2132 = vlaneseq
    %v2133 = vshrl.u32 %v2132, 7
    %v2134 = vsub.s32 %v2131, %v2133
    %v2135 = vrot.slane %v2115, %v2134
    %v2137 = vunpack.c.l.s4 1966171168
    %v2138 = vunpack.c.0.s8 %v2137
    %v2139 = vlaneseq
    %v2140 = vshrl.u32 %v2139, 7
    %v2141 = vsub.s32 %v2138, %v2140
    %v2142 = vrot.slane %v2116, %v2141
    %v2144 = vunpack.c.l.s4 1966171168
    %v2145 = vunpack.c.0.s8 %v2144
    %v2146 = vlaneseq
    %v2147 = vshrl.u32 %v2146, 7
    %v2148 = vsub.s32 %v2145, %v2147
    %v2149 = vrot.slane %v2117, %v2148
    %v2151 = vunpack.c.l.s4 1966171168
    %v2152 = vunpack.c.0.s8 %v2151
    %v2153 = vlaneseq
    %v2154 = vshrl.u32 %v2153, 7
    %v2155 = vsub.s32 %v2152, %v2154
    %v2156 = vrot.slane %v2118, %v2155
    %v2158 = vunpack.c.l.s4 1966171168
    %v2159 = vunpack.c.0.s8 %v2158
    %v2160 = vlaneseq
    %v2161 = vshrl.u32 %v2160, 7
    %v2162 = vsub.s32 %v2159, %v2161
    %v2163 = vrot.slane %v2119, %v2162
    %v2165 = vunpack.c.l.s4 1966171168
    %v2166 = vunpack.c.0.s8 %v2165
    %v2167 = vlaneseq
    %v2168 = vshrl.u32 %v2167, 7
    %v2169 = vsub.s32 %v2166, %v2168
    %v2170 = vrot.slane %v2120, %v2169
    %v2172 = vunpack.c.l.s4 1966171168
    %v2173 = vunpack.c.0.s8 %v2172
    %v2174 = vlaneseq
    %v2175 = vshrl.u32 %v2174, 7
    %v2176 = vsub.s32 %v2173, %v2175
    %v2177 = vrot.slane %v2121, %v2176
    %v2178 = vcombine.low %v2128, %v2142
    %v2179 = vcombine.high %v2128, %v2142
    %v2180 = vcombine.low %v2135, %v2149
    %v2181 = vcombine.low %v2156, %v2170
    %v2182 = vcombine.high %v2156, %v2170
    %v2183 = vcombine.low %v2163, %v2177
    %v2185 = vunpack.c.l.s4 1966171168
    %v2186 = vunpack.c.0.s8 %v2185
    %v2187 = vlaneseq
    %v2188 = vshrl.u32 %v2187, 7
    %v2189 = vsub.s32 %v2186, %v2188
    %v2190 = vrot.slane %v2178, %v2189
    %v2192 = vunpack.c.l.s4 1966171168
    %v2193 = vunpack.c.0.s8 %v2192
    %v2194 = vlaneseq
    %v2195 = vshrl.u32 %v2194, 7
    %v2196 = vsub.s32 %v2193, %v2195
    %v2197 = vrot.slane %v2180, %v2196
    %v2199 = vunpack.c.l.s4 1966171168
    %v2200 = vunpack.c.0.s8 %v2199
    %v2201 = vlaneseq
    %v2202 = vshrl.u32 %v2201, 7
    %v2203 = vsub.s32 %v2200, %v2202
    %v2204 = vrot.slane %v2179, %v2203
    %v2206 = vunpack.c.l.s4 1966171168
    %v2207 = vunpack.c.0.s8 %v2206
    %v2208 = vlaneseq
    %v2209 = vshrl.u32 %v2208, 7
    %v2210 = vsub.s32 %v2207, %v2209
    %v2211 = vrot.slane %v2181, %v2210
    %v2213 = vunpack.c.l.s4 1966171168
    %v2214 = vunpack.c.0.s8 %v2213
    %v2215 = vlaneseq
    %v2216 = vshrl.u32 %v2215, 7
    %v2217 = vsub.s32 %v2214, %v2216
    %v2218 = vrot.slane %v2183, %v2217
    %v2220 = vunpack.c.l.s4 1966171168
    %v2221 = vunpack.c.0.s8 %v2220
    %v2222 = vlaneseq
    %v2223 = vshrl.u32 %v2222, 7
    %v2224 = vsub.s32 %v2221, %v2223
    %v2225 = vrot.slane %v2182, %v2224
    %v2226 = vcombine.low %v2190, %v2211
    %v2227 = vcombine.high %v2190, %v2211
    %v2228 = vcombine.low %v2197, %v2218
    %v2229 = vcombine.low %v2204, %v2225
    %v2230 = vcombine.high %v2204, %v2225
    %v2231 = vcombine.low %v1796, %v1799
    %v2232 = vcombine.high %v1796, %v1799
    %v2233 = vcombine.low %v1797, %v1800
    %v2234 = vcombine.high %v1797, %v1800
    %v2235 = vcombine.low %v2009, %v2012
    %v2236 = vcombine.high %v2009, %v2012
    %v2237 = vcombine.low %v2010, %v2013
    %v2238 = vcombine.high %v2010, %v2013
    %v2240 = vunpack.c.l.s4 1966171168
    %v2241 = vunpack.c.0.s8 %v2240
    %v2242 = vlaneseq
    %v2243 = vshrl.u32 %v2242, 7
    %v2244 = vsub.s32 %v2241, %v2243
    %v2245 = vrot.slane %v2231, %v2244
    %v2247 = vunpack.c.l.s4 1966171168
    %v2248 = vunpack.c.0.s8 %v2247
    %v2249 = vlaneseq
    %v2250 = vshrl.u32 %v2249, 7
    %v2251 = vsub.s32 %v2248, %v2250
    %v2252 = vrot.slane %v2232, %v2251
    %v2254 = vunpack.c.l.s4 1966171168
    %v2255 = vunpack.c.0.s8 %v2254
    %v2256 = vlaneseq
    %v2257 = vshrl.u32 %v2256, 7
    %v2258 = vsub.s32 %v2255, %v2257
    %v2259 = vrot.slane %v2233, %v2258
    %v2261 = vunpack.c.l.s4 1966171168
    %v2262 = vunpack.c.0.s8 %v2261
    %v2263 = vlaneseq
    %v2264 = vshrl.u32 %v2263, 7
    %v2265 = vsub.s32 %v2262, %v2264
    %v2266 = vrot.slane %v2234, %v2265
    %v2268 = vunpack.c.l.s4 1966171168
    %v2269 = vunpack.c.0.s8 %v2268
    %v2270 = vlaneseq
    %v2271 = vshrl.u32 %v2270, 7
    %v2272 = vsub.s32 %v2269, %v2271
    %v2273 = vrot.slane %v2235, %v2272
    %v2275 = vunpack.c.l.s4 1966171168
    %v2276 = vunpack.c.0.s8 %v2275
    %v2277 = vlaneseq
    %v2278 = vshrl.u32 %v2277, 7
    %v2279 = vsub.s32 %v2276, %v2278
    %v2280 = vrot.slane %v2236, %v2279
    %v2282 = vunpack.c.l.s4 1966171168
    %v2283 = vunpack.c.0.s8 %v2282
    %v2284 = vlaneseq
    %v2285 = vshrl.u32 %v2284, 7
    %v2286 = vsub.s32 %v2283, %v2285
    %v2287 = vrot.slane %v2237, %v2286
    %v2289 = vunpack.c.l.s4 1966171168
    %v2290 = vunpack.c.0.s8 %v2289
    %v2291 = vlaneseq
    %v2292 = vshrl.u32 %v2291, 7
    %v2293 = vsub.s32 %v2290, %v2292
    %v2294 = vrot.slane %v2238, %v2293
    %v2295 = vcombine.low %v2245, %v2259
    %v2296 = vcombine.high %v2245, %v2259
    %v2297 = vcombine.low %v2252, %v2266
    %v2298 = vcombine.low %v2273, %v2287
    %v2299 = vcombine.high %v2273, %v2287
    %v2300 = vcombine.low %v2280, %v2294
    %v2302 = vunpack.c.l.s4 1966171168
    %v2303 = vunpack.c.0.s8 %v2302
    %v2304 = vlaneseq
    %v2305 = vshrl.u32 %v2304, 7
    %v2306 = vsub.s32 %v2303, %v2305
    %v2307 = vrot.slane %v2295, %v2306
    %v2309 = vunpack.c.l.s4 1966171168
    %v2310 = vunpack.c.0.s8 %v2309
    %v2311 = vlaneseq
    %v2312 = vshrl.u32 %v2311, 7
    %v2313 = vsub.s32 %v2310, %v2312
    %v2314 = vrot.slane %v2297, %v2313
    %v2316 = vunpack.c.l.s4 1966171168
    %v2317 = vunpack.c.0.s8 %v2316
    %v2318 = vlaneseq
    %v2319 = vshrl.u32 %v2318, 7
    %v2320 = vsub.s32 %v2317, %v2319
    %v2321 = vrot.slane %v2296, %v2320
    %v2323 = vunpack.c.l.s4 1966171168
    %v2324 = vunpack.c.0.s8 %v2323
    %v2325 = vlaneseq
    %v2326 = vshrl.u32 %v2325, 7
    %v2327 = vsub.s32 %v2324, %v2326
    %v2328 = vrot.slane %v2298, %v2327
    %v2330 = vunpack.c.l.s4 1966171168
    %v2331 = vunpack.c.0.s8 %v2330
    %v2332 = vlaneseq
    %v2333 = vshrl.u32 %v2332, 7
    %v2334 = vsub.s32 %v2331, %v2333
    %v2335 = vrot.slane %v2300, %v2334
    %v2337 = vunpack.c.l.s4 1966171168
    %v2338 = vunpack.c.0.s8 %v2337
    %v2339 = vlaneseq
    %v2340 = vshrl.u32 %v2339, 7
    %v2341 = vsub.s32 %v2338, %v2340
    %v2342 = vrot.slane %v2299, %v2341
    %v2343 = vcombine.low %v2307, %v2328
    %v2344 = vcombine.high %v2307, %v2328
    %v2345 = vcombine.low %v2314, %v2335
    %v2346 = vcombine.low %v2321, %v2342
    %v2347 = vcombine.high %v2321, %v2342
    %v2348 = vcombine.low %v2011, %v2014
    %v2349 = vcombine.high %v2011, %v2014
    %v2351 = vunpack.c.l.s4 1966171168
    %v2352 = vunpack.c.0.s8 %v2351
    %v2353 = vlaneseq
    %v2354 = vshrl.u32 %v2353, 7
    %v2355 = vsub.s32 %v2352, %v2354
    %v2356 = vrot.slane %v2348, %v2355
    %v2358 = vunpack.c.l.s4 1966171168
    %v2359 = vunpack.c.0.s8 %v2358
    %v2360 = vlaneseq
    %v2361 = vshrl.u32 %v2360, 7
    %v2362 = vsub.s32 %v2359, %v2361
    %v2363 = vrot.slane %v2349, %v2362
    %v2364 = vcombine.high %v2356, %v2356
    %v2366 = vunpack.c.l.s4 1966171168
    %v2367 = vunpack.c.0.s8 %v2366
    %v2368 = vlaneseq
    %v2369 = vshrl.u32 %v2368, 7
    %v2370 = vsub.s32 %v2367, %v2369
    %v2371 = vrot.slane %v2356, %v2370
    %v2373 = vunpack.c.l.s4 1966171168
    %v2374 = vunpack.c.0.s8 %v2373
    %v2375 = vlaneseq
    %v2376 = vshrl.u32 %v2375, 7
    %v2377 = vsub.s32 %v2374, %v2376
    %v2378 = vrot.slane %v2363, %v2377
    %v2380 = vunpack.c.l.s4 1966171168
    %v2381 = vunpack.c.0.s8 %v2380
    %v2382 = vlaneseq
    %v2383 = vshrl.u32 %v2382, 7
    %v2384 = vsub.s32 %v2381, %v2383
    %v2385 = vrot.slane %v2364, %v2384
    %v2386 = vcombine.high %v2371, %v2371
    %v2387 = vcombine.high %v2385, %v2385
    %v2388 = vcombine.low %v1680, %v1683
    %v2389 = vcombine.high %v1680, %v1683
    %v2390 = vcombine.low %v1681, %v1684
    %v2391 = vcombine.high %v1681, %v1684
    %v2392 = vcombine.low %v1682, %v1685
    %v2393 = vcombine.high %v1682, %v1685
    %v2394 = vcombine.low %v1910, %v1913
    %v2395 = vcombine.high %v1910, %v1913
    %v2397 = vunpack.c.l.s4 1966171168
    %v2398 = vunpack.c.0.s8 %v2397
    %v2399 = vlaneseq
    %v2400 = vshrl.u32 %v2399, 7
    %v2401 = vsub.s32 %v2398, %v2400
    %v2402 = vrot.slane %v2388, %v2401
    %v2404 = vunpack.c.l.s4 1966171168
    %v2405 = vunpack.c.0.s8 %v2404
    %v2406 = vlaneseq
    %v2407 = vshrl.u32 %v2406, 7
    %v2408 = vsub.s32 %v2405, %v2407
    %v2409 = vrot.slane %v2389, %v2408
    %v2411 = vunpack.c.l.s4 1966171168
    %v2412 = vunpack.c.0.s8 %v2411
    %v2413 = vlaneseq
    %v2414 = vshrl.u32 %v2413, 7
    %v2415 = vsub.s32 %v2412, %v2414
    %v2416 = vrot.slane %v2390, %v2415
    %v2418 = vunpack.c.l.s4 1966171168
    %v2419 = vunpack.c.0.s8 %v2418
    %v2420 = vlaneseq
    %v2421 = vshrl.u32 %v2420, 7
    %v2422 = vsub.s32 %v2419, %v2421
    %v2423 = vrot.slane %v2391, %v2422
    %v2425 = vunpack.c.l.s4 1966171168
    %v2426 = vunpack.c.0.s8 %v2425
    %v2427 = vlaneseq
    %v2428 = vshrl.u32 %v2427, 7
    %v2429 = vsub.s32 %v2426, %v2428
    %v2430 = vrot.slane %v2392, %v2429
    %v2432 = vunpack.c.l.s4 1966171168
    %v2433 = vunpack.c.0.s8 %v2432
    %v2434 = vlaneseq
    %v2435 = vshrl.u32 %v2434, 7
    %v2436 = vsub.s32 %v2433, %v2435
    %v2437 = vrot.slane %v2393, %v2436
    %v2439 = vunpack.c.l.s4 1966171168
    %v2440 = vunpack.c.0.s8 %v2439
    %v2441 = vlaneseq
    %v2442 = vshrl.u32 %v2441, 7
    %v2443 = vsub.s32 %v2440, %v2442
    %v2444 = vrot.slane %v2394, %v2443
    %v2446 = vunpack.c.l.s4 1966171168
    %v2447 = vunpack.c.0.s8 %v2446
    %v2448 = vlaneseq
    %v2449 = vshrl.u32 %v2448, 7
    %v2450 = vsub.s32 %v2447, %v2449
    %v2451 = vrot.slane %v2395, %v2450
    %v2452 = vcombine.low %v2402, %v2416
    %v2453 = vcombine.high %v2402, %v2416
    %v2454 = vcombine.low %v2409, %v2423
    %v2455 = vcombine.low %v2430, %v2444
    %v2456 = vcombine.high %v2430, %v2444
    %v2457 = vcombine.low %v2437, %v2451
    %v2459 = vunpack.c.l.s4 1966171168
    %v2460 = vunpack.c.0.s8 %v2459
    %v2461 = vlaneseq
    %v2462 = vshrl.u32 %v2461, 7
    %v2463 = vsub.s32 %v2460, %v2462
    %v2464 = vrot.slane %v2452, %v2463
    %v2466 = vunpack.c.l.s4 1966171168
    %v2467 = vunpack.c.0.s8 %v2466
    %v2468 = vlaneseq
    %v2469 = vshrl.u32 %v2468, 7
    %v2470 = vsub.s32 %v2467, %v2469
    %v2471 = vrot.slane %v2454, %v2470
    %v2473 = vunpack.c.l.s4 1966171168
    %v2474 = vunpack.c.0.s8 %v2473
    %v2475 = vlaneseq
    %v2476 = vshrl.u32 %v2475, 7
    %v2477 = vsub.s32 %v2474, %v2476
    %v2478 = vrot.slane %v2453, %v2477
    %v2480 = vunpack.c.l.s4 1966171168
    %v2481 = vunpack.c.0.s8 %v2480
    %v2482 = vlaneseq
    %v2483 = vshrl.u32 %v2482, 7
    %v2484 = vsub.s32 %v2481, %v2483
    %v2485 = vrot.slane %v2455, %v2484
    %v2487 = vunpack.c.l.s4 1966171168
    %v2488 = vunpack.c.0.s8 %v2487
    %v2489 = vlaneseq
    %v2490 = vshrl.u32 %v2489, 7
    %v2491 = vsub.s32 %v2488, %v2490
    %v2492 = vrot.slane %v2457, %v2491
    %v2494 = vunpack.c.l.s4 1966171168
    %v2495 = vunpack.c.0.s8 %v2494
    %v2496 = vlaneseq
    %v2497 = vshrl.u32 %v2496, 7
    %v2498 = vsub.s32 %v2495, %v2497
    %v2499 = vrot.slane %v2456, %v2498
    %v2500 = vcombine.low %v2464, %v2485
    %v2501 = vcombine.high %v2464, %v2485
    %v2502 = vcombine.low %v2471, %v2492
    %v2503 = vcombine.low %v2478, %v2499
    %v2504 = vcombine.high %v2478, %v2499
    %v2505 = vcombine.low %v1911, %v1914
    %v2506 = vcombine.high %v1911, %v1914
    %v2507 = vcombine.low %v1912, %v1915
    %v2508 = vcombine.high %v1912, %v1915
    %v2509 = vcombine.low %v2108, %v2111
    %v2510 = vcombine.high %v2108, %v2111
    %v2511 = vcombine.low %v2109, %v2112
    %v2512 = vcombine.high %v2109, %v2112
    %v2514 = vunpack.c.l.s4 1966171168
    %v2515 = vunpack.c.0.s8 %v2514
    %v2516 = vlaneseq
    %v2517 = vshrl.u32 %v2516, 7
    %v2518 = vsub.s32 %v2515, %v2517
    %v2519 = vrot.slane %v2505, %v2518
    %v2521 = vunpack.c.l.s4 1966171168
    %v2522 = vunpack.c.0.s8 %v2521
    %v2523 = vlaneseq
    %v2524 = vshrl.u32 %v2523, 7
    %v2525 = vsub.s32 %v2522, %v2524
    %v2526 = vrot.slane %v2506, %v2525
    %v2528 = vunpack.c.l.s4 1966171168
    %v2529 = vunpack.c.0.s8 %v2528
    %v2530 = vlaneseq
    %v2531 = vshrl.u32 %v2530, 7
    %v2532 = vsub.s32 %v2529, %v2531
    %v2533 = vrot.slane %v2507, %v2532
    %v2535 = vunpack.c.l.s4 1966171168
    %v2536 = vunpack.c.0.s8 %v2535
    %v2537 = vlaneseq
    %v2538 = vshrl.u32 %v2537, 7
    %v2539 = vsub.s32 %v2536, %v2538
    %v2540 = vrot.slane %v2508, %v2539
    %v2542 = vunpack.c.l.s4 1966171168
    %v2543 = vunpack.c.0.s8 %v2542
    %v2544 = vlaneseq
    %v2545 = vshrl.u32 %v2544, 7
    %v2546 = vsub.s32 %v2543, %v2545
    %v2547 = vrot.slane %v2509, %v2546
    %v2549 = vunpack.c.l.s4 1966171168
    %v2550 = vunpack.c.0.s8 %v2549
    %v2551 = vlaneseq
    %v2552 = vshrl.u32 %v2551, 7
    %v2553 = vsub.s32 %v2550, %v2552
    %v2554 = vrot.slane %v2510, %v2553
    %v2556 = vunpack.c.l.s4 1966171168
    %v2557 = vunpack.c.0.s8 %v2556
    %v2558 = vlaneseq
    %v2559 = vshrl.u32 %v2558, 7
    %v2560 = vsub.s32 %v2557, %v2559
    %v2561 = vrot.slane %v2511, %v2560
    %v2563 = vunpack.c.l.s4 1966171168
    %v2564 = vunpack.c.0.s8 %v2563
    %v2565 = vlaneseq
    %v2566 = vshrl.u32 %v2565, 7
    %v2567 = vsub.s32 %v2564, %v2566
    %v2568 = vrot.slane %v2512, %v2567
    %v2569 = vcombine.low %v2519, %v2533
    %v2570 = vcombine.high %v2519, %v2533
    %v2571 = vcombine.low %v2526, %v2540
    %v2572 = vcombine.low %v2547, %v2561
    %v2573 = vcombine.high %v2547, %v2561
    %v2574 = vcombine.low %v2554, %v2568
    %v2576 = vunpack.c.l.s4 1966171168
    %v2577 = vunpack.c.0.s8 %v2576
    %v2578 = vlaneseq
    %v2579 = vshrl.u32 %v2578, 7
    %v2580 = vsub.s32 %v2577, %v2579
    %v2581 = vrot.slane %v2569, %v2580
    %v2583 = vunpack.c.l.s4 1966171168
    %v2584 = vunpack.c.0.s8 %v2583
    %v2585 = vlaneseq
    %v2586 = vshrl.u32 %v2585, 7
    %v2587 = vsub.s32 %v2584, %v2586
    %v2588 = vrot.slane %v2571, %v2587
    %v2590 = vunpack.c.l.s4 1966171168
    %v2591 = vunpack.c.0.s8 %v2590
    %v2592 = vlaneseq
    %v2593 = vshrl.u32 %v2592, 7
    %v2594 = vsub.s32 %v2591, %v2593
    %v2595 = vrot.slane %v2570, %v2594
    %v2597 = vunpack.c.l.s4 1966171168
    %v2598 = vunpack.c.0.s8 %v2597
    %v2599 = vlaneseq
    %v2600 = vshrl.u32 %v2599, 7
    %v2601 = vsub.s32 %v2598, %v2600
    %v2602 = vrot.slane %v2572, %v2601
    %v2604 = vunpack.c.l.s4 1966171168
    %v2605 = vunpack.c.0.s8 %v2604
    %v2606 = vlaneseq
    %v2607 = vshrl.u32 %v2606, 7
    %v2608 = vsub.s32 %v2605, %v2607
    %v2609 = vrot.slane %v2574, %v2608
    %v2611 = vunpack.c.l.s4 1966171168
    %v2612 = vunpack.c.0.s8 %v2611
    %v2613 = vlaneseq
    %v2614 = vshrl.u32 %v2613, 7
    %v2615 = vsub.s32 %v2612, %v2614
    %v2616 = vrot.slane %v2573, %v2615
    %v2617 = vcombine.low %v2581, %v2602
    %v2618 = vcombine.high %v2581, %v2602
    %v2619 = vcombine.low %v2588, %v2609
    %v2620 = vcombine.low %v2595, %v2616
    %v2621 = vcombine.high %v2595, %v2616
    %v2622 = vcombine.low %v2110, %v2113
    %v2623 = vcombine.high %v2110, %v2113
    %v2625 = vunpack.c.l.s4 1966171168
    %v2626 = vunpack.c.0.s8 %v2625
    %v2627 = vlaneseq
    %v2628 = vshrl.u32 %v2627, 7
    %v2629 = vsub.s32 %v2626, %v2628
    %v2630 = vrot.slane %v2622, %v2629
    %v2632 = vunpack.c.l.s4 1966171168
    %v2633 = vunpack.c.0.s8 %v2632
    %v2634 = vlaneseq
    %v2635 = vshrl.u32 %v2634, 7
    %v2636 = vsub.s32 %v2633, %v2635
    %v2637 = vrot.slane %v2623, %v2636
    %v2638 = vcombine.high %v2630, %v2630
    %v2640 = vunpack.c.l.s4 1966171168
    %v2641 = vunpack.c.0.s8 %v2640
    %v2642 = vlaneseq
    %v2643 = vshrl.u32 %v2642, 7
    %v2644 = vsub.s32 %v2641, %v2643
    %v2645 = vrot.slane %v2630, %v2644
    %v2647 = vunpack.c.l.s4 1966171168
    %v2648 = vunpack.c.0.s8 %v2647
    %v2649 = vlaneseq
    %v2650 = vshrl.u32 %v2649, 7
    %v2651 = vsub.s32 %v2648, %v2650
    %v2652 = vrot.slane %v2637, %v2651
    %v2654 = vunpack.c.l.s4 1966171168
    %v2655 = vunpack.c.0.s8 %v2654
    %v2656 = vlaneseq
    %v2657 = vshrl.u32 %v2656, 7
    %v2658 = vsub.s32 %v2655, %v2657
    %v2659 = vrot.slane %v2638, %v2658
    %v2660 = vcombine.high %v2645, %v2645
    %v2661 = vcombine.high %v2659, %v2659
    %v2662 = vcombine.low %v2226, %v2229
    %v2663 = vcombine.high %v2226, %v2229
    %v2664 = vcombine.low %v2227, %v2230
    %v2665 = vcombine.high %v2227, %v2230
    %v2666 = vcombine.low %v2228, %v2500
    %v2667 = vcombine.high %v2228, %v2500
    %v2668 = vcombine.low %v2503, %v2501
    %v2669 = vcombine.high %v2503, %v2501
    %v2671 = vunpack.c.l.s4 1966171168
    %v2672 = vunpack.c.0.s8 %v2671
    %v2673 = vlaneseq
    %v2674 = vshrl.u32 %v2673, 7
    %v2675 = vsub.s32 %v2672, %v2674
    %v2676 = vrot.slane %v2662, %v2675
    %v2678 = vunpack.c.l.s4 1966171168
    %v2679 = vunpack.c.0.s8 %v2678
    %v2680 = vlaneseq
    %v2681 = vshrl.u32 %v2680, 7
    %v2682 = vsub.s32 %v2679, %v2681
    %v2683 = vrot.slane %v2663, %v2682
    %v2685 = vunpack.c.l.s4 1966171168
    %v2686 = vunpack.c.0.s8 %v2685
    %v2687 = vlaneseq
    %v2688 = vshrl.u32 %v2687, 7
    %v2689 = vsub.s32 %v2686, %v2688
    %v2690 = vrot.slane %v2664, %v2689
    %v2692 = vunpack.c.l.s4 1966171168
    %v2693 = vunpack.c.0.s8 %v2692
    %v2694 = vlaneseq
    %v2695 = vshrl.u32 %v2694, 7
    %v2696 = vsub.s32 %v2693, %v2695
    %v2697 = vrot.slane %v2665, %v2696
    %v2699 = vunpack.c.l.s4 1966171168
    %v2700 = vunpack.c.0.s8 %v2699
    %v2701 = vlaneseq
    %v2702 = vshrl.u32 %v2701, 7
    %v2703 = vsub.s32 %v2700, %v2702
    %v2704 = vrot.slane %v2666, %v2703
    %v2706 = vunpack.c.l.s4 1966171168
    %v2707 = vunpack.c.0.s8 %v2706
    %v2708 = vlaneseq
    %v2709 = vshrl.u32 %v2708, 7
    %v2710 = vsub.s32 %v2707, %v2709
    %v2711 = vrot.slane %v2667, %v2710
    %v2713 = vunpack.c.l.s4 1966171168
    %v2714 = vunpack.c.0.s8 %v2713
    %v2715 = vlaneseq
    %v2716 = vshrl.u32 %v2715, 7
    %v2717 = vsub.s32 %v2714, %v2716
    %v2718 = vrot.slane %v2668, %v2717
    %v2720 = vunpack.c.l.s4 1966171168
    %v2721 = vunpack.c.0.s8 %v2720
    %v2722 = vlaneseq
    %v2723 = vshrl.u32 %v2722, 7
    %v2724 = vsub.s32 %v2721, %v2723
    %v2725 = vrot.slane %v2669, %v2724
    %v2726 = vcombine.low %v2676, %v2690
    %v2727 = vcombine.high %v2676, %v2690
    %v2728 = vcombine.low %v2683, %v2697
    %v2729 = vcombine.high %v2683, %v2697
    %v2730 = vcombine.low %v2704, %v2718
    %v2731 = vcombine.high %v2704, %v2718
    %v2732 = vcombine.low %v2711, %v2725
    %v2733 = vcombine.high %v2711, %v2725
    %v2735 = vunpack.c.l.s4 1966171168
    %v2736 = vunpack.c.0.s8 %v2735
    %v2737 = vlaneseq
    %v2738 = vshrl.u32 %v2737, 7
    %v2739 = vsub.s32 %v2736, %v2738
    %v2740 = vrot.slane %v2726, %v2739
    %v2742 = vunpack.c.l.s4 1966171168
    %v2743 = vunpack.c.0.s8 %v2742
    %v2744 = vlaneseq
    %v2745 = vshrl.u32 %v2744, 7
    %v2746 = vsub.s32 %v2743, %v2745
    %v2747 = vrot.slane %v2728, %v2746
    %v2749 = vunpack.c.l.s4 1966171168
    %v2750 = vunpack.c.0.s8 %v2749
    %v2751 = vlaneseq
    %v2752 = vshrl.u32 %v2751, 7
    %v2753 = vsub.s32 %v2750, %v2752
    %v2754 = vrot.slane %v2727, %v2753
    %v2756 = vunpack.c.l.s4 1966171168
    %v2757 = vunpack.c.0.s8 %v2756
    %v2758 = vlaneseq
    %v2759 = vshrl.u32 %v2758, 7
    %v2760 = vsub.s32 %v2757, %v2759
    %v2761 = vrot.slane %v2729, %v2760
    %v2763 = vunpack.c.l.s4 1966171168
    %v2764 = vunpack.c.0.s8 %v2763
    %v2765 = vlaneseq
    %v2766 = vshrl.u32 %v2765, 7
    %v2767 = vsub.s32 %v2764, %v2766
    %v2768 = vrot.slane %v2730, %v2767
    %v2770 = vunpack.c.l.s4 1966171168
    %v2771 = vunpack.c.0.s8 %v2770
    %v2772 = vlaneseq
    %v2773 = vshrl.u32 %v2772, 7
    %v2774 = vsub.s32 %v2771, %v2773
    %v2775 = vrot.slane %v2732, %v2774
    %v2777 = vunpack.c.l.s4 1966171168
    %v2778 = vunpack.c.0.s8 %v2777
    %v2779 = vlaneseq
    %v2780 = vshrl.u32 %v2779, 7
    %v2781 = vsub.s32 %v2778, %v2780
    %v2782 = vrot.slane %v2731, %v2781
    %v2784 = vunpack.c.l.s4 1966171168
    %v2785 = vunpack.c.0.s8 %v2784
    %v2786 = vlaneseq
    %v2787 = vshrl.u32 %v2786, 7
    %v2788 = vsub.s32 %v2785, %v2787
    %v2789 = vrot.slane %v2733, %v2788
    %v2790 = vcombine.low %v2740, %v2768
    %v2791 = vcombine.high %v2740, %v2768
    %v2792 = vcombine.low %v2747, %v2775
    %v2793 = vcombine.high %v2747, %v2775
    %v2794 = vcombine.low %v2754, %v2782
    %v2795 = vcombine.high %v2754, %v2782
    %v2796 = vcombine.low %v2761, %v2789
    %v2797 = vcombine.high %v2761, %v2789
    %v2798 = vcombine.low %v2343, %v2346
    %v2799 = vcombine.high %v2343, %v2346
    %v2800 = vcombine.low %v2344, %v2347
    %v2801 = vcombine.high %v2344, %v2347
    %v2802 = vcombine.low %v2345, %v2617
    %v2803 = vcombine.high %v2345, %v2617
    %v2804 = vcombine.low %v2620, %v2618
    %v2805 = vcombine.high %v2620, %v2618
    %v2807 = vunpack.c.l.s4 1966171168
    %v2808 = vunpack.c.0.s8 %v2807
    %v2809 = vlaneseq
    %v2810 = vshrl.u32 %v2809, 7
    %v2811 = vsub.s32 %v2808, %v2810
    %v2812 = vrot.slane %v2798, %v2811
    %v2814 = vunpack.c.l.s4 1966171168
    %v2815 = vunpack.c.0.s8 %v2814
    %v2816 = vlaneseq
    %v2817 = vshrl.u32 %v2816, 7
    %v2818 = vsub.s32 %v2815, %v2817
    %v2819 = vrot.slane %v2799, %v2818
    %v2821 = vunpack.c.l.s4 1966171168
    %v2822 = vunpack.c.0.s8 %v2821
    %v2823 = vlaneseq
    %v2824 = vshrl.u32 %v2823, 7
    %v2825 = vsub.s32 %v2822, %v2824
    %v2826 = vrot.slane %v2800, %v2825
    %v2828 = vunpack.c.l.s4 1966171168
    %v2829 = vunpack.c.0.s8 %v2828
    %v2830 = vlaneseq
    %v2831 = vshrl.u32 %v2830, 7
    %v2832 = vsub.s32 %v2829, %v2831
    %v2833 = vrot.slane %v2801, %v2832
    %v2835 = vunpack.c.l.s4 1966171168
    %v2836 = vunpack.c.0.s8 %v2835
    %v2837 = vlaneseq
    %v2838 = vshrl.u32 %v2837, 7
    %v2839 = vsub.s32 %v2836, %v2838
    %v2840 = vrot.slane %v2802, %v2839
    %v2842 = vunpack.c.l.s4 1966171168
    %v2843 = vunpack.c.0.s8 %v2842
    %v2844 = vlaneseq
    %v2845 = vshrl.u32 %v2844, 7
    %v2846 = vsub.s32 %v2843, %v2845
    %v2847 = vrot.slane %v2803, %v2846
    %v2849 = vunpack.c.l.s4 1966171168
    %v2850 = vunpack.c.0.s8 %v2849
    %v2851 = vlaneseq
    %v2852 = vshrl.u32 %v2851, 7
    %v2853 = vsub.s32 %v2850, %v2852
    %v2854 = vrot.slane %v2804, %v2853
    %v2856 = vunpack.c.l.s4 1966171168
    %v2857 = vunpack.c.0.s8 %v2856
    %v2858 = vlaneseq
    %v2859 = vshrl.u32 %v2858, 7
    %v2860 = vsub.s32 %v2857, %v2859
    %v2861 = vrot.slane %v2805, %v2860
    %v2862 = vcombine.low %v2812, %v2826
    %v2863 = vcombine.high %v2812, %v2826
    %v2864 = vcombine.low %v2819, %v2833
    %v2865 = vcombine.high %v2819, %v2833
    %v2866 = vcombine.low %v2840, %v2854
    %v2867 = vcombine.high %v2840, %v2854
    %v2868 = vcombine.low %v2847, %v2861
    %v2869 = vcombine.high %v2847, %v2861
    %v2871 = vunpack.c.l.s4 1966171168
    %v2872 = vunpack.c.0.s8 %v2871
    %v2873 = vlaneseq
    %v2874 = vshrl.u32 %v2873, 7
    %v2875 = vsub.s32 %v2872, %v2874
    %v2876 = vrot.slane %v2862, %v2875
    %v2878 = vunpack.c.l.s4 1966171168
    %v2879 = vunpack.c.0.s8 %v2878
    %v2880 = vlaneseq
    %v2881 = vshrl.u32 %v2880, 7
    %v2882 = vsub.s32 %v2879, %v2881
    %v2883 = vrot.slane %v2864, %v2882
    %v2885 = vunpack.c.l.s4 1966171168
    %v2886 = vunpack.c.0.s8 %v2885
    %v2887 = vlaneseq
    %v2888 = vshrl.u32 %v2887, 7
    %v2889 = vsub.s32 %v2886, %v2888
    %v2890 = vrot.slane %v2863, %v2889
    %v2892 = vunpack.c.l.s4 1966171168
    %v2893 = vunpack.c.0.s8 %v2892
    %v2894 = vlaneseq
    %v2895 = vshrl.u32 %v2894, 7
    %v2896 = vsub.s32 %v2893, %v2895
    %v2897 = vrot.slane %v2865, %v2896
    %v2899 = vunpack.c.l.s4 1966171168
    %v2900 = vunpack.c.0.s8 %v2899
    %v2901 = vlaneseq
    %v2902 = vshrl.u32 %v2901, 7
    %v2903 = vsub.s32 %v2900, %v2902
    %v2904 = vrot.slane %v2866, %v2903
    %v2906 = vunpack.c.l.s4 1966171168
    %v2907 = vunpack.c.0.s8 %v2906
    %v2908 = vlaneseq
    %v2909 = vshrl.u32 %v2908, 7
    %v2910 = vsub.s32 %v2907, %v2909
    %v2911 = vrot.slane %v2868, %v2910
    %v2913 = vunpack.c.l.s4 1966171168
    %v2914 = vunpack.c.0.s8 %v2913
    %v2915 = vlaneseq
    %v2916 = vshrl.u32 %v2915, 7
    %v2917 = vsub.s32 %v2914, %v2916
    %v2918 = vrot.slane %v2867, %v2917
    %v2920 = vunpack.c.l.s4 1966171168
    %v2921 = vunpack.c.0.s8 %v2920
    %v2922 = vlaneseq
    %v2923 = vshrl.u32 %v2922, 7
    %v2924 = vsub.s32 %v2921, %v2923
    %v2925 = vrot.slane %v2869, %v2924
    %v2926 = vcombine.low %v2876, %v2904
    %v2927 = vcombine.high %v2876, %v2904
    %v2928 = vcombine.low %v2883, %v2911
    %v2929 = vcombine.high %v2883, %v2911
    %v2930 = vcombine.low %v2890, %v2918
    %v2931 = vcombine.high %v2890, %v2918
    %v2932 = vcombine.low %v2897, %v2925
    %v2933 = vcombine.high %v2897, %v2925
    %v2934 = vcombine.low %v2371, %v2385
    %v2935 = vcombine.low %v2386, %v2387
    %v2936 = vcombine.low %v2378, %v2645
    %v2937 = vcombine.low %v2659, %v2660
    %v2939 = vunpack.c.l.s4 1966171168
    %v2940 = vunpack.c.0.s8 %v2939
    %v2941 = vlaneseq
    %v2942 = vshrl.u32 %v2941, 7
    %v2943 = vsub.s32 %v2940, %v2942
    %v2944 = vrot.slane %v2934, %v2943
    %v2946 = vunpack.c.l.s4 1966171168
    %v2947 = vunpack.c.0.s8 %v2946
    %v2948 = vlaneseq
    %v2949 = vshrl.u32 %v2948, 7
    %v2950 = vsub.s32 %v2947, %v2949
    %v2951 = vrot.slane %v2935, %v2950
    %v2953 = vunpack.c.l.s4 1966171168
    %v2954 = vunpack.c.0.s8 %v2953
    %v2955 = vlaneseq
    %v2956 = vshrl.u32 %v2955, 7
    %v2957 = vsub.s32 %v2954, %v2956
    %v2958 = vrot.slane %v2936, %v2957
    %v2960 = vunpack.c.l.s4 1966171168
    %v2961 = vunpack.c.0.s8 %v2960
    %v2962 = vlaneseq
    %v2963 = vshrl.u32 %v2962, 7
    %v2964 = vsub.s32 %v2961, %v2963
    %v2965 = vrot.slane %v2937, %v2964
    %v2966 = vcombine.low %v2944, %v2951
    %v2967 = vcombine.high %v2944, %v2951
    %v2968 = vcombine.low %v2958, %v2965
    %v2969 = vcombine.high %v2958, %v2965
    %v2971 = vunpack.c.l.s4 1966171168
    %v2972 = vunpack.c.0.s8 %v2971
    %v2973 = vlaneseq
    %v2974 = vshrl.u32 %v2973, 7
    %v2975 = vsub.s32 %v2972, %v2974
    %v2976 = vrot.slane %v2966, %v2975
    %v2978 = vunpack.c.l.s4 1966171168
    %v2979 = vunpack.c.0.s8 %v2978
    %v2980 = vlaneseq
    %v2981 = vshrl.u32 %v2980, 7
    %v2982 = vsub.s32 %v2979, %v2981
    %v2983 = vrot.slane %v2967, %v2982
    %v2985 = vunpack.c.l.s4 1966171168
    %v2986 = vunpack.c.0.s8 %v2985
    %v2987 = vlaneseq
    %v2988 = vshrl.u32 %v2987, 7
    %v2989 = vsub.s32 %v2986, %v2988
    %v2990 = vrot.slane %v2968, %v2989
    %v2992 = vunpack.c.l.s4 1966171168
    %v2993 = vunpack.c.0.s8 %v2992
    %v2994 = vlaneseq
    %v2995 = vshrl.u32 %v2994, 7
    %v2996 = vsub.s32 %v2993, %v2995
    %v2997 = vrot.slane %v2969, %v2996
    %v2998 = vcombine.low %v2976, %v2990
    %v2999 = vcombine.low %v2983, %v2997
    %v3000 = vcombine.low %v2504, %v2502
    %v3001 = vcombine.high %v2504, %v2502
    %v3003 = vunpack.c.l.s4 1966171168
    %v3004 = vunpack.c.0.s8 %v3003
    %v3005 = vlaneseq
    %v3006 = vshrl.u32 %v3005, 7
    %v3007 = vsub.s32 %v3004, %v3006
    %v3008 = vrot.slane %v3000, %v3007
    %v3010 = vunpack.c.l.s4 1966171168
    %v3011 = vunpack.c.0.s8 %v3010
    %v3012 = vlaneseq
    %v3013 = vshrl.u32 %v3012, 7
    %v3014 = vsub.s32 %v3011, %v3013
    %v3015 = vrot.slane %v3001, %v3014
    %v3016 = vcombine.high %v3008, %v3008
    %v3017 = vcombine.high %v3015, %v3015
    %v3019 = vunpack.c.l.s4 1966171168
    %v3020 = vunpack.c.0.s8 %v3019
    %v3021 = vlaneseq
    %v3022 = vshrl.u32 %v3021, 7
    %v3023 = vsub.s32 %v3020, %v3022
    %v3024 = vrot.slane %v3008, %v3023
    %v3026 = vunpack.c.l.s4 1966171168
    %v3027 = vunpack.c.0.s8 %v3026
    %v3028 = vlaneseq
    %v3029 = vshrl.u32 %v3028, 7
    %v3030 = vsub.s32 %v3027, %v3029
    %v3031 = vrot.slane %v3015, %v3030
    %v3033 = vunpack.c.l.s4 1966171168
    %v3034 = vunpack.c.0.s8 %v3033
    %v3035 = vlaneseq
    %v3036 = vshrl.u32 %v3035, 7
    %v3037 = vsub.s32 %v3034, %v3036
    %v3038 = vrot.slane %v3016, %v3037
    %v3040 = vunpack.c.l.s4 1966171168
    %v3041 = vunpack.c.0.s8 %v3040
    %v3042 = vlaneseq
    %v3043 = vshrl.u32 %v3042, 7
    %v3044 = vsub.s32 %v3041, %v3043
    %v3045 = vrot.slane %v3017, %v3044
    %v3046 = vcombine.high %v3024, %v3024
    %v3047 = vcombine.high %v3031, %v3031
    %v3048 = vcombine.high %v3038, %v3038
    %v3049 = vcombine.high %v3045, %v3045
    %v3050 = vcombine.low %v2621, %v2619
    %v3051 = vcombine.high %v2621, %v2619
    %v3053 = vunpack.c.l.s4 1966171168
    %v3054 = vunpack.c.0.s8 %v3053
    %v3055 = vlaneseq
    %v3056 = vshrl.u32 %v3055, 7
    %v3057 = vsub.s32 %v3054, %v3056
    %v3058 = vrot.slane %v3050, %v3057
    %v3060 = vunpack.c.l.s4 1966171168
    %v3061 = vunpack.c.0.s8 %v3060
    %v3062 = vlaneseq
    %v3063 = vshrl.u32 %v3062, 7
    %v3064 = vsub.s32 %v3061, %v3063
    %v3065 = vrot.slane %v3051, %v3064
    %v3066 = vcombine.high %v3058, %v3058
    %v3067 = vcombine.high %v3065, %v3065
    %v3069 = vunpack.c.l.s4 1966171168
    %v3070 = vunpack.c.0.s8 %v3069
    %v3071 = vlaneseq
    %v3072 = vshrl.u32 %v3071, 7
    %v3073 = vsub.s32 %v3070, %v3072
    %v3074 = vrot.slane %v3058, %v3073
    %v3076 = vunpack.c.l.s4 1966171168
    %v3077 = vunpack.c.0.s8 %v3076
    %v3078 = vlaneseq
    %v3079 = vshrl.u32 %v3078, 7
    %v3080 = vsub.s32 %v3077, %v3079
    %v3081 = vrot.slane %v3065, %v3080
    %v3083 = vunpack.c.l.s4 1966171168
    %v3084 = vunpack.c.0.s8 %v3083
    %v3085 = vlaneseq
    %v3086 = vshrl.u32 %v3085, 7
    %v3087 = vsub.s32 %v3084, %v3086
    %v3088 = vrot.slane %v3066, %v3087
    %v3090 = vunpack.c.l.s4 1966171168
    %v3091 = vunpack.c.0.s8 %v3090
    %v3092 = vlaneseq
    %v3093 = vshrl.u32 %v3092, 7
    %v3094 = vsub.s32 %v3091, %v3093
    %v3095 = vrot.slane %v3067, %v3094
    %v3096 = vcombine.high %v3074, %v3074
    %v3097 = vcombine.high %v3081, %v3081
    %v3098 = vcombine.high %v3088, %v3088
    %v3099 = vcombine.high %v3095, %v3095
    %v3100 = vcombine.low %v2661, %v2652
    %v3102 = vunpack.c.l.s4 1966171168
    %v3103 = vunpack.c.0.s8 %v3102
    %v3104 = vlaneseq
    %v3105 = vshrl.u32 %v3104, 7
    %v3106 = vsub.s32 %v3103, %v3105
    %v3107 = vrot.slane %v3100, %v3106
    %v3108 = vcombine.high %v3107, %v3107
    %v3110 = vunpack.c.l.s4 1966171168
    %v3111 = vunpack.c.0.s8 %v3110
    %v3112 = vlaneseq
    %v3113 = vshrl.u32 %v3112, 7
    %v3114 = vsub.s32 %v3111, %v3113
    %v3115 = vrot.slane %v3107, %v3114
    %v3117 = vunpack.c.l.s4 1966171168
    %v3118 = vunpack.c.0.s8 %v3117
    %v3119 = vlaneseq
    %v3120 = vshrl.u32 %v3119, 7
    %v3121 = vsub.s32 %v3118, %v3120
    %v3122 = vrot.slane %v3108, %v3121
    %v3159 = vpack.c.bf16 %v3024, %v2790
    %v3160 = vpack.c.bf16 %v3038, %v2794
    %v3161 = vpack.c.bf16 %v3046, %v2791
    %v3162 = vpack.c.bf16 %v3048, %v2795
    %v3163 = vpack.c.bf16 %v3031, %v2792
    %v3164 = vpack.c.bf16 %v3045, %v2796
    %v3165 = vpack.c.bf16 %v3047, %v2793
    %v3166 = vpack.c.bf16 %v3049, %v2797
    %v3167 = vpack.c.bf16 %v3074, %v2926
    %v3168 = vpack.c.bf16 %v3088, %v2930
    %v3169 = vpack.c.bf16 %v3096, %v2927
    %v3170 = vpack.c.bf16 %v3098, %v2931
    %v3171 = vpack.c.bf16 %v3081, %v2928
    %v3172 = vpack.c.bf16 %v3095, %v2932
    %v3173 = vpack.c.bf16 %v3097, %v2929
    %v3174 = vpack.c.bf16 %v3099, %v2933
    %v3175 = vpack.c.bf16 %v3115, %v2998
    %v3176 = vpack.c.bf16 %v3122, %v2999
    %v3177 = vld [vmem:[#allocation2] sm:$0xff]
    %v3178 = vld [vmem:[#allocation2 + $0x8] sm:$0xff]
    %v3179 = vld [vmem:[#allocation2 + $0x10] sm:$0xff]
    %v3180 = vld [vmem:[#allocation2 + $0x18] sm:$0xff]
    %v3181 = vld [vmem:[#allocation2 + $0x20] sm:$0xff]
    %v3182 = vld [vmem:[#allocation2 + $0x28] sm:$0xff]
    %v3183 = vld [vmem:[#allocation2 + $0x30] sm:$0xff]
    %v3184 = vld [vmem:[#allocation2 + $0x38] sm:$0xff]
    %v3185 = vld [vmem:[#allocation2 + $0x40] sm:$0xff]
    %v3186 = vld [vmem:[#allocation2 + $0x48] sm:$0xff]
    %v3187 = vld [vmem:[#allocation2 + $0x50] sm:$0xff]
    %v3188 = vld [vmem:[#allocation2 + $0x58] sm:$0xff]
    %v3189 = vld [vmem:[#allocation2 + $0x60] sm:$0xff]
    %v3190 = vld [vmem:[#allocation2 + $0x68] sm:$0xff]
    %v3191 = vld [vmem:[#allocation2 + $0x70] sm:$0xff]
    %v3192 = vld [vmem:[#allocation2 + $0x78] sm:$0xff]
    %v3193 = vld [vmem:[#allocation2 + $0x80] sm:$0xff]
    %v3194 = vld [vmem:[#allocation2 + $0x88] sm:$0xff]
    %v3195 = vld [vmem:[#allocation2 + $0x90] sm:$0xff]
    %v3196 = vld [vmem:[#allocation2 + $0x98] sm:$0xff]
    %v3197 = vld [vmem:[#allocation2 + $0xa0] sm:$0xff]
    %v3198 = vld [vmem:[#allocation2 + $0xa8] sm:$0xff]
    %v3199 = vld [vmem:[#allocation2 + $0xb0] sm:$0xff]
    %v3200 = vld [vmem:[#allocation2 + $0xb8] sm:$0xff]
    %v3201 = vld [vmem:[#allocation2 + $0xc0] sm:$0xff]
    %v3202 = vld [vmem:[#allocation2 + $0xc8] sm:$0xff]
    %v3203 = vld [vmem:[#allocation2 + $0xd0] sm:$0xff]
    %v3204 = vld [vmem:[#allocation2 + $0xd8] sm:$0xff]
    %v3205 = vld [vmem:[#allocation2 + $0xe0] sm:$0xff]
    %v3206 = vld [vmem:[#allocation2 + $0xe8] sm:$0xff]
    %v3207 = vld [vmem:[#allocation2 + $0xf0] sm:$0xff]
    %v3208 = vld [vmem:[#allocation2 + $0xf8] sm:$0xff]
    %v3209 = vld [vmem:[#allocation2 + $0x100] sm:$0xff]
    %v3210 = vld [vmem:[#allocation2 + $0x108] sm:$0xff]
    %v3211 = vld [vmem:[#allocation2 + $0x110] sm:$0xff]
    %v3212 = vld [vmem:[#allocation2 + $0x118] sm:$0xff]
    %v3213 = vld [vmem:[#allocation2 + $0x120] sm:$0xff]
    %v3214 = vld [vmem:[#allocation2 + $0x128] sm:$0xff]
    %v3215 = vld [vmem:[#allocation2 + $0x130] sm:$0xff]
    %v3216 = vld [vmem:[#allocation2 + $0x138] sm:$0xff]
    %v3217 = vld [vmem:[#allocation2 + $0x140] sm:$0xff]
    %v3218 = vld [vmem:[#allocation2 + $0x148] sm:$0xff]
    %v3219 = vld [vmem:[#allocation2 + $0x150] sm:$0xff]
    %v3220 = vld [vmem:[#allocation2 + $0x158] sm:$0xff]
    %v3221 = vld [vmem:[#allocation2 + $0x160] sm:$0xff]
    %v3222 = vld [vmem:[#allocation2 + $0x168] sm:$0xff]
    %v3223 = vld [vmem:[#allocation2 + $0x170] sm:$0xff]
    %v3224 = vld [vmem:[#allocation2 + $0x178] sm:$0xff]
    %v3225 = vld [vmem:[#allocation2 + $0x180] sm:$0xff]
    %v3226 = vld [vmem:[#allocation2 + $0x188] sm:$0xff]
    %v3227 = vld [vmem:[#allocation2 + $0x190] sm:$0xff]
    %v3228 = vld [vmem:[#allocation2 + $0x198] sm:$0xff]
    %v3229 = vld [vmem:[#allocation2 + $0x1a0] sm:$0xff]
    %v3230 = vld [vmem:[#allocation2 + $0x1a8] sm:$0xff]
    %v3231 = vld [vmem:[#allocation2 + $0x1b0] sm:$0xff]
    %v3232 = vld [vmem:[#allocation2 + $0x1b8] sm:$0xff]
    %v3233 = vld [vmem:[#allocation2 + $0x1c0] sm:$0xff]
    %v3234 = vld [vmem:[#allocation2 + $0x1c8] sm:$0xff]
    %v3235 = vld [vmem:[#allocation2 + $0x1d0] sm:$0xff]
    %v3236 = vld [vmem:[#allocation2 + $0x1d8] sm:$0xff]
    %v3237 = vld [vmem:[#allocation2 + $0x1e0] sm:$0xff]
    %v3238 = vld [vmem:[#allocation2 + $0x1e8] sm:$0xff]
    %v3239 = vld [vmem:[#allocation2 + $0x1f0] sm:$0xff]
    %v3240 = vld [vmem:[#allocation2 + $0x1f8] sm:$0xff]
    %v3241 = vld [vmem:[#allocation2 + $0x200] sm:$0xff]
    %v3242 = vld [vmem:[#allocation2 + $0x208] sm:$0xff]
    %v3243 = vld [vmem:[#allocation2 + $0x210] sm:$0xff]
    %v3244 = vld [vmem:[#allocation2 + $0x218] sm:$0xff]
    %v3245 = vld [vmem:[#allocation2 + $0x220] sm:$0xff]
    %v3246 = vld [vmem:[#allocation2 + $0x228] sm:$0xff]
    %v3247 = vld [vmem:[#allocation2 + $0x230] sm:$0xff]
    %v3248 = vld [vmem:[#allocation2 + $0x238] sm:$0xff]
    %v3249 = vld [vmem:[#allocation2 + $0x240] sm:$0xff]
    %v3250 = vld [vmem:[#allocation2 + $0x248] sm:$0xff]
    %v3251 = vld [vmem:[#allocation2 + $0x250] sm:$0xff]
    %v3252 = vld [vmem:[#allocation2 + $0x258] sm:$0xff]
    %v3253 = vld [vmem:[#allocation2 + $0x260] sm:$0xff]
    %v3254 = vld [vmem:[#allocation2 + $0x268] sm:$0xff]
    %v3255 = vld [vmem:[#allocation2 + $0x270] sm:$0xff]
    %v3256 = vld [vmem:[#allocation2 + $0x278] sm:$0xff]
    %v3257 = vld [vmem:[#allocation2 + $0x280] sm:$0xff]
    %v3258 = vld [vmem:[#allocation2 + $0x288] sm:$0xff]
    %v3259 = vld [vmem:[#allocation2 + $0x290] sm:$0xff]
    %v3260 = vld [vmem:[#allocation2 + $0x298] sm:$0xff]
    %v3261 = vld [vmem:[#allocation2 + $0x2a0] sm:$0xff]
    %v3262 = vld [vmem:[#allocation2 + $0x2a8] sm:$0xff]
    %v3263 = vld [vmem:[#allocation2 + $0x2b0] sm:$0xff]
    %v3264 = vld [vmem:[#allocation2 + $0x2b8] sm:$0xff]
    %v3265 = vld [vmem:[#allocation2 + $0x2c0] sm:$0xff]
    %v3266 = vld [vmem:[#allocation2 + $0x2c8] sm:$0xff]
    %v3267 = vld [vmem:[#allocation2 + $0x2d0] sm:$0xff]
    %v3268 = vld [vmem:[#allocation2 + $0x2d8] sm:$0xff]
    %v3269 = vld [vmem:[#allocation2 + $0x2e0] sm:$0xff]
    %v3270 = vld [vmem:[#allocation2 + $0x2e8] sm:$0xff]
    %v3271 = vld [vmem:[#allocation2 + $0x2f0] sm:$0xff]
    %v3272 = vld [vmem:[#allocation2 + $0x2f8] sm:$0xff]
    %v3273 = vld [vmem:[#allocation2 + $0x300] sm:$0xff]
    %v3274 = vld [vmem:[#allocation2 + $0x308] sm:$0xff]
    %v3275 = vld [vmem:[#allocation2 + $0x310] sm:$0xff]
    %v3276 = vld [vmem:[#allocation2 + $0x318] sm:$0xff]
    %v3277 = vld [vmem:[#allocation2 + $0x320] sm:$0xff]
    %v3278 = vld [vmem:[#allocation2 + $0x328] sm:$0xff]
    %v3279 = vld [vmem:[#allocation2 + $0x330] sm:$0xff]
    %v3280 = vld [vmem:[#allocation2 + $0x338] sm:$0xff]
    %v3281 = vld [vmem:[#allocation2 + $0x340] sm:$0xff]
    %v3282 = vld [vmem:[#allocation2 + $0x348] sm:$0xff]
    %v3283 = vld [vmem:[#allocation2 + $0x350] sm:$0xff]
    %v3284 = vld [vmem:[#allocation2 + $0x358] sm:$0xff]
    %v3285 = vld [vmem:[#allocation2 + $0x360] sm:$0xff]
    %v3286 = vld [vmem:[#allocation2 + $0x368] sm:$0xff]
    %v3287 = vld [vmem:[#allocation2 + $0x370] sm:$0xff]
    %v3288 = vld [vmem:[#allocation2 + $0x378] sm:$0xff]
    %v3289 = vld [vmem:[#allocation2 + $0x380] sm:$0xff]
    %v3290 = vld [vmem:[#allocation2 + $0x388] sm:$0xff]
    %v3291 = vld [vmem:[#allocation2 + $0x390] sm:$0xff]
    %v3292 = vld [vmem:[#allocation2 + $0x398] sm:$0xff]
    %v3293 = vld [vmem:[#allocation2 + $0x3a0] sm:$0xff]
    %v3294 = vld [vmem:[#allocation2 + $0x3a8] sm:$0xff]
    %v3295 = vld [vmem:[#allocation2 + $0x3b0] sm:$0xff]
    %v3296 = vld [vmem:[#allocation2 + $0x3b8] sm:$0xff]
    %v3297 = vld [vmem:[#allocation2 + $0x3c0] sm:$0xff]
    %v3298 = vld [vmem:[#allocation2 + $0x3c8] sm:$0xff]
    %v3299 = vld [vmem:[#allocation2 + $0x3d0] sm:$0xff]
    %v3300 = vld [vmem:[#allocation2 + $0x3d8] sm:$0xff]
    %v3301 = vld [vmem:[#allocation2 + $0x3e0] sm:$0xff]
    %v3302 = vld [vmem:[#allocation2 + $0x3e8] sm:$0xff]
    %v3303 = vld [vmem:[#allocation2 + $0x3f0] sm:$0xff]
    %v3304 = vld [vmem:[#allocation2 + $0x3f8] sm:$0xff]
    %v3305 = vld [vmem:[#allocation2 + $0x400] sm:$0xff]
    %v3306 = vld [vmem:[#allocation2 + $0x408] sm:$0xff]
    %v3307 = vld [vmem:[#allocation2 + $0x410] sm:$0xff]
    %v3308 = vld [vmem:[#allocation2 + $0x418] sm:$0xff]
    %v3309 = vld [vmem:[#allocation2 + $0x420] sm:$0xff]
    %v3310 = vld [vmem:[#allocation2 + $0x428] sm:$0xff]
    %v3311 = vld [vmem:[#allocation2 + $0x430] sm:$0xff]
    %v3312 = vld [vmem:[#allocation2 + $0x438] sm:$0xff]
    %v3313 = vld [vmem:[#allocation2 + $0x440] sm:$0xff]
    %v3314 = vld [vmem:[#allocation2 + $0x448] sm:$0xff]
    %v3315 = vld [vmem:[#allocation2 + $0x450] sm:$0xff]
    %v3316 = vld [vmem:[#allocation2 + $0x458] sm:$0xff]
    %v3317 = vld [vmem:[#allocation2 + $0x460] sm:$0xff]
    %v3318 = vld [vmem:[#allocation2 + $0x468] sm:$0xff]
    %v3319 = vld [vmem:[#allocation2 + $0x470] sm:$0xff]
    %v3320 = vld [vmem:[#allocation2 + $0x478] sm:$0xff]
    %v3321 = vld [vmem:[#allocation2 + $0x480] sm:$0xff]
    %v3322 = vld [vmem:[#allocation2 + $0x488] sm:$0xff]
    %v3323 = vld [vmem:[#allocation2 + $0x490] sm:$0xff]
    %v3324 = vld [vmem:[#allocation2 + $0x498] sm:$0xff]
    %v3325 = vld [vmem:[#allocation2 + $0x4a0] sm:$0xff]
    %v3326 = vld [vmem:[#allocation2 + $0x4a8] sm:$0xff]
    %v3327 = vld [vmem:[#allocation2 + $0x4b0] sm:$0xff]
    %v3328 = vld [vmem:[#allocation2 + $0x4b8] sm:$0xff]
    %v3329 = vld [vmem:[#allocation2 + $0x4c0] sm:$0xff]
    %v3330 = vld [vmem:[#allocation2 + $0x4c8] sm:$0xff]
    %v3331 = vld [vmem:[#allocation2 + $0x4d0] sm:$0xff]
    %v3332 = vld [vmem:[#allocation2 + $0x4d8] sm:$0xff]
    %v3333 = vld [vmem:[#allocation2 + $0x4e0] sm:$0xff]
    %v3334 = vld [vmem:[#allocation2 + $0x4e8] sm:$0xff]
    %v3335 = vld [vmem:[#allocation2 + $0x4f0] sm:$0xff]
    %v3336 = vld [vmem:[#allocation2 + $0x4f8] sm:$0xff]
    %v3337 = vld [vmem:[#allocation2 + $0x500] sm:$0xff]
    %v3338 = vld [vmem:[#allocation2 + $0x508] sm:$0xff]
    %v3339 = vld [vmem:[#allocation2 + $0x510] sm:$0xff]
    %v3340 = vld [vmem:[#allocation2 + $0x518] sm:$0xff]
    %v3341 = vld [vmem:[#allocation2 + $0x520] sm:$0xff]
    %v3342 = vld [vmem:[#allocation2 + $0x528] sm:$0xff]
    %v3343 = vld [vmem:[#allocation2 + $0x530] sm:$0xff]
    %v3344 = vld [vmem:[#allocation2 + $0x538] sm:$0xff]
    %v3345 = vld [vmem:[#allocation2 + $0x540] sm:$0xff]
    %v3346 = vld [vmem:[#allocation2 + $0x548] sm:$0xff]
    %v3347 = vld [vmem:[#allocation2 + $0x550] sm:$0xff]
    %v3348 = vld [vmem:[#allocation2 + $0x558] sm:$0xff]
    %v3349 = vld [vmem:[#allocation2 + $0x560] sm:$0xff]
    %v3350 = vld [vmem:[#allocation2 + $0x568] sm:$0xff]
    %v3351 = vld [vmem:[#allocation2 + $0x570] sm:$0xff]
    %v3352 = vld [vmem:[#allocation2 + $0x578] sm:$0xff]
    %v3353 = vld [vmem:[#allocation2 + $0x580] sm:$0xff]
    %v3354 = vld [vmem:[#allocation2 + $0x588] sm:$0xff]
    %v3355 = vld [vmem:[#allocation2 + $0x590] sm:$0xff]
    %v3356 = vld [vmem:[#allocation2 + $0x598] sm:$0xff]
    %v3357 = vld [vmem:[#allocation2 + $0x5a0] sm:$0xff]
    %v3358 = vld [vmem:[#allocation2 + $0x5a8] sm:$0xff]
    %v3359 = vld [vmem:[#allocation2 + $0x5b0] sm:$0xff]
    %v3360 = vld [vmem:[#allocation2 + $0x5b8] sm:$0xff]
    %v3361 = vld [vmem:[#allocation2 + $0x5c0] sm:$0xff]
    %v3362 = vld [vmem:[#allocation2 + $0x5c8] sm:$0xff]
    %v3363 = vld [vmem:[#allocation2 + $0x5d0] sm:$0xff]
    %v3364 = vld [vmem:[#allocation2 + $0x5d8] sm:$0xff]
    %v3365 = vld [vmem:[#allocation2 + $0x5e0] sm:$0xff]
    %v3366 = vld [vmem:[#allocation2 + $0x5e8] sm:$0xff]
    %v3367 = vld [vmem:[#allocation2 + $0x5f0] sm:$0xff]
    %v3368 = vld [vmem:[#allocation2 + $0x5f8] sm:$0xff]
    %v3369 = vld [vmem:[#allocation2 + $0x600] sm:$0xff]
    %v3370 = vld [vmem:[#allocation2 + $0x608] sm:$0xff]
    %v3371 = vld [vmem:[#allocation2 + $0x610] sm:$0xff]
    %v3372 = vld [vmem:[#allocation2 + $0x618] sm:$0xff]
    %v3373 = vld [vmem:[#allocation2 + $0x620] sm:$0xff]
    %v3374 = vld [vmem:[#allocation2 + $0x628] sm:$0xff]
    %v3375 = vld [vmem:[#allocation2 + $0x630] sm:$0xff]
    %v3376 = vld [vmem:[#allocation2 + $0x638] sm:$0xff]
    %v3377 = vld [vmem:[#allocation2 + $0x640] sm:$0xff]
    %v3378 = vld [vmem:[#allocation2 + $0x648] sm:$0xff]
    %v3379 = vld [vmem:[#allocation2 + $0x650] sm:$0xff]
    %v3380 = vld [vmem:[#allocation2 + $0x658] sm:$0xff]
    %v3381 = vld [vmem:[#allocation2 + $0x660] sm:$0xff]
    %v3382 = vld [vmem:[#allocation2 + $0x668] sm:$0xff]
    %v3383 = vld [vmem:[#allocation2 + $0x670] sm:$0xff]
    %v3384 = vld [vmem:[#allocation2 + $0x678] sm:$0xff]
    %v3385 = vld [vmem:[#allocation2 + $0x680] sm:$0xff]
    %v3386 = vld [vmem:[#allocation2 + $0x688] sm:$0xff]
    %v3387 = vld [vmem:[#allocation2 + $0x690] sm:$0xff]
    %v3388 = vld [vmem:[#allocation2 + $0x698] sm:$0xff]
    %v3389 = vld [vmem:[#allocation2 + $0x6a0] sm:$0xff]
    %v3390 = vld [vmem:[#allocation2 + $0x6a8] sm:$0xff]
    %v3391 = vld [vmem:[#allocation2 + $0x6b0] sm:$0xff]
    %v3392 = vld [vmem:[#allocation2 + $0x6b8] sm:$0xff]
    %v3393 = vld [vmem:[#allocation2 + $0x6c0] sm:$0xff]
    %v3394 = vld [vmem:[#allocation2 + $0x6c8] sm:$0xff]
    %v3395 = vld [vmem:[#allocation2 + $0x6d0] sm:$0xff]
    %v3396 = vld [vmem:[#allocation2 + $0x6d8] sm:$0xff]
    %v3397 = vld [vmem:[#allocation2 + $0x6e0] sm:$0xff]
    %v3398 = vld [vmem:[#allocation2 + $0x6e8] sm:$0xff]
    %v3399 = vld [vmem:[#allocation2 + $0x6f0] sm:$0xff]
    %v3400 = vld [vmem:[#allocation2 + $0x6f8] sm:$0xff]
    %v3401 = vld [vmem:[#allocation2 + $0x700] sm:$0xff]
    %v3402 = vld [vmem:[#allocation2 + $0x708] sm:$0xff]
    %v3403 = vld [vmem:[#allocation2 + $0x710] sm:$0xff]
    %v3404 = vld [vmem:[#allocation2 + $0x718] sm:$0xff]
    %v3405 = vld [vmem:[#allocation2 + $0x720] sm:$0xff]
    %v3406 = vld [vmem:[#allocation2 + $0x728] sm:$0xff]
    %v3407 = vld [vmem:[#allocation2 + $0x730] sm:$0xff]
    %v3408 = vld [vmem:[#allocation2 + $0x738] sm:$0xff]
    %v3409 = vld [vmem:[#allocation2 + $0x740] sm:$0xff]
    %v3410 = vld [vmem:[#allocation2 + $0x748] sm:$0xff]
    %v3411 = vld [vmem:[#allocation2 + $0x750] sm:$0xff]
    %v3412 = vld [vmem:[#allocation2 + $0x758] sm:$0xff]
    %v3413 = vld [vmem:[#allocation2 + $0x760] sm:$0xff]
    %v3414 = vld [vmem:[#allocation2 + $0x768] sm:$0xff]
    %v3415 = vld [vmem:[#allocation2 + $0x770] sm:$0xff]
    %v3416 = vld [vmem:[#allocation2 + $0x778] sm:$0xff]
    %v3417 = vld [vmem:[#allocation2 + $0x780] sm:$0xff]
    %v3418 = vld [vmem:[#allocation2 + $0x788] sm:$0xff]
    %v3419 = vld [vmem:[#allocation2 + $0x790] sm:$0xff]
    %v3420 = vld [vmem:[#allocation2 + $0x798] sm:$0xff]
    %v3421 = vld [vmem:[#allocation2 + $0x7a0] sm:$0xff]
    %v3422 = vld [vmem:[#allocation2 + $0x7a8] sm:$0xff]
    %v3423 = vld [vmem:[#allocation2 + $0x7b0] sm:$0xff]
    %v3424 = vld [vmem:[#allocation2 + $0x7b8] sm:$0xff]
    %v3425 = vld [vmem:[#allocation2 + $0x7c0] sm:$0xff]
    %v3426 = vld [vmem:[#allocation2 + $0x7c8] sm:$0xff]
    %v3427 = vld [vmem:[#allocation2 + $0x7d0] sm:$0xff]
    %v3428 = vld [vmem:[#allocation2 + $0x7d8] sm:$0xff]
    %v3429 = vld [vmem:[#allocation2 + $0x7e0] sm:$0xff]
    %v3430 = vld [vmem:[#allocation2 + $0x7e8] sm:$0xff]
    %v3431 = vld [vmem:[#allocation2 + $0x7f0] sm:$0xff]
    %v3432 = vld [vmem:[#allocation2 + $0x7f8] sm:$0xff]
    %v3433 = vld [vmem:[#allocation2 + $0x800] sm:$0xff]
    %v3434 = vld [vmem:[#allocation2 + $0x808] sm:$0xff]
    %v3435 = vld [vmem:[#allocation2 + $0x810] sm:$0xff]
    %v3436 = vld [vmem:[#allocation2 + $0x818] sm:$0xff]
    %v3437 = vld [vmem:[#allocation2 + $0x820] sm:$0xff]
    %v3438 = vld [vmem:[#allocation2 + $0x828] sm:$0xff]
    %v3439 = vld [vmem:[#allocation2 + $0x830] sm:$0xff]
    %v3440 = vld [vmem:[#allocation2 + $0x838] sm:$0xff]
    %v3441 = vld [vmem:[#allocation2 + $0x840] sm:$0xff]
    %v3442 = vld [vmem:[#allocation2 + $0x848] sm:$0xff]
    %v3443 = vld [vmem:[#allocation2 + $0x850] sm:$0xff]
    %v3444 = vld [vmem:[#allocation2 + $0x858] sm:$0xff]
    %v3445 = vld [vmem:[#allocation2 + $0x860] sm:$0xff]
    %v3446 = vld [vmem:[#allocation2 + $0x868] sm:$0xff]
    %v3447 = vld [vmem:[#allocation2 + $0x870] sm:$0xff]
    %v3448 = vld [vmem:[#allocation2 + $0x878] sm:$0xff]
    %v3449 = vld [vmem:[#allocation2 + $0x880] sm:$0xff]
    %v3450 = vld [vmem:[#allocation2 + $0x888] sm:$0xff]
    %v3451 = vld [vmem:[#allocation2 + $0x890] sm:$0xff]
    %v3452 = vld [vmem:[#allocation2 + $0x898] sm:$0xff]
    %v3453 = vld [vmem:[#allocation2 + $0x8a0] sm:$0xff]
    %v3454 = vld [vmem:[#allocation2 + $0x8a8] sm:$0xff]
    %v3455 = vld [vmem:[#allocation2 + $0x8b0] sm:$0xff]
    %v3456 = vld [vmem:[#allocation2 + $0x8b8] sm:$0xff]
    %v3457 = vld [vmem:[#allocation2 + $0x8c0] sm:$0xff]
    %v3458 = vld [vmem:[#allocation2 + $0x8c8] sm:$0xff]
    %v3459 = vld [vmem:[#allocation2 + $0x8d0] sm:$0xff]
    %v3460 = vld [vmem:[#allocation2 + $0x8d8] sm:$0xff]
    %v3461 = vld [vmem:[#allocation2 + $0x8e0] sm:$0xff]
    %v3462 = vld [vmem:[#allocation2 + $0x8e8] sm:$0xff]
    %v3463 = vld [vmem:[#allocation2 + $0x8f0] sm:$0xff]
    %v3464 = vld [vmem:[#allocation2 + $0x8f8] sm:$0xff]
    %v3465 = vld [vmem:[#allocation2 + $0x900] sm:$0xff]
    %v3466 = vld [vmem:[#allocation2 + $0x908] sm:$0xff]
    %v3467 = vld [vmem:[#allocation2 + $0x910] sm:$0xff]
    %v3468 = vld [vmem:[#allocation2 + $0x918] sm:$0xff]
    %v3469 = vld [vmem:[#allocation2 + $0x920] sm:$0xff]
    %v3470 = vld [vmem:[#allocation2 + $0x928] sm:$0xff]
    %v3471 = vld [vmem:[#allocation2 + $0x930] sm:$0xff]
    %v3472 = vld [vmem:[#allocation2 + $0x938] sm:$0xff]
    %v3473 = vld [vmem:[#allocation2 + $0x940] sm:$0xff]
    %v3474 = vld [vmem:[#allocation2 + $0x948] sm:$0xff]
    %v3475 = vld [vmem:[#allocation2 + $0x950] sm:$0xff]
    %v3476 = vld [vmem:[#allocation2 + $0x958] sm:$0xff]
    %v3477 = vld [vmem:[#allocation2 + $0x960] sm:$0xff]
    %v3478 = vld [vmem:[#allocation2 + $0x968] sm:$0xff]
    %v3479 = vld [vmem:[#allocation2 + $0x970] sm:$0xff]
    %v3480 = vld [vmem:[#allocation2 + $0x978] sm:$0xff]
    %v3481 = vld [vmem:[#allocation2 + $0x980] sm:$0xff]
    %v3482 = vld [vmem:[#allocation2 + $0x988] sm:$0xff]
    %v3483 = vld [vmem:[#allocation2 + $0x990] sm:$0xff]
    %v3484 = vld [vmem:[#allocation2 + $0x998] sm:$0xff]
    %v3485 = vld [vmem:[#allocation2 + $0x9a0] sm:$0xff]
    %v3486 = vld [vmem:[#allocation2 + $0x9a8] sm:$0xff]
    %v3487 = vld [vmem:[#allocation2 + $0x9b0] sm:$0xff]
    %v3488 = vld [vmem:[#allocation2 + $0x9b8] sm:$0xff]
    %v3489 = vld [vmem:[#allocation2 + $0x9c0] sm:$0xff]
    %v3490 = vld [vmem:[#allocation2 + $0x9c8] sm:$0xff]
    %v3491 = vld [vmem:[#allocation2 + $0x9d0] sm:$0xff]
    %v3492 = vld [vmem:[#allocation2 + $0x9d8] sm:$0xff]
    %v3493 = vld [vmem:[#allocation2 + $0x9e0] sm:$0xff]
    %v3494 = vld [vmem:[#allocation2 + $0x9e8] sm:$0xff]
    %v3495 = vld [vmem:[#allocation2 + $0x9f0] sm:$0xff]
    %v3496 = vld [vmem:[#allocation2 + $0x9f8] sm:$0xff]
    %v3497 = vld [vmem:[#allocation2 + $0xa00] sm:$0xff]
    %v3498 = vld [vmem:[#allocation2 + $0xa08] sm:$0xff]
    %v3499 = vld [vmem:[#allocation2 + $0xa10] sm:$0xff]
    %v3500 = vld [vmem:[#allocation2 + $0xa18] sm:$0xff]
    %v3501 = vld [vmem:[#allocation2 + $0xa20] sm:$0xff]
    %v3502 = vld [vmem:[#allocation2 + $0xa28] sm:$0xff]
    %v3503 = vld [vmem:[#allocation2 + $0xa30] sm:$0xff]
    %v3504 = vld [vmem:[#allocation2 + $0xa38] sm:$0xff]
    %v3505 = vld [vmem:[#allocation2 + $0xa40] sm:$0xff]
    %v3506 = vld [vmem:[#allocation2 + $0xa48] sm:$0xff]
    %v3507 = vld [vmem:[#allocation2 + $0xa50] sm:$0xff]
    %v3508 = vld [vmem:[#allocation2 + $0xa58] sm:$0xff]
    %v3509 = vld [vmem:[#allocation2 + $0xa60] sm:$0xff]
    %v3510 = vld [vmem:[#allocation2 + $0xa68] sm:$0xff]
    %v3511 = vld [vmem:[#allocation2 + $0xa70] sm:$0xff]
    %v3512 = vld [vmem:[#allocation2 + $0xa78] sm:$0xff]
    %v3513 = vld [vmem:[#allocation2 + $0xa80] sm:$0xff]
    %v3514 = vld [vmem:[#allocation2 + $0xa88] sm:$0xff]
    %v3515 = vld [vmem:[#allocation2 + $0xa90] sm:$0xff]
    %v3516 = vld [vmem:[#allocation2 + $0xa98] sm:$0xff]
    %v3517 = vld [vmem:[#allocation2 + $0xaa0] sm:$0xff]
    %v3518 = vld [vmem:[#allocation2 + $0xaa8] sm:$0xff]
    %v3519 = vld [vmem:[#allocation2 + $0xab0] sm:$0xff]
    %v3520 = vld [vmem:[#allocation2 + $0xab8] sm:$0xff]
    %v3521 = vld [vmem:[#allocation2 + $0xac0] sm:$0xff]
    %v3522 = vld [vmem:[#allocation2 + $0xac8] sm:$0xff]
    %v3523 = vld [vmem:[#allocation2 + $0xad0] sm:$0xff]
    %v3524 = vld [vmem:[#allocation2 + $0xad8] sm:$0xff]
    %v3525 = vld [vmem:[#allocation2 + $0xae0] sm:$0xff]
    %v3526 = vld [vmem:[#allocation2 + $0xae8] sm:$0xff]
    %v3527 = vld [vmem:[#allocation2 + $0xaf0] sm:$0xff]
    %v3528 = vld [vmem:[#allocation2 + $0xaf8] sm:$0xff]
    %v3529 = vld [vmem:[#allocation2 + $0xb00] sm:$0xff]
    %v3530 = vld [vmem:[#allocation2 + $0xb08] sm:$0xff]
    %v3531 = vld [vmem:[#allocation2 + $0xb10] sm:$0xff]
    %v3532 = vld [vmem:[#allocation2 + $0xb18] sm:$0xff]
    %v3533 = vld [vmem:[#allocation2 + $0xb20] sm:$0xff]
    %v3534 = vld [vmem:[#allocation2 + $0xb28] sm:$0xff]
    %v3535 = vld [vmem:[#allocation2 + $0xb30] sm:$0xff]
    %v3536 = vld [vmem:[#allocation2 + $0xb38] sm:$0xff]
    %v3537 = vld [vmem:[#allocation2 + $0xb40] sm:$0xff]
    %v3538 = vld [vmem:[#allocation2 + $0xb48] sm:$0xff]
    %v3539 = vld [vmem:[#allocation2 + $0xb50] sm:$0xff]
    %v3540 = vld [vmem:[#allocation2 + $0xb58] sm:$0xff]
    %v3541 = vld [vmem:[#allocation2 + $0xb60] sm:$0xff]
    %v3542 = vld [vmem:[#allocation2 + $0xb68] sm:$0xff]
    %v3543 = vld [vmem:[#allocation2 + $0xb70] sm:$0xff]
    %v3544 = vld [vmem:[#allocation2 + $0xb78] sm:$0xff]
    %v3545 = vld [vmem:[#allocation2 + $0xb80] sm:$0xff]
    %v3546 = vld [vmem:[#allocation2 + $0xb88] sm:$0xff]
    %v3547 = vld [vmem:[#allocation2 + $0xb90] sm:$0xff]
    %v3548 = vld [vmem:[#allocation2 + $0xb98] sm:$0xff]
    %v3549 = vld [vmem:[#allocation2 + $0xba0] sm:$0xff]
    %v3550 = vld [vmem:[#allocation2 + $0xba8] sm:$0xff]
    %v3551 = vld [vmem:[#allocation2 + $0xbb0] sm:$0xff]
    %v3552 = vld [vmem:[#allocation2 + $0xbb8] sm:$0xff]
    %v3553 = vld [vmem:[#allocation2 + $0xbc0] sm:$0xff]
    %v3554 = vld [vmem:[#allocation2 + $0xbc8] sm:$0xff]
    %v3555 = vld [vmem:[#allocation2 + $0xbd0] sm:$0xff]
    %v3556 = vld [vmem:[#allocation2 + $0xbd8] sm:$0xff]
    %v3557 = vld [vmem:[#allocation2 + $0xbe0] sm:$0xff]
    %v3558 = vld [vmem:[#allocation2 + $0xbe8] sm:$0xff]
    %v3559 = vld [vmem:[#allocation2 + $0xbf0] sm:$0xff]
    %v3560 = vld [vmem:[#allocation2 + $0xbf8] sm:$0xff]
    %v3561 = vld [vmem:[#allocation2 + $0xc00] sm:$0xff]
    %v3562 = vld [vmem:[#allocation2 + $0xc08] sm:$0xff]
    %v3563 = vld [vmem:[#allocation2 + $0xc10] sm:$0xff]
    %v3564 = vld [vmem:[#allocation2 + $0xc18] sm:$0xff]
    %v3565 = vld [vmem:[#allocation2 + $0xc20] sm:$0xff]
    %v3566 = vld [vmem:[#allocation2 + $0xc28] sm:$0xff]
    %v3567 = vld [vmem:[#allocation2 + $0xc30] sm:$0xff]
    %v3568 = vld [vmem:[#allocation2 + $0xc38] sm:$0xff]
    %v3569 = vld [vmem:[#allocation2 + $0xc40] sm:$0xff]
    %v3570 = vld [vmem:[#allocation2 + $0xc48] sm:$0xff]
    %v3571 = vld [vmem:[#allocation2 + $0xc50] sm:$0xff]
    %v3572 = vld [vmem:[#allocation2 + $0xc58] sm:$0xff]
    %v3573 = vld [vmem:[#allocation2 + $0xc60] sm:$0xff]
    %v3574 = vld [vmem:[#allocation2 + $0xc68] sm:$0xff]
    %v3575 = vld [vmem:[#allocation2 + $0xc70] sm:$0xff]
    %v3576 = vld [vmem:[#allocation2 + $0xc78] sm:$0xff]
    %v3577 = vld [vmem:[#allocation2 + $0xc80] sm:$0xff]
    %v3578 = vld [vmem:[#allocation2 + $0xc88] sm:$0xff]
    %v3579 = vld [vmem:[#allocation2 + $0xc90] sm:$0xff]
    %v3580 = vld [vmem:[#allocation2 + $0xc98] sm:$0xff]
    %v3581 = vld [vmem:[#allocation2 + $0xca0] sm:$0xff]
    %v3582 = vld [vmem:[#allocation2 + $0xca8] sm:$0xff]
    %v3583 = vld [vmem:[#allocation2 + $0xcb0] sm:$0xff]
    %v3584 = vld [vmem:[#allocation2 + $0xcb8] sm:$0xff]
    %v3585 = vld [vmem:[#allocation2 + $0xcc0] sm:$0xff]
    %v3586 = vld [vmem:[#allocation2 + $0xcc8] sm:$0xff]
    %v3587 = vld [vmem:[#allocation2 + $0xcd0] sm:$0xff]
    %v3588 = vld [vmem:[#allocation2 + $0xcd8] sm:$0xff]
    %v3589 = vld [vmem:[#allocation2 + $0xce0] sm:$0xff]
    %v3590 = vld [vmem:[#allocation2 + $0xce8] sm:$0xff]
    %v3591 = vld [vmem:[#allocation2 + $0xcf0] sm:$0xff]
    %v3592 = vld [vmem:[#allocation2 + $0xcf8] sm:$0xff]
    %v3593 = vld [vmem:[#allocation2 + $0xd00] sm:$0xff]
    %v3594 = vld [vmem:[#allocation2 + $0xd08] sm:$0xff]
    %v3595 = vld [vmem:[#allocation2 + $0xd10] sm:$0xff]
    %v3596 = vld [vmem:[#allocation2 + $0xd18] sm:$0xff]
    %v3597 = vld [vmem:[#allocation2 + $0xd20] sm:$0xff]
    %v3598 = vld [vmem:[#allocation2 + $0xd28] sm:$0xff]
    %v3599 = vld [vmem:[#allocation2 + $0xd30] sm:$0xff]
    %v3600 = vld [vmem:[#allocation2 + $0xd38] sm:$0xff]
    %v3601 = vld [vmem:[#allocation2 + $0xd40] sm:$0xff]
    %v3602 = vld [vmem:[#allocation2 + $0xd48] sm:$0xff]
    %v3603 = vld [vmem:[#allocation2 + $0xd50] sm:$0xff]
    %v3604 = vld [vmem:[#allocation2 + $0xd58] sm:$0xff]
    %v3605 = vld [vmem:[#allocation2 + $0xd60] sm:$0xff]
    %v3606 = vld [vmem:[#allocation2 + $0xd68] sm:$0xff]
    %v3607 = vld [vmem:[#allocation2 + $0xd70] sm:$0xff]
    %v3608 = vld [vmem:[#allocation2 + $0xd78] sm:$0xff]
    %v3609 = vld [vmem:[#allocation12] sm:$0x7]
    %v3611 = vlaneseq
    %v3612 = vshrl.u32 %v3611, 7
    %v3613 = vsub.s32 0, %v3612
    %v3614 = vrot.slane %v3609, %v3613
    %v3615 = vlaneseq
    %v3616 = vshrl.u32 %v3615, 7
    %v3617 = vsub.s32 1, %v3616
    %v3618 = vrot.slane %v3609, %v3617
    %v3619 = vlaneseq
    %v3620 = vshrl.u32 %v3619, 7
    %v3621 = vsub.s32 2, %v3620
    %v3622 = vrot.slane %v3609, %v3621
    %3626 = vmatprep.subr.bf16.mxu0 %v3178
    %3627 = vmatpush1.bf16.msra.mxu0 %v3177
    %3628 = vmatprep.subr.bf16.mxu0 %v3181
    %3629 = vmatpush1.bf16.msra.mxu0 %v3180
    %3630 = vmatprep.subr.bf16.mxu0 %v3184
    %3631 = vmatpush1.bf16.msra.mxu0 %v3183
    %3632 = vmatprep.subr.bf16.mxu0 %v3187
    %3633 = vmatpush1.bf16.msra.mxu0 %v3186
    %3634 = vmatprep.subr.bf16.mxu0 %v3190
    %3635 = vmatpush1.bf16.msra.mxu0 %v3189
    %3636 = vmatprep.subr.bf16.mxu0 %v3193
    %3637 = vmatpush1.bf16.msra.mxu0 %v3192
    %3638 = vmatprep.subr.bf16.mxu0 %v3196
    %3639 = vmatpush1.bf16.msra.mxu0 %v3195
    %3640 = vmatprep.subr.bf16.mxu0 %v3199
    %3641 = vmatpush1.bf16.msra.mxu0 %v3198
    %3642 = vmatprep.subr.bf16.mxu0 %v3202
    %3643 = vmatpush1.bf16.msra.mxu0 %v3201
    %3644 = vmatprep.subr.bf16.mxu0 %v3205
    %3645 = vmatpush1.bf16.msra.mxu0 %v3204
    %3646 = vmatprep.subr.bf16.mxu0 %v3208
    %3647 = vmatpush1.bf16.msra.mxu0 %v3207
    %3648 = vmatprep.subr.bf16.mxu0 %v3211
    %3649 = vmatpush1.bf16.msra.mxu0 %v3210
    %3650 = vmatprep.subr.bf16.mxu0 %v3214
    %3651 = vmatpush1.bf16.msra.mxu0 %v3213
    %3652 = vmatprep.subr.bf16.mxu0 %v3217
    %3653 = vmatpush1.bf16.msra.mxu0 %v3216
    %3654 = vmatprep.subr.bf16.mxu0 %v3220
    %3655 = vmatpush1.bf16.msra.mxu0 %v3219
    %3656 = vmatprep.subr.bf16.mxu0 %v3223
    %3657 = vmatpush1.bf16.msra.mxu0 %v3222
    %3658 = vmatprep.mubr.bf16.mxu0 %v3160
    %3659 = vmatmul.mubr.bf16.gmra.mrb[0].mxu0 %v3159
    %v3660 = vpop.f32.mrb[0].mxu0
    %v3661 = vadd.f32 %v3614, %v3660
    %v3662 = vpop.f32.mrb[0].mxu0
    %v3663 = vadd.f32 %v3618, %v3662
    %v3664 = vpop.f32.mrb[0].mxu0
    %v3665 = vadd.f32 %v3614, %v3664
    %v3666 = vpop.f32.mrb[0].mxu0
    %v3667 = vadd.f32 %v3618, %v3666
    %3668 = vdwg.mxu0
    %3669 = vmatprep.subr.bf16.mxu0 %v3226
    %3670 = vmatpush1.bf16.msra.mxu0 %v3225
    %3671 = vmatprep.subr.bf16.mxu0 %v3229
    %3672 = vmatpush1.bf16.msra.mxu0 %v3228
    %3673 = vmatprep.subr.bf16.mxu0 %v3232
    %3674 = vmatpush1.bf16.msra.mxu0 %v3231
    %3675 = vmatprep.subr.bf16.mxu0 %v3235
    %3676 = vmatpush1.bf16.msra.mxu0 %v3234
    %3677 = vmatprep.subr.bf16.mxu0 %v3238
    %3678 = vmatpush1.bf16.msra.mxu0 %v3237
    %3679 = vmatprep.subr.bf16.mxu0 %v3241
    %3680 = vmatpush1.bf16.msra.mxu0 %v3240
    %3681 = vmatprep.subr.bf16.mxu0 %v3244
    %3682 = vmatpush1.bf16.msra.mxu0 %v3243
    %3683 = vmatprep.subr.bf16.mxu0 %v3247
    %3684 = vmatpush1.bf16.msra.mxu0 %v3246
    %3685 = vmatprep.subr.bf16.mxu0 %v3250
    %3686 = vmatpush1.bf16.msra.mxu0 %v3249
    %3687 = vmatprep.subr.bf16.mxu0 %v3253
    %3688 = vmatpush1.bf16.msra.mxu0 %v3252
    %3689 = vmatprep.subr.bf16.mxu0 %v3256
    %3690 = vmatpush1.bf16.msra.mxu0 %v3255
    %3691 = vmatprep.subr.bf16.mxu0 %v3259
    %3692 = vmatpush1.bf16.msra.mxu0 %v3258
    %3693 = vmatprep.subr.bf16.mxu0 %v3262
    %3694 = vmatpush1.bf16.msra.mxu0 %v3261
    %3695 = vmatprep.subr.bf16.mxu0 %v3265
    %3696 = vmatpush1.bf16.msra.mxu0 %v3264
    %3697 = vmatprep.subr.bf16.mxu0 %v3268
    %3698 = vmatpush1.bf16.msra.mxu0 %v3267
    %3699 = vmatprep.subr.bf16.mxu0 %v3271
    %3700 = vmatpush1.bf16.msra.mxu0 %v3270
    %3701 = vmatprep.mubr.bf16.mxu0 %v3162
    %3702 = vmatmul.mubr.bf16.gmra.mrb[0].mxu0 %v3161
    %v3703 = vpop.f32.mrb[0].mxu0
    %v3704 = vadd.f32 %v3661, %v3703
    %v3705 = vpop.f32.mrb[0].mxu0
    %v3706 = vadd.f32 %v3663, %v3705
    %v3707 = vpop.f32.mrb[0].mxu0
    %v3708 = vadd.f32 %v3665, %v3707
    %v3709 = vpop.f32.mrb[0].mxu0
    %v3710 = vadd.f32 %v3667, %v3709
    %3711 = vdwg.mxu0
    %3712 = vmatprep.subr.bf16.mxu0 %v3274
    %3713 = vmatpush1.bf16.msra.mxu0 %v3273
    %3714 = vmatprep.subr.bf16.mxu0 %v3277
    %3715 = vmatpush1.bf16.msra.mxu0 %v3276
    %3716 = vmatprep.subr.bf16.mxu0 %v3280
    %3717 = vmatpush1.bf16.msra.mxu0 %v3279
    %3718 = vmatprep.subr.bf16.mxu0 %v3283
    %3719 = vmatpush1.bf16.msra.mxu0 %v3282
    %3720 = vmatprep.subr.bf16.mxu0 %v3286
    %3721 = vmatpush1.bf16.msra.mxu0 %v3285
    %3722 = vmatprep.subr.bf16.mxu0 %v3289
    %3723 = vmatpush1.bf16.msra.mxu0 %v3288
    %3724 = vmatprep.subr.bf16.mxu0 %v3292
    %3725 = vmatpush1.bf16.msra.mxu0 %v3291
    %3726 = vmatprep.subr.bf16.mxu0 %v3295
    %3727 = vmatpush1.bf16.msra.mxu0 %v3294
    %3728 = vmatprep.subr.bf16.mxu0 %v3298
    %3729 = vmatpush1.bf16.msra.mxu0 %v3297
    %3730 = vmatprep.subr.bf16.mxu0 %v3301
    %3731 = vmatpush1.bf16.msra.mxu0 %v3300
    %3732 = vmatprep.subr.bf16.mxu0 %v3304
    %3733 = vmatpush1.bf16.msra.mxu0 %v3303
    %3734 = vmatprep.subr.bf16.mxu0 %v3307
    %3735 = vmatpush1.bf16.msra.mxu0 %v3306
    %3736 = vmatprep.subr.bf16.mxu0 %v3310
    %3737 = vmatpush1.bf16.msra.mxu0 %v3309
    %3738 = vmatprep.subr.bf16.mxu0 %v3313
    %3739 = vmatpush1.bf16.msra.mxu0 %v3312
    %3740 = vmatprep.subr.bf16.mxu0 %v3316
    %3741 = vmatpush1.bf16.msra.mxu0 %v3315
    %3742 = vmatprep.subr.bf16.mxu0 %v3319
    %3743 = vmatpush1.bf16.msra.mxu0 %v3318
    %3744 = vmatprep.mubr.bf16.mxu0 %v3164
    %3745 = vmatmul.mubr.bf16.gmra.mrb[0].mxu0 %v3163
    %v3746 = vpop.f32.mrb[0].mxu0
    %v3747 = vadd.f32 %v3704, %v3746
    %v3748 = vpop.f32.mrb[0].mxu0
    %v3749 = vadd.f32 %v3706, %v3748
    %v3750 = vpop.f32.mrb[0].mxu0
    %v3751 = vadd.f32 %v3708, %v3750
    %v3752 = vpop.f32.mrb[0].mxu0
    %v3753 = vadd.f32 %v3710, %v3752
    %3754 = vdwg.mxu0
    %3755 = vmatprep.subr.bf16.mxu0 %v3322
    %3756 = vmatpush1.bf16.msra.mxu0 %v3321
    %3757 = vmatprep.subr.bf16.mxu0 %v3325
    %3758 = vmatpush1.bf16.msra.mxu0 %v3324
    %3759 = vmatprep.subr.bf16.mxu0 %v3328
    %3760 = vmatpush1.bf16.msra.mxu0 %v3327
    %3761 = vmatprep.subr.bf16.mxu0 %v3331
    %3762 = vmatpush1.bf16.msra.mxu0 %v3330
    %3763 = vmatprep.subr.bf16.mxu0 %v3334
    %3764 = vmatpush1.bf16.msra.mxu0 %v3333
    %3765 = vmatprep.subr.bf16.mxu0 %v3337
    %3766 = vmatpush1.bf16.msra.mxu0 %v3336
    %3767 = vmatprep.subr.bf16.mxu0 %v3340
    %3768 = vmatpush1.bf16.msra.mxu0 %v3339
    %3769 = vmatprep.subr.bf16.mxu0 %v3343
    %3770 = vmatpush1.bf16.msra.mxu0 %v3342
    %3771 = vmatprep.subr.bf16.mxu0 %v3346
    %3772 = vmatpush1.bf16.msra.mxu0 %v3345
    %3773 = vmatprep.subr.bf16.mxu0 %v3349
    %3774 = vmatpush1.bf16.msra.mxu0 %v3348
    %3775 = vmatprep.subr.bf16.mxu0 %v3352
    %3776 = vmatpush1.bf16.msra.mxu0 %v3351
    %3777 = vmatprep.subr.bf16.mxu0 %v3355
    %3778 = vmatpush1.bf16.msra.mxu0 %v3354
    %3779 = vmatprep.subr.bf16.mxu0 %v3358
    %3780 = vmatpush1.bf16.msra.mxu0 %v3357
    %3781 = vmatprep.subr.bf16.mxu0 %v3361
    %3782 = vmatpush1.bf16.msra.mxu0 %v3360
    %3783 = vmatprep.subr.bf16.mxu0 %v3364
    %3784 = vmatpush1.bf16.msra.mxu0 %v3363
    %3785 = vmatprep.subr.bf16.mxu0 %v3367
    %3786 = vmatpush1.bf16.msra.mxu0 %v3366
    %3787 = vmatprep.mubr.bf16.mxu0 %v3166
    %3788 = vmatmul.mubr.bf16.gmra.mrb[0].mxu0 %v3165
    %v3789 = vpop.f32.mrb[0].mxu0
    %v3790 = vadd.f32 %v3747, %v3789
    %v3791 = vpop.f32.mrb[0].mxu0
    %v3792 = vadd.f32 %v3749, %v3791
    %v3793 = vpop.f32.mrb[0].mxu0
    %v3794 = vadd.f32 %v3751, %v3793
    %v3795 = vpop.f32.mrb[0].mxu0
    %v3796 = vadd.f32 %v3753, %v3795
    %3797 = vdwg.mxu0
    %3798 = vmatprep.subr.bf16.mxu0 %v3370
    %3799 = vmatpush1.bf16.msra.mxu0 %v3369
    %3800 = vmatprep.subr.bf16.mxu0 %v3373
    %3801 = vmatpush1.bf16.msra.mxu0 %v3372
    %3802 = vmatprep.subr.bf16.mxu0 %v3376
    %3803 = vmatpush1.bf16.msra.mxu0 %v3375
    %3804 = vmatprep.subr.bf16.mxu0 %v3379
    %3805 = vmatpush1.bf16.msra.mxu0 %v3378
    %3806 = vmatprep.subr.bf16.mxu0 %v3382
    %3807 = vmatpush1.bf16.msra.mxu0 %v3381
    %3808 = vmatprep.subr.bf16.mxu0 %v3385
    %3809 = vmatpush1.bf16.msra.mxu0 %v3384
    %3810 = vmatprep.subr.bf16.mxu0 %v3388
    %3811 = vmatpush1.bf16.msra.mxu0 %v3387
    %3812 = vmatprep.subr.bf16.mxu0 %v3391
    %3813 = vmatpush1.bf16.msra.mxu0 %v3390
    %3814 = vmatprep.subr.bf16.mxu0 %v3394
    %3815 = vmatpush1.bf16.msra.mxu0 %v3393
    %3816 = vmatprep.subr.bf16.mxu0 %v3397
    %3817 = vmatpush1.bf16.msra.mxu0 %v3396
    %3818 = vmatprep.subr.bf16.mxu0 %v3400
    %3819 = vmatpush1.bf16.msra.mxu0 %v3399
    %3820 = vmatprep.subr.bf16.mxu0 %v3403
    %3821 = vmatpush1.bf16.msra.mxu0 %v3402
    %3822 = vmatprep.subr.bf16.mxu0 %v3406
    %3823 = vmatpush1.bf16.msra.mxu0 %v3405
    %3824 = vmatprep.subr.bf16.mxu0 %v3409
    %3825 = vmatpush1.bf16.msra.mxu0 %v3408
    %3826 = vmatprep.subr.bf16.mxu0 %v3412
    %3827 = vmatpush1.bf16.msra.mxu0 %v3411
    %3828 = vmatprep.subr.bf16.mxu0 %v3415
    %3829 = vmatpush1.bf16.msra.mxu0 %v3414
    %3830 = vmatprep.mubr.bf16.mxu0 %v3168
    %3831 = vmatmul.mubr.bf16.gmra.mrb[0].mxu0 %v3167
    %v3832 = vpop.f32.mrb[0].mxu0
    %v3833 = vadd.f32 %v3790, %v3832
    %v3834 = vpop.f32.mrb[0].mxu0
    %v3835 = vadd.f32 %v3792, %v3834
    %v3836 = vpop.f32.mrb[0].mxu0
    %v3837 = vadd.f32 %v3794, %v3836
    %v3838 = vpop.f32.mrb[0].mxu0
    %v3839 = vadd.f32 %v3796, %v3838
    %3840 = vdwg.mxu0
    %3841 = vmatprep.subr.bf16.mxu0 %v3418
    %3842 = vmatpush1.bf16.msra.mxu0 %v3417
    %3843 = vmatprep.subr.bf16.mxu0 %v3421
    %3844 = vmatpush1.bf16.msra.mxu0 %v3420
    %3845 = vmatprep.subr.bf16.mxu0 %v3424
    %3846 = vmatpush1.bf16.msra.mxu0 %v3423
    %3847 = vmatprep.subr.bf16.mxu0 %v3427
    %3848 = vmatpush1.bf16.msra.mxu0 %v3426
    %3849 = vmatprep.subr.bf16.mxu0 %v3430
    %3850 = vmatpush1.bf16.msra.mxu0 %v3429
    %3851 = vmatprep.subr.bf16.mxu0 %v3433
    %3852 = vmatpush1.bf16.msra.mxu0 %v3432
    %3853 = vmatprep.subr.bf16.mxu0 %v3436
    %3854 = vmatpush1.bf16.msra.mxu0 %v3435
    %3855 = vmatprep.subr.bf16.mxu0 %v3439
    %3856 = vmatpush1.bf16.msra.mxu0 %v3438
    %3857 = vmatprep.subr.bf16.mxu0 %v3442
    %3858 = vmatpush1.bf16.msra.mxu0 %v3441
    %3859 = vmatprep.subr.bf16.mxu0 %v3445
    %3860 = vmatpush1.bf16.msra.mxu0 %v3444
    %3861 = vmatprep.subr.bf16.mxu0 %v3448
    %3862 = vmatpush1.bf16.msra.mxu0 %v3447
    %3863 = vmatprep.subr.bf16.mxu0 %v3451
    %3864 = vmatpush1.bf16.msra.mxu0 %v3450
    %3865 = vmatprep.subr.bf16.mxu0 %v3454
    %3866 = vmatpush1.bf16.msra.mxu0 %v3453
    %3867 = vmatprep.subr.bf16.mxu0 %v3457
    %3868 = vmatpush1.bf16.msra.mxu0 %v3456
    %3869 = vmatprep.subr.bf16.mxu0 %v3460
    %3870 = vmatpush1.bf16.msra.mxu0 %v3459
    %3871 = vmatprep.subr.bf16.mxu0 %v3463
    %3872 = vmatpush1.bf16.msra.mxu0 %v3462
    %3873 = vmatprep.mubr.bf16.mxu0 %v3170
    %3874 = vmatmul.mubr.bf16.gmra.mrb[0].mxu0 %v3169
    %v3875 = vpop.f32.mrb[0].mxu0
    %v3876 = vadd.f32 %v3833, %v3875
    %v3877 = vpop.f32.mrb[0].mxu0
    %v3878 = vadd.f32 %v3835, %v3877
    %v3879 = vpop.f32.mrb[0].mxu0
    %v3880 = vadd.f32 %v3837, %v3879
    %v3881 = vpop.f32.mrb[0].mxu0
    %v3882 = vadd.f32 %v3839, %v3881
    %3883 = vdwg.mxu0
    %3884 = vmatprep.subr.bf16.mxu0 %v3466
    %3885 = vmatpush1.bf16.msra.mxu0 %v3465
    %3886 = vmatprep.subr.bf16.mxu0 %v3469
    %3887 = vmatpush1.bf16.msra.mxu0 %v3468
    %3888 = vmatprep.subr.bf16.mxu0 %v3472
    %3889 = vmatpush1.bf16.msra.mxu0 %v3471
    %3890 = vmatprep.subr.bf16.mxu0 %v3475
    %3891 = vmatpush1.bf16.msra.mxu0 %v3474
    %3892 = vmatprep.subr.bf16.mxu0 %v3478
    %3893 = vmatpush1.bf16.msra.mxu0 %v3477
    %3894 = vmatprep.subr.bf16.mxu0 %v3481
    %3895 = vmatpush1.bf16.msra.mxu0 %v3480
    %3896 = vmatprep.subr.bf16.mxu0 %v3484
    %3897 = vmatpush1.bf16.msra.mxu0 %v3483
    %3898 = vmatprep.subr.bf16.mxu0 %v3487
    %3899 = vmatpush1.bf16.msra.mxu0 %v3486
    %3900 = vmatprep.subr.bf16.mxu0 %v3490
    %3901 = vmatpush1.bf16.msra.mxu0 %v3489
    %3902 = vmatprep.subr.bf16.mxu0 %v3493
    %3903 = vmatpush1.bf16.msra.mxu0 %v3492
    %3904 = vmatprep.subr.bf16.mxu0 %v3496
    %3905 = vmatpush1.bf16.msra.mxu0 %v3495
    %3906 = vmatprep.subr.bf16.mxu0 %v3499
    %3907 = vmatpush1.bf16.msra.mxu0 %v3498
    %3908 = vmatprep.subr.bf16.mxu0 %v3502
    %3909 = vmatpush1.bf16.msra.mxu0 %v3501
    %3910 = vmatprep.subr.bf16.mxu0 %v3505
    %3911 = vmatpush1.bf16.msra.mxu0 %v3504
    %3912 = vmatprep.subr.bf16.mxu0 %v3508
    %3913 = vmatpush1.bf16.msra.mxu0 %v3507
    %3914 = vmatprep.subr.bf16.mxu0 %v3511
    %3915 = vmatpush1.bf16.msra.mxu0 %v3510
    %3916 = vmatprep.mubr.bf16.mxu0 %v3172
    %3917 = vmatmul.mubr.bf16.gmra.mrb[0].mxu0 %v3171
    %v3918 = vpop.f32.mrb[0].mxu0
    %v3919 = vadd.f32 %v3876, %v3918
    %v3920 = vpop.f32.mrb[0].mxu0
    %v3921 = vadd.f32 %v3878, %v3920
    %v3922 = vpop.f32.mrb[0].mxu0
    %v3923 = vadd.f32 %v3880, %v3922
    %v3924 = vpop.f32.mrb[0].mxu0
    %v3925 = vadd.f32 %v3882, %v3924
    %3926 = vdwg.mxu0
    %3927 = vmatprep.subr.bf16.mxu0 %v3514
    %3928 = vmatpush1.bf16.msra.mxu0 %v3513
    %3929 = vmatprep.subr.bf16.mxu0 %v3517
    %3930 = vmatpush1.bf16.msra.mxu0 %v3516
    %3931 = vmatprep.subr.bf16.mxu0 %v3520
    %3932 = vmatpush1.bf16.msra.mxu0 %v3519
    %3933 = vmatprep.subr.bf16.mxu0 %v3523
    %3934 = vmatpush1.bf16.msra.mxu0 %v3522
    %3935 = vmatprep.subr.bf16.mxu0 %v3526
    %3936 = vmatpush1.bf16.msra.mxu0 %v3525
    %3937 = vmatprep.subr.bf16.mxu0 %v3529
    %3938 = vmatpush1.bf16.msra.mxu0 %v3528
    %3939 = vmatprep.subr.bf16.mxu0 %v3532
    %3940 = vmatpush1.bf16.msra.mxu0 %v3531
    %3941 = vmatprep.subr.bf16.mxu0 %v3535
    %3942 = vmatpush1.bf16.msra.mxu0 %v3534
    %3943 = vmatprep.subr.bf16.mxu0 %v3538
    %3944 = vmatpush1.bf16.msra.mxu0 %v3537
    %3945 = vmatprep.subr.bf16.mxu0 %v3541
    %3946 = vmatpush1.bf16.msra.mxu0 %v3540
    %3947 = vmatprep.subr.bf16.mxu0 %v3544
    %3948 = vmatpush1.bf16.msra.mxu0 %v3543
    %3949 = vmatprep.subr.bf16.mxu0 %v3547
    %3950 = vmatpush1.bf16.msra.mxu0 %v3546
    %3951 = vmatprep.subr.bf16.mxu0 %v3550
    %3952 = vmatpush1.bf16.msra.mxu0 %v3549
    %3953 = vmatprep.subr.bf16.mxu0 %v3553
    %3954 = vmatpush1.bf16.msra.mxu0 %v3552
    %3955 = vmatprep.subr.bf16.mxu0 %v3556
    %3956 = vmatpush1.bf16.msra.mxu0 %v3555
    %3957 = vmatprep.subr.bf16.mxu0 %v3559
    %3958 = vmatpush1.bf16.msra.mxu0 %v3558
    %3959 = vmatprep.mubr.bf16.mxu0 %v3174
    %3960 = vmatmul.mubr.bf16.gmra.mrb[0].mxu0 %v3173
    %v3961 = vpop.f32.mrb[0].mxu0
    %v3962 = vadd.f32 %v3919, %v3961
    %v3963 = vpop.f32.mrb[0].mxu0
    %v3964 = vadd.f32 %v3921, %v3963
    %v3965 = vpop.f32.mrb[0].mxu0
    %v3966 = vadd.f32 %v3923, %v3965
    %v3967 = vpop.f32.mrb[0].mxu0
    %v3968 = vadd.f32 %v3925, %v3967
    %3969 = vdwg.mxu0
    %3970 = vmatprep.subr.bf16.mxu0 %v3562
    %3971 = vmatpush1.bf16.msra.mxu0 %v3561
    %3972 = vmatprep.subr.bf16.mxu0 %v3565
    %3973 = vmatpush1.bf16.msra.mxu0 %v3564
    %3974 = vmatprep.subr.bf16.mxu0 %v3568
    %3975 = vmatpush1.bf16.msra.mxu0 %v3567
    %3976 = vmatprep.subr.bf16.mxu0 %v3571
    %3977 = vmatpush1.bf16.msra.mxu0 %v3570
    %3978 = vmatprep.subr.bf16.mxu0 %v3574
    %3979 = vmatpush1.bf16.msra.mxu0 %v3573
    %3980 = vmatprep.subr.bf16.mxu0 %v3577
    %3981 = vmatpush1.bf16.msra.mxu0 %v3576
    %3982 = vmatprep.subr.bf16.mxu0 %v3580
    %3983 = vmatpush1.bf16.msra.mxu0 %v3579
    %3984 = vmatprep.subr.bf16.mxu0 %v3583
    %3985 = vmatpush1.bf16.msra.mxu0 %v3582
    %3986 = vmatprep.subr.bf16.mxu0 %v3586
    %3987 = vmatpush1.bf16.msra.mxu0 %v3585
    %3988 = vmatprep.subr.bf16.mxu0 %v3589
    %3989 = vmatpush1.bf16.msra.mxu0 %v3588
    %3990 = vmatprep.subr.bf16.mxu0 %v3592
    %3991 = vmatpush1.bf16.msra.mxu0 %v3591
    %3992 = vmatprep.subr.bf16.mxu0 %v3595
    %3993 = vmatpush1.bf16.msra.mxu0 %v3594
    %3994 = vmatprep.subr.bf16.mxu0 %v3598
    %3995 = vmatpush1.bf16.msra.mxu0 %v3597
    %3996 = vmatprep.subr.bf16.mxu0 %v3601
    %3997 = vmatpush1.bf16.msra.mxu0 %v3600
    %3998 = vmatprep.subr.bf16.mxu0 %v3604
    %3999 = vmatpush1.bf16.msra.mxu0 %v3603
    %4000 = vmatprep.subr.bf16.mxu0 %v3607
    %4001 = vmatpush1.bf16.msra.mxu0 %v3606
    %4002 = vmatprep.mubr.bf16.mxu0 %v3176
    %4003 = vmatmul.mubr.bf16.gmra.mrb[0].mxu0 %v3175
    %v4004 = vpop.f32.mrb[0].mxu0
    %v4005 = vadd.f32 %v3962, %v4004
    %v4006 = vpop.f32.mrb[0].mxu0
    %v4007 = vadd.f32 %v3964, %v4006
    %v4008 = vpop.f32.mrb[0].mxu0
    %v4009 = vadd.f32 %v3966, %v4008
    %v4010 = vpop.f32.mrb[0].mxu0
    %v4011 = vadd.f32 %v3968, %v4010
    %4012 = vdwg.mxu0
    %4013 = vmatprep.subr.bf16.mxu0 0
    %4014 = vmatpush1.bf16.msra.mxu0 %v3179
    %4015 = vmatprep.subr.bf16.mxu0 0
    %4016 = vmatpush1.bf16.msra.mxu0 %v3182
    %4017 = vmatprep.subr.bf16.mxu0 0
    %4018 = vmatpush1.bf16.msra.mxu0 %v3185
    %4019 = vmatprep.subr.bf16.mxu0 0
    %4020 = vmatpush1.bf16.msra.mxu0 %v3188
    %4021 = vmatprep.subr.bf16.mxu0 0
    %4022 = vmatpush1.bf16.msra.mxu0 %v3191
    %4023 = vmatprep.subr.bf16.mxu0 0
    %4024 = vmatpush1.bf16.msra.mxu0 %v3194
    %4025 = vmatprep.subr.bf16.mxu0 0
    %4026 = vmatpush1.bf16.msra.mxu0 %v3197
    %4027 = vmatprep.subr.bf16.mxu0 0
    %4028 = vmatpush1.bf16.msra.mxu0 %v3200
    %4029 = vmatprep.subr.bf16.mxu0 0
    %4030 = vmatpush1.bf16.msra.mxu0 %v3203
    %4031 = vmatprep.subr.bf16.mxu0 0
    %4032 = vmatpush1.bf16.msra.mxu0 %v3206
    %4033 = vmatprep.subr.bf16.mxu0 0
    %4034 = vmatpush1.bf16.msra.mxu0 %v3209
    %4035 = vmatprep.subr.bf16.mxu0 0
    %4036 = vmatpush1.bf16.msra.mxu0 %v3212
    %4037 = vmatprep.subr.bf16.mxu0 0
    %4038 = vmatpush1.bf16.msra.mxu0 %v3215
    %4039 = vmatprep.subr.bf16.mxu0 0
    %4040 = vmatpush1.bf16.msra.mxu0 %v3218
    %4041 = vmatprep.subr.bf16.mxu0 0
    %4042 = vmatpush1.bf16.msra.mxu0 %v3221
    %4043 = vmatprep.subr.bf16.mxu0 0
    %4044 = vmatpush1.bf16.msra.mxu0 %v3224
    %4045 = vmatprep.mubr.bf16.mxu0 %v3160
    %4046 = vmatmul.mubr.bf16.gmra.mrb[0].mxu0 %v3159
    %v4047 = vpop.f32.mrb[0].mxu0
    %v4048 = vadd.f32 %v3622, %v4047
    %v4049 = vpop.f32.mrb[0].mxu0
    %v4050 = vpop.f32.mrb[0].mxu0
    %v4051 = vadd.f32 %v3622, %v4050
    %v4052 = vpop.f32.mrb[0].mxu0
    %4053 = vdwg.mxu0
    %4054 = vmatprep.subr.bf16.mxu0 0
    %4055 = vmatpush1.bf16.msra.mxu0 %v3227
    %4056 = vmatprep.subr.bf16.mxu0 0
    %4057 = vmatpush1.bf16.msra.mxu0 %v3230
    %4058 = vmatprep.subr.bf16.mxu0 0
    %4059 = vmatpush1.bf16.msra.mxu0 %v3233
    %4060 = vmatprep.subr.bf16.mxu0 0
    %4061 = vmatpush1.bf16.msra.mxu0 %v3236
    %4062 = vmatprep.subr.bf16.mxu0 0
    %4063 = vmatpush1.bf16.msra.mxu0 %v3239
    %4064 = vmatprep.subr.bf16.mxu0 0
    %4065 = vmatpush1.bf16.msra.mxu0 %v3242
    %4066 = vmatprep.subr.bf16.mxu0 0
    %4067 = vmatpush1.bf16.msra.mxu0 %v3245
    %4068 = vmatprep.subr.bf16.mxu0 0
    %4069 = vmatpush1.bf16.msra.mxu0 %v3248
    %4070 = vmatprep.subr.bf16.mxu0 0
    %4071 = vmatpush1.bf16.msra.mxu0 %v3251
    %4072 = vmatprep.subr.bf16.mxu0 0
    %4073 = vmatpush1.bf16.msra.mxu0 %v3254
    %4074 = vmatprep.subr.bf16.mxu0 0
    %4075 = vmatpush1.bf16.msra.mxu0 %v3257
    %4076 = vmatprep.subr.bf16.mxu0 0
    %4077 = vmatpush1.bf16.msra.mxu0 %v3260
    %4078 = vmatprep.subr.bf16.mxu0 0
    %4079 = vmatpush1.bf16.msra.mxu0 %v3263
    %4080 = vmatprep.subr.bf16.mxu0 0
    %4081 = vmatpush1.bf16.msra.mxu0 %v3266
    %4082 = vmatprep.subr.bf16.mxu0 0
    %4083 = vmatpush1.bf16.msra.mxu0 %v3269
    %4084 = vmatprep.subr.bf16.mxu0 0
    %4085 = vmatpush1.bf16.msra.mxu0 %v3272
    %4086 = vmatprep.mubr.bf16.mxu0 %v3162
    %4087 = vmatmul.mubr.bf16.gmra.mrb[0].mxu0 %v3161
    %v4088 = vpop.f32.mrb[0].mxu0
    %v4089 = vadd.f32 %v4048, %v4088
    %v4090 = vpop.f32.mrb[0].mxu0
    %v4091 = vpop.f32.mrb[0].mxu0
    %v4092 = vadd.f32 %v4051, %v4091
    %v4093 = vpop.f32.mrb[0].mxu0
    %4094 = vdwg.mxu0
    %4095 = vmatprep.subr.bf16.mxu0 0
    %4096 = vmatpush1.bf16.msra.mxu0 %v3275
    %4097 = vmatprep.subr.bf16.mxu0 0
    %4098 = vmatpush1.bf16.msra.mxu0 %v3278
    %4099 = vmatprep.subr.bf16.mxu0 0
    %4100 = vmatpush1.bf16.msra.mxu0 %v3281
    %4101 = vmatprep.subr.bf16.mxu0 0
    %4102 = vmatpush1.bf16.msra.mxu0 %v3284
    %4103 = vmatprep.subr.bf16.mxu0 0
    %4104 = vmatpush1.bf16.msra.mxu0 %v3287
    %4105 = vmatprep.subr.bf16.mxu0 0
    %4106 = vmatpush1.bf16.msra.mxu0 %v3290
    %4107 = vmatprep.subr.bf16.mxu0 0
    %4108 = vmatpush1.bf16.msra.mxu0 %v3293
    %4109 = vmatprep.subr.bf16.mxu0 0
    %4110 = vmatpush1.bf16.msra.mxu0 %v3296
    %4111 = vmatprep.subr.bf16.mxu0 0
    %4112 = vmatpush1.bf16.msra.mxu0 %v3299
    %4113 = vmatprep.subr.bf16.mxu0 0
    %4114 = vmatpush1.bf16.msra.mxu0 %v3302
    %4115 = vmatprep.subr.bf16.mxu0 0
    %4116 = vmatpush1.bf16.msra.mxu0 %v3305
    %4117 = vmatprep.subr.bf16.mxu0 0
    %4118 = vmatpush1.bf16.msra.mxu0 %v3308
    %4119 = vmatprep.subr.bf16.mxu0 0
    %4120 = vmatpush1.bf16.msra.mxu0 %v3311
    %4121 = vmatprep.subr.bf16.mxu0 0
    %4122 = vmatpush1.bf16.msra.mxu0 %v3314
    %4123 = vmatprep.subr.bf16.mxu0 0
    %4124 = vmatpush1.bf16.msra.mxu0 %v3317
    %4125 = vmatprep.subr.bf16.mxu0 0
    %4126 = vmatpush1.bf16.msra.mxu0 %v3320
    %4127 = vmatprep.mubr.bf16.mxu0 %v3164
    %4128 = vmatmul.mubr.bf16.gmra.mrb[0].mxu0 %v3163
    %v4129 = vpop.f32.mrb[0].mxu0
    %v4130 = vadd.f32 %v4089, %v4129
    %v4131 = vpop.f32.mrb[0].mxu0
    %v4132 = vpop.f32.mrb[0].mxu0
    %v4133 = vadd.f32 %v4092, %v4132
    %v4134 = vpop.f32.mrb[0].mxu0
    %4135 = vdwg.mxu0
    %4136 = vmatprep.subr.bf16.mxu0 0
    %4137 = vmatpush1.bf16.msra.mxu0 %v3323
    %4138 = vmatprep.subr.bf16.mxu0 0
    %4139 = vmatpush1.bf16.msra.mxu0 %v3326
    %4140 = vmatprep.subr.bf16.mxu0 0
    %4141 = vmatpush1.bf16.msra.mxu0 %v3329
    %4142 = vmatprep.subr.bf16.mxu0 0
    %4143 = vmatpush1.bf16.msra.mxu0 %v3332
    %4144 = vmatprep.subr.bf16.mxu0 0
    %4145 = vmatpush1.bf16.msra.mxu0 %v3335
    %4146 = vmatprep.subr.bf16.mxu0 0
    %4147 = vmatpush1.bf16.msra.mxu0 %v3338
    %4148 = vmatprep.subr.bf16.mxu0 0
    %4149 = vmatpush1.bf16.msra.mxu0 %v3341
    %4150 = vmatprep.subr.bf16.mxu0 0
    %4151 = vmatpush1.bf16.msra.mxu0 %v3344
    %4152 = vmatprep.subr.bf16.mxu0 0
    %4153 = vmatpush1.bf16.msra.mxu0 %v3347
    %4154 = vmatprep.subr.bf16.mxu0 0
    %4155 = vmatpush1.bf16.msra.mxu0 %v3350
    %4156 = vmatprep.subr.bf16.mxu0 0
    %4157 = vmatpush1.bf16.msra.mxu0 %v3353
    %4158 = vmatprep.subr.bf16.mxu0 0
    %4159 = vmatpush1.bf16.msra.mxu0 %v3356
    %4160 = vmatprep.subr.bf16.mxu0 0
    %4161 = vmatpush1.bf16.msra.mxu0 %v3359
    %4162 = vmatprep.subr.bf16.mxu0 0
    %4163 = vmatpush1.bf16.msra.mxu0 %v3362
    %4164 = vmatprep.subr.bf16.mxu0 0
    %4165 = vmatpush1.bf16.msra.mxu0 %v3365
    %4166 = vmatprep.subr.bf16.mxu0 0
    %4167 = vmatpush1.bf16.msra.mxu0 %v3368
    %4168 = vmatprep.mubr.bf16.mxu0 %v3166
    %4169 = vmatmul.mubr.bf16.gmra.mrb[0].mxu0 %v3165
    %v4170 = vpop.f32.mrb[0].mxu0
    %v4171 = vadd.f32 %v4130, %v4170
    %v4172 = vpop.f32.mrb[0].mxu0
    %v4173 = vpop.f32.mrb[0].mxu0
    %v4174 = vadd.f32 %v4133, %v4173
    %v4175 = vpop.f32.mrb[0].mxu0
    %4176 = vdwg.mxu0
    %4177 = vmatprep.subr.bf16.mxu0 0
    %4178 = vmatpush1.bf16.msra.mxu0 %v3371
    %4179 = vmatprep.subr.bf16.mxu0 0
    %4180 = vmatpush1.bf16.msra.mxu0 %v3374
    %4181 = vmatprep.subr.bf16.mxu0 0
    %4182 = vmatpush1.bf16.msra.mxu0 %v3377
    %4183 = vmatprep.subr.bf16.mxu0 0
    %4184 = vmatpush1.bf16.msra.mxu0 %v3380
    %4185 = vmatprep.subr.bf16.mxu0 0
    %4186 = vmatpush1.bf16.msra.mxu0 %v3383
    %4187 = vmatprep.subr.bf16.mxu0 0
    %4188 = vmatpush1.bf16.msra.mxu0 %v3386
    %4189 = vmatprep.subr.bf16.mxu0 0
    %4190 = vmatpush1.bf16.msra.mxu0 %v3389
    %4191 = vmatprep.subr.bf16.mxu0 0
    %4192 = vmatpush1.bf16.msra.mxu0 %v3392
    %4193 = vmatprep.subr.bf16.mxu0 0
    %4194 = vmatpush1.bf16.msra.mxu0 %v3395
    %4195 = vmatprep.subr.bf16.mxu0 0
    %4196 = vmatpush1.bf16.msra.mxu0 %v3398
    %4197 = vmatprep.subr.bf16.mxu0 0
    %4198 = vmatpush1.bf16.msra.mxu0 %v3401
    %4199 = vmatprep.subr.bf16.mxu0 0
    %4200 = vmatpush1.bf16.msra.mxu0 %v3404
    %4201 = vmatprep.subr.bf16.mxu0 0
    %4202 = vmatpush1.bf16.msra.mxu0 %v3407
    %4203 = vmatprep.subr.bf16.mxu0 0
    %4204 = vmatpush1.bf16.msra.mxu0 %v3410
    %4205 = vmatprep.subr.bf16.mxu0 0
    %4206 = vmatpush1.bf16.msra.mxu0 %v3413
    %4207 = vmatprep.subr.bf16.mxu0 0
    %4208 = vmatpush1.bf16.msra.mxu0 %v3416
    %4209 = vmatprep.mubr.bf16.mxu0 %v3168
    %4210 = vmatmul.mubr.bf16.gmra.mrb[0].mxu0 %v3167
    %v4211 = vpop.f32.mrb[0].mxu0
    %v4212 = vadd.f32 %v4171, %v4211
    %v4213 = vpop.f32.mrb[0].mxu0
    %v4214 = vpop.f32.mrb[0].mxu0
    %v4215 = vadd.f32 %v4174, %v4214
    %v4216 = vpop.f32.mrb[0].mxu0
    %4217 = vdwg.mxu0
    %4218 = vmatprep.subr.bf16.mxu0 0
    %4219 = vmatpush1.bf16.msra.mxu0 %v3419
    %4220 = vmatprep.subr.bf16.mxu0 0
    %4221 = vmatpush1.bf16.msra.mxu0 %v3422
    %4222 = vmatprep.subr.bf16.mxu0 0
    %4223 = vmatpush1.bf16.msra.mxu0 %v3425
    %4224 = vmatprep.subr.bf16.mxu0 0
    %4225 = vmatpush1.bf16.msra.mxu0 %v3428
    %4226 = vmatprep.subr.bf16.mxu0 0
    %4227 = vmatpush1.bf16.msra.mxu0 %v3431
    %4228 = vmatprep.subr.bf16.mxu0 0
    %4229 = vmatpush1.bf16.msra.mxu0 %v3434
    %4230 = vmatprep.subr.bf16.mxu0 0
    %4231 = vmatpush1.bf16.msra.mxu0 %v3437
    %4232 = vmatprep.subr.bf16.mxu0 0
    %4233 = vmatpush1.bf16.msra.mxu0 %v3440
    %4234 = vmatprep.subr.bf16.mxu0 0
    %4235 = vmatpush1.bf16.msra.mxu0 %v3443
    %4236 = vmatprep.subr.bf16.mxu0 0
    %4237 = vmatpush1.bf16.msra.mxu0 %v3446
    %4238 = vmatprep.subr.bf16.mxu0 0
    %4239 = vmatpush1.bf16.msra.mxu0 %v3449
    %4240 = vmatprep.subr.bf16.mxu0 0
    %4241 = vmatpush1.bf16.msra.mxu0 %v3452
    %4242 = vmatprep.subr.bf16.mxu0 0
    %4243 = vmatpush1.bf16.msra.mxu0 %v3455
    %4244 = vmatprep.subr.bf16.mxu0 0
    %4245 = vmatpush1.bf16.msra.mxu0 %v3458
    %4246 = vmatprep.subr.bf16.mxu0 0
    %4247 = vmatpush1.bf16.msra.mxu0 %v3461
    %4248 = vmatprep.subr.bf16.mxu0 0
    %4249 = vmatpush1.bf16.msra.mxu0 %v3464
    %4250 = vmatprep.mubr.bf16.mxu0 %v3170
    %4251 = vmatmul.mubr.bf16.gmra.mrb[0].mxu0 %v3169
    %v4252 = vpop.f32.mrb[0].mxu0
    %v4253 = vadd.f32 %v4212, %v4252
    %v4254 = vpop.f32.mrb[0].mxu0
    %v4255 = vpop.f32.mrb[0].mxu0
    %v4256 = vadd.f32 %v4215, %v4255
    %v4257 = vpop.f32.mrb[0].mxu0
    %4258 = vdwg.mxu0
    %4259 = vmatprep.subr.bf16.mxu0 0
    %4260 = vmatpush1.bf16.msra.mxu0 %v3467
    %4261 = vmatprep.subr.bf16.mxu0 0
    %4262 = vmatpush1.bf16.msra.mxu0 %v3470
    %4263 = vmatprep.subr.bf16.mxu0 0
    %4264 = vmatpush1.bf16.msra.mxu0 %v3473
    %4265 = vmatprep.subr.bf16.mxu0 0
    %4266 = vmatpush1.bf16.msra.mxu0 %v3476
    %4267 = vmatprep.subr.bf16.mxu0 0
    %4268 = vmatpush1.bf16.msra.mxu0 %v3479
    %4269 = vmatprep.subr.bf16.mxu0 0
    %4270 = vmatpush1.bf16.msra.mxu0 %v3482
    %4271 = vmatprep.subr.bf16.mxu0 0
    %4272 = vmatpush1.bf16.msra.mxu0 %v3485
    %4273 = vmatprep.subr.bf16.mxu0 0
    %4274 = vmatpush1.bf16.msra.mxu0 %v3488
    %4275 = vmatprep.subr.bf16.mxu0 0
    %4276 = vmatpush1.bf16.msra.mxu0 %v3491
    %4277 = vmatprep.subr.bf16.mxu0 0
    %4278 = vmatpush1.bf16.msra.mxu0 %v3494
    %4279 = vmatprep.subr.bf16.mxu0 0
    %4280 = vmatpush1.bf16.msra.mxu0 %v3497
    %4281 = vmatprep.subr.bf16.mxu0 0
    %4282 = vmatpush1.bf16.msra.mxu0 %v3500
    %4283 = vmatprep.subr.bf16.mxu0 0
    %4284 = vmatpush1.bf16.msra.mxu0 %v3503
    %4285 = vmatprep.subr.bf16.mxu0 0
    %4286 = vmatpush1.bf16.msra.mxu0 %v3506
    %4287 = vmatprep.subr.bf16.mxu0 0
    %4288 = vmatpush1.bf16.msra.mxu0 %v3509
    %4289 = vmatprep.subr.bf16.mxu0 0
    %4290 = vmatpush1.bf16.msra.mxu0 %v3512
    %4291 = vmatprep.mubr.bf16.mxu0 %v3172
    %4292 = vmatmul.mubr.bf16.gmra.mrb[0].mxu0 %v3171
    %v4293 = vpop.f32.mrb[0].mxu0
    %v4294 = vadd.f32 %v4253, %v4293
    %v4295 = vpop.f32.mrb[0].mxu0
    %v4296 = vpop.f32.mrb[0].mxu0
    %v4297 = vadd.f32 %v4256, %v4296
    %v4298 = vpop.f32.mrb[0].mxu0
    %4299 = vdwg.mxu0
    %4300 = vmatprep.subr.bf16.mxu0 0
    %4301 = vmatpush1.bf16.msra.mxu0 %v3515
    %4302 = vmatprep.subr.bf16.mxu0 0
    %4303 = vmatpush1.bf16.msra.mxu0 %v3518
    %4304 = vmatprep.subr.bf16.mxu0 0
    %4305 = vmatpush1.bf16.msra.mxu0 %v3521
    %4306 = vmatprep.subr.bf16.mxu0 0
    %4307 = vmatpush1.bf16.msra.mxu0 %v3524
    %4308 = vmatprep.subr.bf16.mxu0 0
    %4309 = vmatpush1.bf16.msra.mxu0 %v3527
    %4310 = vmatprep.subr.bf16.mxu0 0
    %4311 = vmatpush1.bf16.msra.mxu0 %v3530
    %4312 = vmatprep.subr.bf16.mxu0 0
    %4313 = vmatpush1.bf16.msra.mxu0 %v3533
    %4314 = vmatprep.subr.bf16.mxu0 0
    %4315 = vmatpush1.bf16.msra.mxu0 %v3536
    %4316 = vmatprep.subr.bf16.mxu0 0
    %4317 = vmatpush1.bf16.msra.mxu0 %v3539
    %4318 = vmatprep.subr.bf16.mxu0 0
    %4319 = vmatpush1.bf16.msra.mxu0 %v3542
    %4320 = vmatprep.subr.bf16.mxu0 0
    %4321 = vmatpush1.bf16.msra.mxu0 %v3545
    %4322 = vmatprep.subr.bf16.mxu0 0
    %4323 = vmatpush1.bf16.msra.mxu0 %v3548
    %4324 = vmatprep.subr.bf16.mxu0 0
    %4325 = vmatpush1.bf16.msra.mxu0 %v3551
    %4326 = vmatprep.subr.bf16.mxu0 0
    %4327 = vmatpush1.bf16.msra.mxu0 %v3554
    %4328 = vmatprep.subr.bf16.mxu0 0
    %4329 = vmatpush1.bf16.msra.mxu0 %v3557
    %4330 = vmatprep.subr.bf16.mxu0 0
    %4331 = vmatpush1.bf16.msra.mxu0 %v3560
    %4332 = vmatprep.mubr.bf16.mxu0 %v3174
    %4333 = vmatmul.mubr.bf16.gmra.mrb[0].mxu0 %v3173
    %v4334 = vpop.f32.mrb[0].mxu0
    %v4335 = vadd.f32 %v4294, %v4334
    %v4336 = vpop.f32.mrb[0].mxu0
    %v4337 = vpop.f32.mrb[0].mxu0
    %v4338 = vadd.f32 %v4297, %v4337
    %v4339 = vpop.f32.mrb[0].mxu0
    %4340 = vdwg.mxu0
    %4341 = vmatprep.subr.bf16.mxu0 0
    %4342 = vmatpush1.bf16.msra.mxu0 %v3563
    %4343 = vmatprep.subr.bf16.mxu0 0
    %4344 = vmatpush1.bf16.msra.mxu0 %v3566
    %4345 = vmatprep.subr.bf16.mxu0 0
    %4346 = vmatpush1.bf16.msra.mxu0 %v3569
    %4347 = vmatprep.subr.bf16.mxu0 0
    %4348 = vmatpush1.bf16.msra.mxu0 %v3572
    %4349 = vmatprep.subr.bf16.mxu0 0
    %4350 = vmatpush1.bf16.msra.mxu0 %v3575
    %4351 = vmatprep.subr.bf16.mxu0 0
    %4352 = vmatpush1.bf16.msra.mxu0 %v3578
    %4353 = vmatprep.subr.bf16.mxu0 0
    %4354 = vmatpush1.bf16.msra.mxu0 %v3581
    %4355 = vmatprep.subr.bf16.mxu0 0
    %4356 = vmatpush1.bf16.msra.mxu0 %v3584
    %4357 = vmatprep.subr.bf16.mxu0 0
    %4358 = vmatpush1.bf16.msra.mxu0 %v3587
    %4359 = vmatprep.subr.bf16.mxu0 0
    %4360 = vmatpush1.bf16.msra.mxu0 %v3590
    %4361 = vmatprep.subr.bf16.mxu0 0
    %4362 = vmatpush1.bf16.msra.mxu0 %v3593
    %4363 = vmatprep.subr.bf16.mxu0 0
    %4364 = vmatpush1.bf16.msra.mxu0 %v3596
    %4365 = vmatprep.subr.bf16.mxu0 0
    %4366 = vmatpush1.bf16.msra.mxu0 %v3599
    %4367 = vmatprep.subr.bf16.mxu0 0
    %4368 = vmatpush1.bf16.msra.mxu0 %v3602
    %4369 = vmatprep.subr.bf16.mxu0 0
    %4370 = vmatpush1.bf16.msra.mxu0 %v3605
    %4371 = vmatprep.subr.bf16.mxu0 0
    %4372 = vmatpush1.bf16.msra.mxu0 %v3608
    %4373 = vmatprep.mubr.bf16.mxu0 %v3176
    %4374 = vmatmul.mubr.bf16.gmra.mrb[0].mxu0 %v3175
    %v4375 = vpop.f32.mrb[0].mxu0
    %v4376 = vadd.f32 %v4335, %v4375
    %v4377 = vpop.f32.mrb[0].mxu0
    %v4378 = vpop.f32.mrb[0].mxu0
    %v4379 = vadd.f32 %v4338, %v4378
    %v4380 = vpop.f32.mrb[0].mxu0
    %4381 = vdwg.mxu0
    %v4382 = vtanh.pop %v4005
    %v4383 = vtanh.pop %v4007
    %v4384 = vtanh.pop %v4376
    %v4385 = vtanh.pop %v4009
    %v4386 = vtanh.pop %v4011
    %v4387 = vtanh.pop %v4379
    %v4394 = vcombine.low %v4382, %v4383
    %v4395 = vcombine.high %v4382, %v4383
    %v4396 = vcombine.high %v4384, %v4384
    %v4398 = vunpack.c.l.s4 1966171168
    %v4399 = vunpack.c.0.s8 %v4398
    %v4400 = vlaneseq
    %v4401 = vshrl.u32 %v4400, 7
    %v4402 = vsub.s32 %v4399, %v4401
    %v4403 = vrot.slane %v4394, %v4402
    %v4405 = vunpack.c.l.s4 1966171168
    %v4406 = vunpack.c.0.s8 %v4405
    %v4407 = vlaneseq
    %v4408 = vshrl.u32 %v4407, 7
    %v4409 = vsub.s32 %v4406, %v4408
    %v4410 = vrot.slane %v4395, %v4409
    %v4412 = vunpack.c.l.s4 1966171168
    %v4413 = vunpack.c.0.s8 %v4412
    %v4414 = vlaneseq
    %v4415 = vshrl.u32 %v4414, 7
    %v4416 = vsub.s32 %v4413, %v4415
    %v4417 = vrot.slane %v4384, %v4416
    %v4419 = vunpack.c.l.s4 1966171168
    %v4420 = vunpack.c.0.s8 %v4419
    %v4421 = vlaneseq
    %v4422 = vshrl.u32 %v4421, 7
    %v4423 = vsub.s32 %v4420, %v4422
    %v4424 = vrot.slane %v4396, %v4423
    %v4425 = vcombine.low %v4403, %v4417
    %v4426 = vcombine.high %v4403, %v4417
    %v4427 = vcombine.low %v4410, %v4424
    %v4428 = vcombine.high %v4410, %v4424
    %v4430 = vunpack.c.l.s4 1966171168
    %v4431 = vunpack.c.0.s8 %v4430
    %v4432 = vlaneseq
    %v4433 = vshrl.u32 %v4432, 7
    %v4434 = vsub.s32 %v4431, %v4433
    %v4435 = vrot.slane %v4425, %v4434
    %v4437 = vunpack.c.l.s4 1966171168
    %v4438 = vunpack.c.0.s8 %v4437
    %v4439 = vlaneseq
    %v4440 = vshrl.u32 %v4439, 7
    %v4441 = vsub.s32 %v4438, %v4440
    %v4442 = vrot.slane %v4427, %v4441
    %v4444 = vunpack.c.l.s4 1966171168
    %v4445 = vunpack.c.0.s8 %v4444
    %v4446 = vlaneseq
    %v4447 = vshrl.u32 %v4446, 7
    %v4448 = vsub.s32 %v4445, %v4447
    %v4449 = vrot.slane %v4426, %v4448
    %v4451 = vunpack.c.l.s4 1966171168
    %v4452 = vunpack.c.0.s8 %v4451
    %v4453 = vlaneseq
    %v4454 = vshrl.u32 %v4453, 7
    %v4455 = vsub.s32 %v4452, %v4454
    %v4456 = vrot.slane %v4428, %v4455
    %v4457 = vcombine.high %v4435, %v4435
    %v4458 = vcombine.high %v4442, %v4442
    %v4459 = vcombine.high %v4449, %v4449
    %v4460 = vcombine.high %v4456, %v4456
    %v4461 = vcombine.low %v4385, %v4386
    %v4463 = vunpack.c.l.s4 1966171168
    %v4464 = vunpack.c.0.s8 %v4463
    %v4465 = vlaneseq
    %v4466 = vshrl.u32 %v4465, 7
    %v4467 = vsub.s32 %v4464, %v4466
    %v4468 = vrot.slane %v4461, %v4467
    %v4470 = vunpack.c.l.s4 1966171168
    %v4471 = vunpack.c.0.s8 %v4470
    %v4472 = vlaneseq
    %v4473 = vshrl.u32 %v4472, 7
    %v4474 = vsub.s32 %v4471, %v4473
    %v4475 = vrot.slane %v4387, %v4474
    %v4476 = vcombine.low %v4468, %v4475
    %v4477 = vcombine.high %v4468, %v4475
    %v4479 = vunpack.c.l.s4 1966171168
    %v4480 = vunpack.c.0.s8 %v4479
    %v4481 = vlaneseq
    %v4482 = vshrl.u32 %v4481, 7
    %v4483 = vsub.s32 %v4480, %v4482
    %v4484 = vrot.slane %v4476, %v4483
    %v4486 = vunpack.c.l.s4 1966171168
    %v4487 = vunpack.c.0.s8 %v4486
    %v4488 = vlaneseq
    %v4489 = vshrl.u32 %v4488, 7
    %v4490 = vsub.s32 %v4487, %v4489
    %v4491 = vrot.slane %v4477, %v4490
    %s4492 = smul.u32 4, 240
    %s4493 = smul.u32 %s4492, 1
    %s4494 = sshll.u32 %s4493, 4
    %4495 = dma.done %s153, %s4494
    %v4496 = vlaneseq
    %v4497 = vshrl.u32 %v4496, 7
    %v4498 = vsub.s32 0, %v4497
    %v4499 = vrot.slane %v4435, %v4498
    %v4500 = vlaneseq
    %v4501 = vshrl.u32 %v4500, 7
    %v4502 = vsub.s32 1, %v4501
    %v4503 = vrot.slane %v4435, %v4502
    %v4504 = vlaneseq
    %v4505 = vshrl.u32 %v4504, 7
    %v4506 = vsub.s32 2, %v4505
    %v4507 = vrot.slane %v4435, %v4506
    %v4508 = vlaneseq
    %v4509 = vshrl.u32 %v4508, 7
    %v4510 = vsub.s32 0, %v4509
    %v4511 = vrot.slane %v4456, %v4510
    %v4512 = vlaneseq
    %v4513 = vshrl.u32 %v4512, 7
    %v4514 = vsub.s32 1, %v4513
    %v4515 = vrot.slane %v4456, %v4514
    %v4516 = vlaneseq
    %v4517 = vshrl.u32 %v4516, 7
    %v4518 = vsub.s32 2, %v4517
    %v4519 = vrot.slane %v4456, %v4518
    %v4526 = vlaneseq
    %v4527 = vshrl.u32 %v4526, 7
    %v4528 = vsub.s32 0, %v4527
    %v4529 = vrot.slane %v4449, %v4528
    %v4530 = vlaneseq
    %v4531 = vshrl.u32 %v4530, 7
    %v4532 = vsub.s32 1, %v4531
    %v4533 = vrot.slane %v4449, %v4532
    %v4534 = vlaneseq
    %v4535 = vshrl.u32 %v4534, 7
    %v4536 = vsub.s32 2, %v4535
    %v4537 = vrot.slane %v4449, %v4536
    %v4538 = vlaneseq
    %v4539 = vshrl.u32 %v4538, 7
    %v4540 = vsub.s32 0, %v4539
    %v4541 = vrot.slane %v4458, %v4540
    %v4542 = vlaneseq
    %v4543 = vshrl.u32 %v4542, 7
    %v4544 = vsub.s32 1, %v4543
    %v4545 = vrot.slane %v4458, %v4544
    %v4546 = vlaneseq
    %v4547 = vshrl.u32 %v4546, 7
    %v4548 = vsub.s32 2, %v4547
    %v4549 = vrot.slane %v4458, %v4548
    %v4556 = vlaneseq
    %v4557 = vshrl.u32 %v4556, 7
    %v4558 = vsub.s32 0, %v4557
    %v4559 = vrot.slane %v4457, %v4558
    %v4560 = vlaneseq
    %v4561 = vshrl.u32 %v4560, 7
    %v4562 = vsub.s32 1, %v4561
    %v4563 = vrot.slane %v4457, %v4562
    %v4564 = vlaneseq
    %v4565 = vshrl.u32 %v4564, 7
    %v4566 = vsub.s32 2, %v4565
    %v4567 = vrot.slane %v4457, %v4566
    %v4568 = vlaneseq
    %v4569 = vshrl.u32 %v4568, 7
    %v4570 = vsub.s32 0, %v4569
    %v4571 = vrot.slane %v4460, %v4570
    %v4572 = vlaneseq
    %v4573 = vshrl.u32 %v4572, 7
    %v4574 = vsub.s32 1, %v4573
    %v4575 = vrot.slane %v4460, %v4574
    %v4576 = vlaneseq
    %v4577 = vshrl.u32 %v4576, 7
    %v4578 = vsub.s32 2, %v4577
    %v4579 = vrot.slane %v4460, %v4578
    %v4586 = vlaneseq
    %v4587 = vshrl.u32 %v4586, 7
    %v4588 = vsub.s32 0, %v4587
    %v4589 = vrot.slane %v4459, %v4588
    %v4590 = vlaneseq
    %v4591 = vshrl.u32 %v4590, 7
    %v4592 = vsub.s32 1, %v4591
    %v4593 = vrot.slane %v4459, %v4592
    %v4594 = vlaneseq
    %v4595 = vshrl.u32 %v4594, 7
    %v4596 = vsub.s32 2, %v4595
    %v4597 = vrot.slane %v4459, %v4596
    %v4598 = vlaneseq
    %v4599 = vshrl.u32 %v4598, 7
    %v4600 = vsub.s32 0, %v4599
    %v4601 = vrot.slane %v4484, %v4600
    %v4602 = vlaneseq
    %v4603 = vshrl.u32 %v4602, 7
    %v4604 = vsub.s32 1, %v4603
    %v4605 = vrot.slane %v4484, %v4604
    %v4606 = vlaneseq
    %v4607 = vshrl.u32 %v4606, 7
    %v4608 = vsub.s32 2, %v4607
    %v4609 = vrot.slane %v4484, %v4608
    %v4616 = vlaneseq
    %v4617 = vshrl.u32 %v4616, 7
    %v4618 = vsub.s32 0, %v4617
    %v4619 = vrot.slane %v4442, %v4618
    %v4620 = vlaneseq
    %v4621 = vshrl.u32 %v4620, 7
    %v4622 = vsub.s32 1, %v4621
    %v4623 = vrot.slane %v4442, %v4622
    %v4624 = vlaneseq
    %v4625 = vshrl.u32 %v4624, 7
    %v4626 = vsub.s32 2, %v4625
    %v4627 = vrot.slane %v4442, %v4626
    %v4628 = vlaneseq
    %v4629 = vshrl.u32 %v4628, 7
    %v4630 = vsub.s32 0, %v4629
    %v4631 = vrot.slane %v4491, %v4630
    %v4632 = vlaneseq
    %v4633 = vshrl.u32 %v4632, 7
    %v4634 = vsub.s32 1, %v4633
    %v4635 = vrot.slane %v4491, %v4634
    %v4636 = vlaneseq
    %v4637 = vshrl.u32 %v4636, 7
    %v4638 = vsub.s32 2, %v4637
    %v4639 = vrot.slane %v4491, %v4638
    %v4646 = vpack.c.bf16 %v4499, %v4499
    %v4647 = vpack.c.bf16 %v4503, %v4503
    %v4648 = vpack.c.bf16 %v4507, %v4507
    %v4649 = vpack.c.bf16 %v4529, %v4529
    %v4650 = vpack.c.bf16 %v4533, %v4533
    %v4651 = vpack.c.bf16 %v4537, %v4537
    %v4652 = vpack.c.bf16 %v4559, %v4559
    %v4653 = vpack.c.bf16 %v4563, %v4563
    %v4654 = vpack.c.bf16 %v4567, %v4567
    %v4655 = vpack.c.bf16 %v4589, %v4589
    %v4656 = vpack.c.bf16 %v4593, %v4593
    %v4657 = vpack.c.bf16 %v4597, %v4597
    %v4658 = vpack.c.bf16 %v4619, %v4619
    %v4659 = vpack.c.bf16 %v4623, %v4623
    %v4660 = vpack.c.bf16 %v4627, %v4627
    %v4661 = vpack.c.bf16 %v4511, %v4511
    %v4662 = vpack.c.bf16 %v4515, %v4515
    %v4663 = vpack.c.bf16 %v4519, %v4519
    %v4664 = vpack.c.bf16 %v4541, %v4541
    %v4665 = vpack.c.bf16 %v4545, %v4545
    %v4666 = vpack.c.bf16 %v4549, %v4549
    %v4667 = vpack.c.bf16 %v4571, %v4571
    %v4668 = vpack.c.bf16 %v4575, %v4575
    %v4669 = vpack.c.bf16 %v4579, %v4579
    %v4670 = vpack.c.bf16 %v4601, %v4601
    %v4671 = vpack.c.bf16 %v4605, %v4605
    %v4672 = vpack.c.bf16 %v4609, %v4609
    %v4673 = vpack.c.bf16 %v4631, %v4631
    %v4674 = vpack.c.bf16 %v4635, %v4635
    %v4675 = vpack.c.bf16 %v4639, %v4639
    %v4676 = vld [vmem:[#allocation3] sm:$0xff]
    %v4677 = vld [vmem:[#allocation3 + $0x8] sm:$0xff]
    %v4678 = vld [vmem:[#allocation3 + $0x10] sm:$0xff]
    %v4679 = vld [vmem:[#allocation3 + $0x18] sm:$0xff]
    %v4680 = vld [vmem:[#allocation3 + $0x20] sm:$0xff]
    %v4681 = vld [vmem:[#allocation3 + $0x28] sm:$0xff]
    %v4682 = vld [vmem:[#allocation3 + $0x30] sm:$0xff]
    %v4683 = vld [vmem:[#allocation3 + $0x38] sm:$0xff]
    %v4684 = vld [vmem:[#allocation3 + $0x40] sm:$0xff]
    %v4685 = vld [vmem:[#allocation3 + $0x48] sm:$0xff]
    %v4686 = vld [vmem:[#allocation3 + $0x50] sm:$0xff]
    %v4687 = vld [vmem:[#allocation3 + $0x58] sm:$0xff]
    %v4688 = vld [vmem:[#allocation3 + $0x60] sm:$0xff]
    %v4689 = vld [vmem:[#allocation3 + $0x68] sm:$0xff]
    %v4690 = vld [vmem:[#allocation3 + $0x70] sm:$0xff]
    %v4691 = vld [vmem:[#allocation3 + $0x78] sm:$0xff]
    %v4692 = vld [vmem:[#allocation3 + $0x80] sm:$0xff]
    %v4693 = vld [vmem:[#allocation3 + $0x88] sm:$0xff]
    %v4694 = vld [vmem:[#allocation3 + $0x90] sm:$0xff]
    %v4695 = vld [vmem:[#allocation3 + $0x98] sm:$0xff]
    %v4696 = vld [vmem:[#allocation3 + $0xa0] sm:$0xff]
    %v4697 = vld [vmem:[#allocation3 + $0xa8] sm:$0xff]
    %v4698 = vld [vmem:[#allocation3 + $0xb0] sm:$0xff]
    %v4699 = vld [vmem:[#allocation3 + $0xb8] sm:$0xff]
    %v4700 = vld [vmem:[#allocation3 + $0xc0] sm:$0xff]
    %v4701 = vld [vmem:[#allocation3 + $0xc8] sm:$0xff]
    %v4702 = vld [vmem:[#allocation3 + $0xd0] sm:$0xff]
    %v4703 = vld [vmem:[#allocation3 + $0xd8] sm:$0xff]
    %v4704 = vld [vmem:[#allocation3 + $0xe0] sm:$0xff]
    %v4705 = vld [vmem:[#allocation3 + $0xe8] sm:$0xff]
    %v4706 = vld [vmem:[#allocation3 + $0xf0] sm:$0xff]
    %v4707 = vld [vmem:[#allocation3 + $0xf8] sm:$0xff]
    %v4708 = vld [vmem:[#allocation3 + $0x100] sm:$0xff]
    %v4709 = vld [vmem:[#allocation3 + $0x108] sm:$0xff]
    %v4710 = vld [vmem:[#allocation3 + $0x110] sm:$0xff]
    %v4711 = vld [vmem:[#allocation3 + $0x118] sm:$0xff]
    %v4712 = vld [vmem:[#allocation3 + $0x120] sm:$0xff]
    %v4713 = vld [vmem:[#allocation3 + $0x128] sm:$0xff]
    %v4714 = vld [vmem:[#allocation3 + $0x130] sm:$0xff]
    %v4715 = vld [vmem:[#allocation3 + $0x138] sm:$0xff]
    %v4716 = vld [vmem:[#allocation3 + $0x140] sm:$0xff]
    %v4717 = vld [vmem:[#allocation3 + $0x148] sm:$0xff]
    %v4718 = vld [vmem:[#allocation3 + $0x150] sm:$0xff]
    %v4719 = vld [vmem:[#allocation3 + $0x158] sm:$0xff]
    %v4720 = vld [vmem:[#allocation3 + $0x160] sm:$0xff]
    %v4721 = vld [vmem:[#allocation3 + $0x168] sm:$0xff]
    %v4722 = vld [vmem:[#allocation3 + $0x170] sm:$0xff]
    %v4723 = vld [vmem:[#allocation3 + $0x178] sm:$0xff]
    %v4724 = vld [vmem:[#allocation3 + $0x180] sm:$0xff]
    %v4725 = vld [vmem:[#allocation3 + $0x188] sm:$0xff]
    %v4726 = vld [vmem:[#allocation3 + $0x190] sm:$0xff]
    %v4727 = vld [vmem:[#allocation3 + $0x198] sm:$0xff]
    %v4728 = vld [vmem:[#allocation3 + $0x1a0] sm:$0xff]
    %v4729 = vld [vmem:[#allocation3 + $0x1a8] sm:$0xff]
    %v4730 = vld [vmem:[#allocation3 + $0x1b0] sm:$0xff]
    %v4731 = vld [vmem:[#allocation3 + $0x1b8] sm:$0xff]
    %v4732 = vld [vmem:[#allocation3 + $0x1c0] sm:$0xff]
    %v4733 = vld [vmem:[#allocation3 + $0x1c8] sm:$0xff]
    %v4734 = vld [vmem:[#allocation3 + $0x1d0] sm:$0xff]
    %v4735 = vld [vmem:[#allocation3 + $0x1d8] sm:$0xff]
    %v4736 = vld [vmem:[#allocation3 + $0x1e0] sm:$0xff]
    %v4737 = vld [vmem:[#allocation3 + $0x1e8] sm:$0xff]
    %v4738 = vld [vmem:[#allocation3 + $0x1f0] sm:$0xff]
    %v4739 = vld [vmem:[#allocation3 + $0x1f8] sm:$0xff]
    %v4740 = vld [vmem:[#allocation3 + $0x200] sm:$0xff]
    %v4741 = vld [vmem:[#allocation3 + $0x208] sm:$0xff]
    %v4742 = vld [vmem:[#allocation3 + $0x210] sm:$0xff]
    %v4743 = vld [vmem:[#allocation3 + $0x218] sm:$0xff]
    %v4744 = vld [vmem:[#allocation3 + $0x220] sm:$0xff]
    %v4745 = vld [vmem:[#allocation3 + $0x228] sm:$0xff]
    %v4746 = vld [vmem:[#allocation3 + $0x230] sm:$0xff]
    %v4747 = vld [vmem:[#allocation3 + $0x238] sm:$0xff]
    %v4748 = vld [vmem:[#allocation3 + $0x240] sm:$0xff]
    %v4749 = vld [vmem:[#allocation3 + $0x248] sm:$0xff]
    %v4750 = vld [vmem:[#allocation3 + $0x250] sm:$0xff]
    %v4751 = vld [vmem:[#allocation3 + $0x258] sm:$0xff]
    %v4752 = vld [vmem:[#allocation3 + $0x260] sm:$0xff]
    %v4753 = vld [vmem:[#allocation3 + $0x268] sm:$0xff]
    %v4754 = vld [vmem:[#allocation3 + $0x270] sm:$0xff]
    %v4755 = vld [vmem:[#allocation3 + $0x278] sm:$0xff]
    %v4756 = vld [vmem:[#allocation3 + $0x280] sm:$0xff]
    %v4757 = vld [vmem:[#allocation3 + $0x288] sm:$0xff]
    %v4758 = vld [vmem:[#allocation3 + $0x290] sm:$0xff]
    %v4759 = vld [vmem:[#allocation3 + $0x298] sm:$0xff]
    %v4760 = vld [vmem:[#allocation3 + $0x2a0] sm:$0xff]
    %v4761 = vld [vmem:[#allocation3 + $0x2a8] sm:$0xff]
    %v4762 = vld [vmem:[#allocation3 + $0x2b0] sm:$0xff]
    %v4763 = vld [vmem:[#allocation3 + $0x2b8] sm:$0xff]
    %v4764 = vld [vmem:[#allocation3 + $0x2c0] sm:$0xff]
    %v4765 = vld [vmem:[#allocation3 + $0x2c8] sm:$0xff]
    %v4766 = vld [vmem:[#allocation3 + $0x2d0] sm:$0xff]
    %v4767 = vld [vmem:[#allocation3 + $0x2d8] sm:$0xff]
    %v4768 = vld [vmem:[#allocation3 + $0x2e0] sm:$0xff]
    %v4769 = vld [vmem:[#allocation3 + $0x2e8] sm:$0xff]
    %v4770 = vld [vmem:[#allocation3 + $0x2f0] sm:$0xff]
    %v4771 = vld [vmem:[#allocation3 + $0x2f8] sm:$0xff]
    %v4772 = vld [vmem:[#allocation3 + $0x300] sm:$0xff]
    %v4773 = vld [vmem:[#allocation3 + $0x308] sm:$0xff]
    %v4774 = vld [vmem:[#allocation3 + $0x310] sm:$0xff]
    %v4775 = vld [vmem:[#allocation3 + $0x318] sm:$0xff]
    %v4776 = vld [vmem:[#allocation3 + $0x320] sm:$0xff]
    %v4777 = vld [vmem:[#allocation3 + $0x328] sm:$0xff]
    %v4778 = vld [vmem:[#allocation3 + $0x330] sm:$0xff]
    %v4779 = vld [vmem:[#allocation3 + $0x338] sm:$0xff]
    %v4780 = vld [vmem:[#allocation3 + $0x340] sm:$0xff]
    %v4781 = vld [vmem:[#allocation3 + $0x348] sm:$0xff]
    %v4782 = vld [vmem:[#allocation3 + $0x350] sm:$0xff]
    %v4783 = vld [vmem:[#allocation3 + $0x358] sm:$0xff]
    %v4784 = vld [vmem:[#allocation3 + $0x360] sm:$0xff]
    %v4785 = vld [vmem:[#allocation3 + $0x368] sm:$0xff]
    %v4786 = vld [vmem:[#allocation3 + $0x370] sm:$0xff]
    %v4787 = vld [vmem:[#allocation3 + $0x378] sm:$0xff]
    %v4788 = vld [vmem:[#allocation3 + $0x380] sm:$0xff]
    %v4789 = vld [vmem:[#allocation3 + $0x388] sm:$0xff]
    %v4790 = vld [vmem:[#allocation3 + $0x390] sm:$0xff]
    %v4791 = vld [vmem:[#allocation3 + $0x398] sm:$0xff]
    %v4792 = vld [vmem:[#allocation3 + $0x3a0] sm:$0xff]
    %v4793 = vld [vmem:[#allocation3 + $0x3a8] sm:$0xff]
    %v4794 = vld [vmem:[#allocation3 + $0x3b0] sm:$0xff]
    %v4795 = vld [vmem:[#allocation3 + $0x3b8] sm:$0xff]
    %v4796 = vld [vmem:[#allocation13] sm:$0x1]
    %v4798 = vlaneseq
    %v4799 = vshrl.u32 %v4798, 7
    %v4800 = vsub.s32 0, %v4799
    %v4801 = vrot.slane %v4796, %v4800
    %v4833 = vunpack.c.l.b16 %v4646
    %v4834 = vunpack.c.l.b16 %v4647
    %v4835 = vunpack.c.l.b16 %v4648
    %v4836 = vunpack.c.l.b16 %v4649
    %v4837 = vunpack.c.l.b16 %v4650
    %v4838 = vunpack.c.l.b16 %v4651
    %v4839 = vunpack.c.l.b16 %v4652
    %v4840 = vunpack.c.l.b16 %v4653
    %v4841 = vunpack.c.l.b16 %v4654
    %v4842 = vunpack.c.l.b16 %v4655
    %v4843 = vunpack.c.l.b16 %v4656
    %v4844 = vunpack.c.l.b16 %v4657
    %v4845 = vunpack.c.l.b16 %v4658
    %v4846 = vunpack.c.l.b16 %v4659
    %v4847 = vunpack.c.l.b16 %v4660
    %v4848 = vunpack.c.l.b16 %v4661
    %v4849 = vunpack.c.l.b16 %v4662
    %v4850 = vunpack.c.l.b16 %v4663
    %v4851 = vunpack.c.l.b16 %v4664
    %v4852 = vunpack.c.l.b16 %v4665
    %v4853 = vunpack.c.l.b16 %v4666
    %v4854 = vunpack.c.l.b16 %v4667
    %v4855 = vunpack.c.l.b16 %v4668
    %v4856 = vunpack.c.l.b16 %v4669
    %v4857 = vunpack.c.l.b16 %v4670
    %v4858 = vunpack.c.l.b16 %v4671
    %v4859 = vunpack.c.l.b16 %v4672
    %v4860 = vunpack.c.l.b16 %v4673
    %v4861 = vunpack.c.l.b16 %v4674
    %v4862 = vunpack.c.l.b16 %v4675
    %v4863 = vrot.slane %v4848, 7
    %vm4864 = vcmask 1041409
    %v4865 = vsel %vm4864, %v4863, %v4833
    %v4866 = vrot.slane %v4849, 7
    %v4867 = vsel %vm4864, %v4866, %v4834
    %v4868 = vrot.slane %v4850, 7
    %v4869 = vsel %vm4864, %v4868, %v4835
    %v4870 = vrot.slane %v4851, 7
    %v4871 = vsel %vm4864, %v4870, %v4836
    %v4872 = vrot.slane %v4852, 7
    %v4873 = vsel %vm4864, %v4872, %v4837
    %v4874 = vrot.slane %v4853, 7
    %v4875 = vsel %vm4864, %v4874, %v4838
    %v4876 = vrot.slane %v4854, 7
    %v4877 = vsel %vm4864, %v4876, %v4839
    %v4878 = vrot.slane %v4855, 7
    %v4879 = vsel %vm4864, %v4878, %v4840
    %v4880 = vrot.slane %v4856, 7
    %v4881 = vsel %vm4864, %v4880, %v4841
    %v4882 = vrot.slane %v4857, 7
    %v4883 = vsel %vm4864, %v4882, %v4842
    %v4884 = vrot.slane %v4858, 7
    %v4885 = vsel %vm4864, %v4884, %v4843
    %v4886 = vrot.slane %v4859, 7
    %v4887 = vsel %vm4864, %v4886, %v4844
    %v4888 = vrot.slane %v4860, 7
    %v4889 = vsel %vm4864, %v4888, %v4845
    %v4890 = vrot.slane %v4861, 7
    %v4891 = vsel %vm4864, %v4890, %v4846
    %v4892 = vrot.slane %v4862, 7
    %v4893 = vsel %vm4864, %v4892, %v4847
    %v4894 = vpack.c.b16 %v4865, %v4865
    %v4895 = vpack.c.b16 %v4867, %v4867
    %v4896 = vpack.c.b16 %v4869, %v4869
    %v4897 = vpack.c.b16 %v4871, %v4871
    %v4898 = vpack.c.b16 %v4873, %v4873
    %v4899 = vpack.c.b16 %v4875, %v4875
    %v4900 = vpack.c.b16 %v4877, %v4877
    %v4901 = vpack.c.b16 %v4879, %v4879
    %v4902 = vpack.c.b16 %v4881, %v4881
    %v4903 = vpack.c.b16 %v4883, %v4883
    %v4904 = vpack.c.b16 %v4885, %v4885
    %v4905 = vpack.c.b16 %v4887, %v4887
    %v4906 = vpack.c.b16 %v4889, %v4889
    %v4907 = vpack.c.b16 %v4891, %v4891
    %v4908 = vpack.c.b16 %v4893, %v4893
    %4924 = vmatprep.subr.bf16.mxu0 0
    %4925 = vmatpush1.bf16.msra.mxu0 %v4676
    %4926 = vmatprep.subr.bf16.mxu0 0
    %4927 = vmatpush1.bf16.msra.mxu0 %v4677
    %4928 = vmatprep.subr.bf16.mxu0 0
    %4929 = vmatpush1.bf16.msra.mxu0 %v4678
    %4930 = vmatprep.subr.bf16.mxu0 0
    %4931 = vmatpush1.bf16.msra.mxu0 %v4679
    %4932 = vmatprep.subr.bf16.mxu0 0
    %4933 = vmatpush1.bf16.msra.mxu0 %v4680
    %4934 = vmatprep.subr.bf16.mxu0 0
    %4935 = vmatpush1.bf16.msra.mxu0 %v4681
    %4936 = vmatprep.subr.bf16.mxu0 0
    %4937 = vmatpush1.bf16.msra.mxu0 %v4682
    %4938 = vmatprep.subr.bf16.mxu0 0
    %4939 = vmatpush1.bf16.msra.mxu0 %v4683
    %4940 = vmatprep.subr.bf16.mxu0 0
    %4941 = vmatpush1.bf16.msra.mxu0 %v4684
    %4942 = vmatprep.subr.bf16.mxu0 0
    %4943 = vmatpush1.bf16.msra.mxu0 %v4685
    %4944 = vmatprep.subr.bf16.mxu0 0
    %4945 = vmatpush1.bf16.msra.mxu0 %v4686
    %4946 = vmatprep.subr.bf16.mxu0 0
    %4947 = vmatpush1.bf16.msra.mxu0 %v4687
    %4948 = vmatprep.subr.bf16.mxu0 0
    %4949 = vmatpush1.bf16.msra.mxu0 %v4688
    %4950 = vmatprep.subr.bf16.mxu0 0
    %4951 = vmatpush1.bf16.msra.mxu0 %v4689
    %4952 = vmatprep.subr.bf16.mxu0 0
    %4953 = vmatpush1.bf16.msra.mxu0 %v4690
    %4954 = vmatprep.subr.bf16.mxu0 0
    %4955 = vmatpush1.bf16.msra.mxu0 %v4691
    %4956 = vmatprep.mubr.bf16.mxu0 %v4895
    %4957 = vmatmul.mubr.bf16.gmra.mrb[0].mxu0 %v4894
    %v4958 = vpop.f32.mrb[0].mxu0
    %v4959 = vadd.f32 %v4801, %v4958
    %v4960 = vpop.f32.mrb[0].mxu0
    %v4961 = vpop.f32.mrb[0].mxu0
    %v4962 = vpop.f32.mrb[0].mxu0
    %4963 = vdwg.mxu0
    %4964 = vmatprep.subr.bf16.mxu0 0
    %4965 = vmatpush1.bf16.msra.mxu0 %v4692
    %4966 = vmatprep.subr.bf16.mxu0 0
    %4967 = vmatpush1.bf16.msra.mxu0 %v4693
    %4968 = vmatprep.subr.bf16.mxu0 0
    %4969 = vmatpush1.bf16.msra.mxu0 %v4694
    %4970 = vmatprep.subr.bf16.mxu0 0
    %4971 = vmatpush1.bf16.msra.mxu0 %v4695
    %4972 = vmatprep.subr.bf16.mxu0 0
    %4973 = vmatpush1.bf16.msra.mxu0 %v4696
    %4974 = vmatprep.subr.bf16.mxu0 0
    %4975 = vmatpush1.bf16.msra.mxu0 %v4697
    %4976 = vmatprep.subr.bf16.mxu0 0
    %4977 = vmatpush1.bf16.msra.mxu0 %v4698
    %4978 = vmatprep.subr.bf16.mxu0 0
    %4979 = vmatpush1.bf16.msra.mxu0 %v4699
    %4980 = vmatprep.subr.bf16.mxu0 0
    %4981 = vmatpush1.bf16.msra.mxu0 %v4700
    %4982 = vmatprep.subr.bf16.mxu0 0
    %4983 = vmatpush1.bf16.msra.mxu0 %v4701
    %4984 = vmatprep.subr.bf16.mxu0 0
    %4985 = vmatpush1.bf16.msra.mxu0 %v4702
    %4986 = vmatprep.subr.bf16.mxu0 0
    %4987 = vmatpush1.bf16.msra.mxu0 %v4703
    %4988 = vmatprep.subr.bf16.mxu0 0
    %4989 = vmatpush1.bf16.msra.mxu0 %v4704
    %4990 = vmatprep.subr.bf16.mxu0 0
    %4991 = vmatpush1.bf16.msra.mxu0 %v4705
    %4992 = vmatprep.subr.bf16.mxu0 0
    %4993 = vmatpush1.bf16.msra.mxu0 %v4706
    %4994 = vmatprep.subr.bf16.mxu0 0
    %4995 = vmatpush1.bf16.msra.mxu0 %v4707
    %4996 = vmatprep.mubr.bf16.mxu0 %v4897
    %4997 = vmatmul.mubr.bf16.gmra.mrb[0].mxu0 %v4896
    %v4998 = vpop.f32.mrb[0].mxu0
    %v4999 = vadd.f32 %v4959, %v4998
    %v5000 = vpop.f32.mrb[0].mxu0
    %v5001 = vpop.f32.mrb[0].mxu0
    %v5002 = vpop.f32.mrb[0].mxu0
    %5003 = vdwg.mxu0
    %5004 = vmatprep.subr.bf16.mxu0 0
    %5005 = vmatpush1.bf16.msra.mxu0 %v4708
    %5006 = vmatprep.subr.bf16.mxu0 0
    %5007 = vmatpush1.bf16.msra.mxu0 %v4709
    %5008 = vmatprep.subr.bf16.mxu0 0
    %5009 = vmatpush1.bf16.msra.mxu0 %v4710
    %5010 = vmatprep.subr.bf16.mxu0 0
    %5011 = vmatpush1.bf16.msra.mxu0 %v4711
    %5012 = vmatprep.subr.bf16.mxu0 0
    %5013 = vmatpush1.bf16.msra.mxu0 %v4712
    %5014 = vmatprep.subr.bf16.mxu0 0
    %5015 = vmatpush1.bf16.msra.mxu0 %v4713
    %5016 = vmatprep.subr.bf16.mxu0 0
    %5017 = vmatpush1.bf16.msra.mxu0 %v4714
    %5018 = vmatprep.subr.bf16.mxu0 0
    %5019 = vmatpush1.bf16.msra.mxu0 %v4715
    %5020 = vmatprep.subr.bf16.mxu0 0
    %5021 = vmatpush1.bf16.msra.mxu0 %v4716
    %5022 = vmatprep.subr.bf16.mxu0 0
    %5023 = vmatpush1.bf16.msra.mxu0 %v4717
    %5024 = vmatprep.subr.bf16.mxu0 0
    %5025 = vmatpush1.bf16.msra.mxu0 %v4718
    %5026 = vmatprep.subr.bf16.mxu0 0
    %5027 = vmatpush1.bf16.msra.mxu0 %v4719
    %5028 = vmatprep.subr.bf16.mxu0 0
    %5029 = vmatpush1.bf16.msra.mxu0 %v4720
    %5030 = vmatprep.subr.bf16.mxu0 0
    %5031 = vmatpush1.bf16.msra.mxu0 %v4721
    %5032 = vmatprep.subr.bf16.mxu0 0
    %5033 = vmatpush1.bf16.msra.mxu0 %v4722
    %5034 = vmatprep.subr.bf16.mxu0 0
    %5035 = vmatpush1.bf16.msra.mxu0 %v4723
    %5036 = vmatprep.mubr.bf16.mxu0 %v4899
    %5037 = vmatmul.mubr.bf16.gmra.mrb[0].mxu0 %v4898
    %v5038 = vpop.f32.mrb[0].mxu0
    %v5039 = vadd.f32 %v4999, %v5038
    %v5040 = vpop.f32.mrb[0].mxu0
    %v5041 = vpop.f32.mrb[0].mxu0
    %v5042 = vpop.f32.mrb[0].mxu0
    %5043 = vdwg.mxu0
    %5044 = vmatprep.subr.bf16.mxu0 0
    %5045 = vmatpush1.bf16.msra.mxu0 %v4724
    %5046 = vmatprep.subr.bf16.mxu0 0
    %5047 = vmatpush1.bf16.msra.mxu0 %v4725
    %5048 = vmatprep.subr.bf16.mxu0 0
    %5049 = vmatpush1.bf16.msra.mxu0 %v4726
    %5050 = vmatprep.subr.bf16.mxu0 0
    %5051 = vmatpush1.bf16.msra.mxu0 %v4727
    %5052 = vmatprep.subr.bf16.mxu0 0
    %5053 = vmatpush1.bf16.msra.mxu0 %v4728
    %5054 = vmatprep.subr.bf16.mxu0 0
    %5055 = vmatpush1.bf16.msra.mxu0 %v4729
    %5056 = vmatprep.subr.bf16.mxu0 0
    %5057 = vmatpush1.bf16.msra.mxu0 %v4730
    %5058 = vmatprep.subr.bf16.mxu0 0
    %5059 = vmatpush1.bf16.msra.mxu0 %v4731
    %5060 = vmatprep.subr.bf16.mxu0 0
    %5061 = vmatpush1.bf16.msra.mxu0 %v4732
    %5062 = vmatprep.subr.bf16.mxu0 0
    %5063 = vmatpush1.bf16.msra.mxu0 %v4733
    %5064 = vmatprep.subr.bf16.mxu0 0
    %5065 = vmatpush1.bf16.msra.mxu0 %v4734
    %5066 = vmatprep.subr.bf16.mxu0 0
    %5067 = vmatpush1.bf16.msra.mxu0 %v4735
    %5068 = vmatprep.subr.bf16.mxu0 0
    %5069 = vmatpush1.bf16.msra.mxu0 %v4736
    %5070 = vmatprep.subr.bf16.mxu0 0
    %5071 = vmatpush1.bf16.msra.mxu0 %v4737
    %5072 = vmatprep.subr.bf16.mxu0 0
    %5073 = vmatpush1.bf16.msra.mxu0 %v4738
    %5074 = vmatprep.subr.bf16.mxu0 0
    %5075 = vmatpush1.bf16.msra.mxu0 %v4739
    %5076 = vmatprep.mubr.bf16.mxu0 %v4901
    %5077 = vmatmul.mubr.bf16.gmra.mrb[0].mxu0 %v4900
    %v5078 = vpop.f32.mrb[0].mxu0
    %v5079 = vadd.f32 %v5039, %v5078
    %v5080 = vpop.f32.mrb[0].mxu0
    %v5081 = vpop.f32.mrb[0].mxu0
    %v5082 = vpop.f32.mrb[0].mxu0
    %5083 = vdwg.mxu0
    %5084 = vmatprep.subr.bf16.mxu0 0
    %5085 = vmatpush1.bf16.msra.mxu0 %v4740
    %5086 = vmatprep.subr.bf16.mxu0 0
    %5087 = vmatpush1.bf16.msra.mxu0 %v4741
    %5088 = vmatprep.subr.bf16.mxu0 0
    %5089 = vmatpush1.bf16.msra.mxu0 %v4742
    %5090 = vmatprep.subr.bf16.mxu0 0
    %5091 = vmatpush1.bf16.msra.mxu0 %v4743
    %5092 = vmatprep.subr.bf16.mxu0 0
    %5093 = vmatpush1.bf16.msra.mxu0 %v4744
    %5094 = vmatprep.subr.bf16.mxu0 0
    %5095 = vmatpush1.bf16.msra.mxu0 %v4745
    %5096 = vmatprep.subr.bf16.mxu0 0
    %5097 = vmatpush1.bf16.msra.mxu0 %v4746
    %5098 = vmatprep.subr.bf16.mxu0 0
    %5099 = vmatpush1.bf16.msra.mxu0 %v4747
    %5100 = vmatprep.subr.bf16.mxu0 0
    %5101 = vmatpush1.bf16.msra.mxu0 %v4748
    %5102 = vmatprep.subr.bf16.mxu0 0
    %5103 = vmatpush1.bf16.msra.mxu0 %v4749
    %5104 = vmatprep.subr.bf16.mxu0 0
    %5105 = vmatpush1.bf16.msra.mxu0 %v4750
    %5106 = vmatprep.subr.bf16.mxu0 0
    %5107 = vmatpush1.bf16.msra.mxu0 %v4751
    %5108 = vmatprep.subr.bf16.mxu0 0
    %5109 = vmatpush1.bf16.msra.mxu0 %v4752
    %5110 = vmatprep.subr.bf16.mxu0 0
    %5111 = vmatpush1.bf16.msra.mxu0 %v4753
    %5112 = vmatprep.subr.bf16.mxu0 0
    %5113 = vmatpush1.bf16.msra.mxu0 %v4754
    %5114 = vmatprep.subr.bf16.mxu0 0
    %5115 = vmatpush1.bf16.msra.mxu0 %v4755
    %5116 = vmatprep.mubr.bf16.mxu0 %v4903
    %5117 = vmatmul.mubr.bf16.gmra.mrb[0].mxu0 %v4902
    %v5118 = vpop.f32.mrb[0].mxu0
    %v5119 = vadd.f32 %v5079, %v5118
    %v5120 = vpop.f32.mrb[0].mxu0
    %v5121 = vpop.f32.mrb[0].mxu0
    %v5122 = vpop.f32.mrb[0].mxu0
    %5123 = vdwg.mxu0
    %5124 = vmatprep.subr.bf16.mxu0 0
    %5125 = vmatpush1.bf16.msra.mxu0 %v4756
    %5126 = vmatprep.subr.bf16.mxu0 0
    %5127 = vmatpush1.bf16.msra.mxu0 %v4757
    %5128 = vmatprep.subr.bf16.mxu0 0
    %5129 = vmatpush1.bf16.msra.mxu0 %v4758
    %5130 = vmatprep.subr.bf16.mxu0 0
    %5131 = vmatpush1.bf16.msra.mxu0 %v4759
    %5132 = vmatprep.subr.bf16.mxu0 0
    %5133 = vmatpush1.bf16.msra.mxu0 %v4760
    %5134 = vmatprep.subr.bf16.mxu0 0
    %5135 = vmatpush1.bf16.msra.mxu0 %v4761
    %5136 = vmatprep.subr.bf16.mxu0 0
    %5137 = vmatpush1.bf16.msra.mxu0 %v4762
    %5138 = vmatprep.subr.bf16.mxu0 0
    %5139 = vmatpush1.bf16.msra.mxu0 %v4763
    %5140 = vmatprep.subr.bf16.mxu0 0
    %5141 = vmatpush1.bf16.msra.mxu0 %v4764
    %5142 = vmatprep.subr.bf16.mxu0 0
    %5143 = vmatpush1.bf16.msra.mxu0 %v4765
    %5144 = vmatprep.subr.bf16.mxu0 0
    %5145 = vmatpush1.bf16.msra.mxu0 %v4766
    %5146 = vmatprep.subr.bf16.mxu0 0
    %5147 = vmatpush1.bf16.msra.mxu0 %v4767
    %5148 = vmatprep.subr.bf16.mxu0 0
    %5149 = vmatpush1.bf16.msra.mxu0 %v4768
    %5150 = vmatprep.subr.bf16.mxu0 0
    %5151 = vmatpush1.bf16.msra.mxu0 %v4769
    %5152 = vmatprep.subr.bf16.mxu0 0
    %5153 = vmatpush1.bf16.msra.mxu0 %v4770
    %5154 = vmatprep.subr.bf16.mxu0 0
    %5155 = vmatpush1.bf16.msra.mxu0 %v4771
    %5156 = vmatprep.mubr.bf16.mxu0 %v4905
    %5157 = vmatmul.mubr.bf16.gmra.mrb[0].mxu0 %v4904
    %v5158 = vpop.f32.mrb[0].mxu0
    %v5159 = vadd.f32 %v5119, %v5158
    %v5160 = vpop.f32.mrb[0].mxu0
    %v5161 = vpop.f32.mrb[0].mxu0
    %v5162 = vpop.f32.mrb[0].mxu0
    %5163 = vdwg.mxu0
    %5164 = vmatprep.subr.bf16.mxu0 0
    %5165 = vmatpush1.bf16.msra.mxu0 %v4772
    %5166 = vmatprep.subr.bf16.mxu0 0
    %5167 = vmatpush1.bf16.msra.mxu0 %v4773
    %5168 = vmatprep.subr.bf16.mxu0 0
    %5169 = vmatpush1.bf16.msra.mxu0 %v4774
    %5170 = vmatprep.subr.bf16.mxu0 0
    %5171 = vmatpush1.bf16.msra.mxu0 %v4775
    %5172 = vmatprep.subr.bf16.mxu0 0
    %5173 = vmatpush1.bf16.msra.mxu0 %v4776
    %5174 = vmatprep.subr.bf16.mxu0 0
    %5175 = vmatpush1.bf16.msra.mxu0 %v4777
    %5176 = vmatprep.subr.bf16.mxu0 0
    %5177 = vmatpush1.bf16.msra.mxu0 %v4778
    %5178 = vmatprep.subr.bf16.mxu0 0
    %5179 = vmatpush1.bf16.msra.mxu0 %v4779
    %5180 = vmatprep.subr.bf16.mxu0 0
    %5181 = vmatpush1.bf16.msra.mxu0 %v4780
    %5182 = vmatprep.subr.bf16.mxu0 0
    %5183 = vmatpush1.bf16.msra.mxu0 %v4781
    %5184 = vmatprep.subr.bf16.mxu0 0
    %5185 = vmatpush1.bf16.msra.mxu0 %v4782
    %5186 = vmatprep.subr.bf16.mxu0 0
    %5187 = vmatpush1.bf16.msra.mxu0 %v4783
    %5188 = vmatprep.subr.bf16.mxu0 0
    %5189 = vmatpush1.bf16.msra.mxu0 %v4784
    %5190 = vmatprep.subr.bf16.mxu0 0
    %5191 = vmatpush1.bf16.msra.mxu0 %v4785
    %5192 = vmatprep.subr.bf16.mxu0 0
    %5193 = vmatpush1.bf16.msra.mxu0 %v4786
    %5194 = vmatprep.subr.bf16.mxu0 0
    %5195 = vmatpush1.bf16.msra.mxu0 %v4787
    %5196 = vmatprep.mubr.bf16.mxu0 %v4907
    %5197 = vmatmul.mubr.bf16.gmra.mrb[0].mxu0 %v4906
    %v5198 = vpop.f32.mrb[0].mxu0
    %v5199 = vadd.f32 %v5159, %v5198
    %v5200 = vpop.f32.mrb[0].mxu0
    %v5201 = vpop.f32.mrb[0].mxu0
    %v5202 = vpop.f32.mrb[0].mxu0
    %5203 = vdwg.mxu0
    %5204 = vmatprep.subr.bf16.mxu0 0
    %5205 = vmatpush1.bf16.msra.mxu0 %v4788
    %5206 = vmatprep.subr.bf16.mxu0 0
    %5207 = vmatpush1.bf16.msra.mxu0 %v4789
    %5208 = vmatprep.subr.bf16.mxu0 0
    %5209 = vmatpush1.bf16.msra.mxu0 %v4790
    %5210 = vmatprep.subr.bf16.mxu0 0
    %5211 = vmatpush1.bf16.msra.mxu0 %v4791
    %5212 = vmatprep.subr.bf16.mxu0 0
    %5213 = vmatpush1.bf16.msra.mxu0 %v4792
    %5214 = vmatprep.subr.bf16.mxu0 0
    %5215 = vmatpush1.bf16.msra.mxu0 %v4793
    %5216 = vmatprep.subr.bf16.mxu0 0
    %5217 = vmatpush1.bf16.msra.mxu0 %v4794
    %5218 = vmatprep.subr.bf16.mxu0 0
    %5219 = vmatpush1.bf16.msra.mxu0 %v4795
    %5220 = vmatprep.subr.bf16.mxu0 0
    %5221 = vmatpush1.bf16.msra.mxu0 0
    %5222 = vmatprep.subr.bf16.mxu0 0
    %5223 = vmatpush1.bf16.msra.mxu0 0
    %5224 = vmatprep.subr.bf16.mxu0 0
    %5225 = vmatpush1.bf16.msra.mxu0 0
    %5226 = vmatprep.subr.bf16.mxu0 0
    %5227 = vmatpush1.bf16.msra.mxu0 0
    %5228 = vmatprep.subr.bf16.mxu0 0
    %5229 = vmatpush1.bf16.msra.mxu0 0
    %5230 = vmatprep.subr.bf16.mxu0 0
    %5231 = vmatpush1.bf16.msra.mxu0 0
    %5232 = vmatprep.subr.bf16.mxu0 0
    %5233 = vmatpush1.bf16.msra.mxu0 0
    %5234 = vmatprep.subr.bf16.mxu0 0
    %5235 = vmatpush1.bf16.msra.mxu0 0
    %5236 = vmatprep.mubr.bf16.mxu0 0
    %5237 = vmatmul.mubr.bf16.gmra.mrb[0].mxu0 %v4908
    %v5238 = vpop.f32.mrb[0].mxu0
    %v5239 = vadd.f32 %v5199, %v5238
    %v5240 = vpop.f32.mrb[0].mxu0
    %v5241 = vpop.f32.mrb[0].mxu0
    %v5242 = vpop.f32.mrb[0].mxu0
    %5243 = vdwg.mxu0
    %v5244 = vtanh.pop %v5239
    %v5247 = vunpack.c.l.s4 1966171168
    %v5248 = vunpack.c.0.s8 %v5247
    %v5249 = vlaneseq
    %v5250 = vshrl.u32 %v5249, 7
    %v5251 = vsub.s32 %v5248, %v5250
    %v5252 = vrot.slane %v5244, %v5251
    %v5253 = vcombine.high %v5252, %v5252
    %v5255 = vunpack.c.l.s4 1966171168
    %v5256 = vunpack.c.0.s8 %v5255
    %v5257 = vlaneseq
    %v5258 = vshrl.u32 %v5257, 7
    %v5259 = vsub.s32 %v5256, %v5258
    %v5260 = vrot.slane %v5252, %v5259
    %v5262 = vunpack.c.l.s4 1966171168
    %v5263 = vunpack.c.0.s8 %v5262
    %v5264 = vlaneseq
    %v5265 = vshrl.u32 %v5264, 7
    %v5266 = vsub.s32 %v5263, %v5265
    %v5267 = vrot.slane %v5253, %v5266
    %s5268 = smul.u32 4, 80
    %s5269 = smul.u32 %s5268, 1
    %s5270 = sshll.u32 %s5269, 4
    %5271 = dma.done %s165, %s5270
    %v5272 = vlaneseq
    %v5273 = vshrl.u32 %v5272, 7
    %v5274 = vsub.s32 0, %v5273
    %v5275 = vrot.slane %v5260, %v5274
    %v5276 = vlaneseq
    %v5277 = vshrl.u32 %v5276, 7
    %v5278 = vsub.s32 0, %v5277
    %v5279 = vrot.slane %v5267, %v5278
    %vm5282 = vcmask 1043456
    %v5283 = vsel %vm5282, 0.0, %v5275
    %v5284 = vsel %vm5282, 0.0, %v5279
    %vm5285 = vcmask 1044480
    %v5286 = vsel %vm5285, %v5283, 0.0
    %v5287 = vsel %vm5285, %v5284, 0.0
    %v5290 = vrot.slane %v5286, 1
    %v5291 = vrot.slane %v5287, 1
    %v5292 = vrot.slane %v5286, 2
    %v5293 = vrot.slane %v5287, 2
    %v5294 = vrot.slane %v5286, 3
    %v5295 = vrot.slane %v5287, 3
    %v5297 = vrot.slane %v5286, 4
    %v5298 = vrot.slane 0.0, 4
    %v5299 = vsel %vm5282, %v5297, %v5298
    %v5300 = vrot.slane %v5287, 4
    %v5301 = vsel %vm5282, %v5300, %v5298
    %v5302 = vcombine.low %v5286, %v5290
    %v5303 = vcombine.high %v5286, %v5290
    %v5304 = vcombine.low %v5292, %v5294
    %v5305 = vcombine.high %v5292, %v5294
    %v5306 = vcombine.high %v5299, %v5299
    %v5308 = vunpack.c.l.s4 1966171168
    %v5309 = vunpack.c.0.s8 %v5308
    %v5310 = vlaneseq
    %v5311 = vshrl.u32 %v5310, 7
    %v5312 = vsub.s32 %v5309, %v5311
    %v5313 = vrot.slane %v5302, %v5312
    %v5315 = vunpack.c.l.s4 1966171168
    %v5316 = vunpack.c.0.s8 %v5315
    %v5317 = vlaneseq
    %v5318 = vshrl.u32 %v5317, 7
    %v5319 = vsub.s32 %v5316, %v5318
    %v5320 = vrot.slane %v5303, %v5319
    %v5322 = vunpack.c.l.s4 1966171168
    %v5323 = vunpack.c.0.s8 %v5322
    %v5324 = vlaneseq
    %v5325 = vshrl.u32 %v5324, 7
    %v5326 = vsub.s32 %v5323, %v5325
    %v5327 = vrot.slane %v5304, %v5326
    %v5329 = vunpack.c.l.s4 1966171168
    %v5330 = vunpack.c.0.s8 %v5329
    %v5331 = vlaneseq
    %v5332 = vshrl.u32 %v5331, 7
    %v5333 = vsub.s32 %v5330, %v5332
    %v5334 = vrot.slane %v5305, %v5333
    %v5336 = vunpack.c.l.s4 1966171168
    %v5337 = vunpack.c.0.s8 %v5336
    %v5338 = vlaneseq
    %v5339 = vshrl.u32 %v5338, 7
    %v5340 = vsub.s32 %v5337, %v5339
    %v5341 = vrot.slane %v5299, %v5340
    %v5343 = vunpack.c.l.s4 1966171168
    %v5344 = vunpack.c.0.s8 %v5343
    %v5345 = vlaneseq
    %v5346 = vshrl.u32 %v5345, 7
    %v5347 = vsub.s32 %v5344, %v5346
    %v5348 = vrot.slane %v5306, %v5347
    %v5349 = vcombine.low %v5313, %v5327
    %v5350 = vcombine.high %v5313, %v5327
    %v5351 = vcombine.low %v5320, %v5334
    %v5352 = vcombine.high %v5341, %v5341
    %v5354 = vunpack.c.l.s4 1966171168
    %v5355 = vunpack.c.0.s8 %v5354
    %v5356 = vlaneseq
    %v5357 = vshrl.u32 %v5356, 7
    %v5358 = vsub.s32 %v5355, %v5357
    %v5359 = vrot.slane %v5349, %v5358
    %v5361 = vunpack.c.l.s4 1966171168
    %v5362 = vunpack.c.0.s8 %v5361
    %v5363 = vlaneseq
    %v5364 = vshrl.u32 %v5363, 7
    %v5365 = vsub.s32 %v5362, %v5364
    %v5366 = vrot.slane %v5351, %v5365
    %v5368 = vunpack.c.l.s4 1966171168
    %v5369 = vunpack.c.0.s8 %v5368
    %v5370 = vlaneseq
    %v5371 = vshrl.u32 %v5370, 7
    %v5372 = vsub.s32 %v5369, %v5371
    %v5373 = vrot.slane %v5350, %v5372
    %v5375 = vunpack.c.l.s4 1966171168
    %v5376 = vunpack.c.0.s8 %v5375
    %v5377 = vlaneseq
    %v5378 = vshrl.u32 %v5377, 7
    %v5379 = vsub.s32 %v5376, %v5378
    %v5380 = vrot.slane %v5341, %v5379
    %v5382 = vunpack.c.l.s4 1966171168
    %v5383 = vunpack.c.0.s8 %v5382
    %v5384 = vlaneseq
    %v5385 = vshrl.u32 %v5384, 7
    %v5386 = vsub.s32 %v5383, %v5385
    %v5387 = vrot.slane %v5348, %v5386
    %v5389 = vunpack.c.l.s4 1966171168
    %v5390 = vunpack.c.0.s8 %v5389
    %v5391 = vlaneseq
    %v5392 = vshrl.u32 %v5391, 7
    %v5393 = vsub.s32 %v5390, %v5392
    %v5394 = vrot.slane %v5352, %v5393
    %v5395 = vcombine.low %v5359, %v5380
    %v5396 = vcombine.high %v5359, %v5380
    %v5397 = vcombine.low %v5366, %v5387
    %v5398 = vcombine.low %v5373, %v5394
    %v5399 = vcombine.high %v5373, %v5394
    %v5400 = vcombine.low %v5287, %v5291
    %v5401 = vcombine.high %v5287, %v5291
    %v5402 = vcombine.low %v5293, %v5295
    %v5403 = vcombine.high %v5293, %v5295
    %v5404 = vcombine.high %v5301, %v5301
    %v5406 = vunpack.c.l.s4 1966171168
    %v5407 = vunpack.c.0.s8 %v5406
    %v5408 = vlaneseq
    %v5409 = vshrl.u32 %v5408, 7
    %v5410 = vsub.s32 %v5407, %v5409
    %v5411 = vrot.slane %v5400, %v5410
    %v5413 = vunpack.c.l.s4 1966171168
    %v5414 = vunpack.c.0.s8 %v5413
    %v5415 = vlaneseq
    %v5416 = vshrl.u32 %v5415, 7
    %v5417 = vsub.s32 %v5414, %v5416
    %v5418 = vrot.slane %v5401, %v5417
    %v5420 = vunpack.c.l.s4 1966171168
    %v5421 = vunpack.c.0.s8 %v5420
    %v5422 = vlaneseq
    %v5423 = vshrl.u32 %v5422, 7
    %v5424 = vsub.s32 %v5421, %v5423
    %v5425 = vrot.slane %v5402, %v5424
    %v5427 = vunpack.c.l.s4 1966171168
    %v5428 = vunpack.c.0.s8 %v5427
    %v5429 = vlaneseq
    %v5430 = vshrl.u32 %v5429, 7
    %v5431 = vsub.s32 %v5428, %v5430
    %v5432 = vrot.slane %v5403, %v5431
    %v5434 = vunpack.c.l.s4 1966171168
    %v5435 = vunpack.c.0.s8 %v5434
    %v5436 = vlaneseq
    %v5437 = vshrl.u32 %v5436, 7
    %v5438 = vsub.s32 %v5435, %v5437
    %v5439 = vrot.slane %v5301, %v5438
    %v5441 = vunpack.c.l.s4 1966171168
    %v5442 = vunpack.c.0.s8 %v5441
    %v5443 = vlaneseq
    %v5444 = vshrl.u32 %v5443, 7
    %v5445 = vsub.s32 %v5442, %v5444
    %v5446 = vrot.slane %v5404, %v5445
    %v5447 = vcombine.low %v5411, %v5425
    %v5448 = vcombine.high %v5411, %v5425
    %v5449 = vcombine.low %v5418, %v5432
    %v5450 = vcombine.high %v5439, %v5439
    %v5452 = vunpack.c.l.s4 1966171168
    %v5453 = vunpack.c.0.s8 %v5452
    %v5454 = vlaneseq
    %v5455 = vshrl.u32 %v5454, 7
    %v5456 = vsub.s32 %v5453, %v5455
    %v5457 = vrot.slane %v5447, %v5456
    %v5459 = vunpack.c.l.s4 1966171168
    %v5460 = vunpack.c.0.s8 %v5459
    %v5461 = vlaneseq
    %v5462 = vshrl.u32 %v5461, 7
    %v5463 = vsub.s32 %v5460, %v5462
    %v5464 = vrot.slane %v5449, %v5463
    %v5466 = vunpack.c.l.s4 1966171168
    %v5467 = vunpack.c.0.s8 %v5466
    %v5468 = vlaneseq
    %v5469 = vshrl.u32 %v5468, 7
    %v5470 = vsub.s32 %v5467, %v5469
    %v5471 = vrot.slane %v5448, %v5470
    %v5473 = vunpack.c.l.s4 1966171168
    %v5474 = vunpack.c.0.s8 %v5473
    %v5475 = vlaneseq
    %v5476 = vshrl.u32 %v5475, 7
    %v5477 = vsub.s32 %v5474, %v5476
    %v5478 = vrot.slane %v5439, %v5477
    %v5480 = vunpack.c.l.s4 1966171168
    %v5481 = vunpack.c.0.s8 %v5480
    %v5482 = vlaneseq
    %v5483 = vshrl.u32 %v5482, 7
    %v5484 = vsub.s32 %v5481, %v5483
    %v5485 = vrot.slane %v5446, %v5484
    %v5487 = vunpack.c.l.s4 1966171168
    %v5488 = vunpack.c.0.s8 %v5487
    %v5489 = vlaneseq
    %v5490 = vshrl.u32 %v5489, 7
    %v5491 = vsub.s32 %v5488, %v5490
    %v5492 = vrot.slane %v5450, %v5491
    %v5493 = vcombine.low %v5457, %v5478
    %v5494 = vcombine.high %v5457, %v5478
    %v5495 = vcombine.low %v5464, %v5485
    %v5496 = vcombine.low %v5471, %v5492
    %v5497 = vcombine.high %v5471, %v5492
    %v5498 = vcombine.low %v5395, %v5398
    %v5499 = vcombine.high %v5395, %v5398
    %v5500 = vcombine.low %v5396, %v5399
    %v5501 = vcombine.high %v5396, %v5399
    %v5502 = vcombine.low %v5397, %v5493
    %v5503 = vcombine.high %v5397, %v5493
    %v5504 = vcombine.low %v5496, %v5494
    %v5505 = vcombine.high %v5496, %v5494
    %v5507 = vunpack.c.l.s4 1966171168
    %v5508 = vunpack.c.0.s8 %v5507
    %v5509 = vlaneseq
    %v5510 = vshrl.u32 %v5509, 7
    %v5511 = vsub.s32 %v5508, %v5510
    %v5512 = vrot.slane %v5498, %v5511
    %v5514 = vunpack.c.l.s4 1966171168
    %v5515 = vunpack.c.0.s8 %v5514
    %v5516 = vlaneseq
    %v5517 = vshrl.u32 %v5516, 7
    %v5518 = vsub.s32 %v5515, %v5517
    %v5519 = vrot.slane %v5499, %v5518
    %v5521 = vunpack.c.l.s4 1966171168
    %v5522 = vunpack.c.0.s8 %v5521
    %v5523 = vlaneseq
    %v5524 = vshrl.u32 %v5523, 7
    %v5525 = vsub.s32 %v5522, %v5524
    %v5526 = vrot.slane %v5500, %v5525
    %v5528 = vunpack.c.l.s4 1966171168
    %v5529 = vunpack.c.0.s8 %v5528
    %v5530 = vlaneseq
    %v5531 = vshrl.u32 %v5530, 7
    %v5532 = vsub.s32 %v5529, %v5531
    %v5533 = vrot.slane %v5501, %v5532
    %v5535 = vunpack.c.l.s4 1966171168
    %v5536 = vunpack.c.0.s8 %v5535
    %v5537 = vlaneseq
    %v5538 = vshrl.u32 %v5537, 7
    %v5539 = vsub.s32 %v5536, %v5538
    %v5540 = vrot.slane %v5502, %v5539
    %v5542 = vunpack.c.l.s4 1966171168
    %v5543 = vunpack.c.0.s8 %v5542
    %v5544 = vlaneseq
    %v5545 = vshrl.u32 %v5544, 7
    %v5546 = vsub.s32 %v5543, %v5545
    %v5547 = vrot.slane %v5503, %v5546
    %v5549 = vunpack.c.l.s4 1966171168
    %v5550 = vunpack.c.0.s8 %v5549
    %v5551 = vlaneseq
    %v5552 = vshrl.u32 %v5551, 7
    %v5553 = vsub.s32 %v5550, %v5552
    %v5554 = vrot.slane %v5504, %v5553
    %v5556 = vunpack.c.l.s4 1966171168
    %v5557 = vunpack.c.0.s8 %v5556
    %v5558 = vlaneseq
    %v5559 = vshrl.u32 %v5558, 7
    %v5560 = vsub.s32 %v5557, %v5559
    %v5561 = vrot.slane %v5505, %v5560
    %v5562 = vcombine.low %v5512, %v5526
    %v5563 = vcombine.high %v5512, %v5526
    %v5564 = vcombine.low %v5519, %v5533
    %v5565 = vcombine.low %v5540, %v5554
    %v5566 = vcombine.high %v5540, %v5554
    %v5567 = vcombine.low %v5547, %v5561
    %v5569 = vunpack.c.l.s4 1966171168
    %v5570 = vunpack.c.0.s8 %v5569
    %v5571 = vlaneseq
    %v5572 = vshrl.u32 %v5571, 7
    %v5573 = vsub.s32 %v5570, %v5572
    %v5574 = vrot.slane %v5562, %v5573
    %v5576 = vunpack.c.l.s4 1966171168
    %v5577 = vunpack.c.0.s8 %v5576
    %v5578 = vlaneseq
    %v5579 = vshrl.u32 %v5578, 7
    %v5580 = vsub.s32 %v5577, %v5579
    %v5581 = vrot.slane %v5564, %v5580
    %v5583 = vunpack.c.l.s4 1966171168
    %v5584 = vunpack.c.0.s8 %v5583
    %v5585 = vlaneseq
    %v5586 = vshrl.u32 %v5585, 7
    %v5587 = vsub.s32 %v5584, %v5586
    %v5588 = vrot.slane %v5563, %v5587
    %v5590 = vunpack.c.l.s4 1966171168
    %v5591 = vunpack.c.0.s8 %v5590
    %v5592 = vlaneseq
    %v5593 = vshrl.u32 %v5592, 7
    %v5594 = vsub.s32 %v5591, %v5593
    %v5595 = vrot.slane %v5565, %v5594
    %v5597 = vunpack.c.l.s4 1966171168
    %v5598 = vunpack.c.0.s8 %v5597
    %v5599 = vlaneseq
    %v5600 = vshrl.u32 %v5599, 7
    %v5601 = vsub.s32 %v5598, %v5600
    %v5602 = vrot.slane %v5567, %v5601
    %v5604 = vunpack.c.l.s4 1966171168
    %v5605 = vunpack.c.0.s8 %v5604
    %v5606 = vlaneseq
    %v5607 = vshrl.u32 %v5606, 7
    %v5608 = vsub.s32 %v5605, %v5607
    %v5609 = vrot.slane %v5566, %v5608
    %v5610 = vcombine.low %v5574, %v5595
    %v5611 = vcombine.high %v5574, %v5595
    %v5612 = vcombine.low %v5581, %v5602
    %v5613 = vcombine.low %v5588, %v5609
    %v5614 = vcombine.high %v5588, %v5609
    %v5615 = vcombine.low %v5497, %v5495
    %v5616 = vcombine.high %v5497, %v5495
    %v5618 = vunpack.c.l.s4 1966171168
    %v5619 = vunpack.c.0.s8 %v5618
    %v5620 = vlaneseq
    %v5621 = vshrl.u32 %v5620, 7
    %v5622 = vsub.s32 %v5619, %v5621
    %v5623 = vrot.slane %v5615, %v5622
    %v5625 = vunpack.c.l.s4 1966171168
    %v5626 = vunpack.c.0.s8 %v5625
    %v5627 = vlaneseq
    %v5628 = vshrl.u32 %v5627, 7
    %v5629 = vsub.s32 %v5626, %v5628
    %v5630 = vrot.slane %v5616, %v5629
    %v5631 = vcombine.high %v5623, %v5623
    %v5633 = vunpack.c.l.s4 1966171168
    %v5634 = vunpack.c.0.s8 %v5633
    %v5635 = vlaneseq
    %v5636 = vshrl.u32 %v5635, 7
    %v5637 = vsub.s32 %v5634, %v5636
    %v5638 = vrot.slane %v5623, %v5637
    %v5640 = vunpack.c.l.s4 1966171168
    %v5641 = vunpack.c.0.s8 %v5640
    %v5642 = vlaneseq
    %v5643 = vshrl.u32 %v5642, 7
    %v5644 = vsub.s32 %v5641, %v5643
    %v5645 = vrot.slane %v5630, %v5644
    %v5647 = vunpack.c.l.s4 1966171168
    %v5648 = vunpack.c.0.s8 %v5647
    %v5649 = vlaneseq
    %v5650 = vshrl.u32 %v5649, 7
    %v5651 = vsub.s32 %v5648, %v5650
    %v5652 = vrot.slane %v5631, %v5651
    %v5653 = vcombine.high %v5638, %v5638
    %v5654 = vcombine.high %v5652, %v5652
    %v5665 = vpack.c.bf16 %v5638, %v5610
    %v5666 = vpack.c.bf16 %v5652, %v5613
    %v5667 = vpack.c.bf16 %v5653, %v5611
    %v5668 = vpack.c.bf16 %v5654, %v5614
    %v5669 = vpack.c.bf16 %v5645, %v5612
    %v5670 = vld [vmem:[#allocation4] sm:$0xff]
    %v5671 = vld [vmem:[#allocation4 + $0x8] sm:$0xff]
    %v5672 = vld [vmem:[#allocation4 + $0x10] sm:$0xff]
    %v5673 = vld [vmem:[#allocation4 + $0x18] sm:$0xff]
    %v5674 = vld [vmem:[#allocation4 + $0x20] sm:$0xff]
    %v5675 = vld [vmem:[#allocation4 + $0x28] sm:$0xff]
    %v5676 = vld [vmem:[#allocation4 + $0x30] sm:$0xff]
    %v5677 = vld [vmem:[#allocation4 + $0x38] sm:$0xff]
    %v5678 = vld [vmem:[#allocation4 + $0x40] sm:$0xff]
    %v5679 = vld [vmem:[#allocation4 + $0x48] sm:$0xff]
    %v5680 = vld [vmem:[#allocation4 + $0x50] sm:$0xff]
    %v5681 = vld [vmem:[#allocation4 + $0x58] sm:$0xff]
    %v5682 = vld [vmem:[#allocation4 + $0x60] sm:$0xff]
    %v5683 = vld [vmem:[#allocation4 + $0x68] sm:$0xff]
    %v5684 = vld [vmem:[#allocation4 + $0x70] sm:$0xff]
    %v5685 = vld [vmem:[#allocation4 + $0x78] sm:$0xff]
    %v5686 = vld [vmem:[#allocation4 + $0x80] sm:$0xff]
    %v5687 = vld [vmem:[#allocation4 + $0x88] sm:$0xff]
    %v5688 = vld [vmem:[#allocation4 + $0x90] sm:$0xff]
    %v5689 = vld [vmem:[#allocation4 + $0x98] sm:$0xff]
    %v5690 = vld [vmem:[#allocation4 + $0xa0] sm:$0xff]
    %v5691 = vld [vmem:[#allocation4 + $0xa8] sm:$0xff]
    %v5692 = vld [vmem:[#allocation4 + $0xb0] sm:$0xff]
    %v5693 = vld [vmem:[#allocation4 + $0xb8] sm:$0xff]
    %v5694 = vld [vmem:[#allocation4 + $0xc0] sm:$0xff]
    %v5695 = vld [vmem:[#allocation4 + $0xc8] sm:$0xff]
    %v5696 = vld [vmem:[#allocation4 + $0xd0] sm:$0xff]
    %v5697 = vld [vmem:[#allocation4 + $0xd8] sm:$0xff]
    %v5698 = vld [vmem:[#allocation4 + $0xe0] sm:$0xff]
    %v5699 = vld [vmem:[#allocation4 + $0xe8] sm:$0xff]
    %v5700 = vld [vmem:[#allocation4 + $0xf0] sm:$0xff]
    %v5701 = vld [vmem:[#allocation4 + $0xf8] sm:$0xff]
    %v5702 = vld [vmem:[#allocation4 + $0x100] sm:$0xff]
    %v5703 = vld [vmem:[#allocation4 + $0x108] sm:$0xff]
    %v5704 = vld [vmem:[#allocation4 + $0x110] sm:$0xff]
    %v5705 = vld [vmem:[#allocation4 + $0x118] sm:$0xff]
    %v5706 = vld [vmem:[#allocation4 + $0x120] sm:$0xff]
    %v5707 = vld [vmem:[#allocation4 + $0x128] sm:$0xff]
    %v5708 = vld [vmem:[#allocation4 + $0x130] sm:$0xff]
    %v5709 = vld [vmem:[#allocation4 + $0x138] sm:$0xff]
    %v5710 = vld [vmem:[#allocation15] sm:$0x1]
    %v5712 = vlaneseq
    %v5713 = vshrl.u32 %v5712, 7
    %v5714 = vsub.s32 0, %v5713
    %v5715 = vrot.slane %v5710, %v5714
    %5717 = vmatprep.subr.bf16.mxu0 0
    %5718 = vmatpush1.bf16.msra.mxu0 %v5670
    %5719 = vmatprep.subr.bf16.mxu0 0
    %5720 = vmatpush1.bf16.msra.mxu0 %v5671
    %5721 = vmatprep.subr.bf16.mxu0 0
    %5722 = vmatpush1.bf16.msra.mxu0 %v5672
    %5723 = vmatprep.subr.bf16.mxu0 0
    %5724 = vmatpush1.bf16.msra.mxu0 %v5673
    %5725 = vmatprep.subr.bf16.mxu0 0
    %5726 = vmatpush1.bf16.msra.mxu0 %v5674
    %5727 = vmatprep.subr.bf16.mxu0 0
    %5728 = vmatpush1.bf16.msra.mxu0 %v5675
    %5729 = vmatprep.subr.bf16.mxu0 0
    %5730 = vmatpush1.bf16.msra.mxu0 %v5676
    %5731 = vmatprep.subr.bf16.mxu0 0
    %5732 = vmatpush1.bf16.msra.mxu0 %v5677
    %5733 = vmatprep.subr.bf16.mxu0 0
    %5734 = vmatpush1.bf16.msra.mxu0 %v5678
    %5735 = vmatprep.subr.bf16.mxu0 0
    %5736 = vmatpush1.bf16.msra.mxu0 %v5679
    %5737 = vmatprep.subr.bf16.mxu0 0
    %5738 = vmatpush1.bf16.msra.mxu0 %v5680
    %5739 = vmatprep.subr.bf16.mxu0 0
    %5740 = vmatpush1.bf16.msra.mxu0 %v5681
    %5741 = vmatprep.subr.bf16.mxu0 0
    %5742 = vmatpush1.bf16.msra.mxu0 %v5682
    %5743 = vmatprep.subr.bf16.mxu0 0
    %5744 = vmatpush1.bf16.msra.mxu0 %v5683
    %5745 = vmatprep.subr.bf16.mxu0 0
    %5746 = vmatpush1.bf16.msra.mxu0 %v5684
    %5747 = vmatprep.subr.bf16.mxu0 0
    %5748 = vmatpush1.bf16.msra.mxu0 %v5685
    %5749 = vmatprep.mubr.bf16.mxu0 %v5666
    %5750 = vmatmul.mubr.bf16.gmra.mrb[0].mxu0 %v5665
    %v5751 = vpop.f32.mrb[0].mxu0
    %v5752 = vadd.f32 %v5715, %v5751
    %v5753 = vpop.f32.mrb[0].mxu0
    %v5754 = vpop.f32.mrb[0].mxu0
    %v5755 = vadd.f32 %v5715, %v5754
    %v5756 = vpop.f32.mrb[0].mxu0
    %5757 = vdwg.mxu0
    %5758 = vmatprep.subr.bf16.mxu0 0
    %5759 = vmatpush1.bf16.msra.mxu0 %v5686
    %5760 = vmatprep.subr.bf16.mxu0 0
    %5761 = vmatpush1.bf16.msra.mxu0 %v5687
    %5762 = vmatprep.subr.bf16.mxu0 0
    %5763 = vmatpush1.bf16.msra.mxu0 %v5688
    %5764 = vmatprep.subr.bf16.mxu0 0
    %5765 = vmatpush1.bf16.msra.mxu0 %v5689
    %5766 = vmatprep.subr.bf16.mxu0 0
    %5767 = vmatpush1.bf16.msra.mxu0 %v5690
    %5768 = vmatprep.subr.bf16.mxu0 0
    %5769 = vmatpush1.bf16.msra.mxu0 %v5691
    %5770 = vmatprep.subr.bf16.mxu0 0
    %5771 = vmatpush1.bf16.msra.mxu0 %v5692
    %5772 = vmatprep.subr.bf16.mxu0 0
    %5773 = vmatpush1.bf16.msra.mxu0 %v5693
    %5774 = vmatprep.subr.bf16.mxu0 0
    %5775 = vmatpush1.bf16.msra.mxu0 %v5694
    %5776 = vmatprep.subr.bf16.mxu0 0
    %5777 = vmatpush1.bf16.msra.mxu0 %v5695
    %5778 = vmatprep.subr.bf16.mxu0 0
    %5779 = vmatpush1.bf16.msra.mxu0 %v5696
    %5780 = vmatprep.subr.bf16.mxu0 0
    %5781 = vmatpush1.bf16.msra.mxu0 %v5697
    %5782 = vmatprep.subr.bf16.mxu0 0
    %5783 = vmatpush1.bf16.msra.mxu0 %v5698
    %5784 = vmatprep.subr.bf16.mxu0 0
    %5785 = vmatpush1.bf16.msra.mxu0 %v5699
    %5786 = vmatprep.subr.bf16.mxu0 0
    %5787 = vmatpush1.bf16.msra.mxu0 %v5700
    %5788 = vmatprep.subr.bf16.mxu0 0
    %5789 = vmatpush1.bf16.msra.mxu0 %v5701
    %5790 = vmatprep.mubr.bf16.mxu0 %v5668
    %5791 = vmatmul.mubr.bf16.gmra.mrb[0].mxu0 %v5667
    %v5792 = vpop.f32.mrb[0].mxu0
    %v5793 = vadd.f32 %v5752, %v5792
    %v5794 = vpop.f32.mrb[0].mxu0
    %v5795 = vpop.f32.mrb[0].mxu0
    %v5796 = vadd.f32 %v5755, %v5795
    %v5797 = vpop.f32.mrb[0].mxu0
    %5798 = vdwg.mxu0
    %5799 = vmatprep.subr.bf16.mxu0 0
    %5800 = vmatpush1.bf16.msra.mxu0 %v5702
    %5801 = vmatprep.subr.bf16.mxu0 0
    %5802 = vmatpush1.bf16.msra.mxu0 %v5703
    %5803 = vmatprep.subr.bf16.mxu0 0
    %5804 = vmatpush1.bf16.msra.mxu0 %v5704
    %5805 = vmatprep.subr.bf16.mxu0 0
    %5806 = vmatpush1.bf16.msra.mxu0 %v5705
    %5807 = vmatprep.subr.bf16.mxu0 0
    %5808 = vmatpush1.bf16.msra.mxu0 %v5706
    %5809 = vmatprep.subr.bf16.mxu0 0
    %5810 = vmatpush1.bf16.msra.mxu0 %v5707
    %5811 = vmatprep.subr.bf16.mxu0 0
    %5812 = vmatpush1.bf16.msra.mxu0 %v5708
    %5813 = vmatprep.subr.bf16.mxu0 0
    %5814 = vmatpush1.bf16.msra.mxu0 %v5709
    %5815 = vmatprep.subr.bf16.mxu0 0
    %5816 = vmatpush1.bf16.msra.mxu0 0
    %5817 = vmatprep.subr.bf16.mxu0 0
    %5818 = vmatpush1.bf16.msra.mxu0 0
    %5819 = vmatprep.subr.bf16.mxu0 0
    %5820 = vmatpush1.bf16.msra.mxu0 0
    %5821 = vmatprep.subr.bf16.mxu0 0
    %5822 = vmatpush1.bf16.msra.mxu0 0
    %5823 = vmatprep.subr.bf16.mxu0 0
    %5824 = vmatpush1.bf16.msra.mxu0 0
    %5825 = vmatprep.subr.bf16.mxu0 0
    %5826 = vmatpush1.bf16.msra.mxu0 0
    %5827 = vmatprep.subr.bf16.mxu0 0
    %5828 = vmatpush1.bf16.msra.mxu0 0
    %5829 = vmatprep.subr.bf16.mxu0 0
    %5830 = vmatpush1.bf16.msra.mxu0 0
    %5831 = vmatprep.mubr.bf16.mxu0 0
    %5832 = vmatmul.mubr.bf16.gmra.mrb[0].mxu0 %v5669
    %v5833 = vpop.f32.mrb[0].mxu0
    %v5834 = vadd.f32 %v5793, %v5833
    %v5835 = vpop.f32.mrb[0].mxu0
    %v5836 = vpop.f32.mrb[0].mxu0
    %v5837 = vadd.f32 %v5796, %v5836
    %v5838 = vpop.f32.mrb[0].mxu0
    %5839 = vdwg.mxu0
    %v5840 = vtanh.pop %v5834
    %v5841 = vtanh.pop %v5837
    %v5844 = vcombine.high %v5840, %v5840
    %v5846 = vunpack.c.l.s4 1966171168
    %v5847 = vunpack.c.0.s8 %v5846
    %v5848 = vlaneseq
    %v5849 = vshrl.u32 %v5848, 7
    %v5850 = vsub.s32 %v5847, %v5849
    %v5851 = vrot.slane %v5840, %v5850
    %v5853 = vunpack.c.l.s4 1966171168
    %v5854 = vunpack.c.0.s8 %v5853
    %v5855 = vlaneseq
    %v5856 = vshrl.u32 %v5855, 7
    %v5857 = vsub.s32 %v5854, %v5856
    %v5858 = vrot.slane %v5844, %v5857
    %v5859 = vcombine.high %v5851, %v5851
    %v5860 = vcombine.high %v5858, %v5858
    %v5862 = vunpack.c.l.s4 1966171168
    %v5863 = vunpack.c.0.s8 %v5862
    %v5864 = vlaneseq
    %v5865 = vshrl.u32 %v5864, 7
    %v5866 = vsub.s32 %v5863, %v5865
    %v5867 = vrot.slane %v5851, %v5866
    %v5869 = vunpack.c.l.s4 1966171168
    %v5870 = vunpack.c.0.s8 %v5869
    %v5871 = vlaneseq
    %v5872 = vshrl.u32 %v5871, 7
    %v5873 = vsub.s32 %v5870, %v5872
    %v5874 = vrot.slane %v5858, %v5873
    %v5876 = vunpack.c.l.s4 1966171168
    %v5877 = vunpack.c.0.s8 %v5876
    %v5878 = vlaneseq
    %v5879 = vshrl.u32 %v5878, 7
    %v5880 = vsub.s32 %v5877, %v5879
    %v5881 = vrot.slane %v5859, %v5880
    %v5883 = vunpack.c.l.s4 1966171168
    %v5884 = vunpack.c.0.s8 %v5883
    %v5885 = vlaneseq
    %v5886 = vshrl.u32 %v5885, 7
    %v5887 = vsub.s32 %v5884, %v5886
    %v5888 = vrot.slane %v5860, %v5887
    %v5889 = vcombine.high %v5867, %v5867
    %v5890 = vcombine.high %v5874, %v5874
    %v5891 = vcombine.high %v5881, %v5881
    %v5892 = vcombine.high %v5888, %v5888
    %v5894 = vunpack.c.l.s4 1966171168
    %v5895 = vunpack.c.0.s8 %v5894
    %v5896 = vlaneseq
    %v5897 = vshrl.u32 %v5896, 7
    %v5898 = vsub.s32 %v5895, %v5897
    %v5899 = vrot.slane %v5841, %v5898
    %v5900 = vcombine.high %v5899, %v5899
    %v5902 = vunpack.c.l.s4 1966171168
    %v5903 = vunpack.c.0.s8 %v5902
    %v5904 = vlaneseq
    %v5905 = vshrl.u32 %v5904, 7
    %v5906 = vsub.s32 %v5903, %v5905
    %v5907 = vrot.slane %v5899, %v5906
    %v5909 = vunpack.c.l.s4 1966171168
    %v5910 = vunpack.c.0.s8 %v5909
    %v5911 = vlaneseq
    %v5912 = vshrl.u32 %v5911, 7
    %v5913 = vsub.s32 %v5910, %v5912
    %v5914 = vrot.slane %v5900, %v5913
    %s5915 = smul.u32 4, 48
    %s5916 = smul.u32 %s5915, 2
    %s5917 = sshll.u32 %s5916, 4
    %5918 = dma.done %s177, %s5917
    %v5919 = vcombine.low %v5867, %v5881
    %v5920 = vcombine.low %v5889, %v5891
    %v5922 = vunpack.c.l.s4 1966171168
    %v5923 = vunpack.c.0.s8 %v5922
    %v5924 = vlaneseq
    %v5925 = vshrl.u32 %v5924, 7
    %v5926 = vsub.s32 %v5923, %v5925
    %v5927 = vrot.slane %v5919, %v5926
    %v5929 = vunpack.c.l.s4 1966171168
    %v5930 = vunpack.c.0.s8 %v5929
    %v5931 = vlaneseq
    %v5932 = vshrl.u32 %v5931, 7
    %v5933 = vsub.s32 %v5930, %v5932
    %v5934 = vrot.slane %v5920, %v5933
    %v5936 = vunpack.c.l.s4 1966171168
    %v5937 = vunpack.c.0.s8 %v5936
    %v5938 = vlaneseq
    %v5939 = vshrl.u32 %v5938, 7
    %v5940 = vsub.s32 %v5937, %v5939
    %v5941 = vrot.slane %v5874, %v5940
    %v5942 = vcombine.low %v5927, %v5927
    %v5943 = vcombine.low %v5934, %v5941
    %v5945 = vunpack.c.l.s4 1966171168
    %v5946 = vunpack.c.0.s8 %v5945
    %v5947 = vlaneseq
    %v5948 = vshrl.u32 %v5947, 7
    %v5949 = vsub.s32 %v5946, %v5948
    %v5950 = vrot.slane %v5942, %v5949
    %v5952 = vunpack.c.l.s4 1966171168
    %v5953 = vunpack.c.0.s8 %v5952
    %v5954 = vlaneseq
    %v5955 = vshrl.u32 %v5954, 7
    %v5956 = vsub.s32 %v5953, %v5955
    %v5957 = vrot.slane %v5943, %v5956
    %v5958 = vcombine.low %v5950, %v5957
    %v5959 = vcombine.low %v5888, %v5890
    %v5960 = vcombine.low %v5892, %v5907
    %v5962 = vunpack.c.l.s4 1966171168
    %v5963 = vunpack.c.0.s8 %v5962
    %v5964 = vlaneseq
    %v5965 = vshrl.u32 %v5964, 7
    %v5966 = vsub.s32 %v5963, %v5965
    %v5967 = vrot.slane %v5959, %v5966
    %v5969 = vunpack.c.l.s4 1966171168
    %v5970 = vunpack.c.0.s8 %v5969
    %v5971 = vlaneseq
    %v5972 = vshrl.u32 %v5971, 7
    %v5973 = vsub.s32 %v5970, %v5972
    %v5974 = vrot.slane %v5960, %v5973
    %v5976 = vunpack.c.l.s4 1966171168
    %v5977 = vunpack.c.0.s8 %v5976
    %v5978 = vlaneseq
    %v5979 = vshrl.u32 %v5978, 7
    %v5980 = vsub.s32 %v5977, %v5979
    %v5981 = vrot.slane %v5914, %v5980
    %v5982 = vcombine.low %v5967, %v5967
    %v5983 = vcombine.low %v5974, %v5981
    %v5985 = vunpack.c.l.s4 1966171168
    %v5986 = vunpack.c.0.s8 %v5985
    %v5987 = vlaneseq
    %v5988 = vshrl.u32 %v5987, 7
    %v5989 = vsub.s32 %v5986, %v5988
    %v5990 = vrot.slane %v5982, %v5989
    %v5992 = vunpack.c.l.s4 1966171168
    %v5993 = vunpack.c.0.s8 %v5992
    %v5994 = vlaneseq
    %v5995 = vshrl.u32 %v5994, 7
    %v5996 = vsub.s32 %v5993, %v5995
    %v5997 = vrot.slane %v5983, %v5996
    %v5998 = vcombine.low %v5990, %v5997
    %vm6001 = vcmask 1041408
    %v6002 = vsel %vm6001, 0.0, %v5958
    %v6003 = vsel %vm6001, 0.0, %v5998
    %vm6004 = vcmask 1046528
    %v6005 = vsel %vm6004, %v6002, 0.0
    %v6006 = vsel %vm6004, %v6003, 0.0
    %v6009 = vrot.slane %v6005, 1
    %v6010 = vrot.slane %v6006, 1
    %vm6011 = vcmask 1045504
    %v6012 = vrot.slane %v6005, 2
    %v6013 = vrot.slane 0.0, 2
    %v6014 = vsel %vm6011, %v6012, %v6013
    %v6015 = vrot.slane %v6006, 2
    %v6016 = vsel %vm6011, %v6015, %v6013
    %v6017 = vcombine.low %v6005, %v6009
    %v6018 = vcombine.high %v6005, %v6009
    %v6019 = vcombine.high %v6014, %v6014
    %v6021 = vunpack.c.l.s4 1966171168
    %v6022 = vunpack.c.0.s8 %v6021
    %v6023 = vlaneseq
    %v6024 = vshrl.u32 %v6023, 7
    %v6025 = vsub.s32 %v6022, %v6024
    %v6026 = vrot.slane %v6017, %v6025
    %v6028 = vunpack.c.l.s4 1966171168
    %v6029 = vunpack.c.0.s8 %v6028
    %v6030 = vlaneseq
    %v6031 = vshrl.u32 %v6030, 7
    %v6032 = vsub.s32 %v6029, %v6031
    %v6033 = vrot.slane %v6018, %v6032
    %v6035 = vunpack.c.l.s4 1966171168
    %v6036 = vunpack.c.0.s8 %v6035
    %v6037 = vlaneseq
    %v6038 = vshrl.u32 %v6037, 7
    %v6039 = vsub.s32 %v6036, %v6038
    %v6040 = vrot.slane %v6014, %v6039
    %v6042 = vunpack.c.l.s4 1966171168
    %v6043 = vunpack.c.0.s8 %v6042
    %v6044 = vlaneseq
    %v6045 = vshrl.u32 %v6044, 7
    %v6046 = vsub.s32 %v6043, %v6045
    %v6047 = vrot.slane %v6019, %v6046
    %v6048 = vcombine.low %v6026, %v6040
    %v6049 = vcombine.high %v6026, %v6040
    %v6050 = vcombine.low %v6033, %v6047
    %v6051 = vcombine.high %v6033, %v6047
    %v6053 = vunpack.c.l.s4 1966171168
    %v6054 = vunpack.c.0.s8 %v6053
    %v6055 = vlaneseq
    %v6056 = vshrl.u32 %v6055, 7
    %v6057 = vsub.s32 %v6054, %v6056
    %v6058 = vrot.slane %v6048, %v6057
    %v6060 = vunpack.c.l.s4 1966171168
    %v6061 = vunpack.c.0.s8 %v6060
    %v6062 = vlaneseq
    %v6063 = vshrl.u32 %v6062, 7
    %v6064 = vsub.s32 %v6061, %v6063
    %v6065 = vrot.slane %v6050, %v6064
    %v6067 = vunpack.c.l.s4 1966171168
    %v6068 = vunpack.c.0.s8 %v6067
    %v6069 = vlaneseq
    %v6070 = vshrl.u32 %v6069, 7
    %v6071 = vsub.s32 %v6068, %v6070
    %v6072 = vrot.slane %v6049, %v6071
    %v6074 = vunpack.c.l.s4 1966171168
    %v6075 = vunpack.c.0.s8 %v6074
    %v6076 = vlaneseq
    %v6077 = vshrl.u32 %v6076, 7
    %v6078 = vsub.s32 %v6075, %v6077
    %v6079 = vrot.slane %v6051, %v6078
    %v6080 = vcombine.high %v6058, %v6058
    %v6081 = vcombine.high %v6065, %v6065
    %v6082 = vcombine.high %v6072, %v6072
    %v6083 = vcombine.low %v6006, %v6010
    %v6084 = vcombine.high %v6006, %v6010
    %v6085 = vcombine.high %v6016, %v6016
    %v6087 = vunpack.c.l.s4 1966171168
    %v6088 = vunpack.c.0.s8 %v6087
    %v6089 = vlaneseq
    %v6090 = vshrl.u32 %v6089, 7
    %v6091 = vsub.s32 %v6088, %v6090
    %v6092 = vrot.slane %v6083, %v6091
    %v6094 = vunpack.c.l.s4 1966171168
    %v6095 = vunpack.c.0.s8 %v6094
    %v6096 = vlaneseq
    %v6097 = vshrl.u32 %v6096, 7
    %v6098 = vsub.s32 %v6095, %v6097
    %v6099 = vrot.slane %v6084, %v6098
    %v6101 = vunpack.c.l.s4 1966171168
    %v6102 = vunpack.c.0.s8 %v6101
    %v6103 = vlaneseq
    %v6104 = vshrl.u32 %v6103, 7
    %v6105 = vsub.s32 %v6102, %v6104
    %v6106 = vrot.slane %v6016, %v6105
    %v6108 = vunpack.c.l.s4 1966171168
    %v6109 = vunpack.c.0.s8 %v6108
    %v6110 = vlaneseq
    %v6111 = vshrl.u32 %v6110, 7
    %v6112 = vsub.s32 %v6109, %v6111
    %v6113 = vrot.slane %v6085, %v6112
    %v6114 = vcombine.low %v6092, %v6106
    %v6115 = vcombine.high %v6092, %v6106
    %v6116 = vcombine.low %v6099, %v6113
    %v6117 = vcombine.high %v6099, %v6113
    %v6119 = vunpack.c.l.s4 1966171168
    %v6120 = vunpack.c.0.s8 %v6119
    %v6121 = vlaneseq
    %v6122 = vshrl.u32 %v6121, 7
    %v6123 = vsub.s32 %v6120, %v6122
    %v6124 = vrot.slane %v6114, %v6123
    %v6126 = vunpack.c.l.s4 1966171168
    %v6127 = vunpack.c.0.s8 %v6126
    %v6128 = vlaneseq
    %v6129 = vshrl.u32 %v6128, 7
    %v6130 = vsub.s32 %v6127, %v6129
    %v6131 = vrot.slane %v6116, %v6130
    %v6133 = vunpack.c.l.s4 1966171168
    %v6134 = vunpack.c.0.s8 %v6133
    %v6135 = vlaneseq
    %v6136 = vshrl.u32 %v6135, 7
    %v6137 = vsub.s32 %v6134, %v6136
    %v6138 = vrot.slane %v6115, %v6137
    %v6140 = vunpack.c.l.s4 1966171168
    %v6141 = vunpack.c.0.s8 %v6140
    %v6142 = vlaneseq
    %v6143 = vshrl.u32 %v6142, 7
    %v6144 = vsub.s32 %v6141, %v6143
    %v6145 = vrot.slane %v6117, %v6144
    %v6146 = vcombine.high %v6124, %v6124
    %v6147 = vcombine.high %v6131, %v6131
    %v6148 = vcombine.high %v6138, %v6138
    %v6149 = vcombine.low %v6058, %v6072
    %v6150 = vcombine.low %v6080, %v6082
    %v6151 = vcombine.low %v6065, %v6079
    %v6152 = vcombine.low %v6081, %v6124
    %v6154 = vunpack.c.l.s4 1966171168
    %v6155 = vunpack.c.0.s8 %v6154
    %v6156 = vlaneseq
    %v6157 = vshrl.u32 %v6156, 7
    %v6158 = vsub.s32 %v6155, %v6157
    %v6159 = vrot.slane %v6149, %v6158
    %v6161 = vunpack.c.l.s4 1966171168
    %v6162 = vunpack.c.0.s8 %v6161
    %v6163 = vlaneseq
    %v6164 = vshrl.u32 %v6163, 7
    %v6165 = vsub.s32 %v6162, %v6164
    %v6166 = vrot.slane %v6150, %v6165
    %v6168 = vunpack.c.l.s4 1966171168
    %v6169 = vunpack.c.0.s8 %v6168
    %v6170 = vlaneseq
    %v6171 = vshrl.u32 %v6170, 7
    %v6172 = vsub.s32 %v6169, %v6171
    %v6173 = vrot.slane %v6151, %v6172
    %v6175 = vunpack.c.l.s4 1966171168
    %v6176 = vunpack.c.0.s8 %v6175
    %v6177 = vlaneseq
    %v6178 = vshrl.u32 %v6177, 7
    %v6179 = vsub.s32 %v6176, %v6178
    %v6180 = vrot.slane %v6152, %v6179
    %v6181 = vcombine.low %v6159, %v6166
    %v6182 = vcombine.high %v6159, %v6166
    %v6183 = vcombine.low %v6173, %v6180
    %v6184 = vcombine.high %v6173, %v6180
    %v6186 = vunpack.c.l.s4 1966171168
    %v6187 = vunpack.c.0.s8 %v6186
    %v6188 = vlaneseq
    %v6189 = vshrl.u32 %v6188, 7
    %v6190 = vsub.s32 %v6187, %v6189
    %v6191 = vrot.slane %v6181, %v6190
    %v6193 = vunpack.c.l.s4 1966171168
    %v6194 = vunpack.c.0.s8 %v6193
    %v6195 = vlaneseq
    %v6196 = vshrl.u32 %v6195, 7
    %v6197 = vsub.s32 %v6194, %v6196
    %v6198 = vrot.slane %v6182, %v6197
    %v6200 = vunpack.c.l.s4 1966171168
    %v6201 = vunpack.c.0.s8 %v6200
    %v6202 = vlaneseq
    %v6203 = vshrl.u32 %v6202, 7
    %v6204 = vsub.s32 %v6201, %v6203
    %v6205 = vrot.slane %v6183, %v6204
    %v6207 = vunpack.c.l.s4 1966171168
    %v6208 = vunpack.c.0.s8 %v6207
    %v6209 = vlaneseq
    %v6210 = vshrl.u32 %v6209, 7
    %v6211 = vsub.s32 %v6208, %v6210
    %v6212 = vrot.slane %v6184, %v6211
    %v6213 = vcombine.low %v6191, %v6205
    %v6214 = vcombine.high %v6191, %v6205
    %v6215 = vcombine.low %v6198, %v6212
    %v6216 = vcombine.low %v6138, %v6146
    %v6217 = vcombine.low %v6148, %v6131
    %v6218 = vcombine.low %v6145, %v6147
    %v6220 = vunpack.c.l.s4 1966171168
    %v6221 = vunpack.c.0.s8 %v6220
    %v6222 = vlaneseq
    %v6223 = vshrl.u32 %v6222, 7
    %v6224 = vsub.s32 %v6221, %v6223
    %v6225 = vrot.slane %v6216, %v6224
    %v6227 = vunpack.c.l.s4 1966171168
    %v6228 = vunpack.c.0.s8 %v6227
    %v6229 = vlaneseq
    %v6230 = vshrl.u32 %v6229, 7
    %v6231 = vsub.s32 %v6228, %v6230
    %v6232 = vrot.slane %v6217, %v6231
    %v6234 = vunpack.c.l.s4 1966171168
    %v6235 = vunpack.c.0.s8 %v6234
    %v6236 = vlaneseq
    %v6237 = vshrl.u32 %v6236, 7
    %v6238 = vsub.s32 %v6235, %v6237
    %v6239 = vrot.slane %v6218, %v6238
    %v6240 = vcombine.low %v6225, %v6232
    %v6241 = vcombine.high %v6225, %v6232
    %v6242 = vcombine.high %v6239, %v6239
    %v6244 = vunpack.c.l.s4 1966171168
    %v6245 = vunpack.c.0.s8 %v6244
    %v6246 = vlaneseq
    %v6247 = vshrl.u32 %v6246, 7
    %v6248 = vsub.s32 %v6245, %v6247
    %v6249 = vrot.slane %v6240, %v6248
    %v6251 = vunpack.c.l.s4 1966171168
    %v6252 = vunpack.c.0.s8 %v6251
    %v6253 = vlaneseq
    %v6254 = vshrl.u32 %v6253, 7
    %v6255 = vsub.s32 %v6252, %v6254
    %v6256 = vrot.slane %v6241, %v6255
    %v6258 = vunpack.c.l.s4 1966171168
    %v6259 = vunpack.c.0.s8 %v6258
    %v6260 = vlaneseq
    %v6261 = vshrl.u32 %v6260, 7
    %v6262 = vsub.s32 %v6259, %v6261
    %v6263 = vrot.slane %v6239, %v6262
    %v6265 = vunpack.c.l.s4 1966171168
    %v6266 = vunpack.c.0.s8 %v6265
    %v6267 = vlaneseq
    %v6268 = vshrl.u32 %v6267, 7
    %v6269 = vsub.s32 %v6266, %v6268
    %v6270 = vrot.slane %v6242, %v6269
    %v6271 = vcombine.low %v6249, %v6263
    %v6272 = vcombine.high %v6249, %v6263
    %v6273 = vcombine.low %v6256, %v6270
    %v6280 = vpack.c.bf16 %v6271, %v6213
    %v6281 = vpack.c.bf16 %v6273, %v6215
    %v6282 = vpack.c.bf16 %v6272, %v6214
    %v6283 = vld [vmem:[#allocation5] sm:$0xff]
    %v6284 = vld [vmem:[#allocation5 + $0x8] sm:$0xff]
    %v6285 = vld [vmem:[#allocation5 + $0x10] sm:$0xff]
    %v6286 = vld [vmem:[#allocation5 + $0x18] sm:$0xff]
    %v6287 = vld [vmem:[#allocation5 + $0x20] sm:$0xff]
    %v6288 = vld [vmem:[#allocation5 + $0x28] sm:$0xff]
    %v6289 = vld [vmem:[#allocation5 + $0x30] sm:$0xff]
    %v6290 = vld [vmem:[#allocation5 + $0x38] sm:$0xff]
    %v6291 = vld [vmem:[#allocation5 + $0x40] sm:$0xff]
    %v6292 = vld [vmem:[#allocation5 + $0x48] sm:$0xff]
    %v6293 = vld [vmem:[#allocation5 + $0x50] sm:$0xff]
    %v6294 = vld [vmem:[#allocation5 + $0x58] sm:$0xff]
    %v6295 = vld [vmem:[#allocation5 + $0x60] sm:$0xff]
    %v6296 = vld [vmem:[#allocation5 + $0x68] sm:$0xff]
    %v6297 = vld [vmem:[#allocation5 + $0x70] sm:$0xff]
    %v6298 = vld [vmem:[#allocation5 + $0x78] sm:$0xff]
    %v6299 = vld [vmem:[#allocation5 + $0x80] sm:$0xff]
    %v6300 = vld [vmem:[#allocation5 + $0x88] sm:$0xff]
    %v6301 = vld [vmem:[#allocation5 + $0x90] sm:$0xff]
    %v6302 = vld [vmem:[#allocation5 + $0x98] sm:$0xff]
    %v6303 = vld [vmem:[#allocation5 + $0xa0] sm:$0xff]
    %v6304 = vld [vmem:[#allocation5 + $0xa8] sm:$0xff]
    %v6305 = vld [vmem:[#allocation5 + $0xb0] sm:$0xff]
    %v6306 = vld [vmem:[#allocation5 + $0xb8] sm:$0xff]
    %v6307 = vld [vmem:[#allocation5 + $0xc0] sm:$0xff]
    %v6308 = vld [vmem:[#allocation5 + $0xc8] sm:$0xff]
    %v6309 = vld [vmem:[#allocation5 + $0xd0] sm:$0xff]
    %v6310 = vld [vmem:[#allocation5 + $0xd8] sm:$0xff]
    %v6311 = vld [vmem:[#allocation5 + $0xe0] sm:$0xff]
    %v6312 = vld [vmem:[#allocation5 + $0xe8] sm:$0xff]
    %v6313 = vld [vmem:[#allocation5 + $0xf0] sm:$0xff]
    %v6314 = vld [vmem:[#allocation5 + $0xf8] sm:$0xff]
    %v6315 = vld [vmem:[#allocation5 + $0x100] sm:$0xff]
    %v6316 = vld [vmem:[#allocation5 + $0x108] sm:$0xff]
    %v6317 = vld [vmem:[#allocation5 + $0x110] sm:$0xff]
    %v6318 = vld [vmem:[#allocation5 + $0x118] sm:$0xff]
    %v6319 = vld [vmem:[#allocation5 + $0x120] sm:$0xff]
    %v6320 = vld [vmem:[#allocation5 + $0x128] sm:$0xff]
    %v6321 = vld [vmem:[#allocation5 + $0x130] sm:$0xff]
    %v6322 = vld [vmem:[#allocation5 + $0x138] sm:$0xff]
    %v6323 = vld [vmem:[#allocation5 + $0x140] sm:$0xff]
    %v6324 = vld [vmem:[#allocation5 + $0x148] sm:$0xff]
    %v6325 = vld [vmem:[#allocation5 + $0x150] sm:$0xff]
    %v6326 = vld [vmem:[#allocation5 + $0x158] sm:$0xff]
    %v6327 = vld [vmem:[#allocation5 + $0x160] sm:$0xff]
    %v6328 = vld [vmem:[#allocation5 + $0x168] sm:$0xff]
    %v6329 = vld [vmem:[#allocation5 + $0x170] sm:$0xff]
    %v6330 = vld [vmem:[#allocation5 + $0x178] sm:$0xff]
    %v6331 = vld [vmem:[#allocation16] sm:$0x3]
    %v6333 = vlaneseq
    %v6334 = vshrl.u32 %v6333, 7
    %v6335 = vsub.s32 0, %v6334
    %v6336 = vrot.slane %v6331, %v6335
    %v6337 = vlaneseq
    %v6338 = vshrl.u32 %v6337, 7
    %v6339 = vsub.s32 1, %v6338
    %v6340 = vrot.slane %v6331, %v6339
    %6343 = vmatprep.subr.bf16.mxu0 %v6284
    %6344 = vmatpush1.bf16.msra.mxu0 %v6283
    %6345 = vmatprep.subr.bf16.mxu0 %v6286
    %6346 = vmatpush1.bf16.msra.mxu0 %v6285
    %6347 = vmatprep.subr.bf16.mxu0 %v6288
    %6348 = vmatpush1.bf16.msra.mxu0 %v6287
    %6349 = vmatprep.subr.bf16.mxu0 %v6290
    %6350 = vmatpush1.bf16.msra.mxu0 %v6289
    %6351 = vmatprep.subr.bf16.mxu0 %v6292
    %6352 = vmatpush1.bf16.msra.mxu0 %v6291
    %6353 = vmatprep.subr.bf16.mxu0 %v6294
    %6354 = vmatpush1.bf16.msra.mxu0 %v6293
    %6355 = vmatprep.subr.bf16.mxu0 %v6296
    %6356 = vmatpush1.bf16.msra.mxu0 %v6295
    %6357 = vmatprep.subr.bf16.mxu0 %v6298
    %6358 = vmatpush1.bf16.msra.mxu0 %v6297
    %6359 = vmatprep.subr.bf16.mxu0 %v6300
    %6360 = vmatpush1.bf16.msra.mxu0 %v6299
    %6361 = vmatprep.subr.bf16.mxu0 %v6302
    %6362 = vmatpush1.bf16.msra.mxu0 %v6301
    %6363 = vmatprep.subr.bf16.mxu0 %v6304
    %6364 = vmatpush1.bf16.msra.mxu0 %v6303
    %6365 = vmatprep.subr.bf16.mxu0 %v6306
    %6366 = vmatpush1.bf16.msra.mxu0 %v6305
    %6367 = vmatprep.subr.bf16.mxu0 %v6308
    %6368 = vmatpush1.bf16.msra.mxu0 %v6307
    %6369 = vmatprep.subr.bf16.mxu0 %v6310
    %6370 = vmatpush1.bf16.msra.mxu0 %v6309
    %6371 = vmatprep.subr.bf16.mxu0 %v6312
    %6372 = vmatpush1.bf16.msra.mxu0 %v6311
    %6373 = vmatprep.subr.bf16.mxu0 %v6314
    %6374 = vmatpush1.bf16.msra.mxu0 %v6313
    %6375 = vmatprep.mubr.bf16.mxu0 %v6281
    %6376 = vmatmul.mubr.bf16.gmra.mrb[0].mxu0 %v6280
    %v6377 = vpop.f32.mrb[0].mxu0
    %v6378 = vadd.f32 %v6336, %v6377
    %v6379 = vpop.f32.mrb[0].mxu0
    %v6380 = vadd.f32 %v6340, %v6379
    %v6381 = vpop.f32.mrb[0].mxu0
    %v6382 = vadd.f32 %v6336, %v6381
    %v6383 = vpop.f32.mrb[0].mxu0
    %v6384 = vadd.f32 %v6340, %v6383
    %6385 = vdwg.mxu0
    %6386 = vmatprep.subr.bf16.mxu0 %v6316
    %6387 = vmatpush1.bf16.msra.mxu0 %v6315
    %6388 = vmatprep.subr.bf16.mxu0 %v6318
    %6389 = vmatpush1.bf16.msra.mxu0 %v6317
    %6390 = vmatprep.subr.bf16.mxu0 %v6320
    %6391 = vmatpush1.bf16.msra.mxu0 %v6319
    %6392 = vmatprep.subr.bf16.mxu0 %v6322
    %6393 = vmatpush1.bf16.msra.mxu0 %v6321
    %6394 = vmatprep.subr.bf16.mxu0 %v6324
    %6395 = vmatpush1.bf16.msra.mxu0 %v6323
    %6396 = vmatprep.subr.bf16.mxu0 %v6326
    %6397 = vmatpush1.bf16.msra.mxu0 %v6325
    %6398 = vmatprep.subr.bf16.mxu0 %v6328
    %6399 = vmatpush1.bf16.msra.mxu0 %v6327
    %6400 = vmatprep.subr.bf16.mxu0 %v6330
    %6401 = vmatpush1.bf16.msra.mxu0 %v6329
    %6402 = vmatprep.subr.bf16.mxu0 0
    %6403 = vmatpush1.bf16.msra.mxu0 0
    %6404 = vmatprep.subr.bf16.mxu0 0
    %6405 = vmatpush1.bf16.msra.mxu0 0
    %6406 = vmatprep.subr.bf16.mxu0 0
    %6407 = vmatpush1.bf16.msra.mxu0 0
    %6408 = vmatprep.subr.bf16.mxu0 0
    %6409 = vmatpush1.bf16.msra.mxu0 0
    %6410 = vmatprep.subr.bf16.mxu0 0
    %6411 = vmatpush1.bf16.msra.mxu0 0
    %6412 = vmatprep.subr.bf16.mxu0 0
    %6413 = vmatpush1.bf16.msra.mxu0 0
    %6414 = vmatprep.subr.bf16.mxu0 0
    %6415 = vmatpush1.bf16.msra.mxu0 0
    %6416 = vmatprep.subr.bf16.mxu0 0
    %6417 = vmatpush1.bf16.msra.mxu0 0
    %6418 = vmatprep.mubr.bf16.mxu0 0
    %6419 = vmatmul.mubr.bf16.gmra.mrb[0].mxu0 %v6282
    %v6420 = vpop.f32.mrb[0].mxu0
    %v6421 = vadd.f32 %v6378, %v6420
    %v6422 = vpop.f32.mrb[0].mxu0
    %v6423 = vadd.f32 %v6380, %v6422
    %v6424 = vpop.f32.mrb[0].mxu0
    %v6425 = vadd.f32 %v6382, %v6424
    %v6426 = vpop.f32.mrb[0].mxu0
    %v6427 = vadd.f32 %v6384, %v6426
    %6428 = vdwg.mxu0
    %v6429 = vtanh.pop %v6421
    %v6430 = vtanh.pop %v6423
    %v6431 = vtanh.pop %v6425
    %v6432 = vtanh.pop %v6427
    %v6437 = vcombine.low %v6429, %v6430
    %v6438 = vcombine.high %v6429, %v6430
    %v6440 = vunpack.c.l.s4 1966171168
    %v6441 = vunpack.c.0.s8 %v6440
    %v6442 = vlaneseq
    %v6443 = vshrl.u32 %v6442, 7
    %v6444 = vsub.s32 %v6441, %v6443
    %v6445 = vrot.slane %v6437, %v6444
    %v6447 = vunpack.c.l.s4 1966171168
    %v6448 = vunpack.c.0.s8 %v6447
    %v6449 = vlaneseq
    %v6450 = vshrl.u32 %v6449, 7
    %v6451 = vsub.s32 %v6448, %v6450
    %v6452 = vrot.slane %v6438, %v6451
    %v6453 = vcombine.high %v6445, %v6445
    %v6454 = vcombine.high %v6452, %v6452
    %v6456 = vunpack.c.l.s4 1966171168
    %v6457 = vunpack.c.0.s8 %v6456
    %v6458 = vlaneseq
    %v6459 = vshrl.u32 %v6458, 7
    %v6460 = vsub.s32 %v6457, %v6459
    %v6461 = vrot.slane %v6445, %v6460
    %v6463 = vunpack.c.l.s4 1966171168
    %v6464 = vunpack.c.0.s8 %v6463
    %v6465 = vlaneseq
    %v6466 = vshrl.u32 %v6465, 7
    %v6467 = vsub.s32 %v6464, %v6466
    %v6468 = vrot.slane %v6452, %v6467
    %v6470 = vunpack.c.l.s4 1966171168
    %v6471 = vunpack.c.0.s8 %v6470
    %v6472 = vlaneseq
    %v6473 = vshrl.u32 %v6472, 7
    %v6474 = vsub.s32 %v6471, %v6473
    %v6475 = vrot.slane %v6453, %v6474
    %v6477 = vunpack.c.l.s4 1966171168
    %v6478 = vunpack.c.0.s8 %v6477
    %v6479 = vlaneseq
    %v6480 = vshrl.u32 %v6479, 7
    %v6481 = vsub.s32 %v6478, %v6480
    %v6482 = vrot.slane %v6454, %v6481
    %v6483 = vcombine.high %v6461, %v6461
    %v6484 = vcombine.high %v6468, %v6468
    %v6485 = vcombine.high %v6475, %v6475
    %v6486 = vcombine.high %v6482, %v6482
    %v6487 = vcombine.low %v6431, %v6432
    %v6488 = vcombine.high %v6431, %v6432
    %v6490 = vunpack.c.l.s4 1966171168
    %v6491 = vunpack.c.0.s8 %v6490
    %v6492 = vlaneseq
    %v6493 = vshrl.u32 %v6492, 7
    %v6494 = vsub.s32 %v6491, %v6493
    %v6495 = vrot.slane %v6487, %v6494
    %v6497 = vunpack.c.l.s4 1966171168
    %v6498 = vunpack.c.0.s8 %v6497
    %v6499 = vlaneseq
    %v6500 = vshrl.u32 %v6499, 7
    %v6501 = vsub.s32 %v6498, %v6500
    %v6502 = vrot.slane %v6488, %v6501
    %v6503 = vcombine.high %v6495, %v6495
    %v6504 = vcombine.high %v6502, %v6502
    %v6506 = vunpack.c.l.s4 1966171168
    %v6507 = vunpack.c.0.s8 %v6506
    %v6508 = vlaneseq
    %v6509 = vshrl.u32 %v6508, 7
    %v6510 = vsub.s32 %v6507, %v6509
    %v6511 = vrot.slane %v6495, %v6510
    %v6513 = vunpack.c.l.s4 1966171168
    %v6514 = vunpack.c.0.s8 %v6513
    %v6515 = vlaneseq
    %v6516 = vshrl.u32 %v6515, 7
    %v6517 = vsub.s32 %v6514, %v6516
    %v6518 = vrot.slane %v6502, %v6517
    %v6520 = vunpack.c.l.s4 1966171168
    %v6521 = vunpack.c.0.s8 %v6520
    %v6522 = vlaneseq
    %v6523 = vshrl.u32 %v6522, 7
    %v6524 = vsub.s32 %v6521, %v6523
    %v6525 = vrot.slane %v6503, %v6524
    %v6527 = vunpack.c.l.s4 1966171168
    %v6528 = vunpack.c.0.s8 %v6527
    %v6529 = vlaneseq
    %v6530 = vshrl.u32 %v6529, 7
    %v6531 = vsub.s32 %v6528, %v6530
    %v6532 = vrot.slane %v6504, %v6531
    %v6533 = vcombine.high %v6511, %v6511
    %v6534 = vcombine.high %v6525, %v6525
    %s6535 = smul.u32 4, 64
    %s6536 = smul.u32 %s6535, 1
    %s6537 = sshll.u32 %s6536, 4
    %6538 = dma.done %s212, %s6537
    %v6539 = vcombine.low %v6461, %v6461
    %v6540 = vcombine.low %v6475, %v6483
    %v6541 = vcombine.low %v6485, %v6468
    %v6542 = vcombine.low %v6482, %v6484
    %v6544 = vunpack.c.l.s4 1966171168
    %v6545 = vunpack.c.0.s8 %v6544
    %v6546 = vlaneseq
    %v6547 = vshrl.u32 %v6546, 7
    %v6548 = vsub.s32 %v6545, %v6547
    %v6549 = vrot.slane %v6539, %v6548
    %v6551 = vunpack.c.l.s4 1966171168
    %v6552 = vunpack.c.0.s8 %v6551
    %v6553 = vlaneseq
    %v6554 = vshrl.u32 %v6553, 7
    %v6555 = vsub.s32 %v6552, %v6554
    %v6556 = vrot.slane %v6540, %v6555
    %v6558 = vunpack.c.l.s4 1966171168
    %v6559 = vunpack.c.0.s8 %v6558
    %v6560 = vlaneseq
    %v6561 = vshrl.u32 %v6560, 7
    %v6562 = vsub.s32 %v6559, %v6561
    %v6563 = vrot.slane %v6541, %v6562
    %v6565 = vunpack.c.l.s4 1966171168
    %v6566 = vunpack.c.0.s8 %v6565
    %v6567 = vlaneseq
    %v6568 = vshrl.u32 %v6567, 7
    %v6569 = vsub.s32 %v6566, %v6568
    %v6570 = vrot.slane %v6542, %v6569
    %v6571 = vcombine.low %v6549, %v6556
    %v6572 = vcombine.high %v6549, %v6556
    %v6573 = vcombine.low %v6563, %v6570
    %v6574 = vcombine.high %v6563, %v6570
    %v6576 = vunpack.c.l.s4 1966171168
    %v6577 = vunpack.c.0.s8 %v6576
    %v6578 = vlaneseq
    %v6579 = vshrl.u32 %v6578, 7
    %v6580 = vsub.s32 %v6577, %v6579
    %v6581 = vrot.slane %v6571, %v6580
    %v6583 = vunpack.c.l.s4 1966171168
    %v6584 = vunpack.c.0.s8 %v6583
    %v6585 = vlaneseq
    %v6586 = vshrl.u32 %v6585, 7
    %v6587 = vsub.s32 %v6584, %v6586
    %v6588 = vrot.slane %v6572, %v6587
    %v6590 = vunpack.c.l.s4 1966171168
    %v6591 = vunpack.c.0.s8 %v6590
    %v6592 = vlaneseq
    %v6593 = vshrl.u32 %v6592, 7
    %v6594 = vsub.s32 %v6591, %v6593
    %v6595 = vrot.slane %v6573, %v6594
    %v6597 = vunpack.c.l.s4 1966171168
    %v6598 = vunpack.c.0.s8 %v6597
    %v6599 = vlaneseq
    %v6600 = vshrl.u32 %v6599, 7
    %v6601 = vsub.s32 %v6598, %v6600
    %v6602 = vrot.slane %v6574, %v6601
    %v6603 = vcombine.low %v6581, %v6595
    %v6604 = vcombine.low %v6588, %v6602
    %v6605 = vcombine.low %v6486, %v6486
    %v6606 = vcombine.low %v6511, %v6525
    %v6607 = vcombine.low %v6533, %v6534
    %v6608 = vcombine.low %v6518, %v6532
    %v6610 = vunpack.c.l.s4 1966171168
    %v6611 = vunpack.c.0.s8 %v6610
    %v6612 = vlaneseq
    %v6613 = vshrl.u32 %v6612, 7
    %v6614 = vsub.s32 %v6611, %v6613
    %v6615 = vrot.slane %v6605, %v6614
    %v6617 = vunpack.c.l.s4 1966171168
    %v6618 = vunpack.c.0.s8 %v6617
    %v6619 = vlaneseq
    %v6620 = vshrl.u32 %v6619, 7
    %v6621 = vsub.s32 %v6618, %v6620
    %v6622 = vrot.slane %v6606, %v6621
    %v6624 = vunpack.c.l.s4 1966171168
    %v6625 = vunpack.c.0.s8 %v6624
    %v6626 = vlaneseq
    %v6627 = vshrl.u32 %v6626, 7
    %v6628 = vsub.s32 %v6625, %v6627
    %v6629 = vrot.slane %v6607, %v6628
    %v6631 = vunpack.c.l.s4 1966171168
    %v6632 = vunpack.c.0.s8 %v6631
    %v6633 = vlaneseq
    %v6634 = vshrl.u32 %v6633, 7
    %v6635 = vsub.s32 %v6632, %v6634
    %v6636 = vrot.slane %v6608, %v6635
    %v6637 = vcombine.low %v6615, %v6622
    %v6638 = vcombine.high %v6615, %v6622
    %v6639 = vcombine.low %v6629, %v6636
    %v6640 = vcombine.high %v6629, %v6636
    %v6642 = vunpack.c.l.s4 1966171168
    %v6643 = vunpack.c.0.s8 %v6642
    %v6644 = vlaneseq
    %v6645 = vshrl.u32 %v6644, 7
    %v6646 = vsub.s32 %v6643, %v6645
    %v6647 = vrot.slane %v6637, %v6646
    %v6649 = vunpack.c.l.s4 1966171168
    %v6650 = vunpack.c.0.s8 %v6649
    %v6651 = vlaneseq
    %v6652 = vshrl.u32 %v6651, 7
    %v6653 = vsub.s32 %v6650, %v6652
    %v6654 = vrot.slane %v6638, %v6653
    %v6656 = vunpack.c.l.s4 1966171168
    %v6657 = vunpack.c.0.s8 %v6656
    %v6658 = vlaneseq
    %v6659 = vshrl.u32 %v6658, 7
    %v6660 = vsub.s32 %v6657, %v6659
    %v6661 = vrot.slane %v6639, %v6660
    %v6663 = vunpack.c.l.s4 1966171168
    %v6664 = vunpack.c.0.s8 %v6663
    %v6665 = vlaneseq
    %v6666 = vshrl.u32 %v6665, 7
    %v6667 = vsub.s32 %v6664, %v6666
    %v6668 = vrot.slane %v6640, %v6667
    %v6669 = vcombine.low %v6647, %v6661
    %v6670 = vcombine.low %v6654, %v6668
    %vm6675 = vcmask 1040384
    %v6676 = vsel %vm6675, 0.0, %v6603
    %v6677 = vsel %vm6675, 0.0, %v6604
    %v6678 = vsel %vm6675, 0.0, %v6669
    %v6679 = vsel %vm6675, 0.0, %v6670
    %v6684 = vrot.slane %v6676, 1
    %v6685 = vrot.slane 0.0, 1
    %v6686 = vsel %vm6004, %v6684, %v6685
    %v6687 = vrot.slane %v6677, 1
    %v6688 = vsel %vm6004, %v6687, %v6685
    %v6689 = vrot.slane %v6678, 1
    %v6690 = vsel %vm6004, %v6689, %v6685
    %v6691 = vrot.slane %v6679, 1
    %v6692 = vsel %vm6004, %v6691, %v6685
    %v6697 = vpack.c.bf16 %v6678, %v6676
    %v6698 = vpack.c.bf16 %v6679, %v6677
    %v6699 = vpack.c.bf16 %v6690, %v6686
    %v6700 = vpack.c.bf16 %v6692, %v6688
    %v6701 = vld [vmem:[#allocation6] sm:$0xff]
    %v6702 = vld [vmem:[#allocation6 + $0x8] sm:$0xff]
    %v6703 = vld [vmem:[#allocation6 + $0x10] sm:$0xff]
    %v6704 = vld [vmem:[#allocation6 + $0x18] sm:$0xff]
    %v6705 = vld [vmem:[#allocation6 + $0x20] sm:$0xff]
    %v6706 = vld [vmem:[#allocation6 + $0x28] sm:$0xff]
    %v6707 = vld [vmem:[#allocation6 + $0x30] sm:$0xff]
    %v6708 = vld [vmem:[#allocation6 + $0x38] sm:$0xff]
    %v6709 = vld [vmem:[#allocation6 + $0x40] sm:$0xff]
    %v6710 = vld [vmem:[#allocation6 + $0x48] sm:$0xff]
    %v6711 = vld [vmem:[#allocation6 + $0x50] sm:$0xff]
    %v6712 = vld [vmem:[#allocation6 + $0x58] sm:$0xff]
    %v6713 = vld [vmem:[#allocation6 + $0x60] sm:$0xff]
    %v6714 = vld [vmem:[#allocation6 + $0x68] sm:$0xff]
    %v6715 = vld [vmem:[#allocation6 + $0x70] sm:$0xff]
    %v6716 = vld [vmem:[#allocation6 + $0x78] sm:$0xff]
    %v6717 = vld [vmem:[#allocation6 + $0x80] sm:$0xff]
    %v6718 = vld [vmem:[#allocation6 + $0x88] sm:$0xff]
    %v6719 = vld [vmem:[#allocation6 + $0x90] sm:$0xff]
    %v6720 = vld [vmem:[#allocation6 + $0x98] sm:$0xff]
    %v6721 = vld [vmem:[#allocation6 + $0xa0] sm:$0xff]
    %v6722 = vld [vmem:[#allocation6 + $0xa8] sm:$0xff]
    %v6723 = vld [vmem:[#allocation6 + $0xb0] sm:$0xff]
    %v6724 = vld [vmem:[#allocation6 + $0xb8] sm:$0xff]
    %v6725 = vld [vmem:[#allocation6 + $0xc0] sm:$0xff]
    %v6726 = vld [vmem:[#allocation6 + $0xc8] sm:$0xff]
    %v6727 = vld [vmem:[#allocation6 + $0xd0] sm:$0xff]
    %v6728 = vld [vmem:[#allocation6 + $0xd8] sm:$0xff]
    %v6729 = vld [vmem:[#allocation6 + $0xe0] sm:$0xff]
    %v6730 = vld [vmem:[#allocation6 + $0xe8] sm:$0xff]
    %v6731 = vld [vmem:[#allocation6 + $0xf0] sm:$0xff]
    %v6732 = vld [vmem:[#allocation6 + $0xf8] sm:$0xff]
    %v6733 = vld [vmem:[#allocation18] sm:$0x1]
    %v6735 = vlaneseq
    %v6736 = vshrl.u32 %v6735, 7
    %v6737 = vsub.s32 0, %v6736
    %v6738 = vrot.slane %v6733, %v6737
    %6740 = vmatprep.subr.bf16.mxu0 0
    %6741 = vmatpush1.bf16.msra.mxu0 %v6701
    %6742 = vmatprep.subr.bf16.mxu0 0
    %6743 = vmatpush1.bf16.msra.mxu0 %v6702
    %6744 = vmatprep.subr.bf16.mxu0 0
    %6745 = vmatpush1.bf16.msra.mxu0 %v6703
    %6746 = vmatprep.subr.bf16.mxu0 0
    %6747 = vmatpush1.bf16.msra.mxu0 %v6704
    %6748 = vmatprep.subr.bf16.mxu0 0
    %6749 = vmatpush1.bf16.msra.mxu0 %v6705
    %6750 = vmatprep.subr.bf16.mxu0 0
    %6751 = vmatpush1.bf16.msra.mxu0 %v6706
    %6752 = vmatprep.subr.bf16.mxu0 0
    %6753 = vmatpush1.bf16.msra.mxu0 %v6707
    %6754 = vmatprep.subr.bf16.mxu0 0
    %6755 = vmatpush1.bf16.msra.mxu0 %v6708
    %6756 = vmatprep.subr.bf16.mxu0 0
    %6757 = vmatpush1.bf16.msra.mxu0 %v6709
    %6758 = vmatprep.subr.bf16.mxu0 0
    %6759 = vmatpush1.bf16.msra.mxu0 %v6710
    %6760 = vmatprep.subr.bf16.mxu0 0
    %6761 = vmatpush1.bf16.msra.mxu0 %v6711
    %6762 = vmatprep.subr.bf16.mxu0 0
    %6763 = vmatpush1.bf16.msra.mxu0 %v6712
    %6764 = vmatprep.subr.bf16.mxu0 0
    %6765 = vmatpush1.bf16.msra.mxu0 %v6713
    %6766 = vmatprep.subr.bf16.mxu0 0
    %6767 = vmatpush1.bf16.msra.mxu0 %v6714
    %6768 = vmatprep.subr.bf16.mxu0 0
    %6769 = vmatpush1.bf16.msra.mxu0 %v6715
    %6770 = vmatprep.subr.bf16.mxu0 0
    %6771 = vmatpush1.bf16.msra.mxu0 %v6716
    %6772 = vmatprep.mubr.bf16.mxu0 %v6698
    %6773 = vmatmul.mubr.bf16.gmra.mrb[0].mxu0 %v6697
    %v6774 = vpop.f32.mrb[0].mxu0
    %v6775 = vadd.f32 %v6738, %v6774
    %v6776 = vpop.f32.mrb[0].mxu0
    %v6777 = vpop.f32.mrb[0].mxu0
    %v6778 = vadd.f32 %v6738, %v6777
    %v6779 = vpop.f32.mrb[0].mxu0
    %6780 = vdwg.mxu0
    %6781 = vmatprep.subr.bf16.mxu0 0
    %6782 = vmatpush1.bf16.msra.mxu0 %v6717
    %6783 = vmatprep.subr.bf16.mxu0 0
    %6784 = vmatpush1.bf16.msra.mxu0 %v6718
    %6785 = vmatprep.subr.bf16.mxu0 0
    %6786 = vmatpush1.bf16.msra.mxu0 %v6719
    %6787 = vmatprep.subr.bf16.mxu0 0
    %6788 = vmatpush1.bf16.msra.mxu0 %v6720
    %6789 = vmatprep.subr.bf16.mxu0 0
    %6790 = vmatpush1.bf16.msra.mxu0 %v6721
    %6791 = vmatprep.subr.bf16.mxu0 0
    %6792 = vmatpush1.bf16.msra.mxu0 %v6722
    %6793 = vmatprep.subr.bf16.mxu0 0
    %6794 = vmatpush1.bf16.msra.mxu0 %v6723
    %6795 = vmatprep.subr.bf16.mxu0 0
    %6796 = vmatpush1.bf16.msra.mxu0 %v6724
    %6797 = vmatprep.subr.bf16.mxu0 0
    %6798 = vmatpush1.bf16.msra.mxu0 %v6725
    %6799 = vmatprep.subr.bf16.mxu0 0
    %6800 = vmatpush1.bf16.msra.mxu0 %v6726
    %6801 = vmatprep.subr.bf16.mxu0 0
    %6802 = vmatpush1.bf16.msra.mxu0 %v6727
    %6803 = vmatprep.subr.bf16.mxu0 0
    %6804 = vmatpush1.bf16.msra.mxu0 %v6728
    %6805 = vmatprep.subr.bf16.mxu0 0
    %6806 = vmatpush1.bf16.msra.mxu0 %v6729
    %6807 = vmatprep.subr.bf16.mxu0 0
    %6808 = vmatpush1.bf16.msra.mxu0 %v6730
    %6809 = vmatprep.subr.bf16.mxu0 0
    %6810 = vmatpush1.bf16.msra.mxu0 %v6731
    %6811 = vmatprep.subr.bf16.mxu0 0
    %6812 = vmatpush1.bf16.msra.mxu0 %v6732
    %6813 = vmatprep.mubr.bf16.mxu0 %v6700
    %6814 = vmatmul.mubr.bf16.gmra.mrb[0].mxu0 %v6699
    %v6815 = vpop.f32.mrb[0].mxu0
    %v6816 = vadd.f32 %v6775, %v6815
    %v6817 = vpop.f32.mrb[0].mxu0
    %v6818 = vpop.f32.mrb[0].mxu0
    %v6819 = vadd.f32 %v6778, %v6818
    %v6820 = vpop.f32.mrb[0].mxu0
    %6821 = vdwg.mxu0
    %v6822 = vmul.f32 %v6816, 0.5
    %v6823 = vmul.f32 %v6819, 0.5
    %v6824 = vtanh.pop %v6822
    %v6825 = vtanh.pop %v6823
    %v6826 = vadd.f32 %v6824, 1.0
    %v6827 = vadd.f32 %v6825, 1.0
    %v6828 = vmul.f32 %v6826, 0.5
    %v6829 = vmul.f32 %v6827, 0.5
    %6830 = vst [vmem:[%s13] sm:$0xff] %v6828
    %6831 = vst [vmem:[%s13 + $0x8] sm:$0xff] %v6829
    // Predicated region
    $region74: #{forward.1} parent=1 // pred_check
      _
    $region75: #{forward.1} parent=1 // pred_check_branch
      %6833 = sbr.rel (0) target = $region77
    $region76: #{forward.1} parent=1 // pred_region
      _
    $region77: #{forward.1} parent=1 // pred_fallthru
      _
    // Predicated region
    $region78: #{forward.1} parent=1 // pred_check
      _
    $region79: #{forward.1} parent=1 // pred_check_branch
      %6835 = sbr.rel (0) target = $region81
    $region80: #{forward.1} parent=1 // pred_region
      _
    $region81: #{forward.1} parent=1 // pred_fallthru
      _
    %6836 = vsyncpa [#allocation9], 1
    %6837 = vsyncpa [#allocation11], 1
    %6838 = vsyncpa [#allocation14], 1
    %6839 = vsyncpa [#allocation17], 1
  %6840 = vsyncmov [#allocation7]
  %s6841 = vpop.sfrf %6840
  %p6842 = scmp.eq.s32.totalorder %s6841, 0
  %p6843 = pneg %p6842
  %6845 = shalt.err (%p6843)
  %s6846 = scalar_lea.sflag [#allocation7], 1
  %6847 = vsyncmov %s6846
  %s6848 = vpop.sfrf %6847
  %p6849 = scmp.eq.s32.totalorder %s6848, 0
  %p6850 = pneg %p6849
  %6852 = shalt.err (%p6850)
  %s6853 = scalar_lea.sflag [#allocation7], 2
  %6854 = vsyncmov %s6853
  %s6855 = vpop.sfrf %6854
  %p6856 = scmp.eq.s32.totalorder %s6855, 0
  %p6857 = pneg %p6856
  %6859 = shalt.err (%p6857)
  %s6860 = scalar_lea.sflag [#allocation7], 3
  %6861 = vsyncmov %s6860
  %s6862 = vpop.sfrf %6861
  %p6863 = scmp.eq.s32.totalorder %s6862, 0
  %p6864 = pneg %p6863
  %6866 = shalt.err (%p6864)
  %s6867 = scalar_lea.sflag [#allocation7], 4
  %6868 = vsyncmov %s6867
  %s6869 = vpop.sfrf %6868
  %p6870 = scmp.eq.s32.totalorder %s6869, 0
  %p6871 = pneg %p6870
  %6873 = shalt.err (%p6871)

</llo_original>
